<compile_context>
chip_gen: v5e
topology: v5e:2x2
jax: 0.10.0
libtpu: 0.0.40
codegen_flags: <defaults>
</compile_context>

<pallas_src>
import functools

import jax
import jax.numpy as jnp
from jax import lax
from jax.experimental import pallas as pl
from jax.experimental.pallas import tpu as pltpu


def _round_up(x, m):
    return (x + m - 1) // m * m


# ------------------------------ Pallas kernel -------------------------------

def _make_gru_kernel(L, T, Hp, Fp, G, use_gi_scratch, fori_unroll):
    """Build the fused multi-layer GRU + linear-head kernel for a static config.

    Ref layout:
      x_ref   : (T, Bt, Fp)   time-major input, features padded to Fp only
      wih0_ref: (Fp, G)       layer-0 W_ih^T, gate order [r|z|n], lane-padded
      wih_ref : (Lr, Hp, G)   W_ih^T for layers 1..L-1 (dummy if L == 1)
      whh_ref : (L, Hp, G)    W_hh^T stacked
      bih_ref : (L, 1, G)     b_ih stacked
      bhh_ref : (L, 1, G)     b_hh stacked
      lw_ref  : (1, Hp)       final linear weight as a row
      lb_ref  : (1, 1)        final linear bias
      out_ref : (Bt, 1)       prediction per batch row
      scratch : [seq (T,Bt,Hp) if L>1] + [gi (T,Bt,G) if use_gi_scratch]
    """

    def kernel(x_ref, wih0_ref, wih_ref, whh_ref, bih_ref, bhh_ref,
               lw_ref, lb_ref, out_ref, *scratch):
        idx = 0
        seq_ref = None
        if L > 1:
            seq_ref = scratch[idx]
            idx += 1
        gi_ref = scratch[idx] if use_gi_scratch else None

        Bt = x_ref.shape[1]
        h = jnp.zeros((Bt, Hp), jnp.float32)

        for l in range(L):  # static layer loop (unrolled at trace time)
            # Hoisted input projection: ONE big MXU matmul over all timesteps.
            if l == 0:
                xs = x_ref[...].reshape(T * Bt, Fp)   # contract over Fp, not Hp
                w_in = wih0_ref[...]
            else:
                xs = seq_ref[...].reshape(T * Bt, Hp)
                w_in = wih_ref[l - 1]
            gi_all = (jnp.dot(xs, w_in, preferred_element_type=jnp.float32)
                      + bih_ref[l])

            whh_l = whh_ref[l]
            # Hoist the (1,3Hp)->(Bt,3Hp) bias broadcast out of the time loop.
            bhh_b = jnp.broadcast_to(bhh_ref[l], (Bt, G))
            store_seq = l < L - 1           # top layer's sequence is never read
            h = jnp.zeros((Bt, Hp), jnp.float32)   # h0 = 0 for every layer

            if not use_gi_scratch:
                # Small-T path: consume in-register gi slices directly (no VMEM
                # round trip), fully unrolled so the scheduler interleaves
                # MXU / EUP / VPU work across steps.
                for t in range(T):
                    gi_t = gi_all[t * Bt:(t + 1) * Bt, :]
                    gh = (jnp.dot(h, whh_l, preferred_element_type=jnp.float32)
                          + bhh_b)
                    # Lane-aligned 128-wide gate stripes (Hp % 128 == 0).
                    r = jax.nn.sigmoid(gi_t[:, 0:Hp] + gh[:, 0:Hp])
                    z = jax.nn.sigmoid(gi_t[:, Hp:2 * Hp] + gh[:, Hp:2 * Hp])
                    n = jnp.tanh(gi_t[:, 2 * Hp:] + r * gh[:, 2 * Hp:])
                    h = (1.0 - z) * n + z * h
                    if store_seq:
                        seq_ref[t] = h
            else:
                # Large-T fallback: park gi in VMEM scratch; capped unroll keeps
                # the per-step live set within the register file.
                gi_ref[...] = gi_all.reshape(T, Bt, G)

                def step(t, h, whh_l=whh_l, bhh_b=bhh_b, store_seq=store_seq):
                    gi_t = gi_ref[t]
                    gh = (jnp.dot(h, whh_l, preferred_element_type=jnp.float32)
                          + bhh_b)
                    r = jax.nn.sigmoid(gi_t[:, 0:Hp] + gh[:, 0:Hp])
                    z = jax.nn.sigmoid(gi_t[:, Hp:2 * Hp] + gh[:, Hp:2 * Hp])
                    n = jnp.tanh(gi_t[:, 2 * Hp:] + r * gh[:, 2 * Hp:])
                    h_new = (1.0 - z) * n + z * h
                    if store_seq:
                        seq_ref[t] = h_new
                    return h_new

                h = lax.fori_loop(0, T, step, h, unroll=fori_unroll)

        # Fused linear head: N=1 MXU matmul replaced by VPU mul + lane reduce.
        out_ref[...] = (jnp.sum(h * lw_ref[...], axis=-1, keepdims=True)
                        + lb_ref[...])

    return kernel


# ------------------------------- Wrapper ------------------------------------

def _gru_forward_impl(x_btf, packed, *, single_buffer):
    """x_btf: (B, T, n_features) float32  ->  (B, 1) float32."""
    x_btf = x_btf.astype(jnp.float32)
    B, T, F = x_btf.shape
    wih0 = packed["wih0"]
    Fp, G = wih0.shape
    L, Hp, _ = packed["whh"].shape
    Lr = packed["wih"].shape[0]

    # ---- trace-time device heuristics (safe fallbacks everywhere) ----
    try:
        kind = jax.devices()[0].device_kind.lower()
    except Exception:
        kind = ""
    two_tc = ("v7" in kind) or ("7x" in kind)        # v7x: 2 TensorCores/chip
    is_v5 = "v5" in kind
    try:
        vmem_cap = int(pltpu.get_tpu_info().vmem_capacity_bytes)
    except Exception:
        vmem_cap = (64 if two_tc else 128) * 1024 * 1024
    vmem_budget = int(vmem_cap) * 3 // 4             # leave compiler headroom

    # ---- batch tile choice (generation aware) ----
    big_tile = 128 if is_v5 else 256
    if B <= 8:
        Bt = 8
    elif B <= big_tile:
        # On v7x split mid-size batches across both TensorCores; on v5e/v6e
        # keep a single tile (grid step overhead buys nothing on 1 TC).
        Bt = _round_up(pl.cdiv(B, 2), 8) if two_tc else _round_up(B, 8)
    else:
        Bt = big_tile

    def footprint(bt, steps):
        w_bytes = 4 * (Fp * G + Lr * Hp * G + L * Hp * G + 2 * L * G + Hp + 1)
        w_bytes *= 1 if single_buffer else 2
        x_bytes = 4 * T * bt * Fp * (1 if (single_buffer and steps == 1) else 2)
        seq_bytes = 4 * T * bt * Hp if L > 1 else 0
        gi_bytes = 4 * T * bt * G                    # in-register value or scratch
        work = 4 * 4 * bt * (Hp + G)                 # per-step live-set headroom
        out_bytes = 4 * 2 * bt
        return w_bytes + x_bytes + seq_bytes + gi_bytes + work + out_bytes

    # Shrink Bt until whole-sequence residency fits the per-core VMEM budget.
    while Bt > 8 and footprint(Bt, _round_up(B, Bt) // Bt) > vmem_budget:
        Bt = max(8, _round_up(Bt // 2, 8))
    Bp = _round_up(B, Bt)
    steps = Bp // Bt
    need = footprint(Bt, steps)
    vmem_limit = int(min(max(need * 13 // 10, 32 * 1024 * 1024), vmem_budget))

    use_gi_scratch = (T > 16) or (4 * T * Bt * G > 256 * 1024)
    fori_unroll = 2

    kernel = _make_gru_kernel(L, T, Hp, Fp, G, use_gi_scratch, fori_unroll)

    # Single-buffer once-fetched blocks (constant index_map) when requested.
    can_buf1 = single_buffer and hasattr(pl, "Buffered")

    def const_spec(shape):
        if can_buf1:
            return pl.BlockSpec(shape, lambda *_: (0,) * len(shape),
                                pipeline_mode=pl.Buffered(1))
        return pl.BlockSpec(shape, lambda *_: (0,) * len(shape))

    if can_buf1 and steps == 1:
        x_spec = pl.BlockSpec((T, Bt, Fp), lambda b: (0, b, 0),
                              pipeline_mode=pl.Buffered(1))
    else:
        x_spec = pl.BlockSpec((T, Bt, Fp), lambda b: (0, b, 0))

    scratch_shapes = []
    if L > 1:
        scratch_shapes.append(pltpu.VMEM((T, Bt, Hp), jnp.float32))
    if use_gi_scratch:
        scratch_shapes.append(pltpu.VMEM((T, Bt, G), jnp.float32))

    # Time-major layout; pad batch to the tile and features to Fp (not Hp!).
    x = jnp.transpose(x_btf, (1, 0, 2))                  # (T, B, F)
    x = jnp.pad(x, ((0, 0), (0, Bp - B), (0, Fp - F)))   # (T, Bp, Fp)

    out = pl.pallas_call(
        kernel,
        out_shape=jax.ShapeDtypeStruct((Bp, 1), jnp.float32),
        grid_spec=pltpu.PrefetchScalarGridSpec(
            num_scalar_prefetch=0,
            grid=(steps,),
            in_specs=[
                x_spec,                       # x (T, Bt, Fp)
                const_spec((Fp, G)),          # layer-0 W_ih^T
                const_spec((Lr, Hp, G)),      # layers 1..L-1 W_ih^T
                const_spec((L, Hp, G)),       # W_hh^T stacked
                const_spec((L, 1, G)),        # b_ih stacked
                const_spec((L, 1, G)),        # b_hh stacked
                const_spec((1, Hp)),          # linear weight row
                const_spec((1, 1)),           # linear bias
            ],
            out_specs=pl.BlockSpec((Bt, 1), lambda b: (b, 0)),
            scratch_shapes=scratch_shapes,
        ),
        compiler_params=pltpu.CompilerParams(
            dimension_semantics=("parallel",),   # batch tiles -> 2 TCs on v7x
            vmem_limit_bytes=vmem_limit,
        ),
    )(x, packed["wih0"], packed["wih"], packed["whh"],
      packed["bih"], packed["bhh"], packed["lin_w"], packed["lin_b"])
    return out[:B]


_gru_forward_sb = jax.jit(functools.partial(_gru_forward_impl, single_buffer=True))
_gru_forward_db = jax.jit(functools.partial(_gru_forward_impl, single_buffer=False))
_PREFER_SB = True


def gru_forward(x_btf, packed):
    """Dispatcher: try the single-buffered (Buffered(1)) variant, fall back to
    default double-buffering if this jax build rejects pipeline_mode."""
    global _PREFER_SB
    if _PREFER_SB:
        try:
            return _gru_forward_sb(x_btf, packed)
        except Exception:
            _PREFER_SB = False
    return _gru_forward_db(x_btf, packed)


# ------------------------------ Params --------------------------------------

def init_gru_params(key, n_features, hidden_units, n_layers):
    """PyTorch-style uniform(-1/sqrt(H), 1/sqrt(H)) init, unpadded layout."""
    k = 1.0 / float(hidden_units) ** 0.5
    params = {"layers": []}
    for layer in range(n_layers):
        d_in = n_features if layer == 0 else hidden_units
        key, k1, k2, k3, k4 = jax.random.split(key, 5)
        params["layers"].append({
            # stored transposed for x @ W^T form, gate order [r|z|n]
            "w_ih_t": jax.random.uniform(k1, (d_in, 3 * hidden_units), jnp.float32, -k, k),
            "w_hh_t": jax.random.uniform(k2, (hidden_units, 3 * hidden_units), jnp.float32, -k, k),
            "b_ih": jax.random.uniform(k3, (1, 3 * hidden_units), jnp.float32, -k, k),
            "b_hh": jax.random.uniform(k4, (1, 3 * hidden_units), jnp.float32, -k, k),
        })
    key, k1, k2 = jax.random.split(key, 3)
    params["lin_w_t"] = jax.random.uniform(k1, (hidden_units, 1), jnp.float32, -k, k)
    params["lin_b"] = jax.random.uniform(k2, (1, 1), jnp.float32, -k, k)
    return params


def pack_gru_params(params):
    """Pad gate/hidden dims to 128 lanes (zero padding == exact semantics),
    keep layer 0's contraction at Fp = round_up(F, 128), stack layers."""
    H = params["layers"][0]["w_hh_t"].shape[0]
    F = params["layers"][0]["w_ih_t"].shape[0]
    Hp = _round_up(H, 128)
    Fp = _round_up(F, 128)
    G = 3 * Hp

    def pad_gates(w, rows_to):  # (rows, 3H) -> (rows_to, 3Hp), per-gate padding
        rows = w.shape[0]
        w3 = w.reshape(rows, 3, H)
        w3 = jnp.pad(w3, ((0, rows_to - rows), (0, 0), (0, Hp - H)))
        return w3.reshape(rows_to, G)

    layers = params["layers"]
    wih0 = pad_gates(layers[0]["w_ih_t"], Fp)
    if len(layers) > 1:
        wih = jnp.stack([pad_gates(lp["w_ih_t"], Hp) for lp in layers[1:]])
    else:
        wih = jnp.zeros((1, Hp, G), jnp.float32)        # unused dummy when L == 1
    whh = jnp.stack([pad_gates(lp["w_hh_t"], Hp) for lp in layers])
    bih = jnp.stack([pad_gates(lp["b_ih"], 1) for lp in layers])
    bhh = jnp.stack([pad_gates(lp["b_hh"], 1) for lp in layers])
    lin_w = jnp.pad(params["lin_w_t"].T, ((0, 0), (0, Hp - H)))   # (1, Hp) row
    return {"wih0": wih0, "wih": wih, "whh": whh, "bih": bih, "bhh": bhh,
            "lin_w": lin_w, "lin_b": params["lin_b"]}


# ------------------------------ Reference ------------------------------------

def gru_forward_ref(x_btf, params):
    """Pure-JAX reference (unpadded, no Pallas) for the correctness check."""
    x = jnp.transpose(x_btf.astype(jnp.float32), (1, 0, 2))
    for lp in params["layers"]:
        H = lp["w_hh_t"].shape[0]

        def step(h, x_t, lp=lp, H=H):
            gi = x_t @ lp["w_ih_t"] + lp["b_ih"]
            gh = h @ lp["w_hh_t"] + lp["b_hh"]
            r = jax.nn.sigmoid(gi[:, :H] + gh[:, :H])
            z = jax.nn.sigmoid(gi[:, H:2 * H] + gh[:, H:2 * H])
            n = jnp.tanh(gi[:, 2 * H:] + r * gh[:, 2 * H:])
            h_new = (1.0 - z) * n + z * h
            return h_new, h_new

        h0 = jnp.zeros((x.shape[1], H), jnp.float32)
        _, x = lax.scan(step, h0, x)
    return x[-1] @ params["lin_w_t"] + params["lin_b"]


# --------------------------------- Main ---------------------------------------

if __name__ == "__main__":
    # Small shapes consistent with the module's forward: x is (B, T, n_features).
    batch, seq_len = 2, 8
    n_features, hidden_units, n_layers = 4, 32, 3

    key = jax.random.PRNGKey(0)
    key, pkey, xkey = jax.random.split(key, 3)
    params = init_gru_params(pkey, n_features, hidden_units, n_layers)
    packed = pack_gru_params(params)
    x = jax.random.normal(xkey, (batch, seq_len, n_features), jnp.float32)

    out = gru_forward(x, packed)
    out = jax.block_until_ready(out)

    ref = gru_forward_ref(x, params)
    assert out.shape == (batch, 1), out.shape
    assert jnp.allclose(out, ref, atol=1e-4, rtol=1e-4), (out, ref)

    print("KERNEL_OK")
</pallas_src>

<mosaic_0001>
module attributes {stable_mosaic.version = 11 : i64} {
  func.func @kernel(%arg0: i32, %arg1: memref<8x8x128xf32, #tpu.memory_space<vmem>>, %arg2: memref<128x384xf32, #tpu.memory_space<vmem>>, %arg3: memref<2x128x384xf32, #tpu.memory_space<vmem>>, %arg4: memref<3x128x384xf32, #tpu.memory_space<vmem>>, %arg5: memref<3x1x384xf32, #tpu.memory_space<vmem>>, %arg6: memref<3x1x384xf32, #tpu.memory_space<vmem>>, %arg7: memref<1x128xf32, #tpu.memory_space<vmem>>, %arg8: memref<1x1xf32, #tpu.memory_space<vmem>>, %arg9: memref<8x1xf32, #tpu.memory_space<vmem>>, %arg10: memref<8x8x128xf32, #tpu.memory_space<vmem>>) attributes {dimension_semantics = [#tpu.dimension_semantics<parallel>], iteration_bounds = array<i64: 1>, scalar_prefetch = 0 : i64, scratch_operands = 1 : i64, tpu.core_type = #tpu.core_type<tc>, window_params = [{pipeline_mode = #tpu.pipeline_mode<synchronous>, transform_indices = @transform_0, window_bounds = array<i64: 8, 8, 128>}, {pipeline_mode = #tpu.pipeline_mode<synchronous>, transform_indices = @transform_1, window_bounds = array<i64: 128, 384>}, {pipeline_mode = #tpu.pipeline_mode<synchronous>, transform_indices = @transform_2, window_bounds = array<i64: 2, 128, 384>}, {pipeline_mode = #tpu.pipeline_mode<synchronous>, transform_indices = @transform_3, window_bounds = array<i64: 3, 128, 384>}, {pipeline_mode = #tpu.pipeline_mode<synchronous>, transform_indices = @transform_4, window_bounds = array<i64: 3, 1, 384>}, {pipeline_mode = #tpu.pipeline_mode<synchronous>, transform_indices = @transform_5, window_bounds = array<i64: 3, 1, 384>}, {pipeline_mode = #tpu.pipeline_mode<synchronous>, transform_indices = @transform_6, window_bounds = array<i64: 1, 128>}, {pipeline_mode = #tpu.pipeline_mode<synchronous>, transform_indices = @transform_7, window_bounds = array<i64: 1, 1>}, {transform_indices = @transform_8, window_bounds = array<i64: 8, 1>}]} {
    %c0 = arith.constant 0 : index
    %c0_0 = arith.constant 0 : index
    %c0_1 = arith.constant 0 : index
    %0 = vector.load %arg1[%c0, %c0_0, %c0_1] : memref<8x8x128xf32, #tpu.memory_space<vmem>>, vector<8x8x128xf32>
    %1 = vector.shape_cast %0 : vector<8x8x128xf32> to vector<64x128xf32>
    %c0_2 = arith.constant 0 : index
    %c0_3 = arith.constant 0 : index
    %2 = vector.load %arg2[%c0_2, %c0_3] : memref<128x384xf32, #tpu.memory_space<vmem>>, vector<128x384xf32>
    %cst = arith.constant dense<0.000000e+00> : vector<64x384xf32>
    %3 = tpu.matmul %1, %2, %cst {dimension_numbers = #tpu.dot_dimension_numbers<[1], [0], [0], [1], [0, 0, 1, 1], [], []>} : vector<64x128xf32>, vector<128x384xf32>, vector<64x384xf32> -> vector<64x384xf32>
    %c0_4 = arith.constant 0 : index
    %c0_5 = arith.constant 0 : index
    %c0_6 = arith.constant 0 : index
    %4 = vector.load %arg5[%c0_4, %c0_5, %c0_6] : memref<3x1x384xf32, #tpu.memory_space<vmem>>, vector<1x1x384xf32>
    %5 = vector.shape_cast %4 : vector<1x1x384xf32> to vector<1x384xf32>
    %6 = vector.broadcast %5 : vector<1x384xf32> to vector<64x384xf32>
    %7 = arith.addf %3, %6 : vector<64x384xf32>
    %c0_7 = arith.constant 0 : index
    %c0_8 = arith.constant 0 : index
    %c0_9 = arith.constant 0 : index
    %8 = vector.load %arg4[%c0_7, %c0_8, %c0_9] : memref<3x128x384xf32, #tpu.memory_space<vmem>>, vector<1x128x384xf32>
    %9 = vector.shape_cast %8 : vector<1x128x384xf32> to vector<128x384xf32>
    %c0_10 = arith.constant 0 : index
    %c0_11 = arith.constant 0 : index
    %c0_12 = arith.constant 0 : index
    %10 = vector.load %arg6[%c0_10, %c0_11, %c0_12] : memref<3x1x384xf32, #tpu.memory_space<vmem>>, vector<1x1x384xf32>
    %11 = vector.shape_cast %10 : vector<1x1x384xf32> to vector<1x384xf32>
    %12 = vector.shape_cast %11 : vector<1x384xf32> to vector<1x384xf32>
    %13 = vector.broadcast %12 : vector<1x384xf32> to vector<8x384xf32>
    %cst_13 = arith.constant 0.000000e+00 : f32
    %14 = vector.broadcast %cst_13 : f32 to vector<8x128xf32>
    %15 = vector.extract_strided_slice %7 {offsets = [0, 0], sizes = [8, 384], strides = [1, 1]} : vector<64x384xf32> to vector<8x384xf32>
    %cst_14 = arith.constant dense<0.000000e+00> : vector<8x384xf32>
    %16 = tpu.matmul %14, %9, %cst_14 {dimension_numbers = #tpu.dot_dimension_numbers<[1], [0], [0], [1], [0, 0, 1, 1], [], []>} : vector<8x128xf32>, vector<128x384xf32>, vector<8x384xf32> -> vector<8x384xf32>
    %17 = arith.addf %16, %13 : vector<8x384xf32>
    %18 = vector.extract_strided_slice %15 {offsets = [0, 0], sizes = [8, 128], strides = [1, 1]} : vector<8x384xf32> to vector<8x128xf32>
    %19 = vector.extract_strided_slice %17 {offsets = [0, 0], sizes = [8, 128], strides = [1, 1]} : vector<8x384xf32> to vector<8x128xf32>
    %20 = arith.addf %18, %19 : vector<8x128xf32>
    %21 = arith.negf %20 : vector<8x128xf32>
    %22 = math.exp %21 : vector<8x128xf32>
    %cst_15 = arith.constant 1.000000e+00 : f32
    %23 = vector.broadcast %cst_15 : f32 to vector<8x128xf32>
    %24 = arith.addf %23, %22 : vector<8x128xf32>
    %25 = arith.divf %23, %24 : vector<8x128xf32>
    %26 = vector.extract_strided_slice %15 {offsets = [0, 128], sizes = [8, 128], strides = [1, 1]} : vector<8x384xf32> to vector<8x128xf32>
    %27 = vector.extract_strided_slice %17 {offsets = [0, 128], sizes = [8, 128], strides = [1, 1]} : vector<8x384xf32> to vector<8x128xf32>
    %28 = arith.addf %26, %27 : vector<8x128xf32>
    %29 = arith.negf %28 : vector<8x128xf32>
    %30 = math.exp %29 : vector<8x128xf32>
    %cst_16 = arith.constant 1.000000e+00 : f32
    %31 = vector.broadcast %cst_16 : f32 to vector<8x128xf32>
    %32 = arith.addf %31, %30 : vector<8x128xf32>
    %33 = arith.divf %31, %32 : vector<8x128xf32>
    %34 = vector.extract_strided_slice %15 {offsets = [0, 256], sizes = [8, 128], strides = [1, 1]} : vector<8x384xf32> to vector<8x128xf32>
    %35 = vector.extract_strided_slice %17 {offsets = [0, 256], sizes = [8, 128], strides = [1, 1]} : vector<8x384xf32> to vector<8x128xf32>
    %36 = arith.mulf %25, %35 : vector<8x128xf32>
    %37 = arith.addf %34, %36 : vector<8x128xf32>
    %38 = math.tanh %37 : vector<8x128xf32>
    %cst_17 = arith.constant 1.000000e+00 : f32
    %39 = vector.broadcast %cst_17 : f32 to vector<8x128xf32>
    %40 = arith.subf %39, %33 : vector<8x128xf32>
    %41 = arith.mulf %40, %38 : vector<8x128xf32>
    %42 = arith.mulf %33, %14 : vector<8x128xf32>
    %43 = arith.addf %41, %42 : vector<8x128xf32>
    %c0_18 = arith.constant 0 : index
    %c0_19 = arith.constant 0 : index
    %c0_20 = arith.constant 0 : index
    %44 = vector.load %arg10[%c0_18, %c0_19, %c0_20] : memref<8x8x128xf32, #tpu.memory_space<vmem>>, vector<1x8x128xf32>
    %45 = vector.shape_cast %44 : vector<1x8x128xf32> to vector<8x128xf32>
    %46 = vector.shape_cast %43 : vector<8x128xf32> to vector<1x8x128xf32>
    tpu.vector_store %arg10[%c0_18, %c0_19, %c0_20], %46 {strides = array<i32>} : memref<8x8x128xf32, #tpu.memory_space<vmem>>, vector<1x8x128xf32>,
    %47 = vector.extract_strided_slice %7 {offsets = [8, 0], sizes = [8, 384], strides = [1, 1]} : vector<64x384xf32> to vector<8x384xf32>
    %cst_21 = arith.constant dense<0.000000e+00> : vector<8x384xf32>
    %48 = tpu.matmul %43, %9, %cst_21 {dimension_numbers = #tpu.dot_dimension_numbers<[1], [0], [0], [1], [0, 0, 1, 1], [], []>} : vector<8x128xf32>, vector<128x384xf32>, vector<8x384xf32> -> vector<8x384xf32>
    %49 = arith.addf %48, %13 : vector<8x384xf32>
    %50 = vector.extract_strided_slice %47 {offsets = [0, 0], sizes = [8, 128], strides = [1, 1]} : vector<8x384xf32> to vector<8x128xf32>
    %51 = vector.extract_strided_slice %49 {offsets = [0, 0], sizes = [8, 128], strides = [1, 1]} : vector<8x384xf32> to vector<8x128xf32>
    %52 = arith.addf %50, %51 : vector<8x128xf32>
    %53 = arith.negf %52 : vector<8x128xf32>
    %54 = math.exp %53 : vector<8x128xf32>
    %cst_22 = arith.constant 1.000000e+00 : f32
    %55 = vector.broadcast %cst_22 : f32 to vector<8x128xf32>
    %56 = arith.addf %55, %54 : vector<8x128xf32>
    %57 = arith.divf %55, %56 : vector<8x128xf32>
    %58 = vector.extract_strided_slice %47 {offsets = [0, 128], sizes = [8, 128], strides = [1, 1]} : vector<8x384xf32> to vector<8x128xf32>
    %59 = vector.extract_strided_slice %49 {offsets = [0, 128], sizes = [8, 128], strides = [1, 1]} : vector<8x384xf32> to vector<8x128xf32>
    %60 = arith.addf %58, %59 : vector<8x128xf32>
    %61 = arith.negf %60 : vector<8x128xf32>
    %62 = math.exp %61 : vector<8x128xf32>
    %cst_23 = arith.constant 1.000000e+00 : f32
    %63 = vector.broadcast %cst_23 : f32 to vector<8x128xf32>
    %64 = arith.addf %63, %62 : vector<8x128xf32>
    %65 = arith.divf %63, %64 : vector<8x128xf32>
    %66 = vector.extract_strided_slice %47 {offsets = [0, 256], sizes = [8, 128], strides = [1, 1]} : vector<8x384xf32> to vector<8x128xf32>
    %67 = vector.extract_strided_slice %49 {offsets = [0, 256], sizes = [8, 128], strides = [1, 1]} : vector<8x384xf32> to vector<8x128xf32>
    %68 = arith.mulf %57, %67 : vector<8x128xf32>
    %69 = arith.addf %66, %68 : vector<8x128xf32>
    %70 = math.tanh %69 : vector<8x128xf32>
    %cst_24 = arith.constant 1.000000e+00 : f32
    %71 = vector.broadcast %cst_24 : f32 to vector<8x128xf32>
    %72 = arith.subf %71, %65 : vector<8x128xf32>
    %73 = arith.mulf %72, %70 : vector<8x128xf32>
    %74 = arith.mulf %65, %43 : vector<8x128xf32>
    %75 = arith.addf %73, %74 : vector<8x128xf32>
    %c1 = arith.constant 1 : index
    %c0_25 = arith.constant 0 : index
    %c0_26 = arith.constant 0 : index
    %76 = vector.load %arg10[%c1, %c0_25, %c0_26] : memref<8x8x128xf32, #tpu.memory_space<vmem>>, vector<1x8x128xf32>
    %77 = vector.shape_cast %76 : vector<1x8x128xf32> to vector<8x128xf32>
    %78 = vector.shape_cast %75 : vector<8x128xf32> to vector<1x8x128xf32>
    tpu.vector_store %arg10[%c1, %c0_25, %c0_26], %78 {strides = array<i32>} : memref<8x8x128xf32, #tpu.memory_space<vmem>>, vector<1x8x128xf32>,
    %79 = vector.extract_strided_slice %7 {offsets = [16, 0], sizes = [8, 384], strides = [1, 1]} : vector<64x384xf32> to vector<8x384xf32>
    %cst_27 = arith.constant dense<0.000000e+00> : vector<8x384xf32>
    %80 = tpu.matmul %75, %9, %cst_27 {dimension_numbers = #tpu.dot_dimension_numbers<[1], [0], [0], [1], [0, 0, 1, 1], [], []>} : vector<8x128xf32>, vector<128x384xf32>, vector<8x384xf32> -> vector<8x384xf32>
    %81 = arith.addf %80, %13 : vector<8x384xf32>
    %82 = vector.extract_strided_slice %79 {offsets = [0, 0], sizes = [8, 128], strides = [1, 1]} : vector<8x384xf32> to vector<8x128xf32>
    %83 = vector.extract_strided_slice %81 {offsets = [0, 0], sizes = [8, 128], strides = [1, 1]} : vector<8x384xf32> to vector<8x128xf32>
    %84 = arith.addf %82, %83 : vector<8x128xf32>
    %85 = arith.negf %84 : vector<8x128xf32>
    %86 = math.exp %85 : vector<8x128xf32>
    %cst_28 = arith.constant 1.000000e+00 : f32
    %87 = vector.broadcast %cst_28 : f32 to vector<8x128xf32>
    %88 = arith.addf %87, %86 : vector<8x128xf32>
    %89 = arith.divf %87, %88 : vector<8x128xf32>
    %90 = vector.extract_strided_slice %79 {offsets = [0, 128], sizes = [8, 128], strides = [1, 1]} : vector<8x384xf32> to vector<8x128xf32>
    %91 = vector.extract_strided_slice %81 {offsets = [0, 128], sizes = [8, 128], strides = [1, 1]} : vector<8x384xf32> to vector<8x128xf32>
    %92 = arith.addf %90, %91 : vector<8x128xf32>
    %93 = arith.negf %92 : vector<8x128xf32>
    %94 = math.exp %93 : vector<8x128xf32>
    %cst_29 = arith.constant 1.000000e+00 : f32
    %95 = vector.broadcast %cst_29 : f32 to vector<8x128xf32>
    %96 = arith.addf %95, %94 : vector<8x128xf32>
    %97 = arith.divf %95, %96 : vector<8x128xf32>
    %98 = vector.extract_strided_slice %79 {offsets = [0, 256], sizes = [8, 128], strides = [1, 1]} : vector<8x384xf32> to vector<8x128xf32>
    %99 = vector.extract_strided_slice %81 {offsets = [0, 256], sizes = [8, 128], strides = [1, 1]} : vector<8x384xf32> to vector<8x128xf32>
    %100 = arith.mulf %89, %99 : vector<8x128xf32>
    %101 = arith.addf %98, %100 : vector<8x128xf32>
    %102 = math.tanh %101 : vector<8x128xf32>
    %cst_30 = arith.constant 1.000000e+00 : f32
    %103 = vector.broadcast %cst_30 : f32 to vector<8x128xf32>
    %104 = arith.subf %103, %97 : vector<8x128xf32>
    %105 = arith.mulf %104, %102 : vector<8x128xf32>
    %106 = arith.mulf %97, %75 : vector<8x128xf32>
    %107 = arith.addf %105, %106 : vector<8x128xf32>
    %c2 = arith.constant 2 : index
    %c0_31 = arith.constant 0 : index
    %c0_32 = arith.constant 0 : index
    %108 = vector.load %arg10[%c2, %c0_31, %c0_32] : memref<8x8x128xf32, #tpu.memory_space<vmem>>, vector<1x8x128xf32>
    %109 = vector.shape_cast %108 : vector<1x8x128xf32> to vector<8x128xf32>
    %110 = vector.shape_cast %107 : vector<8x128xf32> to vector<1x8x128xf32>
    tpu.vector_store %arg10[%c2, %c0_31, %c0_32], %110 {strides = array<i32>} : memref<8x8x128xf32, #tpu.memory_space<vmem>>, vector<1x8x128xf32>,
    %111 = vector.extract_strided_slice %7 {offsets = [24, 0], sizes = [8, 384], strides = [1, 1]} : vector<64x384xf32> to vector<8x384xf32>
    %cst_33 = arith.constant dense<0.000000e+00> : vector<8x384xf32>
    %112 = tpu.matmul %107, %9, %cst_33 {dimension_numbers = #tpu.dot_dimension_numbers<[1], [0], [0], [1], [0, 0, 1, 1], [], []>} : vector<8x128xf32>, vector<128x384xf32>, vector<8x384xf32> -> vector<8x384xf32>
    %113 = arith.addf %112, %13 : vector<8x384xf32>
    %114 = vector.extract_strided_slice %111 {offsets = [0, 0], sizes = [8, 128], strides = [1, 1]} : vector<8x384xf32> to vector<8x128xf32>
    %115 = vector.extract_strided_slice %113 {offsets = [0, 0], sizes = [8, 128], strides = [1, 1]} : vector<8x384xf32> to vector<8x128xf32>
    %116 = arith.addf %114, %115 : vector<8x128xf32>
    %117 = arith.negf %116 : vector<8x128xf32>
    %118 = math.exp %117 : vector<8x128xf32>
    %cst_34 = arith.constant 1.000000e+00 : f32
    %119 = vector.broadcast %cst_34 : f32 to vector<8x128xf32>
    %120 = arith.addf %119, %118 : vector<8x128xf32>
    %121 = arith.divf %119, %120 : vector<8x128xf32>
    %122 = vector.extract_strided_slice %111 {offsets = [0, 128], sizes = [8, 128], strides = [1, 1]} : vector<8x384xf32> to vector<8x128xf32>
    %123 = vector.extract_strided_slice %113 {offsets = [0, 128], sizes = [8, 128], strides = [1, 1]} : vector<8x384xf32> to vector<8x128xf32>
    %124 = arith.addf %122, %123 : vector<8x128xf32>
    %125 = arith.negf %124 : vector<8x128xf32>
    %126 = math.exp %125 : vector<8x128xf32>
    %cst_35 = arith.constant 1.000000e+00 : f32
    %127 = vector.broadcast %cst_35 : f32 to vector<8x128xf32>
    %128 = arith.addf %127, %126 : vector<8x128xf32>
    %129 = arith.divf %127, %128 : vector<8x128xf32>
    %130 = vector.extract_strided_slice %111 {offsets = [0, 256], sizes = [8, 128], strides = [1, 1]} : vector<8x384xf32> to vector<8x128xf32>
    %131 = vector.extract_strided_slice %113 {offsets = [0, 256], sizes = [8, 128], strides = [1, 1]} : vector<8x384xf32> to vector<8x128xf32>
    %132 = arith.mulf %121, %131 : vector<8x128xf32>
    %133 = arith.addf %130, %132 : vector<8x128xf32>
    %134 = math.tanh %133 : vector<8x128xf32>
    %cst_36 = arith.constant 1.000000e+00 : f32
    %135 = vector.broadcast %cst_36 : f32 to vector<8x128xf32>
    %136 = arith.subf %135, %129 : vector<8x128xf32>
    %137 = arith.mulf %136, %134 : vector<8x128xf32>
    %138 = arith.mulf %129, %107 : vector<8x128xf32>
    %139 = arith.addf %137, %138 : vector<8x128xf32>
    %c3 = arith.constant 3 : index
    %c0_37 = arith.constant 0 : index
    %c0_38 = arith.constant 0 : index
    %140 = vector.load %arg10[%c3, %c0_37, %c0_38] : memref<8x8x128xf32, #tpu.memory_space<vmem>>, vector<1x8x128xf32>
    %141 = vector.shape_cast %140 : vector<1x8x128xf32> to vector<8x128xf32>
    %142 = vector.shape_cast %139 : vector<8x128xf32> to vector<1x8x128xf32>
    tpu.vector_store %arg10[%c3, %c0_37, %c0_38], %142 {strides = array<i32>} : memref<8x8x128xf32, #tpu.memory_space<vmem>>, vector<1x8x128xf32>,
    %143 = vector.extract_strided_slice %7 {offsets = [32, 0], sizes = [8, 384], strides = [1, 1]} : vector<64x384xf32> to vector<8x384xf32>
    %cst_39 = arith.constant dense<0.000000e+00> : vector<8x384xf32>
    %144 = tpu.matmul %139, %9, %cst_39 {dimension_numbers = #tpu.dot_dimension_numbers<[1], [0], [0], [1], [0, 0, 1, 1], [], []>} : vector<8x128xf32>, vector<128x384xf32>, vector<8x384xf32> -> vector<8x384xf32>
    %145 = arith.addf %144, %13 : vector<8x384xf32>
    %146 = vector.extract_strided_slice %143 {offsets = [0, 0], sizes = [8, 128], strides = [1, 1]} : vector<8x384xf32> to vector<8x128xf32>
    %147 = vector.extract_strided_slice %145 {offsets = [0, 0], sizes = [8, 128], strides = [1, 1]} : vector<8x384xf32> to vector<8x128xf32>
    %148 = arith.addf %146, %147 : vector<8x128xf32>
    %149 = arith.negf %148 : vector<8x128xf32>
    %150 = math.exp %149 : vector<8x128xf32>
    %cst_40 = arith.constant 1.000000e+00 : f32
    %151 = vector.broadcast %cst_40 : f32 to vector<8x128xf32>
    %152 = arith.addf %151, %150 : vector<8x128xf32>
    %153 = arith.divf %151, %152 : vector<8x128xf32>
    %154 = vector.extract_strided_slice %143 {offsets = [0, 128], sizes = [8, 128], strides = [1, 1]} : vector<8x384xf32> to vector<8x128xf32>
    %155 = vector.extract_strided_slice %145 {offsets = [0, 128], sizes = [8, 128], strides = [1, 1]} : vector<8x384xf32> to vector<8x128xf32>
    %156 = arith.addf %154, %155 : vector<8x128xf32>
    %157 = arith.negf %156 : vector<8x128xf32>
    %158 = math.exp %157 : vector<8x128xf32>
    %cst_41 = arith.constant 1.000000e+00 : f32
    %159 = vector.broadcast %cst_41 : f32 to vector<8x128xf32>
    %160 = arith.addf %159, %158 : vector<8x128xf32>
    %161 = arith.divf %159, %160 : vector<8x128xf32>
    %162 = vector.extract_strided_slice %143 {offsets = [0, 256], sizes = [8, 128], strides = [1, 1]} : vector<8x384xf32> to vector<8x128xf32>
    %163 = vector.extract_strided_slice %145 {offsets = [0, 256], sizes = [8, 128], strides = [1, 1]} : vector<8x384xf32> to vector<8x128xf32>
    %164 = arith.mulf %153, %163 : vector<8x128xf32>
    %165 = arith.addf %162, %164 : vector<8x128xf32>
    %166 = math.tanh %165 : vector<8x128xf32>
    %cst_42 = arith.constant 1.000000e+00 : f32
    %167 = vector.broadcast %cst_42 : f32 to vector<8x128xf32>
    %168 = arith.subf %167, %161 : vector<8x128xf32>
    %169 = arith.mulf %168, %166 : vector<8x128xf32>
    %170 = arith.mulf %161, %139 : vector<8x128xf32>
    %171 = arith.addf %169, %170 : vector<8x128xf32>
    %c4 = arith.constant 4 : index
    %c0_43 = arith.constant 0 : index
    %c0_44 = arith.constant 0 : index
    %172 = vector.load %arg10[%c4, %c0_43, %c0_44] : memref<8x8x128xf32, #tpu.memory_space<vmem>>, vector<1x8x128xf32>
    %173 = vector.shape_cast %172 : vector<1x8x128xf32> to vector<8x128xf32>
    %174 = vector.shape_cast %171 : vector<8x128xf32> to vector<1x8x128xf32>
    tpu.vector_store %arg10[%c4, %c0_43, %c0_44], %174 {strides = array<i32>} : memref<8x8x128xf32, #tpu.memory_space<vmem>>, vector<1x8x128xf32>,
    %175 = vector.extract_strided_slice %7 {offsets = [40, 0], sizes = [8, 384], strides = [1, 1]} : vector<64x384xf32> to vector<8x384xf32>
    %cst_45 = arith.constant dense<0.000000e+00> : vector<8x384xf32>
    %176 = tpu.matmul %171, %9, %cst_45 {dimension_numbers = #tpu.dot_dimension_numbers<[1], [0], [0], [1], [0, 0, 1, 1], [], []>} : vector<8x128xf32>, vector<128x384xf32>, vector<8x384xf32> -> vector<8x384xf32>
    %177 = arith.addf %176, %13 : vector<8x384xf32>
    %178 = vector.extract_strided_slice %175 {offsets = [0, 0], sizes = [8, 128], strides = [1, 1]} : vector<8x384xf32> to vector<8x128xf32>
    %179 = vector.extract_strided_slice %177 {offsets = [0, 0], sizes = [8, 128], strides = [1, 1]} : vector<8x384xf32> to vector<8x128xf32>
    %180 = arith.addf %178, %179 : vector<8x128xf32>
    %181 = arith.negf %180 : vector<8x128xf32>
    %182 = math.exp %181 : vector<8x128xf32>
    %cst_46 = arith.constant 1.000000e+00 : f32
    %183 = vector.broadcast %cst_46 : f32 to vector<8x128xf32>
    %184 = arith.addf %183, %182 : vector<8x128xf32>
    %185 = arith.divf %183, %184 : vector<8x128xf32>
    %186 = vector.extract_strided_slice %175 {offsets = [0, 128], sizes = [8, 128], strides = [1, 1]} : vector<8x384xf32> to vector<8x128xf32>
    %187 = vector.extract_strided_slice %177 {offsets = [0, 128], sizes = [8, 128], strides = [1, 1]} : vector<8x384xf32> to vector<8x128xf32>
    %188 = arith.addf %186, %187 : vector<8x128xf32>
    %189 = arith.negf %188 : vector<8x128xf32>
    %190 = math.exp %189 : vector<8x128xf32>
    %cst_47 = arith.constant 1.000000e+00 : f32
    %191 = vector.broadcast %cst_47 : f32 to vector<8x128xf32>
    %192 = arith.addf %191, %190 : vector<8x128xf32>
    %193 = arith.divf %191, %192 : vector<8x128xf32>
    %194 = vector.extract_strided_slice %175 {offsets = [0, 256], sizes = [8, 128], strides = [1, 1]} : vector<8x384xf32> to vector<8x128xf32>
    %195 = vector.extract_strided_slice %177 {offsets = [0, 256], sizes = [8, 128], strides = [1, 1]} : vector<8x384xf32> to vector<8x128xf32>
    %196 = arith.mulf %185, %195 : vector<8x128xf32>
    %197 = arith.addf %194, %196 : vector<8x128xf32>
    %198 = math.tanh %197 : vector<8x128xf32>
    %cst_48 = arith.constant 1.000000e+00 : f32
    %199 = vector.broadcast %cst_48 : f32 to vector<8x128xf32>
    %200 = arith.subf %199, %193 : vector<8x128xf32>
    %201 = arith.mulf %200, %198 : vector<8x128xf32>
    %202 = arith.mulf %193, %171 : vector<8x128xf32>
    %203 = arith.addf %201, %202 : vector<8x128xf32>
    %c5 = arith.constant 5 : index
    %c0_49 = arith.constant 0 : index
    %c0_50 = arith.constant 0 : index
    %204 = vector.load %arg10[%c5, %c0_49, %c0_50] : memref<8x8x128xf32, #tpu.memory_space<vmem>>, vector<1x8x128xf32>
    %205 = vector.shape_cast %204 : vector<1x8x128xf32> to vector<8x128xf32>
    %206 = vector.shape_cast %203 : vector<8x128xf32> to vector<1x8x128xf32>
    tpu.vector_store %arg10[%c5, %c0_49, %c0_50], %206 {strides = array<i32>} : memref<8x8x128xf32, #tpu.memory_space<vmem>>, vector<1x8x128xf32>,
    %207 = vector.extract_strided_slice %7 {offsets = [48, 0], sizes = [8, 384], strides = [1, 1]} : vector<64x384xf32> to vector<8x384xf32>
    %cst_51 = arith.constant dense<0.000000e+00> : vector<8x384xf32>
    %208 = tpu.matmul %203, %9, %cst_51 {dimension_numbers = #tpu.dot_dimension_numbers<[1], [0], [0], [1], [0, 0, 1, 1], [], []>} : vector<8x128xf32>, vector<128x384xf32>, vector<8x384xf32> -> vector<8x384xf32>
    %209 = arith.addf %208, %13 : vector<8x384xf32>
    %210 = vector.extract_strided_slice %207 {offsets = [0, 0], sizes = [8, 128], strides = [1, 1]} : vector<8x384xf32> to vector<8x128xf32>
    %211 = vector.extract_strided_slice %209 {offsets = [0, 0], sizes = [8, 128], strides = [1, 1]} : vector<8x384xf32> to vector<8x128xf32>
    %212 = arith.addf %210, %211 : vector<8x128xf32>
    %213 = arith.negf %212 : vector<8x128xf32>
    %214 = math.exp %213 : vector<8x128xf32>
    %cst_52 = arith.constant 1.000000e+00 : f32
    %215 = vector.broadcast %cst_52 : f32 to vector<8x128xf32>
    %216 = arith.addf %215, %214 : vector<8x128xf32>
    %217 = arith.divf %215, %216 : vector<8x128xf32>
    %218 = vector.extract_strided_slice %207 {offsets = [0, 128], sizes = [8, 128], strides = [1, 1]} : vector<8x384xf32> to vector<8x128xf32>
    %219 = vector.extract_strided_slice %209 {offsets = [0, 128], sizes = [8, 128], strides = [1, 1]} : vector<8x384xf32> to vector<8x128xf32>
    %220 = arith.addf %218, %219 : vector<8x128xf32>
    %221 = arith.negf %220 : vector<8x128xf32>
    %222 = math.exp %221 : vector<8x128xf32>
    %cst_53 = arith.constant 1.000000e+00 : f32
    %223 = vector.broadcast %cst_53 : f32 to vector<8x128xf32>
    %224 = arith.addf %223, %222 : vector<8x128xf32>
    %225 = arith.divf %223, %224 : vector<8x128xf32>
    %226 = vector.extract_strided_slice %207 {offsets = [0, 256], sizes = [8, 128], strides = [1, 1]} : vector<8x384xf32> to vector<8x128xf32>
    %227 = vector.extract_strided_slice %209 {offsets = [0, 256], sizes = [8, 128], strides = [1, 1]} : vector<8x384xf32> to vector<8x128xf32>
    %228 = arith.mulf %217, %227 : vector<8x128xf32>
    %229 = arith.addf %226, %228 : vector<8x128xf32>
    %230 = math.tanh %229 : vector<8x128xf32>
    %cst_54 = arith.constant 1.000000e+00 : f32
    %231 = vector.broadcast %cst_54 : f32 to vector<8x128xf32>
    %232 = arith.subf %231, %225 : vector<8x128xf32>
    %233 = arith.mulf %232, %230 : vector<8x128xf32>
    %234 = arith.mulf %225, %203 : vector<8x128xf32>
    %235 = arith.addf %233, %234 : vector<8x128xf32>
    %c6 = arith.constant 6 : index
    %c0_55 = arith.constant 0 : index
    %c0_56 = arith.constant 0 : index
    %236 = vector.load %arg10[%c6, %c0_55, %c0_56] : memref<8x8x128xf32, #tpu.memory_space<vmem>>, vector<1x8x128xf32>
    %237 = vector.shape_cast %236 : vector<1x8x128xf32> to vector<8x128xf32>
    %238 = vector.shape_cast %235 : vector<8x128xf32> to vector<1x8x128xf32>
    tpu.vector_store %arg10[%c6, %c0_55, %c0_56], %238 {strides = array<i32>} : memref<8x8x128xf32, #tpu.memory_space<vmem>>, vector<1x8x128xf32>,
    %239 = vector.extract_strided_slice %7 {offsets = [56, 0], sizes = [8, 384], strides = [1, 1]} : vector<64x384xf32> to vector<8x384xf32>
    %cst_57 = arith.constant dense<0.000000e+00> : vector<8x384xf32>
    %240 = tpu.matmul %235, %9, %cst_57 {dimension_numbers = #tpu.dot_dimension_numbers<[1], [0], [0], [1], [0, 0, 1, 1], [], []>} : vector<8x128xf32>, vector<128x384xf32>, vector<8x384xf32> -> vector<8x384xf32>
    %241 = arith.addf %240, %13 : vector<8x384xf32>
    %242 = vector.extract_strided_slice %239 {offsets = [0, 0], sizes = [8, 128], strides = [1, 1]} : vector<8x384xf32> to vector<8x128xf32>
    %243 = vector.extract_strided_slice %241 {offsets = [0, 0], sizes = [8, 128], strides = [1, 1]} : vector<8x384xf32> to vector<8x128xf32>
    %244 = arith.addf %242, %243 : vector<8x128xf32>
    %245 = arith.negf %244 : vector<8x128xf32>
    %246 = math.exp %245 : vector<8x128xf32>
    %cst_58 = arith.constant 1.000000e+00 : f32
    %247 = vector.broadcast %cst_58 : f32 to vector<8x128xf32>
    %248 = arith.addf %247, %246 : vector<8x128xf32>
    %249 = arith.divf %247, %248 : vector<8x128xf32>
    %250 = vector.extract_strided_slice %239 {offsets = [0, 128], sizes = [8, 128], strides = [1, 1]} : vector<8x384xf32> to vector<8x128xf32>
    %251 = vector.extract_strided_slice %241 {offsets = [0, 128], sizes = [8, 128], strides = [1, 1]} : vector<8x384xf32> to vector<8x128xf32>
    %252 = arith.addf %250, %251 : vector<8x128xf32>
    %253 = arith.negf %252 : vector<8x128xf32>
    %254 = math.exp %253 : vector<8x128xf32>
    %cst_59 = arith.constant 1.000000e+00 : f32
    %255 = vector.broadcast %cst_59 : f32 to vector<8x128xf32>
    %256 = arith.addf %255, %254 : vector<8x128xf32>
    %257 = arith.divf %255, %256 : vector<8x128xf32>
    %258 = vector.extract_strided_slice %239 {offsets = [0, 256], sizes = [8, 128], strides = [1, 1]} : vector<8x384xf32> to vector<8x128xf32>
    %259 = vector.extract_strided_slice %241 {offsets = [0, 256], sizes = [8, 128], strides = [1, 1]} : vector<8x384xf32> to vector<8x128xf32>
    %260 = arith.mulf %249, %259 : vector<8x128xf32>
    %261 = arith.addf %258, %260 : vector<8x128xf32>
    %262 = math.tanh %261 : vector<8x128xf32>
    %cst_60 = arith.constant 1.000000e+00 : f32
    %263 = vector.broadcast %cst_60 : f32 to vector<8x128xf32>
    %264 = arith.subf %263, %257 : vector<8x128xf32>
    %265 = arith.mulf %264, %262 : vector<8x128xf32>
    %266 = arith.mulf %257, %235 : vector<8x128xf32>
    %267 = arith.addf %265, %266 : vector<8x128xf32>
    %c7 = arith.constant 7 : index
    %c0_61 = arith.constant 0 : index
    %c0_62 = arith.constant 0 : index
    %268 = vector.load %arg10[%c7, %c0_61, %c0_62] : memref<8x8x128xf32, #tpu.memory_space<vmem>>, vector<1x8x128xf32>
    %269 = vector.shape_cast %268 : vector<1x8x128xf32> to vector<8x128xf32>
    %270 = vector.shape_cast %267 : vector<8x128xf32> to vector<1x8x128xf32>
    tpu.vector_store %arg10[%c7, %c0_61, %c0_62], %270 {strides = array<i32>} : memref<8x8x128xf32, #tpu.memory_space<vmem>>, vector<1x8x128xf32>,
    %c0_63 = arith.constant 0 : index
    %c0_64 = arith.constant 0 : index
    %c0_65 = arith.constant 0 : index
    %271 = vector.load %arg10[%c0_63, %c0_64, %c0_65] : memref<8x8x128xf32, #tpu.memory_space<vmem>>, vector<8x8x128xf32>
    %272 = vector.shape_cast %271 : vector<8x8x128xf32> to vector<64x128xf32>
    %c0_66 = arith.constant 0 : index
    %c0_67 = arith.constant 0 : index
    %c0_68 = arith.constant 0 : index
    %273 = vector.load %arg3[%c0_66, %c0_67, %c0_68] : memref<2x128x384xf32, #tpu.memory_space<vmem>>, vector<1x128x384xf32>
    %274 = vector.shape_cast %273 : vector<1x128x384xf32> to vector<128x384xf32>
    %cst_69 = arith.constant dense<0.000000e+00> : vector<64x384xf32>
    %275 = tpu.matmul %272, %274, %cst_69 {dimension_numbers = #tpu.dot_dimension_numbers<[1], [0], [0], [1], [0, 0, 1, 1], [], []>} : vector<64x128xf32>, vector<128x384xf32>, vector<64x384xf32> -> vector<64x384xf32>
    %c1_70 = arith.constant 1 : index
    %c0_71 = arith.constant 0 : index
    %c0_72 = arith.constant 0 : index
    %276 = vector.load %arg5[%c1_70, %c0_71, %c0_72] : memref<3x1x384xf32, #tpu.memory_space<vmem>>, vector<1x1x384xf32>
    %277 = vector.shape_cast %276 : vector<1x1x384xf32> to vector<1x384xf32>
    %278 = vector.broadcast %277 : vector<1x384xf32> to vector<64x384xf32>
    %279 = arith.addf %275, %278 : vector<64x384xf32>
    %c1_73 = arith.constant 1 : index
    %c0_74 = arith.constant 0 : index
    %c0_75 = arith.constant 0 : index
    %280 = vector.load %arg4[%c1_73, %c0_74, %c0_75] : memref<3x128x384xf32, #tpu.memory_space<vmem>>, vector<1x128x384xf32>
    %281 = vector.shape_cast %280 : vector<1x128x384xf32> to vector<128x384xf32>
    %c1_76 = arith.constant 1 : index
    %c0_77 = arith.constant 0 : index
    %c0_78 = arith.constant 0 : index
    %282 = vector.load %arg6[%c1_76, %c0_77, %c0_78] : memref<3x1x384xf32, #tpu.memory_space<vmem>>, vector<1x1x384xf32>
    %283 = vector.shape_cast %282 : vector<1x1x384xf32> to vector<1x384xf32>
    %284 = vector.shape_cast %283 : vector<1x384xf32> to vector<1x384xf32>
    %285 = vector.broadcast %284 : vector<1x384xf32> to vector<8x384xf32>
    %cst_79 = arith.constant 0.000000e+00 : f32
    %286 = vector.broadcast %cst_79 : f32 to vector<8x128xf32>
    %287 = vector.extract_strided_slice %279 {offsets = [0, 0], sizes = [8, 384], strides = [1, 1]} : vector<64x384xf32> to vector<8x384xf32>
    %cst_80 = arith.constant dense<0.000000e+00> : vector<8x384xf32>
    %288 = tpu.matmul %286, %281, %cst_80 {dimension_numbers = #tpu.dot_dimension_numbers<[1], [0], [0], [1], [0, 0, 1, 1], [], []>} : vector<8x128xf32>, vector<128x384xf32>, vector<8x384xf32> -> vector<8x384xf32>
    %289 = arith.addf %288, %285 : vector<8x384xf32>
    %290 = vector.extract_strided_slice %287 {offsets = [0, 0], sizes = [8, 128], strides = [1, 1]} : vector<8x384xf32> to vector<8x128xf32>
    %291 = vector.extract_strided_slice %289 {offsets = [0, 0], sizes = [8, 128], strides = [1, 1]} : vector<8x384xf32> to vector<8x128xf32>
    %292 = arith.addf %290, %291 : vector<8x128xf32>
    %293 = arith.negf %292 : vector<8x128xf32>
    %294 = math.exp %293 : vector<8x128xf32>
    %cst_81 = arith.constant 1.000000e+00 : f32
    %295 = vector.broadcast %cst_81 : f32 to vector<8x128xf32>
    %296 = arith.addf %295, %294 : vector<8x128xf32>
    %297 = arith.divf %295, %296 : vector<8x128xf32>
    %298 = vector.extract_strided_slice %287 {offsets = [0, 128], sizes = [8, 128], strides = [1, 1]} : vector<8x384xf32> to vector<8x128xf32>
    %299 = vector.extract_strided_slice %289 {offsets = [0, 128], sizes = [8, 128], strides = [1, 1]} : vector<8x384xf32> to vector<8x128xf32>
    %300 = arith.addf %298, %299 : vector<8x128xf32>
    %301 = arith.negf %300 : vector<8x128xf32>
    %302 = math.exp %301 : vector<8x128xf32>
    %cst_82 = arith.constant 1.000000e+00 : f32
    %303 = vector.broadcast %cst_82 : f32 to vector<8x128xf32>
    %304 = arith.addf %303, %302 : vector<8x128xf32>
    %305 = arith.divf %303, %304 : vector<8x128xf32>
    %306 = vector.extract_strided_slice %287 {offsets = [0, 256], sizes = [8, 128], strides = [1, 1]} : vector<8x384xf32> to vector<8x128xf32>
    %307 = vector.extract_strided_slice %289 {offsets = [0, 256], sizes = [8, 128], strides = [1, 1]} : vector<8x384xf32> to vector<8x128xf32>
    %308 = arith.mulf %297, %307 : vector<8x128xf32>
    %309 = arith.addf %306, %308 : vector<8x128xf32>
    %310 = math.tanh %309 : vector<8x128xf32>
    %cst_83 = arith.constant 1.000000e+00 : f32
    %311 = vector.broadcast %cst_83 : f32 to vector<8x128xf32>
    %312 = arith.subf %311, %305 : vector<8x128xf32>
    %313 = arith.mulf %312, %310 : vector<8x128xf32>
    %314 = arith.mulf %305, %286 : vector<8x128xf32>
    %315 = arith.addf %313, %314 : vector<8x128xf32>
    %c0_84 = arith.constant 0 : index
    %c0_85 = arith.constant 0 : index
    %c0_86 = arith.constant 0 : index
    %316 = vector.load %arg10[%c0_84, %c0_85, %c0_86] : memref<8x8x128xf32, #tpu.memory_space<vmem>>, vector<1x8x128xf32>
    %317 = vector.shape_cast %316 : vector<1x8x128xf32> to vector<8x128xf32>
    %318 = vector.shape_cast %315 : vector<8x128xf32> to vector<1x8x128xf32>
    tpu.vector_store %arg10[%c0_84, %c0_85, %c0_86], %318 {strides = array<i32>} : memref<8x8x128xf32, #tpu.memory_space<vmem>>, vector<1x8x128xf32>,
    %319 = vector.extract_strided_slice %279 {offsets = [8, 0], sizes = [8, 384], strides = [1, 1]} : vector<64x384xf32> to vector<8x384xf32>
    %cst_87 = arith.constant dense<0.000000e+00> : vector<8x384xf32>
    %320 = tpu.matmul %315, %281, %cst_87 {dimension_numbers = #tpu.dot_dimension_numbers<[1], [0], [0], [1], [0, 0, 1, 1], [], []>} : vector<8x128xf32>, vector<128x384xf32>, vector<8x384xf32> -> vector<8x384xf32>
    %321 = arith.addf %320, %285 : vector<8x384xf32>
    %322 = vector.extract_strided_slice %319 {offsets = [0, 0], sizes = [8, 128], strides = [1, 1]} : vector<8x384xf32> to vector<8x128xf32>
    %323 = vector.extract_strided_slice %321 {offsets = [0, 0], sizes = [8, 128], strides = [1, 1]} : vector<8x384xf32> to vector<8x128xf32>
    %324 = arith.addf %322, %323 : vector<8x128xf32>
    %325 = arith.negf %324 : vector<8x128xf32>
    %326 = math.exp %325 : vector<8x128xf32>
    %cst_88 = arith.constant 1.000000e+00 : f32
    %327 = vector.broadcast %cst_88 : f32 to vector<8x128xf32>
    %328 = arith.addf %327, %326 : vector<8x128xf32>
    %329 = arith.divf %327, %328 : vector<8x128xf32>
    %330 = vector.extract_strided_slice %319 {offsets = [0, 128], sizes = [8, 128], strides = [1, 1]} : vector<8x384xf32> to vector<8x128xf32>
    %331 = vector.extract_strided_slice %321 {offsets = [0, 128], sizes = [8, 128], strides = [1, 1]} : vector<8x384xf32> to vector<8x128xf32>
    %332 = arith.addf %330, %331 : vector<8x128xf32>
    %333 = arith.negf %332 : vector<8x128xf32>
    %334 = math.exp %333 : vector<8x128xf32>
    %cst_89 = arith.constant 1.000000e+00 : f32
    %335 = vector.broadcast %cst_89 : f32 to vector<8x128xf32>
    %336 = arith.addf %335, %334 : vector<8x128xf32>
    %337 = arith.divf %335, %336 : vector<8x128xf32>
    %338 = vector.extract_strided_slice %319 {offsets = [0, 256], sizes = [8, 128], strides = [1, 1]} : vector<8x384xf32> to vector<8x128xf32>
    %339 = vector.extract_strided_slice %321 {offsets = [0, 256], sizes = [8, 128], strides = [1, 1]} : vector<8x384xf32> to vector<8x128xf32>
    %340 = arith.mulf %329, %339 : vector<8x128xf32>
    %341 = arith.addf %338, %340 : vector<8x128xf32>
    %342 = math.tanh %341 : vector<8x128xf32>
    %cst_90 = arith.constant 1.000000e+00 : f32
    %343 = vector.broadcast %cst_90 : f32 to vector<8x128xf32>
    %344 = arith.subf %343, %337 : vector<8x128xf32>
    %345 = arith.mulf %344, %342 : vector<8x128xf32>
    %346 = arith.mulf %337, %315 : vector<8x128xf32>
    %347 = arith.addf %345, %346 : vector<8x128xf32>
    %c1_91 = arith.constant 1 : index
    %c0_92 = arith.constant 0 : index
    %c0_93 = arith.constant 0 : index
    %348 = vector.load %arg10[%c1_91, %c0_92, %c0_93] : memref<8x8x128xf32, #tpu.memory_space<vmem>>, vector<1x8x128xf32>
    %349 = vector.shape_cast %348 : vector<1x8x128xf32> to vector<8x128xf32>
    %350 = vector.shape_cast %347 : vector<8x128xf32> to vector<1x8x128xf32>
    tpu.vector_store %arg10[%c1_91, %c0_92, %c0_93], %350 {strides = array<i32>} : memref<8x8x128xf32, #tpu.memory_space<vmem>>, vector<1x8x128xf32>,
    %351 = vector.extract_strided_slice %279 {offsets = [16, 0], sizes = [8, 384], strides = [1, 1]} : vector<64x384xf32> to vector<8x384xf32>
    %cst_94 = arith.constant dense<0.000000e+00> : vector<8x384xf32>
    %352 = tpu.matmul %347, %281, %cst_94 {dimension_numbers = #tpu.dot_dimension_numbers<[1], [0], [0], [1], [0, 0, 1, 1], [], []>} : vector<8x128xf32>, vector<128x384xf32>, vector<8x384xf32> -> vector<8x384xf32>
    %353 = arith.addf %352, %285 : vector<8x384xf32>
    %354 = vector.extract_strided_slice %351 {offsets = [0, 0], sizes = [8, 128], strides = [1, 1]} : vector<8x384xf32> to vector<8x128xf32>
    %355 = vector.extract_strided_slice %353 {offsets = [0, 0], sizes = [8, 128], strides = [1, 1]} : vector<8x384xf32> to vector<8x128xf32>
    %356 = arith.addf %354, %355 : vector<8x128xf32>
    %357 = arith.negf %356 : vector<8x128xf32>
    %358 = math.exp %357 : vector<8x128xf32>
    %cst_95 = arith.constant 1.000000e+00 : f32
    %359 = vector.broadcast %cst_95 : f32 to vector<8x128xf32>
    %360 = arith.addf %359, %358 : vector<8x128xf32>
    %361 = arith.divf %359, %360 : vector<8x128xf32>
    %362 = vector.extract_strided_slice %351 {offsets = [0, 128], sizes = [8, 128], strides = [1, 1]} : vector<8x384xf32> to vector<8x128xf32>
    %363 = vector.extract_strided_slice %353 {offsets = [0, 128], sizes = [8, 128], strides = [1, 1]} : vector<8x384xf32> to vector<8x128xf32>
    %364 = arith.addf %362, %363 : vector<8x128xf32>
    %365 = arith.negf %364 : vector<8x128xf32>
    %366 = math.exp %365 : vector<8x128xf32>
    %cst_96 = arith.constant 1.000000e+00 : f32
    %367 = vector.broadcast %cst_96 : f32 to vector<8x128xf32>
    %368 = arith.addf %367, %366 : vector<8x128xf32>
    %369 = arith.divf %367, %368 : vector<8x128xf32>
    %370 = vector.extract_strided_slice %351 {offsets = [0, 256], sizes = [8, 128], strides = [1, 1]} : vector<8x384xf32> to vector<8x128xf32>
    %371 = vector.extract_strided_slice %353 {offsets = [0, 256], sizes = [8, 128], strides = [1, 1]} : vector<8x384xf32> to vector<8x128xf32>
    %372 = arith.mulf %361, %371 : vector<8x128xf32>
    %373 = arith.addf %370, %372 : vector<8x128xf32>
    %374 = math.tanh %373 : vector<8x128xf32>
    %cst_97 = arith.constant 1.000000e+00 : f32
    %375 = vector.broadcast %cst_97 : f32 to vector<8x128xf32>
    %376 = arith.subf %375, %369 : vector<8x128xf32>
    %377 = arith.mulf %376, %374 : vector<8x128xf32>
    %378 = arith.mulf %369, %347 : vector<8x128xf32>
    %379 = arith.addf %377, %378 : vector<8x128xf32>
    %c2_98 = arith.constant 2 : index
    %c0_99 = arith.constant 0 : index
    %c0_100 = arith.constant 0 : index
    %380 = vector.load %arg10[%c2_98, %c0_99, %c0_100] : memref<8x8x128xf32, #tpu.memory_space<vmem>>, vector<1x8x128xf32>
    %381 = vector.shape_cast %380 : vector<1x8x128xf32> to vector<8x128xf32>
    %382 = vector.shape_cast %379 : vector<8x128xf32> to vector<1x8x128xf32>
    tpu.vector_store %arg10[%c2_98, %c0_99, %c0_100], %382 {strides = array<i32>} : memref<8x8x128xf32, #tpu.memory_space<vmem>>, vector<1x8x128xf32>,
    %383 = vector.extract_strided_slice %279 {offsets = [24, 0], sizes = [8, 384], strides = [1, 1]} : vector<64x384xf32> to vector<8x384xf32>
    %cst_101 = arith.constant dense<0.000000e+00> : vector<8x384xf32>
    %384 = tpu.matmul %379, %281, %cst_101 {dimension_numbers = #tpu.dot_dimension_numbers<[1], [0], [0], [1], [0, 0, 1, 1], [], []>} : vector<8x128xf32>, vector<128x384xf32>, vector<8x384xf32> -> vector<8x384xf32>
    %385 = arith.addf %384, %285 : vector<8x384xf32>
    %386 = vector.extract_strided_slice %383 {offsets = [0, 0], sizes = [8, 128], strides = [1, 1]} : vector<8x384xf32> to vector<8x128xf32>
    %387 = vector.extract_strided_slice %385 {offsets = [0, 0], sizes = [8, 128], strides = [1, 1]} : vector<8x384xf32> to vector<8x128xf32>
    %388 = arith.addf %386, %387 : vector<8x128xf32>
    %389 = arith.negf %388 : vector<8x128xf32>
    %390 = math.exp %389 : vector<8x128xf32>
    %cst_102 = arith.constant 1.000000e+00 : f32
    %391 = vector.broadcast %cst_102 : f32 to vector<8x128xf32>
    %392 = arith.addf %391, %390 : vector<8x128xf32>
    %393 = arith.divf %391, %392 : vector<8x128xf32>
    %394 = vector.extract_strided_slice %383 {offsets = [0, 128], sizes = [8, 128], strides = [1, 1]} : vector<8x384xf32> to vector<8x128xf32>
    %395 = vector.extract_strided_slice %385 {offsets = [0, 128], sizes = [8, 128], strides = [1, 1]} : vector<8x384xf32> to vector<8x128xf32>
    %396 = arith.addf %394, %395 : vector<8x128xf32>
    %397 = arith.negf %396 : vector<8x128xf32>
    %398 = math.exp %397 : vector<8x128xf32>
    %cst_103 = arith.constant 1.000000e+00 : f32
    %399 = vector.broadcast %cst_103 : f32 to vector<8x128xf32>
    %400 = arith.addf %399, %398 : vector<8x128xf32>
    %401 = arith.divf %399, %400 : vector<8x128xf32>
    %402 = vector.extract_strided_slice %383 {offsets = [0, 256], sizes = [8, 128], strides = [1, 1]} : vector<8x384xf32> to vector<8x128xf32>
    %403 = vector.extract_strided_slice %385 {offsets = [0, 256], sizes = [8, 128], strides = [1, 1]} : vector<8x384xf32> to vector<8x128xf32>
    %404 = arith.mulf %393, %403 : vector<8x128xf32>
    %405 = arith.addf %402, %404 : vector<8x128xf32>
    %406 = math.tanh %405 : vector<8x128xf32>
    %cst_104 = arith.constant 1.000000e+00 : f32
    %407 = vector.broadcast %cst_104 : f32 to vector<8x128xf32>
    %408 = arith.subf %407, %401 : vector<8x128xf32>
    %409 = arith.mulf %408, %406 : vector<8x128xf32>
    %410 = arith.mulf %401, %379 : vector<8x128xf32>
    %411 = arith.addf %409, %410 : vector<8x128xf32>
    %c3_105 = arith.constant 3 : index
    %c0_106 = arith.constant 0 : index
    %c0_107 = arith.constant 0 : index
    %412 = vector.load %arg10[%c3_105, %c0_106, %c0_107] : memref<8x8x128xf32, #tpu.memory_space<vmem>>, vector<1x8x128xf32>
    %413 = vector.shape_cast %412 : vector<1x8x128xf32> to vector<8x128xf32>
    %414 = vector.shape_cast %411 : vector<8x128xf32> to vector<1x8x128xf32>
    tpu.vector_store %arg10[%c3_105, %c0_106, %c0_107], %414 {strides = array<i32>} : memref<8x8x128xf32, #tpu.memory_space<vmem>>, vector<1x8x128xf32>,
    %415 = vector.extract_strided_slice %279 {offsets = [32, 0], sizes = [8, 384], strides = [1, 1]} : vector<64x384xf32> to vector<8x384xf32>
    %cst_108 = arith.constant dense<0.000000e+00> : vector<8x384xf32>
    %416 = tpu.matmul %411, %281, %cst_108 {dimension_numbers = #tpu.dot_dimension_numbers<[1], [0], [0], [1], [0, 0, 1, 1], [], []>} : vector<8x128xf32>, vector<128x384xf32>, vector<8x384xf32> -> vector<8x384xf32>
    %417 = arith.addf %416, %285 : vector<8x384xf32>
    %418 = vector.extract_strided_slice %415 {offsets = [0, 0], sizes = [8, 128], strides = [1, 1]} : vector<8x384xf32> to vector<8x128xf32>
    %419 = vector.extract_strided_slice %417 {offsets = [0, 0], sizes = [8, 128], strides = [1, 1]} : vector<8x384xf32> to vector<8x128xf32>
    %420 = arith.addf %418, %419 : vector<8x128xf32>
    %421 = arith.negf %420 : vector<8x128xf32>
    %422 = math.exp %421 : vector<8x128xf32>
    %cst_109 = arith.constant 1.000000e+00 : f32
    %423 = vector.broadcast %cst_109 : f32 to vector<8x128xf32>
    %424 = arith.addf %423, %422 : vector<8x128xf32>
    %425 = arith.divf %423, %424 : vector<8x128xf32>
    %426 = vector.extract_strided_slice %415 {offsets = [0, 128], sizes = [8, 128], strides = [1, 1]} : vector<8x384xf32> to vector<8x128xf32>
    %427 = vector.extract_strided_slice %417 {offsets = [0, 128], sizes = [8, 128], strides = [1, 1]} : vector<8x384xf32> to vector<8x128xf32>
    %428 = arith.addf %426, %427 : vector<8x128xf32>
    %429 = arith.negf %428 : vector<8x128xf32>
    %430 = math.exp %429 : vector<8x128xf32>
    %cst_110 = arith.constant 1.000000e+00 : f32
    %431 = vector.broadcast %cst_110 : f32 to vector<8x128xf32>
    %432 = arith.addf %431, %430 : vector<8x128xf32>
    %433 = arith.divf %431, %432 : vector<8x128xf32>
    %434 = vector.extract_strided_slice %415 {offsets = [0, 256], sizes = [8, 128], strides = [1, 1]} : vector<8x384xf32> to vector<8x128xf32>
    %435 = vector.extract_strided_slice %417 {offsets = [0, 256], sizes = [8, 128], strides = [1, 1]} : vector<8x384xf32> to vector<8x128xf32>
    %436 = arith.mulf %425, %435 : vector<8x128xf32>
    %437 = arith.addf %434, %436 : vector<8x128xf32>
    %438 = math.tanh %437 : vector<8x128xf32>
    %cst_111 = arith.constant 1.000000e+00 : f32
    %439 = vector.broadcast %cst_111 : f32 to vector<8x128xf32>
    %440 = arith.subf %439, %433 : vector<8x128xf32>
    %441 = arith.mulf %440, %438 : vector<8x128xf32>
    %442 = arith.mulf %433, %411 : vector<8x128xf32>
    %443 = arith.addf %441, %442 : vector<8x128xf32>
    %c4_112 = arith.constant 4 : index
    %c0_113 = arith.constant 0 : index
    %c0_114 = arith.constant 0 : index
    %444 = vector.load %arg10[%c4_112, %c0_113, %c0_114] : memref<8x8x128xf32, #tpu.memory_space<vmem>>, vector<1x8x128xf32>
    %445 = vector.shape_cast %444 : vector<1x8x128xf32> to vector<8x128xf32>
    %446 = vector.shape_cast %443 : vector<8x128xf32> to vector<1x8x128xf32>
    tpu.vector_store %arg10[%c4_112, %c0_113, %c0_114], %446 {strides = array<i32>} : memref<8x8x128xf32, #tpu.memory_space<vmem>>, vector<1x8x128xf32>,
    %447 = vector.extract_strided_slice %279 {offsets = [40, 0], sizes = [8, 384], strides = [1, 1]} : vector<64x384xf32> to vector<8x384xf32>
    %cst_115 = arith.constant dense<0.000000e+00> : vector<8x384xf32>
    %448 = tpu.matmul %443, %281, %cst_115 {dimension_numbers = #tpu.dot_dimension_numbers<[1], [0], [0], [1], [0, 0, 1, 1], [], []>} : vector<8x128xf32>, vector<128x384xf32>, vector<8x384xf32> -> vector<8x384xf32>
    %449 = arith.addf %448, %285 : vector<8x384xf32>
    %450 = vector.extract_strided_slice %447 {offsets = [0, 0], sizes = [8, 128], strides = [1, 1]} : vector<8x384xf32> to vector<8x128xf32>
    %451 = vector.extract_strided_slice %449 {offsets = [0, 0], sizes = [8, 128], strides = [1, 1]} : vector<8x384xf32> to vector<8x128xf32>
    %452 = arith.addf %450, %451 : vector<8x128xf32>
    %453 = arith.negf %452 : vector<8x128xf32>
    %454 = math.exp %453 : vector<8x128xf32>
    %cst_116 = arith.constant 1.000000e+00 : f32
    %455 = vector.broadcast %cst_116 : f32 to vector<8x128xf32>
    %456 = arith.addf %455, %454 : vector<8x128xf32>
    %457 = arith.divf %455, %456 : vector<8x128xf32>
    %458 = vector.extract_strided_slice %447 {offsets = [0, 128], sizes = [8, 128], strides = [1, 1]} : vector<8x384xf32> to vector<8x128xf32>
    %459 = vector.extract_strided_slice %449 {offsets = [0, 128], sizes = [8, 128], strides = [1, 1]} : vector<8x384xf32> to vector<8x128xf32>
    %460 = arith.addf %458, %459 : vector<8x128xf32>
    %461 = arith.negf %460 : vector<8x128xf32>
    %462 = math.exp %461 : vector<8x128xf32>
    %cst_117 = arith.constant 1.000000e+00 : f32
    %463 = vector.broadcast %cst_117 : f32 to vector<8x128xf32>
    %464 = arith.addf %463, %462 : vector<8x128xf32>
    %465 = arith.divf %463, %464 : vector<8x128xf32>
    %466 = vector.extract_strided_slice %447 {offsets = [0, 256], sizes = [8, 128], strides = [1, 1]} : vector<8x384xf32> to vector<8x128xf32>
    %467 = vector.extract_strided_slice %449 {offsets = [0, 256], sizes = [8, 128], strides = [1, 1]} : vector<8x384xf32> to vector<8x128xf32>
    %468 = arith.mulf %457, %467 : vector<8x128xf32>
    %469 = arith.addf %466, %468 : vector<8x128xf32>
    %470 = math.tanh %469 : vector<8x128xf32>
    %cst_118 = arith.constant 1.000000e+00 : f32
    %471 = vector.broadcast %cst_118 : f32 to vector<8x128xf32>
    %472 = arith.subf %471, %465 : vector<8x128xf32>
    %473 = arith.mulf %472, %470 : vector<8x128xf32>
    %474 = arith.mulf %465, %443 : vector<8x128xf32>
    %475 = arith.addf %473, %474 : vector<8x128xf32>
    %c5_119 = arith.constant 5 : index
    %c0_120 = arith.constant 0 : index
    %c0_121 = arith.constant 0 : index
    %476 = vector.load %arg10[%c5_119, %c0_120, %c0_121] : memref<8x8x128xf32, #tpu.memory_space<vmem>>, vector<1x8x128xf32>
    %477 = vector.shape_cast %476 : vector<1x8x128xf32> to vector<8x128xf32>
    %478 = vector.shape_cast %475 : vector<8x128xf32> to vector<1x8x128xf32>
    tpu.vector_store %arg10[%c5_119, %c0_120, %c0_121], %478 {strides = array<i32>} : memref<8x8x128xf32, #tpu.memory_space<vmem>>, vector<1x8x128xf32>,
    %479 = vector.extract_strided_slice %279 {offsets = [48, 0], sizes = [8, 384], strides = [1, 1]} : vector<64x384xf32> to vector<8x384xf32>
    %cst_122 = arith.constant dense<0.000000e+00> : vector<8x384xf32>
    %480 = tpu.matmul %475, %281, %cst_122 {dimension_numbers = #tpu.dot_dimension_numbers<[1], [0], [0], [1], [0, 0, 1, 1], [], []>} : vector<8x128xf32>, vector<128x384xf32>, vector<8x384xf32> -> vector<8x384xf32>
    %481 = arith.addf %480, %285 : vector<8x384xf32>
    %482 = vector.extract_strided_slice %479 {offsets = [0, 0], sizes = [8, 128], strides = [1, 1]} : vector<8x384xf32> to vector<8x128xf32>
    %483 = vector.extract_strided_slice %481 {offsets = [0, 0], sizes = [8, 128], strides = [1, 1]} : vector<8x384xf32> to vector<8x128xf32>
    %484 = arith.addf %482, %483 : vector<8x128xf32>
    %485 = arith.negf %484 : vector<8x128xf32>
    %486 = math.exp %485 : vector<8x128xf32>
    %cst_123 = arith.constant 1.000000e+00 : f32
    %487 = vector.broadcast %cst_123 : f32 to vector<8x128xf32>
    %488 = arith.addf %487, %486 : vector<8x128xf32>
    %489 = arith.divf %487, %488 : vector<8x128xf32>
    %490 = vector.extract_strided_slice %479 {offsets = [0, 128], sizes = [8, 128], strides = [1, 1]} : vector<8x384xf32> to vector<8x128xf32>
    %491 = vector.extract_strided_slice %481 {offsets = [0, 128], sizes = [8, 128], strides = [1, 1]} : vector<8x384xf32> to vector<8x128xf32>
    %492 = arith.addf %490, %491 : vector<8x128xf32>
    %493 = arith.negf %492 : vector<8x128xf32>
    %494 = math.exp %493 : vector<8x128xf32>
    %cst_124 = arith.constant 1.000000e+00 : f32
    %495 = vector.broadcast %cst_124 : f32 to vector<8x128xf32>
    %496 = arith.addf %495, %494 : vector<8x128xf32>
    %497 = arith.divf %495, %496 : vector<8x128xf32>
    %498 = vector.extract_strided_slice %479 {offsets = [0, 256], sizes = [8, 128], strides = [1, 1]} : vector<8x384xf32> to vector<8x128xf32>
    %499 = vector.extract_strided_slice %481 {offsets = [0, 256], sizes = [8, 128], strides = [1, 1]} : vector<8x384xf32> to vector<8x128xf32>
    %500 = arith.mulf %489, %499 : vector<8x128xf32>
    %501 = arith.addf %498, %500 : vector<8x128xf32>
    %502 = math.tanh %501 : vector<8x128xf32>
    %cst_125 = arith.constant 1.000000e+00 : f32
    %503 = vector.broadcast %cst_125 : f32 to vector<8x128xf32>
    %504 = arith.subf %503, %497 : vector<8x128xf32>
    %505 = arith.mulf %504, %502 : vector<8x128xf32>
    %506 = arith.mulf %497, %475 : vector<8x128xf32>
    %507 = arith.addf %505, %506 : vector<8x128xf32>
    %c6_126 = arith.constant 6 : index
    %c0_127 = arith.constant 0 : index
    %c0_128 = arith.constant 0 : index
    %508 = vector.load %arg10[%c6_126, %c0_127, %c0_128] : memref<8x8x128xf32, #tpu.memory_space<vmem>>, vector<1x8x128xf32>
    %509 = vector.shape_cast %508 : vector<1x8x128xf32> to vector<8x128xf32>
    %510 = vector.shape_cast %507 : vector<8x128xf32> to vector<1x8x128xf32>
    tpu.vector_store %arg10[%c6_126, %c0_127, %c0_128], %510 {strides = array<i32>} : memref<8x8x128xf32, #tpu.memory_space<vmem>>, vector<1x8x128xf32>,
    %511 = vector.extract_strided_slice %279 {offsets = [56, 0], sizes = [8, 384], strides = [1, 1]} : vector<64x384xf32> to vector<8x384xf32>
    %cst_129 = arith.constant dense<0.000000e+00> : vector<8x384xf32>
    %512 = tpu.matmul %507, %281, %cst_129 {dimension_numbers = #tpu.dot_dimension_numbers<[1], [0], [0], [1], [0, 0, 1, 1], [], []>} : vector<8x128xf32>, vector<128x384xf32>, vector<8x384xf32> -> vector<8x384xf32>
    %513 = arith.addf %512, %285 : vector<8x384xf32>
    %514 = vector.extract_strided_slice %511 {offsets = [0, 0], sizes = [8, 128], strides = [1, 1]} : vector<8x384xf32> to vector<8x128xf32>
    %515 = vector.extract_strided_slice %513 {offsets = [0, 0], sizes = [8, 128], strides = [1, 1]} : vector<8x384xf32> to vector<8x128xf32>
    %516 = arith.addf %514, %515 : vector<8x128xf32>
    %517 = arith.negf %516 : vector<8x128xf32>
    %518 = math.exp %517 : vector<8x128xf32>
    %cst_130 = arith.constant 1.000000e+00 : f32
    %519 = vector.broadcast %cst_130 : f32 to vector<8x128xf32>
    %520 = arith.addf %519, %518 : vector<8x128xf32>
    %521 = arith.divf %519, %520 : vector<8x128xf32>
    %522 = vector.extract_strided_slice %511 {offsets = [0, 128], sizes = [8, 128], strides = [1, 1]} : vector<8x384xf32> to vector<8x128xf32>
    %523 = vector.extract_strided_slice %513 {offsets = [0, 128], sizes = [8, 128], strides = [1, 1]} : vector<8x384xf32> to vector<8x128xf32>
    %524 = arith.addf %522, %523 : vector<8x128xf32>
    %525 = arith.negf %524 : vector<8x128xf32>
    %526 = math.exp %525 : vector<8x128xf32>
    %cst_131 = arith.constant 1.000000e+00 : f32
    %527 = vector.broadcast %cst_131 : f32 to vector<8x128xf32>
    %528 = arith.addf %527, %526 : vector<8x128xf32>
    %529 = arith.divf %527, %528 : vector<8x128xf32>
    %530 = vector.extract_strided_slice %511 {offsets = [0, 256], sizes = [8, 128], strides = [1, 1]} : vector<8x384xf32> to vector<8x128xf32>
    %531 = vector.extract_strided_slice %513 {offsets = [0, 256], sizes = [8, 128], strides = [1, 1]} : vector<8x384xf32> to vector<8x128xf32>
    %532 = arith.mulf %521, %531 : vector<8x128xf32>
    %533 = arith.addf %530, %532 : vector<8x128xf32>
    %534 = math.tanh %533 : vector<8x128xf32>
    %cst_132 = arith.constant 1.000000e+00 : f32
    %535 = vector.broadcast %cst_132 : f32 to vector<8x128xf32>
    %536 = arith.subf %535, %529 : vector<8x128xf32>
    %537 = arith.mulf %536, %534 : vector<8x128xf32>
    %538 = arith.mulf %529, %507 : vector<8x128xf32>
    %539 = arith.addf %537, %538 : vector<8x128xf32>
    %c7_133 = arith.constant 7 : index
    %c0_134 = arith.constant 0 : index
    %c0_135 = arith.constant 0 : index
    %540 = vector.load %arg10[%c7_133, %c0_134, %c0_135] : memref<8x8x128xf32, #tpu.memory_space<vmem>>, vector<1x8x128xf32>
    %541 = vector.shape_cast %540 : vector<1x8x128xf32> to vector<8x128xf32>
    %542 = vector.shape_cast %539 : vector<8x128xf32> to vector<1x8x128xf32>
    tpu.vector_store %arg10[%c7_133, %c0_134, %c0_135], %542 {strides = array<i32>} : memref<8x8x128xf32, #tpu.memory_space<vmem>>, vector<1x8x128xf32>,
    %c0_136 = arith.constant 0 : index
    %c0_137 = arith.constant 0 : index
    %c0_138 = arith.constant 0 : index
    %543 = vector.load %arg10[%c0_136, %c0_137, %c0_138] : memref<8x8x128xf32, #tpu.memory_space<vmem>>, vector<8x8x128xf32>
    %544 = vector.shape_cast %543 : vector<8x8x128xf32> to vector<64x128xf32>
    %c1_139 = arith.constant 1 : index
    %c0_140 = arith.constant 0 : index
    %c0_141 = arith.constant 0 : index
    %545 = vector.load %arg3[%c1_139, %c0_140, %c0_141] : memref<2x128x384xf32, #tpu.memory_space<vmem>>, vector<1x128x384xf32>
    %546 = vector.shape_cast %545 : vector<1x128x384xf32> to vector<128x384xf32>
    %cst_142 = arith.constant dense<0.000000e+00> : vector<64x384xf32>
    %547 = tpu.matmul %544, %546, %cst_142 {dimension_numbers = #tpu.dot_dimension_numbers<[1], [0], [0], [1], [0, 0, 1, 1], [], []>} : vector<64x128xf32>, vector<128x384xf32>, vector<64x384xf32> -> vector<64x384xf32>
    %c2_143 = arith.constant 2 : index
    %c0_144 = arith.constant 0 : index
    %c0_145 = arith.constant 0 : index
    %548 = vector.load %arg5[%c2_143, %c0_144, %c0_145] : memref<3x1x384xf32, #tpu.memory_space<vmem>>, vector<1x1x384xf32>
    %549 = vector.shape_cast %548 : vector<1x1x384xf32> to vector<1x384xf32>
    %550 = vector.broadcast %549 : vector<1x384xf32> to vector<64x384xf32>
    %551 = arith.addf %547, %550 : vector<64x384xf32>
    %c2_146 = arith.constant 2 : index
    %c0_147 = arith.constant 0 : index
    %c0_148 = arith.constant 0 : index
    %552 = vector.load %arg4[%c2_146, %c0_147, %c0_148] : memref<3x128x384xf32, #tpu.memory_space<vmem>>, vector<1x128x384xf32>
    %553 = vector.shape_cast %552 : vector<1x128x384xf32> to vector<128x384xf32>
    %c2_149 = arith.constant 2 : index
    %c0_150 = arith.constant 0 : index
    %c0_151 = arith.constant 0 : index
    %554 = vector.load %arg6[%c2_149, %c0_150, %c0_151] : memref<3x1x384xf32, #tpu.memory_space<vmem>>, vector<1x1x384xf32>
    %555 = vector.shape_cast %554 : vector<1x1x384xf32> to vector<1x384xf32>
    %556 = vector.shape_cast %555 : vector<1x384xf32> to vector<1x384xf32>
    %557 = vector.broadcast %556 : vector<1x384xf32> to vector<8x384xf32>
    %cst_152 = arith.constant 0.000000e+00 : f32
    %558 = vector.broadcast %cst_152 : f32 to vector<8x128xf32>
    %559 = vector.extract_strided_slice %551 {offsets = [0, 0], sizes = [8, 384], strides = [1, 1]} : vector<64x384xf32> to vector<8x384xf32>
    %cst_153 = arith.constant dense<0.000000e+00> : vector<8x384xf32>
    %560 = tpu.matmul %558, %553, %cst_153 {dimension_numbers = #tpu.dot_dimension_numbers<[1], [0], [0], [1], [0, 0, 1, 1], [], []>} : vector<8x128xf32>, vector<128x384xf32>, vector<8x384xf32> -> vector<8x384xf32>
    %561 = arith.addf %560, %557 : vector<8x384xf32>
    %562 = vector.extract_strided_slice %559 {offsets = [0, 0], sizes = [8, 128], strides = [1, 1]} : vector<8x384xf32> to vector<8x128xf32>
    %563 = vector.extract_strided_slice %561 {offsets = [0, 0], sizes = [8, 128], strides = [1, 1]} : vector<8x384xf32> to vector<8x128xf32>
    %564 = arith.addf %562, %563 : vector<8x128xf32>
    %565 = arith.negf %564 : vector<8x128xf32>
    %566 = math.exp %565 : vector<8x128xf32>
    %cst_154 = arith.constant 1.000000e+00 : f32
    %567 = vector.broadcast %cst_154 : f32 to vector<8x128xf32>
    %568 = arith.addf %567, %566 : vector<8x128xf32>
    %569 = arith.divf %567, %568 : vector<8x128xf32>
    %570 = vector.extract_strided_slice %559 {offsets = [0, 128], sizes = [8, 128], strides = [1, 1]} : vector<8x384xf32> to vector<8x128xf32>
    %571 = vector.extract_strided_slice %561 {offsets = [0, 128], sizes = [8, 128], strides = [1, 1]} : vector<8x384xf32> to vector<8x128xf32>
    %572 = arith.addf %570, %571 : vector<8x128xf32>
    %573 = arith.negf %572 : vector<8x128xf32>
    %574 = math.exp %573 : vector<8x128xf32>
    %cst_155 = arith.constant 1.000000e+00 : f32
    %575 = vector.broadcast %cst_155 : f32 to vector<8x128xf32>
    %576 = arith.addf %575, %574 : vector<8x128xf32>
    %577 = arith.divf %575, %576 : vector<8x128xf32>
    %578 = vector.extract_strided_slice %559 {offsets = [0, 256], sizes = [8, 128], strides = [1, 1]} : vector<8x384xf32> to vector<8x128xf32>
    %579 = vector.extract_strided_slice %561 {offsets = [0, 256], sizes = [8, 128], strides = [1, 1]} : vector<8x384xf32> to vector<8x128xf32>
    %580 = arith.mulf %569, %579 : vector<8x128xf32>
    %581 = arith.addf %578, %580 : vector<8x128xf32>
    %582 = math.tanh %581 : vector<8x128xf32>
    %cst_156 = arith.constant 1.000000e+00 : f32
    %583 = vector.broadcast %cst_156 : f32 to vector<8x128xf32>
    %584 = arith.subf %583, %577 : vector<8x128xf32>
    %585 = arith.mulf %584, %582 : vector<8x128xf32>
    %586 = arith.mulf %577, %558 : vector<8x128xf32>
    %587 = arith.addf %585, %586 : vector<8x128xf32>
    %588 = vector.extract_strided_slice %551 {offsets = [8, 0], sizes = [8, 384], strides = [1, 1]} : vector<64x384xf32> to vector<8x384xf32>
    %cst_157 = arith.constant dense<0.000000e+00> : vector<8x384xf32>
    %589 = tpu.matmul %587, %553, %cst_157 {dimension_numbers = #tpu.dot_dimension_numbers<[1], [0], [0], [1], [0, 0, 1, 1], [], []>} : vector<8x128xf32>, vector<128x384xf32>, vector<8x384xf32> -> vector<8x384xf32>
    %590 = arith.addf %589, %557 : vector<8x384xf32>
    %591 = vector.extract_strided_slice %588 {offsets = [0, 0], sizes = [8, 128], strides = [1, 1]} : vector<8x384xf32> to vector<8x128xf32>
    %592 = vector.extract_strided_slice %590 {offsets = [0, 0], sizes = [8, 128], strides = [1, 1]} : vector<8x384xf32> to vector<8x128xf32>
    %593 = arith.addf %591, %592 : vector<8x128xf32>
    %594 = arith.negf %593 : vector<8x128xf32>
    %595 = math.exp %594 : vector<8x128xf32>
    %cst_158 = arith.constant 1.000000e+00 : f32
    %596 = vector.broadcast %cst_158 : f32 to vector<8x128xf32>
    %597 = arith.addf %596, %595 : vector<8x128xf32>
    %598 = arith.divf %596, %597 : vector<8x128xf32>
    %599 = vector.extract_strided_slice %588 {offsets = [0, 128], sizes = [8, 128], strides = [1, 1]} : vector<8x384xf32> to vector<8x128xf32>
    %600 = vector.extract_strided_slice %590 {offsets = [0, 128], sizes = [8, 128], strides = [1, 1]} : vector<8x384xf32> to vector<8x128xf32>
    %601 = arith.addf %599, %600 : vector<8x128xf32>
    %602 = arith.negf %601 : vector<8x128xf32>
    %603 = math.exp %602 : vector<8x128xf32>
    %cst_159 = arith.constant 1.000000e+00 : f32
    %604 = vector.broadcast %cst_159 : f32 to vector<8x128xf32>
    %605 = arith.addf %604, %603 : vector<8x128xf32>
    %606 = arith.divf %604, %605 : vector<8x128xf32>
    %607 = vector.extract_strided_slice %588 {offsets = [0, 256], sizes = [8, 128], strides = [1, 1]} : vector<8x384xf32> to vector<8x128xf32>
    %608 = vector.extract_strided_slice %590 {offsets = [0, 256], sizes = [8, 128], strides = [1, 1]} : vector<8x384xf32> to vector<8x128xf32>
    %609 = arith.mulf %598, %608 : vector<8x128xf32>
    %610 = arith.addf %607, %609 : vector<8x128xf32>
    %611 = math.tanh %610 : vector<8x128xf32>
    %cst_160 = arith.constant 1.000000e+00 : f32
    %612 = vector.broadcast %cst_160 : f32 to vector<8x128xf32>
    %613 = arith.subf %612, %606 : vector<8x128xf32>
    %614 = arith.mulf %613, %611 : vector<8x128xf32>
    %615 = arith.mulf %606, %587 : vector<8x128xf32>
    %616 = arith.addf %614, %615 : vector<8x128xf32>
    %617 = vector.extract_strided_slice %551 {offsets = [16, 0], sizes = [8, 384], strides = [1, 1]} : vector<64x384xf32> to vector<8x384xf32>
    %cst_161 = arith.constant dense<0.000000e+00> : vector<8x384xf32>
    %618 = tpu.matmul %616, %553, %cst_161 {dimension_numbers = #tpu.dot_dimension_numbers<[1], [0], [0], [1], [0, 0, 1, 1], [], []>} : vector<8x128xf32>, vector<128x384xf32>, vector<8x384xf32> -> vector<8x384xf32>
    %619 = arith.addf %618, %557 : vector<8x384xf32>
    %620 = vector.extract_strided_slice %617 {offsets = [0, 0], sizes = [8, 128], strides = [1, 1]} : vector<8x384xf32> to vector<8x128xf32>
    %621 = vector.extract_strided_slice %619 {offsets = [0, 0], sizes = [8, 128], strides = [1, 1]} : vector<8x384xf32> to vector<8x128xf32>
    %622 = arith.addf %620, %621 : vector<8x128xf32>
    %623 = arith.negf %622 : vector<8x128xf32>
    %624 = math.exp %623 : vector<8x128xf32>
    %cst_162 = arith.constant 1.000000e+00 : f32
    %625 = vector.broadcast %cst_162 : f32 to vector<8x128xf32>
    %626 = arith.addf %625, %624 : vector<8x128xf32>
    %627 = arith.divf %625, %626 : vector<8x128xf32>
    %628 = vector.extract_strided_slice %617 {offsets = [0, 128], sizes = [8, 128], strides = [1, 1]} : vector<8x384xf32> to vector<8x128xf32>
    %629 = vector.extract_strided_slice %619 {offsets = [0, 128], sizes = [8, 128], strides = [1, 1]} : vector<8x384xf32> to vector<8x128xf32>
    %630 = arith.addf %628, %629 : vector<8x128xf32>
    %631 = arith.negf %630 : vector<8x128xf32>
    %632 = math.exp %631 : vector<8x128xf32>
    %cst_163 = arith.constant 1.000000e+00 : f32
    %633 = vector.broadcast %cst_163 : f32 to vector<8x128xf32>
    %634 = arith.addf %633, %632 : vector<8x128xf32>
    %635 = arith.divf %633, %634 : vector<8x128xf32>
    %636 = vector.extract_strided_slice %617 {offsets = [0, 256], sizes = [8, 128], strides = [1, 1]} : vector<8x384xf32> to vector<8x128xf32>
    %637 = vector.extract_strided_slice %619 {offsets = [0, 256], sizes = [8, 128], strides = [1, 1]} : vector<8x384xf32> to vector<8x128xf32>
    %638 = arith.mulf %627, %637 : vector<8x128xf32>
    %639 = arith.addf %636, %638 : vector<8x128xf32>
    %640 = math.tanh %639 : vector<8x128xf32>
    %cst_164 = arith.constant 1.000000e+00 : f32
    %641 = vector.broadcast %cst_164 : f32 to vector<8x128xf32>
    %642 = arith.subf %641, %635 : vector<8x128xf32>
    %643 = arith.mulf %642, %640 : vector<8x128xf32>
    %644 = arith.mulf %635, %616 : vector<8x128xf32>
    %645 = arith.addf %643, %644 : vector<8x128xf32>
    %646 = vector.extract_strided_slice %551 {offsets = [24, 0], sizes = [8, 384], strides = [1, 1]} : vector<64x384xf32> to vector<8x384xf32>
    %cst_165 = arith.constant dense<0.000000e+00> : vector<8x384xf32>
    %647 = tpu.matmul %645, %553, %cst_165 {dimension_numbers = #tpu.dot_dimension_numbers<[1], [0], [0], [1], [0, 0, 1, 1], [], []>} : vector<8x128xf32>, vector<128x384xf32>, vector<8x384xf32> -> vector<8x384xf32>
    %648 = arith.addf %647, %557 : vector<8x384xf32>
    %649 = vector.extract_strided_slice %646 {offsets = [0, 0], sizes = [8, 128], strides = [1, 1]} : vector<8x384xf32> to vector<8x128xf32>
    %650 = vector.extract_strided_slice %648 {offsets = [0, 0], sizes = [8, 128], strides = [1, 1]} : vector<8x384xf32> to vector<8x128xf32>
    %651 = arith.addf %649, %650 : vector<8x128xf32>
    %652 = arith.negf %651 : vector<8x128xf32>
    %653 = math.exp %652 : vector<8x128xf32>
    %cst_166 = arith.constant 1.000000e+00 : f32
    %654 = vector.broadcast %cst_166 : f32 to vector<8x128xf32>
    %655 = arith.addf %654, %653 : vector<8x128xf32>
    %656 = arith.divf %654, %655 : vector<8x128xf32>
    %657 = vector.extract_strided_slice %646 {offsets = [0, 128], sizes = [8, 128], strides = [1, 1]} : vector<8x384xf32> to vector<8x128xf32>
    %658 = vector.extract_strided_slice %648 {offsets = [0, 128], sizes = [8, 128], strides = [1, 1]} : vector<8x384xf32> to vector<8x128xf32>
    %659 = arith.addf %657, %658 : vector<8x128xf32>
    %660 = arith.negf %659 : vector<8x128xf32>
    %661 = math.exp %660 : vector<8x128xf32>
    %cst_167 = arith.constant 1.000000e+00 : f32
    %662 = vector.broadcast %cst_167 : f32 to vector<8x128xf32>
    %663 = arith.addf %662, %661 : vector<8x128xf32>
    %664 = arith.divf %662, %663 : vector<8x128xf32>
    %665 = vector.extract_strided_slice %646 {offsets = [0, 256], sizes = [8, 128], strides = [1, 1]} : vector<8x384xf32> to vector<8x128xf32>
    %666 = vector.extract_strided_slice %648 {offsets = [0, 256], sizes = [8, 128], strides = [1, 1]} : vector<8x384xf32> to vector<8x128xf32>
    %667 = arith.mulf %656, %666 : vector<8x128xf32>
    %668 = arith.addf %665, %667 : vector<8x128xf32>
    %669 = math.tanh %668 : vector<8x128xf32>
    %cst_168 = arith.constant 1.000000e+00 : f32
    %670 = vector.broadcast %cst_168 : f32 to vector<8x128xf32>
    %671 = arith.subf %670, %664 : vector<8x128xf32>
    %672 = arith.mulf %671, %669 : vector<8x128xf32>
    %673 = arith.mulf %664, %645 : vector<8x128xf32>
    %674 = arith.addf %672, %673 : vector<8x128xf32>
    %675 = vector.extract_strided_slice %551 {offsets = [32, 0], sizes = [8, 384], strides = [1, 1]} : vector<64x384xf32> to vector<8x384xf32>
    %cst_169 = arith.constant dense<0.000000e+00> : vector<8x384xf32>
    %676 = tpu.matmul %674, %553, %cst_169 {dimension_numbers = #tpu.dot_dimension_numbers<[1], [0], [0], [1], [0, 0, 1, 1], [], []>} : vector<8x128xf32>, vector<128x384xf32>, vector<8x384xf32> -> vector<8x384xf32>
    %677 = arith.addf %676, %557 : vector<8x384xf32>
    %678 = vector.extract_strided_slice %675 {offsets = [0, 0], sizes = [8, 128], strides = [1, 1]} : vector<8x384xf32> to vector<8x128xf32>
    %679 = vector.extract_strided_slice %677 {offsets = [0, 0], sizes = [8, 128], strides = [1, 1]} : vector<8x384xf32> to vector<8x128xf32>
    %680 = arith.addf %678, %679 : vector<8x128xf32>
    %681 = arith.negf %680 : vector<8x128xf32>
    %682 = math.exp %681 : vector<8x128xf32>
    %cst_170 = arith.constant 1.000000e+00 : f32
    %683 = vector.broadcast %cst_170 : f32 to vector<8x128xf32>
    %684 = arith.addf %683, %682 : vector<8x128xf32>
    %685 = arith.divf %683, %684 : vector<8x128xf32>
    %686 = vector.extract_strided_slice %675 {offsets = [0, 128], sizes = [8, 128], strides = [1, 1]} : vector<8x384xf32> to vector<8x128xf32>
    %687 = vector.extract_strided_slice %677 {offsets = [0, 128], sizes = [8, 128], strides = [1, 1]} : vector<8x384xf32> to vector<8x128xf32>
    %688 = arith.addf %686, %687 : vector<8x128xf32>
    %689 = arith.negf %688 : vector<8x128xf32>
    %690 = math.exp %689 : vector<8x128xf32>
    %cst_171 = arith.constant 1.000000e+00 : f32
    %691 = vector.broadcast %cst_171 : f32 to vector<8x128xf32>
    %692 = arith.addf %691, %690 : vector<8x128xf32>
    %693 = arith.divf %691, %692 : vector<8x128xf32>
    %694 = vector.extract_strided_slice %675 {offsets = [0, 256], sizes = [8, 128], strides = [1, 1]} : vector<8x384xf32> to vector<8x128xf32>
    %695 = vector.extract_strided_slice %677 {offsets = [0, 256], sizes = [8, 128], strides = [1, 1]} : vector<8x384xf32> to vector<8x128xf32>
    %696 = arith.mulf %685, %695 : vector<8x128xf32>
    %697 = arith.addf %694, %696 : vector<8x128xf32>
    %698 = math.tanh %697 : vector<8x128xf32>
    %cst_172 = arith.constant 1.000000e+00 : f32
    %699 = vector.broadcast %cst_172 : f32 to vector<8x128xf32>
    %700 = arith.subf %699, %693 : vector<8x128xf32>
    %701 = arith.mulf %700, %698 : vector<8x128xf32>
    %702 = arith.mulf %693, %674 : vector<8x128xf32>
    %703 = arith.addf %701, %702 : vector<8x128xf32>
    %704 = vector.extract_strided_slice %551 {offsets = [40, 0], sizes = [8, 384], strides = [1, 1]} : vector<64x384xf32> to vector<8x384xf32>
    %cst_173 = arith.constant dense<0.000000e+00> : vector<8x384xf32>
    %705 = tpu.matmul %703, %553, %cst_173 {dimension_numbers = #tpu.dot_dimension_numbers<[1], [0], [0], [1], [0, 0, 1, 1], [], []>} : vector<8x128xf32>, vector<128x384xf32>, vector<8x384xf32> -> vector<8x384xf32>
    %706 = arith.addf %705, %557 : vector<8x384xf32>
    %707 = vector.extract_strided_slice %704 {offsets = [0, 0], sizes = [8, 128], strides = [1, 1]} : vector<8x384xf32> to vector<8x128xf32>
    %708 = vector.extract_strided_slice %706 {offsets = [0, 0], sizes = [8, 128], strides = [1, 1]} : vector<8x384xf32> to vector<8x128xf32>
    %709 = arith.addf %707, %708 : vector<8x128xf32>
    %710 = arith.negf %709 : vector<8x128xf32>
    %711 = math.exp %710 : vector<8x128xf32>
    %cst_174 = arith.constant 1.000000e+00 : f32
    %712 = vector.broadcast %cst_174 : f32 to vector<8x128xf32>
    %713 = arith.addf %712, %711 : vector<8x128xf32>
    %714 = arith.divf %712, %713 : vector<8x128xf32>
    %715 = vector.extract_strided_slice %704 {offsets = [0, 128], sizes = [8, 128], strides = [1, 1]} : vector<8x384xf32> to vector<8x128xf32>
    %716 = vector.extract_strided_slice %706 {offsets = [0, 128], sizes = [8, 128], strides = [1, 1]} : vector<8x384xf32> to vector<8x128xf32>
    %717 = arith.addf %715, %716 : vector<8x128xf32>
    %718 = arith.negf %717 : vector<8x128xf32>
    %719 = math.exp %718 : vector<8x128xf32>
    %cst_175 = arith.constant 1.000000e+00 : f32
    %720 = vector.broadcast %cst_175 : f32 to vector<8x128xf32>
    %721 = arith.addf %720, %719 : vector<8x128xf32>
    %722 = arith.divf %720, %721 : vector<8x128xf32>
    %723 = vector.extract_strided_slice %704 {offsets = [0, 256], sizes = [8, 128], strides = [1, 1]} : vector<8x384xf32> to vector<8x128xf32>
    %724 = vector.extract_strided_slice %706 {offsets = [0, 256], sizes = [8, 128], strides = [1, 1]} : vector<8x384xf32> to vector<8x128xf32>
    %725 = arith.mulf %714, %724 : vector<8x128xf32>
    %726 = arith.addf %723, %725 : vector<8x128xf32>
    %727 = math.tanh %726 : vector<8x128xf32>
    %cst_176 = arith.constant 1.000000e+00 : f32
    %728 = vector.broadcast %cst_176 : f32 to vector<8x128xf32>
    %729 = arith.subf %728, %722 : vector<8x128xf32>
    %730 = arith.mulf %729, %727 : vector<8x128xf32>
    %731 = arith.mulf %722, %703 : vector<8x128xf32>
    %732 = arith.addf %730, %731 : vector<8x128xf32>
    %733 = vector.extract_strided_slice %551 {offsets = [48, 0], sizes = [8, 384], strides = [1, 1]} : vector<64x384xf32> to vector<8x384xf32>
    %cst_177 = arith.constant dense<0.000000e+00> : vector<8x384xf32>
    %734 = tpu.matmul %732, %553, %cst_177 {dimension_numbers = #tpu.dot_dimension_numbers<[1], [0], [0], [1], [0, 0, 1, 1], [], []>} : vector<8x128xf32>, vector<128x384xf32>, vector<8x384xf32> -> vector<8x384xf32>
    %735 = arith.addf %734, %557 : vector<8x384xf32>
    %736 = vector.extract_strided_slice %733 {offsets = [0, 0], sizes = [8, 128], strides = [1, 1]} : vector<8x384xf32> to vector<8x128xf32>
    %737 = vector.extract_strided_slice %735 {offsets = [0, 0], sizes = [8, 128], strides = [1, 1]} : vector<8x384xf32> to vector<8x128xf32>
    %738 = arith.addf %736, %737 : vector<8x128xf32>
    %739 = arith.negf %738 : vector<8x128xf32>
    %740 = math.exp %739 : vector<8x128xf32>
    %cst_178 = arith.constant 1.000000e+00 : f32
    %741 = vector.broadcast %cst_178 : f32 to vector<8x128xf32>
    %742 = arith.addf %741, %740 : vector<8x128xf32>
    %743 = arith.divf %741, %742 : vector<8x128xf32>
    %744 = vector.extract_strided_slice %733 {offsets = [0, 128], sizes = [8, 128], strides = [1, 1]} : vector<8x384xf32> to vector<8x128xf32>
    %745 = vector.extract_strided_slice %735 {offsets = [0, 128], sizes = [8, 128], strides = [1, 1]} : vector<8x384xf32> to vector<8x128xf32>
    %746 = arith.addf %744, %745 : vector<8x128xf32>
    %747 = arith.negf %746 : vector<8x128xf32>
    %748 = math.exp %747 : vector<8x128xf32>
    %cst_179 = arith.constant 1.000000e+00 : f32
    %749 = vector.broadcast %cst_179 : f32 to vector<8x128xf32>
    %750 = arith.addf %749, %748 : vector<8x128xf32>
    %751 = arith.divf %749, %750 : vector<8x128xf32>
    %752 = vector.extract_strided_slice %733 {offsets = [0, 256], sizes = [8, 128], strides = [1, 1]} : vector<8x384xf32> to vector<8x128xf32>
    %753 = vector.extract_strided_slice %735 {offsets = [0, 256], sizes = [8, 128], strides = [1, 1]} : vector<8x384xf32> to vector<8x128xf32>
    %754 = arith.mulf %743, %753 : vector<8x128xf32>
    %755 = arith.addf %752, %754 : vector<8x128xf32>
    %756 = math.tanh %755 : vector<8x128xf32>
    %cst_180 = arith.constant 1.000000e+00 : f32
    %757 = vector.broadcast %cst_180 : f32 to vector<8x128xf32>
    %758 = arith.subf %757, %751 : vector<8x128xf32>
    %759 = arith.mulf %758, %756 : vector<8x128xf32>
    %760 = arith.mulf %751, %732 : vector<8x128xf32>
    %761 = arith.addf %759, %760 : vector<8x128xf32>
    %762 = vector.extract_strided_slice %551 {offsets = [56, 0], sizes = [8, 384], strides = [1, 1]} : vector<64x384xf32> to vector<8x384xf32>
    %cst_181 = arith.constant dense<0.000000e+00> : vector<8x384xf32>
    %763 = tpu.matmul %761, %553, %cst_181 {dimension_numbers = #tpu.dot_dimension_numbers<[1], [0], [0], [1], [0, 0, 1, 1], [], []>} : vector<8x128xf32>, vector<128x384xf32>, vector<8x384xf32> -> vector<8x384xf32>
    %764 = arith.addf %763, %557 : vector<8x384xf32>
    %765 = vector.extract_strided_slice %762 {offsets = [0, 0], sizes = [8, 128], strides = [1, 1]} : vector<8x384xf32> to vector<8x128xf32>
    %766 = vector.extract_strided_slice %764 {offsets = [0, 0], sizes = [8, 128], strides = [1, 1]} : vector<8x384xf32> to vector<8x128xf32>
    %767 = arith.addf %765, %766 : vector<8x128xf32>
    %768 = arith.negf %767 : vector<8x128xf32>
    %769 = math.exp %768 : vector<8x128xf32>
    %cst_182 = arith.constant 1.000000e+00 : f32
    %770 = vector.broadcast %cst_182 : f32 to vector<8x128xf32>
    %771 = arith.addf %770, %769 : vector<8x128xf32>
    %772 = arith.divf %770, %771 : vector<8x128xf32>
    %773 = vector.extract_strided_slice %762 {offsets = [0, 128], sizes = [8, 128], strides = [1, 1]} : vector<8x384xf32> to vector<8x128xf32>
    %774 = vector.extract_strided_slice %764 {offsets = [0, 128], sizes = [8, 128], strides = [1, 1]} : vector<8x384xf32> to vector<8x128xf32>
    %775 = arith.addf %773, %774 : vector<8x128xf32>
    %776 = arith.negf %775 : vector<8x128xf32>
    %777 = math.exp %776 : vector<8x128xf32>
    %cst_183 = arith.constant 1.000000e+00 : f32
    %778 = vector.broadcast %cst_183 : f32 to vector<8x128xf32>
    %779 = arith.addf %778, %777 : vector<8x128xf32>
    %780 = arith.divf %778, %779 : vector<8x128xf32>
    %781 = vector.extract_strided_slice %762 {offsets = [0, 256], sizes = [8, 128], strides = [1, 1]} : vector<8x384xf32> to vector<8x128xf32>
    %782 = vector.extract_strided_slice %764 {offsets = [0, 256], sizes = [8, 128], strides = [1, 1]} : vector<8x384xf32> to vector<8x128xf32>
    %783 = arith.mulf %772, %782 : vector<8x128xf32>
    %784 = arith.addf %781, %783 : vector<8x128xf32>
    %785 = math.tanh %784 : vector<8x128xf32>
    %cst_184 = arith.constant 1.000000e+00 : f32
    %786 = vector.broadcast %cst_184 : f32 to vector<8x128xf32>
    %787 = arith.subf %786, %780 : vector<8x128xf32>
    %788 = arith.mulf %787, %785 : vector<8x128xf32>
    %789 = arith.mulf %780, %761 : vector<8x128xf32>
    %790 = arith.addf %788, %789 : vector<8x128xf32>
    %c0_185 = arith.constant 0 : index
    %c0_186 = arith.constant 0 : index
    %791 = vector.load %arg7[%c0_185, %c0_186] : memref<1x128xf32, #tpu.memory_space<vmem>>, vector<1x128xf32>
    %792 = vector.broadcast %791 : vector<1x128xf32> to vector<8x128xf32>
    %793 = arith.mulf %790, %792 : vector<8x128xf32>
    %cst_187 = arith.constant dense<0.000000e+00> : vector<8xf32>
    %794 = vector.multi_reduction <add>, %793, %cst_187 [1] : vector<8x128xf32> to vector<8xf32>
    %795 = vector.shape_cast %794 : vector<8xf32> to vector<8x1xf32>
    %c0_188 = arith.constant 0 : index
    %c0_189 = arith.constant 0 : index
    %796 = vector.load %arg8[%c0_188, %c0_189] : memref<1x1xf32, #tpu.memory_space<vmem>>, vector<1x1xf32>
    %797 = vector.broadcast %796 : vector<1x1xf32> to vector<8x1xf32>
    %798 = arith.addf %795, %797 : vector<8x1xf32>
    %c0_190 = arith.constant 0 : index
    %c0_191 = arith.constant 0 : index
    %799 = vector.load %arg9[%c0_190, %c0_191] : memref<8x1xf32, #tpu.memory_space<vmem>>, vector<8x1xf32>
    tpu.vector_store %arg9[%c0_190, %c0_191], %798 {strides = array<i32>} : memref<8x1xf32, #tpu.memory_space<vmem>>, vector<8x1xf32>,
    return
  }
  func.func @transform_0(%arg0: i32) -> (i32, i32, i32) {
    %c0_i32 = arith.constant 0 : i32
    %c0_i32_0 = arith.constant 0 : i32
    %c0_i32_1 = arith.constant 0 : i32
    return %c0_i32, %arg0, %c0_i32_0 : i32, i32, i32
  }
  func.func @transform_1(%arg0: i32) -> (i32, i32) {
    %c0_i32 = arith.constant 0 : i32
    %c0_i32_0 = arith.constant 0 : i32
    %c0_i32_1 = arith.constant 0 : i32
    return %c0_i32, %c0_i32_0 : i32, i32
  }
  func.func @transform_2(%arg0: i32) -> (i32, i32, i32) {
    %c0_i32 = arith.constant 0 : i32
    %c0_i32_0 = arith.constant 0 : i32
    %c0_i32_1 = arith.constant 0 : i32
    %c0_i32_2 = arith.constant 0 : i32
    return %c0_i32, %c0_i32_0, %c0_i32_1 : i32, i32, i32
  }
  func.func @transform_3(%arg0: i32) -> (i32, i32, i32) {
    %c0_i32 = arith.constant 0 : i32
    %c0_i32_0 = arith.constant 0 : i32
    %c0_i32_1 = arith.constant 0 : i32
    %c0_i32_2 = arith.constant 0 : i32
    return %c0_i32, %c0_i32_0, %c0_i32_1 : i32, i32, i32
  }
  func.func @transform_4(%arg0: i32) -> (i32, i32, i32) {
    %c0_i32 = arith.constant 0 : i32
    %c0_i32_0 = arith.constant 0 : i32
    %c0_i32_1 = arith.constant 0 : i32
    %c0_i32_2 = arith.constant 0 : i32
    return %c0_i32, %c0_i32_0, %c0_i32_1 : i32, i32, i32
  }
  func.func @transform_5(%arg0: i32) -> (i32, i32, i32) {
    %c0_i32 = arith.constant 0 : i32
    %c0_i32_0 = arith.constant 0 : i32
    %c0_i32_1 = arith.constant 0 : i32
    %c0_i32_2 = arith.constant 0 : i32
    return %c0_i32, %c0_i32_0, %c0_i32_1 : i32, i32, i32
  }
  func.func @transform_6(%arg0: i32) -> (i32, i32) {
    %c0_i32 = arith.constant 0 : i32
    %c0_i32_0 = arith.constant 0 : i32
    %c0_i32_1 = arith.constant 0 : i32
    return %c0_i32, %c0_i32_0 : i32, i32
  }
  func.func @transform_7(%arg0: i32) -> (i32, i32) {
    %c0_i32 = arith.constant 0 : i32
    %c0_i32_0 = arith.constant 0 : i32
    %c0_i32_1 = arith.constant 0 : i32
    return %c0_i32, %c0_i32_0 : i32, i32
  }
  func.func @transform_8(%arg0: i32) -> (i32, i32) {
    %c0_i32 = arith.constant 0 : i32
    %c0_i32_0 = arith.constant 0 : i32
    return %arg0, %c0_i32 : i32, i32
  }
}

module attributes {stable_mosaic.version = 11 : i64} {
  func.func @kernel(%arg0: i32, %arg1: memref<8x8x128xf32, #tpu.memory_space<vmem>>, %arg2: memref<128x384xf32, #tpu.memory_space<vmem>>, %arg3: memref<2x128x384xf32, #tpu.memory_space<vmem>>, %arg4: memref<3x128x384xf32, #tpu.memory_space<vmem>>, %arg5: memref<3x1x384xf32, #tpu.memory_space<vmem>>, %arg6: memref<3x1x384xf32, #tpu.memory_space<vmem>>, %arg7: memref<1x128xf32, #tpu.memory_space<vmem>>, %arg8: memref<1x1xf32, #tpu.memory_space<vmem>>, %arg9: memref<8x1xf32, #tpu.memory_space<vmem>>, %arg10: memref<8x8x128xf32, #tpu.memory_space<vmem>>) attributes {dimension_semantics = [#tpu.dimension_semantics<parallel>], iteration_bounds = array<i64: 1>, scalar_prefetch = 0 : i64, scratch_operands = 1 : i64, tpu.core_type = #tpu.core_type<tc>, window_params = [{transform_indices = @transform_0, window_bounds = array<i64: 8, 8, 128>}, {pipeline_mode = #tpu.pipeline_mode<synchronous>, transform_indices = @transform_1, window_bounds = array<i64: 128, 384>}, {pipeline_mode = #tpu.pipeline_mode<synchronous>, transform_indices = @transform_2, window_bounds = array<i64: 2, 128, 384>}, {pipeline_mode = #tpu.pipeline_mode<synchronous>, transform_indices = @transform_3, window_bounds = array<i64: 3, 128, 384>}, {pipeline_mode = #tpu.pipeline_mode<synchronous>, transform_indices = @transform_4, window_bounds = array<i64: 3, 1, 384>}, {pipeline_mode = #tpu.pipeline_mode<synchronous>, transform_indices = @transform_5, window_bounds = array<i64: 3, 1, 384>}, {pipeline_mode = #tpu.pipeline_mode<synchronous>, transform_indices = @transform_6, window_bounds = array<i64: 1, 128>}, {pipeline_mode = #tpu.pipeline_mode<synchronous>, transform_indices = @transform_7, window_bounds = array<i64: 1, 1>}, {transform_indices = @transform_8, window_bounds = array<i64: 8, 1>}]} {
    %c0 = arith.constant 0 : index
    %c0_0 = arith.constant 0 : index
    %c0_1 = arith.constant 0 : index
    %0 = vector.load %arg1[%c0, %c0_0, %c0_1] : memref<8x8x128xf32, #tpu.memory_space<vmem>>, vector<8x8x128xf32>
    %1 = vector.shape_cast %0 : vector<8x8x128xf32> to vector<64x128xf32>
    %c0_2 = arith.constant 0 : index
    %c0_3 = arith.constant 0 : index
    %2 = vector.load %arg2[%c0_2, %c0_3] : memref<128x384xf32, #tpu.memory_space<vmem>>, vector<128x384xf32>
    %cst = arith.constant dense<0.000000e+00> : vector<64x384xf32>
    %3 = tpu.matmul %1, %2, %cst {dimension_numbers = #tpu.dot_dimension_numbers<[1], [0], [0], [1], [0, 0, 1, 1], [], []>} : vector<64x128xf32>, vector<128x384xf32>, vector<64x384xf32> -> vector<64x384xf32>
    %c0_4 = arith.constant 0 : index
    %c0_5 = arith.constant 0 : index
    %c0_6 = arith.constant 0 : index
    %4 = vector.load %arg5[%c0_4, %c0_5, %c0_6] : memref<3x1x384xf32, #tpu.memory_space<vmem>>, vector<1x1x384xf32>
    %5 = vector.shape_cast %4 : vector<1x1x384xf32> to vector<1x384xf32>
    %6 = vector.broadcast %5 : vector<1x384xf32> to vector<64x384xf32>
    %7 = arith.addf %3, %6 : vector<64x384xf32>
    %c0_7 = arith.constant 0 : index
    %c0_8 = arith.constant 0 : index
    %c0_9 = arith.constant 0 : index
    %8 = vector.load %arg4[%c0_7, %c0_8, %c0_9] : memref<3x128x384xf32, #tpu.memory_space<vmem>>, vector<1x128x384xf32>
    %9 = vector.shape_cast %8 : vector<1x128x384xf32> to vector<128x384xf32>
    %c0_10 = arith.constant 0 : index
    %c0_11 = arith.constant 0 : index
    %c0_12 = arith.constant 0 : index
    %10 = vector.load %arg6[%c0_10, %c0_11, %c0_12] : memref<3x1x384xf32, #tpu.memory_space<vmem>>, vector<1x1x384xf32>
    %11 = vector.shape_cast %10 : vector<1x1x384xf32> to vector<1x384xf32>
    %12 = vector.shape_cast %11 : vector<1x384xf32> to vector<1x384xf32>
    %13 = vector.broadcast %12 : vector<1x384xf32> to vector<8x384xf32>
    %cst_13 = arith.constant 0.000000e+00 : f32
    %14 = vector.broadcast %cst_13 : f32 to vector<8x128xf32>
    %15 = vector.extract_strided_slice %7 {offsets = [0, 0], sizes = [8, 384], strides = [1, 1]} : vector<64x384xf32> to vector<8x384xf32>
    %cst_14 = arith.constant dense<0.000000e+00> : vector<8x384xf32>
    %16 = tpu.matmul %14, %9, %cst_14 {dimension_numbers = #tpu.dot_dimension_numbers<[1], [0], [0], [1], [0, 0, 1, 1], [], []>} : vector<8x128xf32>, vector<128x384xf32>, vector<8x384xf32> -> vector<8x384xf32>
    %17 = arith.addf %16, %13 : vector<8x384xf32>
    %18 = vector.extract_strided_slice %15 {offsets = [0, 0], sizes = [8, 128], strides = [1, 1]} : vector<8x384xf32> to vector<8x128xf32>
    %19 = vector.extract_strided_slice %17 {offsets = [0, 0], sizes = [8, 128], strides = [1, 1]} : vector<8x384xf32> to vector<8x128xf32>
    %20 = arith.addf %18, %19 : vector<8x128xf32>
    %21 = arith.negf %20 : vector<8x128xf32>
    %22 = math.exp %21 : vector<8x128xf32>
    %cst_15 = arith.constant 1.000000e+00 : f32
    %23 = vector.broadcast %cst_15 : f32 to vector<8x128xf32>
    %24 = arith.addf %23, %22 : vector<8x128xf32>
    %25 = arith.divf %23, %24 : vector<8x128xf32>
    %26 = vector.extract_strided_slice %15 {offsets = [0, 128], sizes = [8, 128], strides = [1, 1]} : vector<8x384xf32> to vector<8x128xf32>
    %27 = vector.extract_strided_slice %17 {offsets = [0, 128], sizes = [8, 128], strides = [1, 1]} : vector<8x384xf32> to vector<8x128xf32>
    %28 = arith.addf %26, %27 : vector<8x128xf32>
    %29 = arith.negf %28 : vector<8x128xf32>
    %30 = math.exp %29 : vector<8x128xf32>
    %cst_16 = arith.constant 1.000000e+00 : f32
    %31 = vector.broadcast %cst_16 : f32 to vector<8x128xf32>
    %32 = arith.addf %31, %30 : vector<8x128xf32>
    %33 = arith.divf %31, %32 : vector<8x128xf32>
    %34 = vector.extract_strided_slice %15 {offsets = [0, 256], sizes = [8, 128], strides = [1, 1]} : vector<8x384xf32> to vector<8x128xf32>
    %35 = vector.extract_strided_slice %17 {offsets = [0, 256], sizes = [8, 128], strides = [1, 1]} : vector<8x384xf32> to vector<8x128xf32>
    %36 = arith.mulf %25, %35 : vector<8x128xf32>
    %37 = arith.addf %34, %36 : vector<8x128xf32>
    %38 = math.tanh %37 : vector<8x128xf32>
    %cst_17 = arith.constant 1.000000e+00 : f32
    %39 = vector.broadcast %cst_17 : f32 to vector<8x128xf32>
    %40 = arith.subf %39, %33 : vector<8x128xf32>
    %41 = arith.mulf %40, %38 : vector<8x128xf32>
    %42 = arith.mulf %33, %14 : vector<8x128xf32>
    %43 = arith.addf %41, %42 : vector<8x128xf32>
    %c0_18 = arith.constant 0 : index
    %c0_19 = arith.constant 0 : index
    %c0_20 = arith.constant 0 : index
    %44 = vector.load %arg10[%c0_18, %c0_19, %c0_20] : memref<8x8x128xf32, #tpu.memory_space<vmem>>, vector<1x8x128xf32>
    %45 = vector.shape_cast %44 : vector<1x8x128xf32> to vector<8x128xf32>
    %46 = vector.shape_cast %43 : vector<8x128xf32> to vector<1x8x128xf32>
    tpu.vector_store %arg10[%c0_18, %c0_19, %c0_20], %46 {strides = array<i32>} : memref<8x8x128xf32, #tpu.memory_space<vmem>>, vector<1x8x128xf32>,
    %47 = vector.extract_strided_slice %7 {offsets = [8, 0], sizes = [8, 384], strides = [1, 1]} : vector<64x384xf32> to vector<8x384xf32>
    %cst_21 = arith.constant dense<0.000000e+00> : vector<8x384xf32>
    %48 = tpu.matmul %43, %9, %cst_21 {dimension_numbers = #tpu.dot_dimension_numbers<[1], [0], [0], [1], [0, 0, 1, 1], [], []>} : vector<8x128xf32>, vector<128x384xf32>, vector<8x384xf32> -> vector<8x384xf32>
    %49 = arith.addf %48, %13 : vector<8x384xf32>
    %50 = vector.extract_strided_slice %47 {offsets = [0, 0], sizes = [8, 128], strides = [1, 1]} : vector<8x384xf32> to vector<8x128xf32>
    %51 = vector.extract_strided_slice %49 {offsets = [0, 0], sizes = [8, 128], strides = [1, 1]} : vector<8x384xf32> to vector<8x128xf32>
    %52 = arith.addf %50, %51 : vector<8x128xf32>
    %53 = arith.negf %52 : vector<8x128xf32>
    %54 = math.exp %53 : vector<8x128xf32>
    %cst_22 = arith.constant 1.000000e+00 : f32
    %55 = vector.broadcast %cst_22 : f32 to vector<8x128xf32>
    %56 = arith.addf %55, %54 : vector<8x128xf32>
    %57 = arith.divf %55, %56 : vector<8x128xf32>
    %58 = vector.extract_strided_slice %47 {offsets = [0, 128], sizes = [8, 128], strides = [1, 1]} : vector<8x384xf32> to vector<8x128xf32>
    %59 = vector.extract_strided_slice %49 {offsets = [0, 128], sizes = [8, 128], strides = [1, 1]} : vector<8x384xf32> to vector<8x128xf32>
    %60 = arith.addf %58, %59 : vector<8x128xf32>
    %61 = arith.negf %60 : vector<8x128xf32>
    %62 = math.exp %61 : vector<8x128xf32>
    %cst_23 = arith.constant 1.000000e+00 : f32
    %63 = vector.broadcast %cst_23 : f32 to vector<8x128xf32>
    %64 = arith.addf %63, %62 : vector<8x128xf32>
    %65 = arith.divf %63, %64 : vector<8x128xf32>
    %66 = vector.extract_strided_slice %47 {offsets = [0, 256], sizes = [8, 128], strides = [1, 1]} : vector<8x384xf32> to vector<8x128xf32>
    %67 = vector.extract_strided_slice %49 {offsets = [0, 256], sizes = [8, 128], strides = [1, 1]} : vector<8x384xf32> to vector<8x128xf32>
    %68 = arith.mulf %57, %67 : vector<8x128xf32>
    %69 = arith.addf %66, %68 : vector<8x128xf32>
    %70 = math.tanh %69 : vector<8x128xf32>
    %cst_24 = arith.constant 1.000000e+00 : f32
    %71 = vector.broadcast %cst_24 : f32 to vector<8x128xf32>
    %72 = arith.subf %71, %65 : vector<8x128xf32>
    %73 = arith.mulf %72, %70 : vector<8x128xf32>
    %74 = arith.mulf %65, %43 : vector<8x128xf32>
    %75 = arith.addf %73, %74 : vector<8x128xf32>
    %c1 = arith.constant 1 : index
    %c0_25 = arith.constant 0 : index
    %c0_26 = arith.constant 0 : index
    %76 = vector.load %arg10[%c1, %c0_25, %c0_26] : memref<8x8x128xf32, #tpu.memory_space<vmem>>, vector<1x8x128xf32>
    %77 = vector.shape_cast %76 : vector<1x8x128xf32> to vector<8x128xf32>
    %78 = vector.shape_cast %75 : vector<8x128xf32> to vector<1x8x128xf32>
    tpu.vector_store %arg10[%c1, %c0_25, %c0_26], %78 {strides = array<i32>} : memref<8x8x128xf32, #tpu.memory_space<vmem>>, vector<1x8x128xf32>,
    %79 = vector.extract_strided_slice %7 {offsets = [16, 0], sizes = [8, 384], strides = [1, 1]} : vector<64x384xf32> to vector<8x384xf32>
    %cst_27 = arith.constant dense<0.000000e+00> : vector<8x384xf32>
    %80 = tpu.matmul %75, %9, %cst_27 {dimension_numbers = #tpu.dot_dimension_numbers<[1], [0], [0], [1], [0, 0, 1, 1], [], []>} : vector<8x128xf32>, vector<128x384xf32>, vector<8x384xf32> -> vector<8x384xf32>
    %81 = arith.addf %80, %13 : vector<8x384xf32>
    %82 = vector.extract_strided_slice %79 {offsets = [0, 0], sizes = [8, 128], strides = [1, 1]} : vector<8x384xf32> to vector<8x128xf32>
    %83 = vector.extract_strided_slice %81 {offsets = [0, 0], sizes = [8, 128], strides = [1, 1]} : vector<8x384xf32> to vector<8x128xf32>
    %84 = arith.addf %82, %83 : vector<8x128xf32>
    %85 = arith.negf %84 : vector<8x128xf32>
    %86 = math.exp %85 : vector<8x128xf32>
    %cst_28 = arith.constant 1.000000e+00 : f32
    %87 = vector.broadcast %cst_28 : f32 to vector<8x128xf32>
    %88 = arith.addf %87, %86 : vector<8x128xf32>
    %89 = arith.divf %87, %88 : vector<8x128xf32>
    %90 = vector.extract_strided_slice %79 {offsets = [0, 128], sizes = [8, 128], strides = [1, 1]} : vector<8x384xf32> to vector<8x128xf32>
    %91 = vector.extract_strided_slice %81 {offsets = [0, 128], sizes = [8, 128], strides = [1, 1]} : vector<8x384xf32> to vector<8x128xf32>
    %92 = arith.addf %90, %91 : vector<8x128xf32>
    %93 = arith.negf %92 : vector<8x128xf32>
    %94 = math.exp %93 : vector<8x128xf32>
    %cst_29 = arith.constant 1.000000e+00 : f32
    %95 = vector.broadcast %cst_29 : f32 to vector<8x128xf32>
    %96 = arith.addf %95, %94 : vector<8x128xf32>
    %97 = arith.divf %95, %96 : vector<8x128xf32>
    %98 = vector.extract_strided_slice %79 {offsets = [0, 256], sizes = [8, 128], strides = [1, 1]} : vector<8x384xf32> to vector<8x128xf32>
    %99 = vector.extract_strided_slice %81 {offsets = [0, 256], sizes = [8, 128], strides = [1, 1]} : vector<8x384xf32> to vector<8x128xf32>
    %100 = arith.mulf %89, %99 : vector<8x128xf32>
    %101 = arith.addf %98, %100 : vector<8x128xf32>
    %102 = math.tanh %101 : vector<8x128xf32>
    %cst_30 = arith.constant 1.000000e+00 : f32
    %103 = vector.broadcast %cst_30 : f32 to vector<8x128xf32>
    %104 = arith.subf %103, %97 : vector<8x128xf32>
    %105 = arith.mulf %104, %102 : vector<8x128xf32>
    %106 = arith.mulf %97, %75 : vector<8x128xf32>
    %107 = arith.addf %105, %106 : vector<8x128xf32>
    %c2 = arith.constant 2 : index
    %c0_31 = arith.constant 0 : index
    %c0_32 = arith.constant 0 : index
    %108 = vector.load %arg10[%c2, %c0_31, %c0_32] : memref<8x8x128xf32, #tpu.memory_space<vmem>>, vector<1x8x128xf32>
    %109 = vector.shape_cast %108 : vector<1x8x128xf32> to vector<8x128xf32>
    %110 = vector.shape_cast %107 : vector<8x128xf32> to vector<1x8x128xf32>
    tpu.vector_store %arg10[%c2, %c0_31, %c0_32], %110 {strides = array<i32>} : memref<8x8x128xf32, #tpu.memory_space<vmem>>, vector<1x8x128xf32>,
    %111 = vector.extract_strided_slice %7 {offsets = [24, 0], sizes = [8, 384], strides = [1, 1]} : vector<64x384xf32> to vector<8x384xf32>
    %cst_33 = arith.constant dense<0.000000e+00> : vector<8x384xf32>
    %112 = tpu.matmul %107, %9, %cst_33 {dimension_numbers = #tpu.dot_dimension_numbers<[1], [0], [0], [1], [0, 0, 1, 1], [], []>} : vector<8x128xf32>, vector<128x384xf32>, vector<8x384xf32> -> vector<8x384xf32>
    %113 = arith.addf %112, %13 : vector<8x384xf32>
    %114 = vector.extract_strided_slice %111 {offsets = [0, 0], sizes = [8, 128], strides = [1, 1]} : vector<8x384xf32> to vector<8x128xf32>
    %115 = vector.extract_strided_slice %113 {offsets = [0, 0], sizes = [8, 128], strides = [1, 1]} : vector<8x384xf32> to vector<8x128xf32>
    %116 = arith.addf %114, %115 : vector<8x128xf32>
    %117 = arith.negf %116 : vector<8x128xf32>
    %118 = math.exp %117 : vector<8x128xf32>
    %cst_34 = arith.constant 1.000000e+00 : f32
    %119 = vector.broadcast %cst_34 : f32 to vector<8x128xf32>
    %120 = arith.addf %119, %118 : vector<8x128xf32>
    %121 = arith.divf %119, %120 : vector<8x128xf32>
    %122 = vector.extract_strided_slice %111 {offsets = [0, 128], sizes = [8, 128], strides = [1, 1]} : vector<8x384xf32> to vector<8x128xf32>
    %123 = vector.extract_strided_slice %113 {offsets = [0, 128], sizes = [8, 128], strides = [1, 1]} : vector<8x384xf32> to vector<8x128xf32>
    %124 = arith.addf %122, %123 : vector<8x128xf32>
    %125 = arith.negf %124 : vector<8x128xf32>
    %126 = math.exp %125 : vector<8x128xf32>
    %cst_35 = arith.constant 1.000000e+00 : f32
    %127 = vector.broadcast %cst_35 : f32 to vector<8x128xf32>
    %128 = arith.addf %127, %126 : vector<8x128xf32>
    %129 = arith.divf %127, %128 : vector<8x128xf32>
    %130 = vector.extract_strided_slice %111 {offsets = [0, 256], sizes = [8, 128], strides = [1, 1]} : vector<8x384xf32> to vector<8x128xf32>
    %131 = vector.extract_strided_slice %113 {offsets = [0, 256], sizes = [8, 128], strides = [1, 1]} : vector<8x384xf32> to vector<8x128xf32>
    %132 = arith.mulf %121, %131 : vector<8x128xf32>
    %133 = arith.addf %130, %132 : vector<8x128xf32>
    %134 = math.tanh %133 : vector<8x128xf32>
    %cst_36 = arith.constant 1.000000e+00 : f32
    %135 = vector.broadcast %cst_36 : f32 to vector<8x128xf32>
    %136 = arith.subf %135, %129 : vector<8x128xf32>
    %137 = arith.mulf %136, %134 : vector<8x128xf32>
    %138 = arith.mulf %129, %107 : vector<8x128xf32>
    %139 = arith.addf %137, %138 : vector<8x128xf32>
    %c3 = arith.constant 3 : index
    %c0_37 = arith.constant 0 : index
    %c0_38 = arith.constant 0 : index
    %140 = vector.load %arg10[%c3, %c0_37, %c0_38] : memref<8x8x128xf32, #tpu.memory_space<vmem>>, vector<1x8x128xf32>
    %141 = vector.shape_cast %140 : vector<1x8x128xf32> to vector<8x128xf32>
    %142 = vector.shape_cast %139 : vector<8x128xf32> to vector<1x8x128xf32>
    tpu.vector_store %arg10[%c3, %c0_37, %c0_38], %142 {strides = array<i32>} : memref<8x8x128xf32, #tpu.memory_space<vmem>>, vector<1x8x128xf32>,
    %143 = vector.extract_strided_slice %7 {offsets = [32, 0], sizes = [8, 384], strides = [1, 1]} : vector<64x384xf32> to vector<8x384xf32>
    %cst_39 = arith.constant dense<0.000000e+00> : vector<8x384xf32>
    %144 = tpu.matmul %139, %9, %cst_39 {dimension_numbers = #tpu.dot_dimension_numbers<[1], [0], [0], [1], [0, 0, 1, 1], [], []>} : vector<8x128xf32>, vector<128x384xf32>, vector<8x384xf32> -> vector<8x384xf32>
    %145 = arith.addf %144, %13 : vector<8x384xf32>
    %146 = vector.extract_strided_slice %143 {offsets = [0, 0], sizes = [8, 128], strides = [1, 1]} : vector<8x384xf32> to vector<8x128xf32>
    %147 = vector.extract_strided_slice %145 {offsets = [0, 0], sizes = [8, 128], strides = [1, 1]} : vector<8x384xf32> to vector<8x128xf32>
    %148 = arith.addf %146, %147 : vector<8x128xf32>
    %149 = arith.negf %148 : vector<8x128xf32>
    %150 = math.exp %149 : vector<8x128xf32>
    %cst_40 = arith.constant 1.000000e+00 : f32
    %151 = vector.broadcast %cst_40 : f32 to vector<8x128xf32>
    %152 = arith.addf %151, %150 : vector<8x128xf32>
    %153 = arith.divf %151, %152 : vector<8x128xf32>
    %154 = vector.extract_strided_slice %143 {offsets = [0, 128], sizes = [8, 128], strides = [1, 1]} : vector<8x384xf32> to vector<8x128xf32>
    %155 = vector.extract_strided_slice %145 {offsets = [0, 128], sizes = [8, 128], strides = [1, 1]} : vector<8x384xf32> to vector<8x128xf32>
    %156 = arith.addf %154, %155 : vector<8x128xf32>
    %157 = arith.negf %156 : vector<8x128xf32>
    %158 = math.exp %157 : vector<8x128xf32>
    %cst_41 = arith.constant 1.000000e+00 : f32
    %159 = vector.broadcast %cst_41 : f32 to vector<8x128xf32>
    %160 = arith.addf %159, %158 : vector<8x128xf32>
    %161 = arith.divf %159, %160 : vector<8x128xf32>
    %162 = vector.extract_strided_slice %143 {offsets = [0, 256], sizes = [8, 128], strides = [1, 1]} : vector<8x384xf32> to vector<8x128xf32>
    %163 = vector.extract_strided_slice %145 {offsets = [0, 256], sizes = [8, 128], strides = [1, 1]} : vector<8x384xf32> to vector<8x128xf32>
    %164 = arith.mulf %153, %163 : vector<8x128xf32>
    %165 = arith.addf %162, %164 : vector<8x128xf32>
    %166 = math.tanh %165 : vector<8x128xf32>
    %cst_42 = arith.constant 1.000000e+00 : f32
    %167 = vector.broadcast %cst_42 : f32 to vector<8x128xf32>
    %168 = arith.subf %167, %161 : vector<8x128xf32>
    %169 = arith.mulf %168, %166 : vector<8x128xf32>
    %170 = arith.mulf %161, %139 : vector<8x128xf32>
    %171 = arith.addf %169, %170 : vector<8x128xf32>
    %c4 = arith.constant 4 : index
    %c0_43 = arith.constant 0 : index
    %c0_44 = arith.constant 0 : index
    %172 = vector.load %arg10[%c4, %c0_43, %c0_44] : memref<8x8x128xf32, #tpu.memory_space<vmem>>, vector<1x8x128xf32>
    %173 = vector.shape_cast %172 : vector<1x8x128xf32> to vector<8x128xf32>
    %174 = vector.shape_cast %171 : vector<8x128xf32> to vector<1x8x128xf32>
    tpu.vector_store %arg10[%c4, %c0_43, %c0_44], %174 {strides = array<i32>} : memref<8x8x128xf32, #tpu.memory_space<vmem>>, vector<1x8x128xf32>,
    %175 = vector.extract_strided_slice %7 {offsets = [40, 0], sizes = [8, 384], strides = [1, 1]} : vector<64x384xf32> to vector<8x384xf32>
    %cst_45 = arith.constant dense<0.000000e+00> : vector<8x384xf32>
    %176 = tpu.matmul %171, %9, %cst_45 {dimension_numbers = #tpu.dot_dimension_numbers<[1], [0], [0], [1], [0, 0, 1, 1], [], []>} : vector<8x128xf32>, vector<128x384xf32>, vector<8x384xf32> -> vector<8x384xf32>
    %177 = arith.addf %176, %13 : vector<8x384xf32>
    %178 = vector.extract_strided_slice %175 {offsets = [0, 0], sizes = [8, 128], strides = [1, 1]} : vector<8x384xf32> to vector<8x128xf32>
    %179 = vector.extract_strided_slice %177 {offsets = [0, 0], sizes = [8, 128], strides = [1, 1]} : vector<8x384xf32> to vector<8x128xf32>
    %180 = arith.addf %178, %179 : vector<8x128xf32>
    %181 = arith.negf %180 : vector<8x128xf32>
    %182 = math.exp %181 : vector<8x128xf32>
    %cst_46 = arith.constant 1.000000e+00 : f32
    %183 = vector.broadcast %cst_46 : f32 to vector<8x128xf32>
    %184 = arith.addf %183, %182 : vector<8x128xf32>
    %185 = arith.divf %183, %184 : vector<8x128xf32>
    %186 = vector.extract_strided_slice %175 {offsets = [0, 128], sizes = [8, 128], strides = [1, 1]} : vector<8x384xf32> to vector<8x128xf32>
    %187 = vector.extract_strided_slice %177 {offsets = [0, 128], sizes = [8, 128], strides = [1, 1]} : vector<8x384xf32> to vector<8x128xf32>
    %188 = arith.addf %186, %187 : vector<8x128xf32>
    %189 = arith.negf %188 : vector<8x128xf32>
    %190 = math.exp %189 : vector<8x128xf32>
    %cst_47 = arith.constant 1.000000e+00 : f32
    %191 = vector.broadcast %cst_47 : f32 to vector<8x128xf32>
    %192 = arith.addf %191, %190 : vector<8x128xf32>
    %193 = arith.divf %191, %192 : vector<8x128xf32>
    %194 = vector.extract_strided_slice %175 {offsets = [0, 256], sizes = [8, 128], strides = [1, 1]} : vector<8x384xf32> to vector<8x128xf32>
    %195 = vector.extract_strided_slice %177 {offsets = [0, 256], sizes = [8, 128], strides = [1, 1]} : vector<8x384xf32> to vector<8x128xf32>
    %196 = arith.mulf %185, %195 : vector<8x128xf32>
    %197 = arith.addf %194, %196 : vector<8x128xf32>
    %198 = math.tanh %197 : vector<8x128xf32>
    %cst_48 = arith.constant 1.000000e+00 : f32
    %199 = vector.broadcast %cst_48 : f32 to vector<8x128xf32>
    %200 = arith.subf %199, %193 : vector<8x128xf32>
    %201 = arith.mulf %200, %198 : vector<8x128xf32>
    %202 = arith.mulf %193, %171 : vector<8x128xf32>
    %203 = arith.addf %201, %202 : vector<8x128xf32>
    %c5 = arith.constant 5 : index
    %c0_49 = arith.constant 0 : index
    %c0_50 = arith.constant 0 : index
    %204 = vector.load %arg10[%c5, %c0_49, %c0_50] : memref<8x8x128xf32, #tpu.memory_space<vmem>>, vector<1x8x128xf32>
    %205 = vector.shape_cast %204 : vector<1x8x128xf32> to vector<8x128xf32>
    %206 = vector.shape_cast %203 : vector<8x128xf32> to vector<1x8x128xf32>
    tpu.vector_store %arg10[%c5, %c0_49, %c0_50], %206 {strides = array<i32>} : memref<8x8x128xf32, #tpu.memory_space<vmem>>, vector<1x8x128xf32>,
    %207 = vector.extract_strided_slice %7 {offsets = [48, 0], sizes = [8, 384], strides = [1, 1]} : vector<64x384xf32> to vector<8x384xf32>
    %cst_51 = arith.constant dense<0.000000e+00> : vector<8x384xf32>
    %208 = tpu.matmul %203, %9, %cst_51 {dimension_numbers = #tpu.dot_dimension_numbers<[1], [0], [0], [1], [0, 0, 1, 1], [], []>} : vector<8x128xf32>, vector<128x384xf32>, vector<8x384xf32> -> vector<8x384xf32>
    %209 = arith.addf %208, %13 : vector<8x384xf32>
    %210 = vector.extract_strided_slice %207 {offsets = [0, 0], sizes = [8, 128], strides = [1, 1]} : vector<8x384xf32> to vector<8x128xf32>
    %211 = vector.extract_strided_slice %209 {offsets = [0, 0], sizes = [8, 128], strides = [1, 1]} : vector<8x384xf32> to vector<8x128xf32>
    %212 = arith.addf %210, %211 : vector<8x128xf32>
    %213 = arith.negf %212 : vector<8x128xf32>
    %214 = math.exp %213 : vector<8x128xf32>
    %cst_52 = arith.constant 1.000000e+00 : f32
    %215 = vector.broadcast %cst_52 : f32 to vector<8x128xf32>
    %216 = arith.addf %215, %214 : vector<8x128xf32>
    %217 = arith.divf %215, %216 : vector<8x128xf32>
    %218 = vector.extract_strided_slice %207 {offsets = [0, 128], sizes = [8, 128], strides = [1, 1]} : vector<8x384xf32> to vector<8x128xf32>
    %219 = vector.extract_strided_slice %209 {offsets = [0, 128], sizes = [8, 128], strides = [1, 1]} : vector<8x384xf32> to vector<8x128xf32>
    %220 = arith.addf %218, %219 : vector<8x128xf32>
    %221 = arith.negf %220 : vector<8x128xf32>
    %222 = math.exp %221 : vector<8x128xf32>
    %cst_53 = arith.constant 1.000000e+00 : f32
    %223 = vector.broadcast %cst_53 : f32 to vector<8x128xf32>
    %224 = arith.addf %223, %222 : vector<8x128xf32>
    %225 = arith.divf %223, %224 : vector<8x128xf32>
    %226 = vector.extract_strided_slice %207 {offsets = [0, 256], sizes = [8, 128], strides = [1, 1]} : vector<8x384xf32> to vector<8x128xf32>
    %227 = vector.extract_strided_slice %209 {offsets = [0, 256], sizes = [8, 128], strides = [1, 1]} : vector<8x384xf32> to vector<8x128xf32>
    %228 = arith.mulf %217, %227 : vector<8x128xf32>
    %229 = arith.addf %226, %228 : vector<8x128xf32>
    %230 = math.tanh %229 : vector<8x128xf32>
    %cst_54 = arith.constant 1.000000e+00 : f32
    %231 = vector.broadcast %cst_54 : f32 to vector<8x128xf32>
    %232 = arith.subf %231, %225 : vector<8x128xf32>
    %233 = arith.mulf %232, %230 : vector<8x128xf32>
    %234 = arith.mulf %225, %203 : vector<8x128xf32>
    %235 = arith.addf %233, %234 : vector<8x128xf32>
    %c6 = arith.constant 6 : index
    %c0_55 = arith.constant 0 : index
    %c0_56 = arith.constant 0 : index
    %236 = vector.load %arg10[%c6, %c0_55, %c0_56] : memref<8x8x128xf32, #tpu.memory_space<vmem>>, vector<1x8x128xf32>
    %237 = vector.shape_cast %236 : vector<1x8x128xf32> to vector<8x128xf32>
    %238 = vector.shape_cast %235 : vector<8x128xf32> to vector<1x8x128xf32>
    tpu.vector_store %arg10[%c6, %c0_55, %c0_56], %238 {strides = array<i32>} : memref<8x8x128xf32, #tpu.memory_space<vmem>>, vector<1x8x128xf32>,
    %239 = vector.extract_strided_slice %7 {offsets = [56, 0], sizes = [8, 384], strides = [1, 1]} : vector<64x384xf32> to vector<8x384xf32>
    %cst_57 = arith.constant dense<0.000000e+00> : vector<8x384xf32>
    %240 = tpu.matmul %235, %9, %cst_57 {dimension_numbers = #tpu.dot_dimension_numbers<[1], [0], [0], [1], [0, 0, 1, 1], [], []>} : vector<8x128xf32>, vector<128x384xf32>, vector<8x384xf32> -> vector<8x384xf32>
    %241 = arith.addf %240, %13 : vector<8x384xf32>
    %242 = vector.extract_strided_slice %239 {offsets = [0, 0], sizes = [8, 128], strides = [1, 1]} : vector<8x384xf32> to vector<8x128xf32>
    %243 = vector.extract_strided_slice %241 {offsets = [0, 0], sizes = [8, 128], strides = [1, 1]} : vector<8x384xf32> to vector<8x128xf32>
    %244 = arith.addf %242, %243 : vector<8x128xf32>
    %245 = arith.negf %244 : vector<8x128xf32>
    %246 = math.exp %245 : vector<8x128xf32>
    %cst_58 = arith.constant 1.000000e+00 : f32
    %247 = vector.broadcast %cst_58 : f32 to vector<8x128xf32>
    %248 = arith.addf %247, %246 : vector<8x128xf32>
    %249 = arith.divf %247, %248 : vector<8x128xf32>
    %250 = vector.extract_strided_slice %239 {offsets = [0, 128], sizes = [8, 128], strides = [1, 1]} : vector<8x384xf32> to vector<8x128xf32>
    %251 = vector.extract_strided_slice %241 {offsets = [0, 128], sizes = [8, 128], strides = [1, 1]} : vector<8x384xf32> to vector<8x128xf32>
    %252 = arith.addf %250, %251 : vector<8x128xf32>
    %253 = arith.negf %252 : vector<8x128xf32>
    %254 = math.exp %253 : vector<8x128xf32>
    %cst_59 = arith.constant 1.000000e+00 : f32
    %255 = vector.broadcast %cst_59 : f32 to vector<8x128xf32>
    %256 = arith.addf %255, %254 : vector<8x128xf32>
    %257 = arith.divf %255, %256 : vector<8x128xf32>
    %258 = vector.extract_strided_slice %239 {offsets = [0, 256], sizes = [8, 128], strides = [1, 1]} : vector<8x384xf32> to vector<8x128xf32>
    %259 = vector.extract_strided_slice %241 {offsets = [0, 256], sizes = [8, 128], strides = [1, 1]} : vector<8x384xf32> to vector<8x128xf32>
    %260 = arith.mulf %249, %259 : vector<8x128xf32>
    %261 = arith.addf %258, %260 : vector<8x128xf32>
    %262 = math.tanh %261 : vector<8x128xf32>
    %cst_60 = arith.constant 1.000000e+00 : f32
    %263 = vector.broadcast %cst_60 : f32 to vector<8x128xf32>
    %264 = arith.subf %263, %257 : vector<8x128xf32>
    %265 = arith.mulf %264, %262 : vector<8x128xf32>
    %266 = arith.mulf %257, %235 : vector<8x128xf32>
    %267 = arith.addf %265, %266 : vector<8x128xf32>
    %c7 = arith.constant 7 : index
    %c0_61 = arith.constant 0 : index
    %c0_62 = arith.constant 0 : index
    %268 = vector.load %arg10[%c7, %c0_61, %c0_62] : memref<8x8x128xf32, #tpu.memory_space<vmem>>, vector<1x8x128xf32>
    %269 = vector.shape_cast %268 : vector<1x8x128xf32> to vector<8x128xf32>
    %270 = vector.shape_cast %267 : vector<8x128xf32> to vector<1x8x128xf32>
    tpu.vector_store %arg10[%c7, %c0_61, %c0_62], %270 {strides = array<i32>} : memref<8x8x128xf32, #tpu.memory_space<vmem>>, vector<1x8x128xf32>,
    %c0_63 = arith.constant 0 : index
    %c0_64 = arith.constant 0 : index
    %c0_65 = arith.constant 0 : index
    %271 = vector.load %arg10[%c0_63, %c0_64, %c0_65] : memref<8x8x128xf32, #tpu.memory_space<vmem>>, vector<8x8x128xf32>
    %272 = vector.shape_cast %271 : vector<8x8x128xf32> to vector<64x128xf32>
    %c0_66 = arith.constant 0 : index
    %c0_67 = arith.constant 0 : index
    %c0_68 = arith.constant 0 : index
    %273 = vector.load %arg3[%c0_66, %c0_67, %c0_68] : memref<2x128x384xf32, #tpu.memory_space<vmem>>, vector<1x128x384xf32>
    %274 = vector.shape_cast %273 : vector<1x128x384xf32> to vector<128x384xf32>
    %cst_69 = arith.constant dense<0.000000e+00> : vector<64x384xf32>
    %275 = tpu.matmul %272, %274, %cst_69 {dimension_numbers = #tpu.dot_dimension_numbers<[1], [0], [0], [1], [0, 0, 1, 1], [], []>} : vector<64x128xf32>, vector<128x384xf32>, vector<64x384xf32> -> vector<64x384xf32>
    %c1_70 = arith.constant 1 : index
    %c0_71 = arith.constant 0 : index
    %c0_72 = arith.constant 0 : index
    %276 = vector.load %arg5[%c1_70, %c0_71, %c0_72] : memref<3x1x384xf32, #tpu.memory_space<vmem>>, vector<1x1x384xf32>
    %277 = vector.shape_cast %276 : vector<1x1x384xf32> to vector<1x384xf32>
    %278 = vector.broadcast %277 : vector<1x384xf32> to vector<64x384xf32>
    %279 = arith.addf %275, %278 : vector<64x384xf32>
    %c1_73 = arith.constant 1 : index
    %c0_74 = arith.constant 0 : index
    %c0_75 = arith.constant 0 : index
    %280 = vector.load %arg4[%c1_73, %c0_74, %c0_75] : memref<3x128x384xf32, #tpu.memory_space<vmem>>, vector<1x128x384xf32>
    %281 = vector.shape_cast %280 : vector<1x128x384xf32> to vector<128x384xf32>
    %c1_76 = arith.constant 1 : index
    %c0_77 = arith.constant 0 : index
    %c0_78 = arith.constant 0 : index
    %282 = vector.load %arg6[%c1_76, %c0_77, %c0_78] : memref<3x1x384xf32, #tpu.memory_space<vmem>>, vector<1x1x384xf32>
    %283 = vector.shape_cast %282 : vector<1x1x384xf32> to vector<1x384xf32>
    %284 = vector.shape_cast %283 : vector<1x384xf32> to vector<1x384xf32>
    %285 = vector.broadcast %284 : vector<1x384xf32> to vector<8x384xf32>
    %cst_79 = arith.constant 0.000000e+00 : f32
    %286 = vector.broadcast %cst_79 : f32 to vector<8x128xf32>
    %287 = vector.extract_strided_slice %279 {offsets = [0, 0], sizes = [8, 384], strides = [1, 1]} : vector<64x384xf32> to vector<8x384xf32>
    %cst_80 = arith.constant dense<0.000000e+00> : vector<8x384xf32>
    %288 = tpu.matmul %286, %281, %cst_80 {dimension_numbers = #tpu.dot_dimension_numbers<[1], [0], [0], [1], [0, 0, 1, 1], [], []>} : vector<8x128xf32>, vector<128x384xf32>, vector<8x384xf32> -> vector<8x384xf32>
    %289 = arith.addf %288, %285 : vector<8x384xf32>
    %290 = vector.extract_strided_slice %287 {offsets = [0, 0], sizes = [8, 128], strides = [1, 1]} : vector<8x384xf32> to vector<8x128xf32>
    %291 = vector.extract_strided_slice %289 {offsets = [0, 0], sizes = [8, 128], strides = [1, 1]} : vector<8x384xf32> to vector<8x128xf32>
    %292 = arith.addf %290, %291 : vector<8x128xf32>
    %293 = arith.negf %292 : vector<8x128xf32>
    %294 = math.exp %293 : vector<8x128xf32>
    %cst_81 = arith.constant 1.000000e+00 : f32
    %295 = vector.broadcast %cst_81 : f32 to vector<8x128xf32>
    %296 = arith.addf %295, %294 : vector<8x128xf32>
    %297 = arith.divf %295, %296 : vector<8x128xf32>
    %298 = vector.extract_strided_slice %287 {offsets = [0, 128], sizes = [8, 128], strides = [1, 1]} : vector<8x384xf32> to vector<8x128xf32>
    %299 = vector.extract_strided_slice %289 {offsets = [0, 128], sizes = [8, 128], strides = [1, 1]} : vector<8x384xf32> to vector<8x128xf32>
    %300 = arith.addf %298, %299 : vector<8x128xf32>
    %301 = arith.negf %300 : vector<8x128xf32>
    %302 = math.exp %301 : vector<8x128xf32>
    %cst_82 = arith.constant 1.000000e+00 : f32
    %303 = vector.broadcast %cst_82 : f32 to vector<8x128xf32>
    %304 = arith.addf %303, %302 : vector<8x128xf32>
    %305 = arith.divf %303, %304 : vector<8x128xf32>
    %306 = vector.extract_strided_slice %287 {offsets = [0, 256], sizes = [8, 128], strides = [1, 1]} : vector<8x384xf32> to vector<8x128xf32>
    %307 = vector.extract_strided_slice %289 {offsets = [0, 256], sizes = [8, 128], strides = [1, 1]} : vector<8x384xf32> to vector<8x128xf32>
    %308 = arith.mulf %297, %307 : vector<8x128xf32>
    %309 = arith.addf %306, %308 : vector<8x128xf32>
    %310 = math.tanh %309 : vector<8x128xf32>
    %cst_83 = arith.constant 1.000000e+00 : f32
    %311 = vector.broadcast %cst_83 : f32 to vector<8x128xf32>
    %312 = arith.subf %311, %305 : vector<8x128xf32>
    %313 = arith.mulf %312, %310 : vector<8x128xf32>
    %314 = arith.mulf %305, %286 : vector<8x128xf32>
    %315 = arith.addf %313, %314 : vector<8x128xf32>
    %c0_84 = arith.constant 0 : index
    %c0_85 = arith.constant 0 : index
    %c0_86 = arith.constant 0 : index
    %316 = vector.load %arg10[%c0_84, %c0_85, %c0_86] : memref<8x8x128xf32, #tpu.memory_space<vmem>>, vector<1x8x128xf32>
    %317 = vector.shape_cast %316 : vector<1x8x128xf32> to vector<8x128xf32>
    %318 = vector.shape_cast %315 : vector<8x128xf32> to vector<1x8x128xf32>
    tpu.vector_store %arg10[%c0_84, %c0_85, %c0_86], %318 {strides = array<i32>} : memref<8x8x128xf32, #tpu.memory_space<vmem>>, vector<1x8x128xf32>,
    %319 = vector.extract_strided_slice %279 {offsets = [8, 0], sizes = [8, 384], strides = [1, 1]} : vector<64x384xf32> to vector<8x384xf32>
    %cst_87 = arith.constant dense<0.000000e+00> : vector<8x384xf32>
    %320 = tpu.matmul %315, %281, %cst_87 {dimension_numbers = #tpu.dot_dimension_numbers<[1], [0], [0], [1], [0, 0, 1, 1], [], []>} : vector<8x128xf32>, vector<128x384xf32>, vector<8x384xf32> -> vector<8x384xf32>
    %321 = arith.addf %320, %285 : vector<8x384xf32>
    %322 = vector.extract_strided_slice %319 {offsets = [0, 0], sizes = [8, 128], strides = [1, 1]} : vector<8x384xf32> to vector<8x128xf32>
    %323 = vector.extract_strided_slice %321 {offsets = [0, 0], sizes = [8, 128], strides = [1, 1]} : vector<8x384xf32> to vector<8x128xf32>
    %324 = arith.addf %322, %323 : vector<8x128xf32>
    %325 = arith.negf %324 : vector<8x128xf32>
    %326 = math.exp %325 : vector<8x128xf32>
    %cst_88 = arith.constant 1.000000e+00 : f32
    %327 = vector.broadcast %cst_88 : f32 to vector<8x128xf32>
    %328 = arith.addf %327, %326 : vector<8x128xf32>
    %329 = arith.divf %327, %328 : vector<8x128xf32>
    %330 = vector.extract_strided_slice %319 {offsets = [0, 128], sizes = [8, 128], strides = [1, 1]} : vector<8x384xf32> to vector<8x128xf32>
    %331 = vector.extract_strided_slice %321 {offsets = [0, 128], sizes = [8, 128], strides = [1, 1]} : vector<8x384xf32> to vector<8x128xf32>
    %332 = arith.addf %330, %331 : vector<8x128xf32>
    %333 = arith.negf %332 : vector<8x128xf32>
    %334 = math.exp %333 : vector<8x128xf32>
    %cst_89 = arith.constant 1.000000e+00 : f32
    %335 = vector.broadcast %cst_89 : f32 to vector<8x128xf32>
    %336 = arith.addf %335, %334 : vector<8x128xf32>
    %337 = arith.divf %335, %336 : vector<8x128xf32>
    %338 = vector.extract_strided_slice %319 {offsets = [0, 256], sizes = [8, 128], strides = [1, 1]} : vector<8x384xf32> to vector<8x128xf32>
    %339 = vector.extract_strided_slice %321 {offsets = [0, 256], sizes = [8, 128], strides = [1, 1]} : vector<8x384xf32> to vector<8x128xf32>
    %340 = arith.mulf %329, %339 : vector<8x128xf32>
    %341 = arith.addf %338, %340 : vector<8x128xf32>
    %342 = math.tanh %341 : vector<8x128xf32>
    %cst_90 = arith.constant 1.000000e+00 : f32
    %343 = vector.broadcast %cst_90 : f32 to vector<8x128xf32>
    %344 = arith.subf %343, %337 : vector<8x128xf32>
    %345 = arith.mulf %344, %342 : vector<8x128xf32>
    %346 = arith.mulf %337, %315 : vector<8x128xf32>
    %347 = arith.addf %345, %346 : vector<8x128xf32>
    %c1_91 = arith.constant 1 : index
    %c0_92 = arith.constant 0 : index
    %c0_93 = arith.constant 0 : index
    %348 = vector.load %arg10[%c1_91, %c0_92, %c0_93] : memref<8x8x128xf32, #tpu.memory_space<vmem>>, vector<1x8x128xf32>
    %349 = vector.shape_cast %348 : vector<1x8x128xf32> to vector<8x128xf32>
    %350 = vector.shape_cast %347 : vector<8x128xf32> to vector<1x8x128xf32>
    tpu.vector_store %arg10[%c1_91, %c0_92, %c0_93], %350 {strides = array<i32>} : memref<8x8x128xf32, #tpu.memory_space<vmem>>, vector<1x8x128xf32>,
    %351 = vector.extract_strided_slice %279 {offsets = [16, 0], sizes = [8, 384], strides = [1, 1]} : vector<64x384xf32> to vector<8x384xf32>
    %cst_94 = arith.constant dense<0.000000e+00> : vector<8x384xf32>
    %352 = tpu.matmul %347, %281, %cst_94 {dimension_numbers = #tpu.dot_dimension_numbers<[1], [0], [0], [1], [0, 0, 1, 1], [], []>} : vector<8x128xf32>, vector<128x384xf32>, vector<8x384xf32> -> vector<8x384xf32>
    %353 = arith.addf %352, %285 : vector<8x384xf32>
    %354 = vector.extract_strided_slice %351 {offsets = [0, 0], sizes = [8, 128], strides = [1, 1]} : vector<8x384xf32> to vector<8x128xf32>
    %355 = vector.extract_strided_slice %353 {offsets = [0, 0], sizes = [8, 128], strides = [1, 1]} : vector<8x384xf32> to vector<8x128xf32>
    %356 = arith.addf %354, %355 : vector<8x128xf32>
    %357 = arith.negf %356 : vector<8x128xf32>
    %358 = math.exp %357 : vector<8x128xf32>
    %cst_95 = arith.constant 1.000000e+00 : f32
    %359 = vector.broadcast %cst_95 : f32 to vector<8x128xf32>
    %360 = arith.addf %359, %358 : vector<8x128xf32>
    %361 = arith.divf %359, %360 : vector<8x128xf32>
    %362 = vector.extract_strided_slice %351 {offsets = [0, 128], sizes = [8, 128], strides = [1, 1]} : vector<8x384xf32> to vector<8x128xf32>
    %363 = vector.extract_strided_slice %353 {offsets = [0, 128], sizes = [8, 128], strides = [1, 1]} : vector<8x384xf32> to vector<8x128xf32>
    %364 = arith.addf %362, %363 : vector<8x128xf32>
    %365 = arith.negf %364 : vector<8x128xf32>
    %366 = math.exp %365 : vector<8x128xf32>
    %cst_96 = arith.constant 1.000000e+00 : f32
    %367 = vector.broadcast %cst_96 : f32 to vector<8x128xf32>
    %368 = arith.addf %367, %366 : vector<8x128xf32>
    %369 = arith.divf %367, %368 : vector<8x128xf32>
    %370 = vector.extract_strided_slice %351 {offsets = [0, 256], sizes = [8, 128], strides = [1, 1]} : vector<8x384xf32> to vector<8x128xf32>
    %371 = vector.extract_strided_slice %353 {offsets = [0, 256], sizes = [8, 128], strides = [1, 1]} : vector<8x384xf32> to vector<8x128xf32>
    %372 = arith.mulf %361, %371 : vector<8x128xf32>
    %373 = arith.addf %370, %372 : vector<8x128xf32>
    %374 = math.tanh %373 : vector<8x128xf32>
    %cst_97 = arith.constant 1.000000e+00 : f32
    %375 = vector.broadcast %cst_97 : f32 to vector<8x128xf32>
    %376 = arith.subf %375, %369 : vector<8x128xf32>
    %377 = arith.mulf %376, %374 : vector<8x128xf32>
    %378 = arith.mulf %369, %347 : vector<8x128xf32>
    %379 = arith.addf %377, %378 : vector<8x128xf32>
    %c2_98 = arith.constant 2 : index
    %c0_99 = arith.constant 0 : index
    %c0_100 = arith.constant 0 : index
    %380 = vector.load %arg10[%c2_98, %c0_99, %c0_100] : memref<8x8x128xf32, #tpu.memory_space<vmem>>, vector<1x8x128xf32>
    %381 = vector.shape_cast %380 : vector<1x8x128xf32> to vector<8x128xf32>
    %382 = vector.shape_cast %379 : vector<8x128xf32> to vector<1x8x128xf32>
    tpu.vector_store %arg10[%c2_98, %c0_99, %c0_100], %382 {strides = array<i32>} : memref<8x8x128xf32, #tpu.memory_space<vmem>>, vector<1x8x128xf32>,
    %383 = vector.extract_strided_slice %279 {offsets = [24, 0], sizes = [8, 384], strides = [1, 1]} : vector<64x384xf32> to vector<8x384xf32>
    %cst_101 = arith.constant dense<0.000000e+00> : vector<8x384xf32>
    %384 = tpu.matmul %379, %281, %cst_101 {dimension_numbers = #tpu.dot_dimension_numbers<[1], [0], [0], [1], [0, 0, 1, 1], [], []>} : vector<8x128xf32>, vector<128x384xf32>, vector<8x384xf32> -> vector<8x384xf32>
    %385 = arith.addf %384, %285 : vector<8x384xf32>
    %386 = vector.extract_strided_slice %383 {offsets = [0, 0], sizes = [8, 128], strides = [1, 1]} : vector<8x384xf32> to vector<8x128xf32>
    %387 = vector.extract_strided_slice %385 {offsets = [0, 0], sizes = [8, 128], strides = [1, 1]} : vector<8x384xf32> to vector<8x128xf32>
    %388 = arith.addf %386, %387 : vector<8x128xf32>
    %389 = arith.negf %388 : vector<8x128xf32>
    %390 = math.exp %389 : vector<8x128xf32>
    %cst_102 = arith.constant 1.000000e+00 : f32
    %391 = vector.broadcast %cst_102 : f32 to vector<8x128xf32>
    %392 = arith.addf %391, %390 : vector<8x128xf32>
    %393 = arith.divf %391, %392 : vector<8x128xf32>
    %394 = vector.extract_strided_slice %383 {offsets = [0, 128], sizes = [8, 128], strides = [1, 1]} : vector<8x384xf32> to vector<8x128xf32>
    %395 = vector.extract_strided_slice %385 {offsets = [0, 128], sizes = [8, 128], strides = [1, 1]} : vector<8x384xf32> to vector<8x128xf32>
    %396 = arith.addf %394, %395 : vector<8x128xf32>
    %397 = arith.negf %396 : vector<8x128xf32>
    %398 = math.exp %397 : vector<8x128xf32>
    %cst_103 = arith.constant 1.000000e+00 : f32
    %399 = vector.broadcast %cst_103 : f32 to vector<8x128xf32>
    %400 = arith.addf %399, %398 : vector<8x128xf32>
    %401 = arith.divf %399, %400 : vector<8x128xf32>
    %402 = vector.extract_strided_slice %383 {offsets = [0, 256], sizes = [8, 128], strides = [1, 1]} : vector<8x384xf32> to vector<8x128xf32>
    %403 = vector.extract_strided_slice %385 {offsets = [0, 256], sizes = [8, 128], strides = [1, 1]} : vector<8x384xf32> to vector<8x128xf32>
    %404 = arith.mulf %393, %403 : vector<8x128xf32>
    %405 = arith.addf %402, %404 : vector<8x128xf32>
    %406 = math.tanh %405 : vector<8x128xf32>
    %cst_104 = arith.constant 1.000000e+00 : f32
    %407 = vector.broadcast %cst_104 : f32 to vector<8x128xf32>
    %408 = arith.subf %407, %401 : vector<8x128xf32>
    %409 = arith.mulf %408, %406 : vector<8x128xf32>
    %410 = arith.mulf %401, %379 : vector<8x128xf32>
    %411 = arith.addf %409, %410 : vector<8x128xf32>
    %c3_105 = arith.constant 3 : index
    %c0_106 = arith.constant 0 : index
    %c0_107 = arith.constant 0 : index
    %412 = vector.load %arg10[%c3_105, %c0_106, %c0_107] : memref<8x8x128xf32, #tpu.memory_space<vmem>>, vector<1x8x128xf32>
    %413 = vector.shape_cast %412 : vector<1x8x128xf32> to vector<8x128xf32>
    %414 = vector.shape_cast %411 : vector<8x128xf32> to vector<1x8x128xf32>
    tpu.vector_store %arg10[%c3_105, %c0_106, %c0_107], %414 {strides = array<i32>} : memref<8x8x128xf32, #tpu.memory_space<vmem>>, vector<1x8x128xf32>,
    %415 = vector.extract_strided_slice %279 {offsets = [32, 0], sizes = [8, 384], strides = [1, 1]} : vector<64x384xf32> to vector<8x384xf32>
    %cst_108 = arith.constant dense<0.000000e+00> : vector<8x384xf32>
    %416 = tpu.matmul %411, %281, %cst_108 {dimension_numbers = #tpu.dot_dimension_numbers<[1], [0], [0], [1], [0, 0, 1, 1], [], []>} : vector<8x128xf32>, vector<128x384xf32>, vector<8x384xf32> -> vector<8x384xf32>
    %417 = arith.addf %416, %285 : vector<8x384xf32>
    %418 = vector.extract_strided_slice %415 {offsets = [0, 0], sizes = [8, 128], strides = [1, 1]} : vector<8x384xf32> to vector<8x128xf32>
    %419 = vector.extract_strided_slice %417 {offsets = [0, 0], sizes = [8, 128], strides = [1, 1]} : vector<8x384xf32> to vector<8x128xf32>
    %420 = arith.addf %418, %419 : vector<8x128xf32>
    %421 = arith.negf %420 : vector<8x128xf32>
    %422 = math.exp %421 : vector<8x128xf32>
    %cst_109 = arith.constant 1.000000e+00 : f32
    %423 = vector.broadcast %cst_109 : f32 to vector<8x128xf32>
    %424 = arith.addf %423, %422 : vector<8x128xf32>
    %425 = arith.divf %423, %424 : vector<8x128xf32>
    %426 = vector.extract_strided_slice %415 {offsets = [0, 128], sizes = [8, 128], strides = [1, 1]} : vector<8x384xf32> to vector<8x128xf32>
    %427 = vector.extract_strided_slice %417 {offsets = [0, 128], sizes = [8, 128], strides = [1, 1]} : vector<8x384xf32> to vector<8x128xf32>
    %428 = arith.addf %426, %427 : vector<8x128xf32>
    %429 = arith.negf %428 : vector<8x128xf32>
    %430 = math.exp %429 : vector<8x128xf32>
    %cst_110 = arith.constant 1.000000e+00 : f32
    %431 = vector.broadcast %cst_110 : f32 to vector<8x128xf32>
    %432 = arith.addf %431, %430 : vector<8x128xf32>
    %433 = arith.divf %431, %432 : vector<8x128xf32>
    %434 = vector.extract_strided_slice %415 {offsets = [0, 256], sizes = [8, 128], strides = [1, 1]} : vector<8x384xf32> to vector<8x128xf32>
    %435 = vector.extract_strided_slice %417 {offsets = [0, 256], sizes = [8, 128], strides = [1, 1]} : vector<8x384xf32> to vector<8x128xf32>
    %436 = arith.mulf %425, %435 : vector<8x128xf32>
    %437 = arith.addf %434, %436 : vector<8x128xf32>
    %438 = math.tanh %437 : vector<8x128xf32>
    %cst_111 = arith.constant 1.000000e+00 : f32
    %439 = vector.broadcast %cst_111 : f32 to vector<8x128xf32>
    %440 = arith.subf %439, %433 : vector<8x128xf32>
    %441 = arith.mulf %440, %438 : vector<8x128xf32>
    %442 = arith.mulf %433, %411 : vector<8x128xf32>
    %443 = arith.addf %441, %442 : vector<8x128xf32>
    %c4_112 = arith.constant 4 : index
    %c0_113 = arith.constant 0 : index
    %c0_114 = arith.constant 0 : index
    %444 = vector.load %arg10[%c4_112, %c0_113, %c0_114] : memref<8x8x128xf32, #tpu.memory_space<vmem>>, vector<1x8x128xf32>
    %445 = vector.shape_cast %444 : vector<1x8x128xf32> to vector<8x128xf32>
    %446 = vector.shape_cast %443 : vector<8x128xf32> to vector<1x8x128xf32>
    tpu.vector_store %arg10[%c4_112, %c0_113, %c0_114], %446 {strides = array<i32>} : memref<8x8x128xf32, #tpu.memory_space<vmem>>, vector<1x8x128xf32>,
    %447 = vector.extract_strided_slice %279 {offsets = [40, 0], sizes = [8, 384], strides = [1, 1]} : vector<64x384xf32> to vector<8x384xf32>
    %cst_115 = arith.constant dense<0.000000e+00> : vector<8x384xf32>
    %448 = tpu.matmul %443, %281, %cst_115 {dimension_numbers = #tpu.dot_dimension_numbers<[1], [0], [0], [1], [0, 0, 1, 1], [], []>} : vector<8x128xf32>, vector<128x384xf32>, vector<8x384xf32> -> vector<8x384xf32>
    %449 = arith.addf %448, %285 : vector<8x384xf32>
    %450 = vector.extract_strided_slice %447 {offsets = [0, 0], sizes = [8, 128], strides = [1, 1]} : vector<8x384xf32> to vector<8x128xf32>
    %451 = vector.extract_strided_slice %449 {offsets = [0, 0], sizes = [8, 128], strides = [1, 1]} : vector<8x384xf32> to vector<8x128xf32>
    %452 = arith.addf %450, %451 : vector<8x128xf32>
    %453 = arith.negf %452 : vector<8x128xf32>
    %454 = math.exp %453 : vector<8x128xf32>
    %cst_116 = arith.constant 1.000000e+00 : f32
    %455 = vector.broadcast %cst_116 : f32 to vector<8x128xf32>
    %456 = arith.addf %455, %454 : vector<8x128xf32>
    %457 = arith.divf %455, %456 : vector<8x128xf32>
    %458 = vector.extract_strided_slice %447 {offsets = [0, 128], sizes = [8, 128], strides = [1, 1]} : vector<8x384xf32> to vector<8x128xf32>
    %459 = vector.extract_strided_slice %449 {offsets = [0, 128], sizes = [8, 128], strides = [1, 1]} : vector<8x384xf32> to vector<8x128xf32>
    %460 = arith.addf %458, %459 : vector<8x128xf32>
    %461 = arith.negf %460 : vector<8x128xf32>
    %462 = math.exp %461 : vector<8x128xf32>
    %cst_117 = arith.constant 1.000000e+00 : f32
    %463 = vector.broadcast %cst_117 : f32 to vector<8x128xf32>
    %464 = arith.addf %463, %462 : vector<8x128xf32>
    %465 = arith.divf %463, %464 : vector<8x128xf32>
    %466 = vector.extract_strided_slice %447 {offsets = [0, 256], sizes = [8, 128], strides = [1, 1]} : vector<8x384xf32> to vector<8x128xf32>
    %467 = vector.extract_strided_slice %449 {offsets = [0, 256], sizes = [8, 128], strides = [1, 1]} : vector<8x384xf32> to vector<8x128xf32>
    %468 = arith.mulf %457, %467 : vector<8x128xf32>
    %469 = arith.addf %466, %468 : vector<8x128xf32>
    %470 = math.tanh %469 : vector<8x128xf32>
    %cst_118 = arith.constant 1.000000e+00 : f32
    %471 = vector.broadcast %cst_118 : f32 to vector<8x128xf32>
    %472 = arith.subf %471, %465 : vector<8x128xf32>
    %473 = arith.mulf %472, %470 : vector<8x128xf32>
    %474 = arith.mulf %465, %443 : vector<8x128xf32>
    %475 = arith.addf %473, %474 : vector<8x128xf32>
    %c5_119 = arith.constant 5 : index
    %c0_120 = arith.constant 0 : index
    %c0_121 = arith.constant 0 : index
    %476 = vector.load %arg10[%c5_119, %c0_120, %c0_121] : memref<8x8x128xf32, #tpu.memory_space<vmem>>, vector<1x8x128xf32>
    %477 = vector.shape_cast %476 : vector<1x8x128xf32> to vector<8x128xf32>
    %478 = vector.shape_cast %475 : vector<8x128xf32> to vector<1x8x128xf32>
    tpu.vector_store %arg10[%c5_119, %c0_120, %c0_121], %478 {strides = array<i32>} : memref<8x8x128xf32, #tpu.memory_space<vmem>>, vector<1x8x128xf32>,
    %479 = vector.extract_strided_slice %279 {offsets = [48, 0], sizes = [8, 384], strides = [1, 1]} : vector<64x384xf32> to vector<8x384xf32>
    %cst_122 = arith.constant dense<0.000000e+00> : vector<8x384xf32>
    %480 = tpu.matmul %475, %281, %cst_122 {dimension_numbers = #tpu.dot_dimension_numbers<[1], [0], [0], [1], [0, 0, 1, 1], [], []>} : vector<8x128xf32>, vector<128x384xf32>, vector<8x384xf32> -> vector<8x384xf32>
    %481 = arith.addf %480, %285 : vector<8x384xf32>
    %482 = vector.extract_strided_slice %479 {offsets = [0, 0], sizes = [8, 128], strides = [1, 1]} : vector<8x384xf32> to vector<8x128xf32>
    %483 = vector.extract_strided_slice %481 {offsets = [0, 0], sizes = [8, 128], strides = [1, 1]} : vector<8x384xf32> to vector<8x128xf32>
    %484 = arith.addf %482, %483 : vector<8x128xf32>
    %485 = arith.negf %484 : vector<8x128xf32>
    %486 = math.exp %485 : vector<8x128xf32>
    %cst_123 = arith.constant 1.000000e+00 : f32
    %487 = vector.broadcast %cst_123 : f32 to vector<8x128xf32>
    %488 = arith.addf %487, %486 : vector<8x128xf32>
    %489 = arith.divf %487, %488 : vector<8x128xf32>
    %490 = vector.extract_strided_slice %479 {offsets = [0, 128], sizes = [8, 128], strides = [1, 1]} : vector<8x384xf32> to vector<8x128xf32>
    %491 = vector.extract_strided_slice %481 {offsets = [0, 128], sizes = [8, 128], strides = [1, 1]} : vector<8x384xf32> to vector<8x128xf32>
    %492 = arith.addf %490, %491 : vector<8x128xf32>
    %493 = arith.negf %492 : vector<8x128xf32>
    %494 = math.exp %493 : vector<8x128xf32>
    %cst_124 = arith.constant 1.000000e+00 : f32
    %495 = vector.broadcast %cst_124 : f32 to vector<8x128xf32>
    %496 = arith.addf %495, %494 : vector<8x128xf32>
    %497 = arith.divf %495, %496 : vector<8x128xf32>
    %498 = vector.extract_strided_slice %479 {offsets = [0, 256], sizes = [8, 128], strides = [1, 1]} : vector<8x384xf32> to vector<8x128xf32>
    %499 = vector.extract_strided_slice %481 {offsets = [0, 256], sizes = [8, 128], strides = [1, 1]} : vector<8x384xf32> to vector<8x128xf32>
    %500 = arith.mulf %489, %499 : vector<8x128xf32>
    %501 = arith.addf %498, %500 : vector<8x128xf32>
    %502 = math.tanh %501 : vector<8x128xf32>
    %cst_125 = arith.constant 1.000000e+00 : f32
    %503 = vector.broadcast %cst_125 : f32 to vector<8x128xf32>
    %504 = arith.subf %503, %497 : vector<8x128xf32>
    %505 = arith.mulf %504, %502 : vector<8x128xf32>
    %506 = arith.mulf %497, %475 : vector<8x128xf32>
    %507 = arith.addf %505, %506 : vector<8x128xf32>
    %c6_126 = arith.constant 6 : index
    %c0_127 = arith.constant 0 : index
    %c0_128 = arith.constant 0 : index
    %508 = vector.load %arg10[%c6_126, %c0_127, %c0_128] : memref<8x8x128xf32, #tpu.memory_space<vmem>>, vector<1x8x128xf32>
    %509 = vector.shape_cast %508 : vector<1x8x128xf32> to vector<8x128xf32>
    %510 = vector.shape_cast %507 : vector<8x128xf32> to vector<1x8x128xf32>
    tpu.vector_store %arg10[%c6_126, %c0_127, %c0_128], %510 {strides = array<i32>} : memref<8x8x128xf32, #tpu.memory_space<vmem>>, vector<1x8x128xf32>,
    %511 = vector.extract_strided_slice %279 {offsets = [56, 0], sizes = [8, 384], strides = [1, 1]} : vector<64x384xf32> to vector<8x384xf32>
    %cst_129 = arith.constant dense<0.000000e+00> : vector<8x384xf32>
    %512 = tpu.matmul %507, %281, %cst_129 {dimension_numbers = #tpu.dot_dimension_numbers<[1], [0], [0], [1], [0, 0, 1, 1], [], []>} : vector<8x128xf32>, vector<128x384xf32>, vector<8x384xf32> -> vector<8x384xf32>
    %513 = arith.addf %512, %285 : vector<8x384xf32>
    %514 = vector.extract_strided_slice %511 {offsets = [0, 0], sizes = [8, 128], strides = [1, 1]} : vector<8x384xf32> to vector<8x128xf32>
    %515 = vector.extract_strided_slice %513 {offsets = [0, 0], sizes = [8, 128], strides = [1, 1]} : vector<8x384xf32> to vector<8x128xf32>
    %516 = arith.addf %514, %515 : vector<8x128xf32>
    %517 = arith.negf %516 : vector<8x128xf32>
    %518 = math.exp %517 : vector<8x128xf32>
    %cst_130 = arith.constant 1.000000e+00 : f32
    %519 = vector.broadcast %cst_130 : f32 to vector<8x128xf32>
    %520 = arith.addf %519, %518 : vector<8x128xf32>
    %521 = arith.divf %519, %520 : vector<8x128xf32>
    %522 = vector.extract_strided_slice %511 {offsets = [0, 128], sizes = [8, 128], strides = [1, 1]} : vector<8x384xf32> to vector<8x128xf32>
    %523 = vector.extract_strided_slice %513 {offsets = [0, 128], sizes = [8, 128], strides = [1, 1]} : vector<8x384xf32> to vector<8x128xf32>
    %524 = arith.addf %522, %523 : vector<8x128xf32>
    %525 = arith.negf %524 : vector<8x128xf32>
    %526 = math.exp %525 : vector<8x128xf32>
    %cst_131 = arith.constant 1.000000e+00 : f32
    %527 = vector.broadcast %cst_131 : f32 to vector<8x128xf32>
    %528 = arith.addf %527, %526 : vector<8x128xf32>
    %529 = arith.divf %527, %528 : vector<8x128xf32>
    %530 = vector.extract_strided_slice %511 {offsets = [0, 256], sizes = [8, 128], strides = [1, 1]} : vector<8x384xf32> to vector<8x128xf32>
    %531 = vector.extract_strided_slice %513 {offsets = [0, 256], sizes = [8, 128], strides = [1, 1]} : vector<8x384xf32> to vector<8x128xf32>
    %532 = arith.mulf %521, %531 : vector<8x128xf32>
    %533 = arith.addf %530, %532 : vector<8x128xf32>
    %534 = math.tanh %533 : vector<8x128xf32>
    %cst_132 = arith.constant 1.000000e+00 : f32
    %535 = vector.broadcast %cst_132 : f32 to vector<8x128xf32>
    %536 = arith.subf %535, %529 : vector<8x128xf32>
    %537 = arith.mulf %536, %534 : vector<8x128xf32>
    %538 = arith.mulf %529, %507 : vector<8x128xf32>
    %539 = arith.addf %537, %538 : vector<8x128xf32>
    %c7_133 = arith.constant 7 : index
    %c0_134 = arith.constant 0 : index
    %c0_135 = arith.constant 0 : index
    %540 = vector.load %arg10[%c7_133, %c0_134, %c0_135] : memref<8x8x128xf32, #tpu.memory_space<vmem>>, vector<1x8x128xf32>
    %541 = vector.shape_cast %540 : vector<1x8x128xf32> to vector<8x128xf32>
    %542 = vector.shape_cast %539 : vector<8x128xf32> to vector<1x8x128xf32>
    tpu.vector_store %arg10[%c7_133, %c0_134, %c0_135], %542 {strides = array<i32>} : memref<8x8x128xf32, #tpu.memory_space<vmem>>, vector<1x8x128xf32>,
    %c0_136 = arith.constant 0 : index
    %c0_137 = arith.constant 0 : index
    %c0_138 = arith.constant 0 : index
    %543 = vector.load %arg10[%c0_136, %c0_137, %c0_138] : memref<8x8x128xf32, #tpu.memory_space<vmem>>, vector<8x8x128xf32>
    %544 = vector.shape_cast %543 : vector<8x8x128xf32> to vector<64x128xf32>
    %c1_139 = arith.constant 1 : index
    %c0_140 = arith.constant 0 : index
    %c0_141 = arith.constant 0 : index
    %545 = vector.load %arg3[%c1_139, %c0_140, %c0_141] : memref<2x128x384xf32, #tpu.memory_space<vmem>>, vector<1x128x384xf32>
    %546 = vector.shape_cast %545 : vector<1x128x384xf32> to vector<128x384xf32>
    %cst_142 = arith.constant dense<0.000000e+00> : vector<64x384xf32>
    %547 = tpu.matmul %544, %546, %cst_142 {dimension_numbers = #tpu.dot_dimension_numbers<[1], [0], [0], [1], [0, 0, 1, 1], [], []>} : vector<64x128xf32>, vector<128x384xf32>, vector<64x384xf32> -> vector<64x384xf32>
    %c2_143 = arith.constant 2 : index
    %c0_144 = arith.constant 0 : index
    %c0_145 = arith.constant 0 : index
    %548 = vector.load %arg5[%c2_143, %c0_144, %c0_145] : memref<3x1x384xf32, #tpu.memory_space<vmem>>, vector<1x1x384xf32>
    %549 = vector.shape_cast %548 : vector<1x1x384xf32> to vector<1x384xf32>
    %550 = vector.broadcast %549 : vector<1x384xf32> to vector<64x384xf32>
    %551 = arith.addf %547, %550 : vector<64x384xf32>
    %c2_146 = arith.constant 2 : index
    %c0_147 = arith.constant 0 : index
    %c0_148 = arith.constant 0 : index
    %552 = vector.load %arg4[%c2_146, %c0_147, %c0_148] : memref<3x128x384xf32, #tpu.memory_space<vmem>>, vector<1x128x384xf32>
    %553 = vector.shape_cast %552 : vector<1x128x384xf32> to vector<128x384xf32>
    %c2_149 = arith.constant 2 : index
    %c0_150 = arith.constant 0 : index
    %c0_151 = arith.constant 0 : index
    %554 = vector.load %arg6[%c2_149, %c0_150, %c0_151] : memref<3x1x384xf32, #tpu.memory_space<vmem>>, vector<1x1x384xf32>
    %555 = vector.shape_cast %554 : vector<1x1x384xf32> to vector<1x384xf32>
    %556 = vector.shape_cast %555 : vector<1x384xf32> to vector<1x384xf32>
    %557 = vector.broadcast %556 : vector<1x384xf32> to vector<8x384xf32>
    %cst_152 = arith.constant 0.000000e+00 : f32
    %558 = vector.broadcast %cst_152 : f32 to vector<8x128xf32>
    %559 = vector.extract_strided_slice %551 {offsets = [0, 0], sizes = [8, 384], strides = [1, 1]} : vector<64x384xf32> to vector<8x384xf32>
    %cst_153 = arith.constant dense<0.000000e+00> : vector<8x384xf32>
    %560 = tpu.matmul %558, %553, %cst_153 {dimension_numbers = #tpu.dot_dimension_numbers<[1], [0], [0], [1], [0, 0, 1, 1], [], []>} : vector<8x128xf32>, vector<128x384xf32>, vector<8x384xf32> -> vector<8x384xf32>
    %561 = arith.addf %560, %557 : vector<8x384xf32>
    %562 = vector.extract_strided_slice %559 {offsets = [0, 0], sizes = [8, 128], strides = [1, 1]} : vector<8x384xf32> to vector<8x128xf32>
    %563 = vector.extract_strided_slice %561 {offsets = [0, 0], sizes = [8, 128], strides = [1, 1]} : vector<8x384xf32> to vector<8x128xf32>
    %564 = arith.addf %562, %563 : vector<8x128xf32>
    %565 = arith.negf %564 : vector<8x128xf32>
    %566 = math.exp %565 : vector<8x128xf32>
    %cst_154 = arith.constant 1.000000e+00 : f32
    %567 = vector.broadcast %cst_154 : f32 to vector<8x128xf32>
    %568 = arith.addf %567, %566 : vector<8x128xf32>
    %569 = arith.divf %567, %568 : vector<8x128xf32>
    %570 = vector.extract_strided_slice %559 {offsets = [0, 128], sizes = [8, 128], strides = [1, 1]} : vector<8x384xf32> to vector<8x128xf32>
    %571 = vector.extract_strided_slice %561 {offsets = [0, 128], sizes = [8, 128], strides = [1, 1]} : vector<8x384xf32> to vector<8x128xf32>
    %572 = arith.addf %570, %571 : vector<8x128xf32>
    %573 = arith.negf %572 : vector<8x128xf32>
    %574 = math.exp %573 : vector<8x128xf32>
    %cst_155 = arith.constant 1.000000e+00 : f32
    %575 = vector.broadcast %cst_155 : f32 to vector<8x128xf32>
    %576 = arith.addf %575, %574 : vector<8x128xf32>
    %577 = arith.divf %575, %576 : vector<8x128xf32>
    %578 = vector.extract_strided_slice %559 {offsets = [0, 256], sizes = [8, 128], strides = [1, 1]} : vector<8x384xf32> to vector<8x128xf32>
    %579 = vector.extract_strided_slice %561 {offsets = [0, 256], sizes = [8, 128], strides = [1, 1]} : vector<8x384xf32> to vector<8x128xf32>
    %580 = arith.mulf %569, %579 : vector<8x128xf32>
    %581 = arith.addf %578, %580 : vector<8x128xf32>
    %582 = math.tanh %581 : vector<8x128xf32>
    %cst_156 = arith.constant 1.000000e+00 : f32
    %583 = vector.broadcast %cst_156 : f32 to vector<8x128xf32>
    %584 = arith.subf %583, %577 : vector<8x128xf32>
    %585 = arith.mulf %584, %582 : vector<8x128xf32>
    %586 = arith.mulf %577, %558 : vector<8x128xf32>
    %587 = arith.addf %585, %586 : vector<8x128xf32>
    %588 = vector.extract_strided_slice %551 {offsets = [8, 0], sizes = [8, 384], strides = [1, 1]} : vector<64x384xf32> to vector<8x384xf32>
    %cst_157 = arith.constant dense<0.000000e+00> : vector<8x384xf32>
    %589 = tpu.matmul %587, %553, %cst_157 {dimension_numbers = #tpu.dot_dimension_numbers<[1], [0], [0], [1], [0, 0, 1, 1], [], []>} : vector<8x128xf32>, vector<128x384xf32>, vector<8x384xf32> -> vector<8x384xf32>
    %590 = arith.addf %589, %557 : vector<8x384xf32>
    %591 = vector.extract_strided_slice %588 {offsets = [0, 0], sizes = [8, 128], strides = [1, 1]} : vector<8x384xf32> to vector<8x128xf32>
    %592 = vector.extract_strided_slice %590 {offsets = [0, 0], sizes = [8, 128], strides = [1, 1]} : vector<8x384xf32> to vector<8x128xf32>
    %593 = arith.addf %591, %592 : vector<8x128xf32>
    %594 = arith.negf %593 : vector<8x128xf32>
    %595 = math.exp %594 : vector<8x128xf32>
    %cst_158 = arith.constant 1.000000e+00 : f32
    %596 = vector.broadcast %cst_158 : f32 to vector<8x128xf32>
    %597 = arith.addf %596, %595 : vector<8x128xf32>
    %598 = arith.divf %596, %597 : vector<8x128xf32>
    %599 = vector.extract_strided_slice %588 {offsets = [0, 128], sizes = [8, 128], strides = [1, 1]} : vector<8x384xf32> to vector<8x128xf32>
    %600 = vector.extract_strided_slice %590 {offsets = [0, 128], sizes = [8, 128], strides = [1, 1]} : vector<8x384xf32> to vector<8x128xf32>
    %601 = arith.addf %599, %600 : vector<8x128xf32>
    %602 = arith.negf %601 : vector<8x128xf32>
    %603 = math.exp %602 : vector<8x128xf32>
    %cst_159 = arith.constant 1.000000e+00 : f32
    %604 = vector.broadcast %cst_159 : f32 to vector<8x128xf32>
    %605 = arith.addf %604, %603 : vector<8x128xf32>
    %606 = arith.divf %604, %605 : vector<8x128xf32>
    %607 = vector.extract_strided_slice %588 {offsets = [0, 256], sizes = [8, 128], strides = [1, 1]} : vector<8x384xf32> to vector<8x128xf32>
    %608 = vector.extract_strided_slice %590 {offsets = [0, 256], sizes = [8, 128], strides = [1, 1]} : vector<8x384xf32> to vector<8x128xf32>
    %609 = arith.mulf %598, %608 : vector<8x128xf32>
    %610 = arith.addf %607, %609 : vector<8x128xf32>
    %611 = math.tanh %610 : vector<8x128xf32>
    %cst_160 = arith.constant 1.000000e+00 : f32
    %612 = vector.broadcast %cst_160 : f32 to vector<8x128xf32>
    %613 = arith.subf %612, %606 : vector<8x128xf32>
    %614 = arith.mulf %613, %611 : vector<8x128xf32>
    %615 = arith.mulf %606, %587 : vector<8x128xf32>
    %616 = arith.addf %614, %615 : vector<8x128xf32>
    %617 = vector.extract_strided_slice %551 {offsets = [16, 0], sizes = [8, 384], strides = [1, 1]} : vector<64x384xf32> to vector<8x384xf32>
    %cst_161 = arith.constant dense<0.000000e+00> : vector<8x384xf32>
    %618 = tpu.matmul %616, %553, %cst_161 {dimension_numbers = #tpu.dot_dimension_numbers<[1], [0], [0], [1], [0, 0, 1, 1], [], []>} : vector<8x128xf32>, vector<128x384xf32>, vector<8x384xf32> -> vector<8x384xf32>
    %619 = arith.addf %618, %557 : vector<8x384xf32>
    %620 = vector.extract_strided_slice %617 {offsets = [0, 0], sizes = [8, 128], strides = [1, 1]} : vector<8x384xf32> to vector<8x128xf32>
    %621 = vector.extract_strided_slice %619 {offsets = [0, 0], sizes = [8, 128], strides = [1, 1]} : vector<8x384xf32> to vector<8x128xf32>
    %622 = arith.addf %620, %621 : vector<8x128xf32>
    %623 = arith.negf %622 : vector<8x128xf32>
    %624 = math.exp %623 : vector<8x128xf32>
    %cst_162 = arith.constant 1.000000e+00 : f32
    %625 = vector.broadcast %cst_162 : f32 to vector<8x128xf32>
    %626 = arith.addf %625, %624 : vector<8x128xf32>
    %627 = arith.divf %625, %626 : vector<8x128xf32>
    %628 = vector.extract_strided_slice %617 {offsets = [0, 128], sizes = [8, 128], strides = [1, 1]} : vector<8x384xf32> to vector<8x128xf32>
    %629 = vector.extract_strided_slice %619 {offsets = [0, 128], sizes = [8, 128], strides = [1, 1]} : vector<8x384xf32> to vector<8x128xf32>
    %630 = arith.addf %628, %629 : vector<8x128xf32>
    %631 = arith.negf %630 : vector<8x128xf32>
    %632 = math.exp %631 : vector<8x128xf32>
    %cst_163 = arith.constant 1.000000e+00 : f32
    %633 = vector.broadcast %cst_163 : f32 to vector<8x128xf32>
    %634 = arith.addf %633, %632 : vector<8x128xf32>
    %635 = arith.divf %633, %634 : vector<8x128xf32>
    %636 = vector.extract_strided_slice %617 {offsets = [0, 256], sizes = [8, 128], strides = [1, 1]} : vector<8x384xf32> to vector<8x128xf32>
    %637 = vector.extract_strided_slice %619 {offsets = [0, 256], sizes = [8, 128], strides = [1, 1]} : vector<8x384xf32> to vector<8x128xf32>
    %638 = arith.mulf %627, %637 : vector<8x128xf32>
    %639 = arith.addf %636, %638 : vector<8x128xf32>
    %640 = math.tanh %639 : vector<8x128xf32>
    %cst_164 = arith.constant 1.000000e+00 : f32
    %641 = vector.broadcast %cst_164 : f32 to vector<8x128xf32>
    %642 = arith.subf %641, %635 : vector<8x128xf32>
    %643 = arith.mulf %642, %640 : vector<8x128xf32>
    %644 = arith.mulf %635, %616 : vector<8x128xf32>
    %645 = arith.addf %643, %644 : vector<8x128xf32>
    %646 = vector.extract_strided_slice %551 {offsets = [24, 0], sizes = [8, 384], strides = [1, 1]} : vector<64x384xf32> to vector<8x384xf32>
    %cst_165 = arith.constant dense<0.000000e+00> : vector<8x384xf32>
    %647 = tpu.matmul %645, %553, %cst_165 {dimension_numbers = #tpu.dot_dimension_numbers<[1], [0], [0], [1], [0, 0, 1, 1], [], []>} : vector<8x128xf32>, vector<128x384xf32>, vector<8x384xf32> -> vector<8x384xf32>
    %648 = arith.addf %647, %557 : vector<8x384xf32>
    %649 = vector.extract_strided_slice %646 {offsets = [0, 0], sizes = [8, 128], strides = [1, 1]} : vector<8x384xf32> to vector<8x128xf32>
    %650 = vector.extract_strided_slice %648 {offsets = [0, 0], sizes = [8, 128], strides = [1, 1]} : vector<8x384xf32> to vector<8x128xf32>
    %651 = arith.addf %649, %650 : vector<8x128xf32>
    %652 = arith.negf %651 : vector<8x128xf32>
    %653 = math.exp %652 : vector<8x128xf32>
    %cst_166 = arith.constant 1.000000e+00 : f32
    %654 = vector.broadcast %cst_166 : f32 to vector<8x128xf32>
    %655 = arith.addf %654, %653 : vector<8x128xf32>
    %656 = arith.divf %654, %655 : vector<8x128xf32>
    %657 = vector.extract_strided_slice %646 {offsets = [0, 128], sizes = [8, 128], strides = [1, 1]} : vector<8x384xf32> to vector<8x128xf32>
    %658 = vector.extract_strided_slice %648 {offsets = [0, 128], sizes = [8, 128], strides = [1, 1]} : vector<8x384xf32> to vector<8x128xf32>
    %659 = arith.addf %657, %658 : vector<8x128xf32>
    %660 = arith.negf %659 : vector<8x128xf32>
    %661 = math.exp %660 : vector<8x128xf32>
    %cst_167 = arith.constant 1.000000e+00 : f32
    %662 = vector.broadcast %cst_167 : f32 to vector<8x128xf32>
    %663 = arith.addf %662, %661 : vector<8x128xf32>
    %664 = arith.divf %662, %663 : vector<8x128xf32>
    %665 = vector.extract_strided_slice %646 {offsets = [0, 256], sizes = [8, 128], strides = [1, 1]} : vector<8x384xf32> to vector<8x128xf32>
    %666 = vector.extract_strided_slice %648 {offsets = [0, 256], sizes = [8, 128], strides = [1, 1]} : vector<8x384xf32> to vector<8x128xf32>
    %667 = arith.mulf %656, %666 : vector<8x128xf32>
    %668 = arith.addf %665, %667 : vector<8x128xf32>
    %669 = math.tanh %668 : vector<8x128xf32>
    %cst_168 = arith.constant 1.000000e+00 : f32
    %670 = vector.broadcast %cst_168 : f32 to vector<8x128xf32>
    %671 = arith.subf %670, %664 : vector<8x128xf32>
    %672 = arith.mulf %671, %669 : vector<8x128xf32>
    %673 = arith.mulf %664, %645 : vector<8x128xf32>
    %674 = arith.addf %672, %673 : vector<8x128xf32>
    %675 = vector.extract_strided_slice %551 {offsets = [32, 0], sizes = [8, 384], strides = [1, 1]} : vector<64x384xf32> to vector<8x384xf32>
    %cst_169 = arith.constant dense<0.000000e+00> : vector<8x384xf32>
    %676 = tpu.matmul %674, %553, %cst_169 {dimension_numbers = #tpu.dot_dimension_numbers<[1], [0], [0], [1], [0, 0, 1, 1], [], []>} : vector<8x128xf32>, vector<128x384xf32>, vector<8x384xf32> -> vector<8x384xf32>
    %677 = arith.addf %676, %557 : vector<8x384xf32>
    %678 = vector.extract_strided_slice %675 {offsets = [0, 0], sizes = [8, 128], strides = [1, 1]} : vector<8x384xf32> to vector<8x128xf32>
    %679 = vector.extract_strided_slice %677 {offsets = [0, 0], sizes = [8, 128], strides = [1, 1]} : vector<8x384xf32> to vector<8x128xf32>
    %680 = arith.addf %678, %679 : vector<8x128xf32>
    %681 = arith.negf %680 : vector<8x128xf32>
    %682 = math.exp %681 : vector<8x128xf32>
    %cst_170 = arith.constant 1.000000e+00 : f32
    %683 = vector.broadcast %cst_170 : f32 to vector<8x128xf32>
    %684 = arith.addf %683, %682 : vector<8x128xf32>
    %685 = arith.divf %683, %684 : vector<8x128xf32>
    %686 = vector.extract_strided_slice %675 {offsets = [0, 128], sizes = [8, 128], strides = [1, 1]} : vector<8x384xf32> to vector<8x128xf32>
    %687 = vector.extract_strided_slice %677 {offsets = [0, 128], sizes = [8, 128], strides = [1, 1]} : vector<8x384xf32> to vector<8x128xf32>
    %688 = arith.addf %686, %687 : vector<8x128xf32>
    %689 = arith.negf %688 : vector<8x128xf32>
    %690 = math.exp %689 : vector<8x128xf32>
    %cst_171 = arith.constant 1.000000e+00 : f32
    %691 = vector.broadcast %cst_171 : f32 to vector<8x128xf32>
    %692 = arith.addf %691, %690 : vector<8x128xf32>
    %693 = arith.divf %691, %692 : vector<8x128xf32>
    %694 = vector.extract_strided_slice %675 {offsets = [0, 256], sizes = [8, 128], strides = [1, 1]} : vector<8x384xf32> to vector<8x128xf32>
    %695 = vector.extract_strided_slice %677 {offsets = [0, 256], sizes = [8, 128], strides = [1, 1]} : vector<8x384xf32> to vector<8x128xf32>
    %696 = arith.mulf %685, %695 : vector<8x128xf32>
    %697 = arith.addf %694, %696 : vector<8x128xf32>
    %698 = math.tanh %697 : vector<8x128xf32>
    %cst_172 = arith.constant 1.000000e+00 : f32
    %699 = vector.broadcast %cst_172 : f32 to vector<8x128xf32>
    %700 = arith.subf %699, %693 : vector<8x128xf32>
    %701 = arith.mulf %700, %698 : vector<8x128xf32>
    %702 = arith.mulf %693, %674 : vector<8x128xf32>
    %703 = arith.addf %701, %702 : vector<8x128xf32>
    %704 = vector.extract_strided_slice %551 {offsets = [40, 0], sizes = [8, 384], strides = [1, 1]} : vector<64x384xf32> to vector<8x384xf32>
    %cst_173 = arith.constant dense<0.000000e+00> : vector<8x384xf32>
    %705 = tpu.matmul %703, %553, %cst_173 {dimension_numbers = #tpu.dot_dimension_numbers<[1], [0], [0], [1], [0, 0, 1, 1], [], []>} : vector<8x128xf32>, vector<128x384xf32>, vector<8x384xf32> -> vector<8x384xf32>
    %706 = arith.addf %705, %557 : vector<8x384xf32>
    %707 = vector.extract_strided_slice %704 {offsets = [0, 0], sizes = [8, 128], strides = [1, 1]} : vector<8x384xf32> to vector<8x128xf32>
    %708 = vector.extract_strided_slice %706 {offsets = [0, 0], sizes = [8, 128], strides = [1, 1]} : vector<8x384xf32> to vector<8x128xf32>
    %709 = arith.addf %707, %708 : vector<8x128xf32>
    %710 = arith.negf %709 : vector<8x128xf32>
    %711 = math.exp %710 : vector<8x128xf32>
    %cst_174 = arith.constant 1.000000e+00 : f32
    %712 = vector.broadcast %cst_174 : f32 to vector<8x128xf32>
    %713 = arith.addf %712, %711 : vector<8x128xf32>
    %714 = arith.divf %712, %713 : vector<8x128xf32>
    %715 = vector.extract_strided_slice %704 {offsets = [0, 128], sizes = [8, 128], strides = [1, 1]} : vector<8x384xf32> to vector<8x128xf32>
    %716 = vector.extract_strided_slice %706 {offsets = [0, 128], sizes = [8, 128], strides = [1, 1]} : vector<8x384xf32> to vector<8x128xf32>
    %717 = arith.addf %715, %716 : vector<8x128xf32>
    %718 = arith.negf %717 : vector<8x128xf32>
    %719 = math.exp %718 : vector<8x128xf32>
    %cst_175 = arith.constant 1.000000e+00 : f32
    %720 = vector.broadcast %cst_175 : f32 to vector<8x128xf32>
    %721 = arith.addf %720, %719 : vector<8x128xf32>
    %722 = arith.divf %720, %721 : vector<8x128xf32>
    %723 = vector.extract_strided_slice %704 {offsets = [0, 256], sizes = [8, 128], strides = [1, 1]} : vector<8x384xf32> to vector<8x128xf32>
    %724 = vector.extract_strided_slice %706 {offsets = [0, 256], sizes = [8, 128], strides = [1, 1]} : vector<8x384xf32> to vector<8x128xf32>
    %725 = arith.mulf %714, %724 : vector<8x128xf32>
    %726 = arith.addf %723, %725 : vector<8x128xf32>
    %727 = math.tanh %726 : vector<8x128xf32>
    %cst_176 = arith.constant 1.000000e+00 : f32
    %728 = vector.broadcast %cst_176 : f32 to vector<8x128xf32>
    %729 = arith.subf %728, %722 : vector<8x128xf32>
    %730 = arith.mulf %729, %727 : vector<8x128xf32>
    %731 = arith.mulf %722, %703 : vector<8x128xf32>
    %732 = arith.addf %730, %731 : vector<8x128xf32>
    %733 = vector.extract_strided_slice %551 {offsets = [48, 0], sizes = [8, 384], strides = [1, 1]} : vector<64x384xf32> to vector<8x384xf32>
    %cst_177 = arith.constant dense<0.000000e+00> : vector<8x384xf32>
    %734 = tpu.matmul %732, %553, %cst_177 {dimension_numbers = #tpu.dot_dimension_numbers<[1], [0], [0], [1], [0, 0, 1, 1], [], []>} : vector<8x128xf32>, vector<128x384xf32>, vector<8x384xf32> -> vector<8x384xf32>
    %735 = arith.addf %734, %557 : vector<8x384xf32>
    %736 = vector.extract_strided_slice %733 {offsets = [0, 0], sizes = [8, 128], strides = [1, 1]} : vector<8x384xf32> to vector<8x128xf32>
    %737 = vector.extract_strided_slice %735 {offsets = [0, 0], sizes = [8, 128], strides = [1, 1]} : vector<8x384xf32> to vector<8x128xf32>
    %738 = arith.addf %736, %737 : vector<8x128xf32>
    %739 = arith.negf %738 : vector<8x128xf32>
    %740 = math.exp %739 : vector<8x128xf32>
    %cst_178 = arith.constant 1.000000e+00 : f32
    %741 = vector.broadcast %cst_178 : f32 to vector<8x128xf32>
    %742 = arith.addf %741, %740 : vector<8x128xf32>
    %743 = arith.divf %741, %742 : vector<8x128xf32>
    %744 = vector.extract_strided_slice %733 {offsets = [0, 128], sizes = [8, 128], strides = [1, 1]} : vector<8x384xf32> to vector<8x128xf32>
    %745 = vector.extract_strided_slice %735 {offsets = [0, 128], sizes = [8, 128], strides = [1, 1]} : vector<8x384xf32> to vector<8x128xf32>
    %746 = arith.addf %744, %745 : vector<8x128xf32>
    %747 = arith.negf %746 : vector<8x128xf32>
    %748 = math.exp %747 : vector<8x128xf32>
    %cst_179 = arith.constant 1.000000e+00 : f32
    %749 = vector.broadcast %cst_179 : f32 to vector<8x128xf32>
    %750 = arith.addf %749, %748 : vector<8x128xf32>
    %751 = arith.divf %749, %750 : vector<8x128xf32>
    %752 = vector.extract_strided_slice %733 {offsets = [0, 256], sizes = [8, 128], strides = [1, 1]} : vector<8x384xf32> to vector<8x128xf32>
    %753 = vector.extract_strided_slice %735 {offsets = [0, 256], sizes = [8, 128], strides = [1, 1]} : vector<8x384xf32> to vector<8x128xf32>
    %754 = arith.mulf %743, %753 : vector<8x128xf32>
    %755 = arith.addf %752, %754 : vector<8x128xf32>
    %756 = math.tanh %755 : vector<8x128xf32>
    %cst_180 = arith.constant 1.000000e+00 : f32
    %757 = vector.broadcast %cst_180 : f32 to vector<8x128xf32>
    %758 = arith.subf %757, %751 : vector<8x128xf32>
    %759 = arith.mulf %758, %756 : vector<8x128xf32>
    %760 = arith.mulf %751, %732 : vector<8x128xf32>
    %761 = arith.addf %759, %760 : vector<8x128xf32>
    %762 = vector.extract_strided_slice %551 {offsets = [56, 0], sizes = [8, 384], strides = [1, 1]} : vector<64x384xf32> to vector<8x384xf32>
    %cst_181 = arith.constant dense<0.000000e+00> : vector<8x384xf32>
    %763 = tpu.matmul %761, %553, %cst_181 {dimension_numbers = #tpu.dot_dimension_numbers<[1], [0], [0], [1], [0, 0, 1, 1], [], []>} : vector<8x128xf32>, vector<128x384xf32>, vector<8x384xf32> -> vector<8x384xf32>
    %764 = arith.addf %763, %557 : vector<8x384xf32>
    %765 = vector.extract_strided_slice %762 {offsets = [0, 0], sizes = [8, 128], strides = [1, 1]} : vector<8x384xf32> to vector<8x128xf32>
    %766 = vector.extract_strided_slice %764 {offsets = [0, 0], sizes = [8, 128], strides = [1, 1]} : vector<8x384xf32> to vector<8x128xf32>
    %767 = arith.addf %765, %766 : vector<8x128xf32>
    %768 = arith.negf %767 : vector<8x128xf32>
    %769 = math.exp %768 : vector<8x128xf32>
    %cst_182 = arith.constant 1.000000e+00 : f32
    %770 = vector.broadcast %cst_182 : f32 to vector<8x128xf32>
    %771 = arith.addf %770, %769 : vector<8x128xf32>
    %772 = arith.divf %770, %771 : vector<8x128xf32>
    %773 = vector.extract_strided_slice %762 {offsets = [0, 128], sizes = [8, 128], strides = [1, 1]} : vector<8x384xf32> to vector<8x128xf32>
    %774 = vector.extract_strided_slice %764 {offsets = [0, 128], sizes = [8, 128], strides = [1, 1]} : vector<8x384xf32> to vector<8x128xf32>
    %775 = arith.addf %773, %774 : vector<8x128xf32>
    %776 = arith.negf %775 : vector<8x128xf32>
    %777 = math.exp %776 : vector<8x128xf32>
    %cst_183 = arith.constant 1.000000e+00 : f32
    %778 = vector.broadcast %cst_183 : f32 to vector<8x128xf32>
    %779 = arith.addf %778, %777 : vector<8x128xf32>
    %780 = arith.divf %778, %779 : vector<8x128xf32>
    %781 = vector.extract_strided_slice %762 {offsets = [0, 256], sizes = [8, 128], strides = [1, 1]} : vector<8x384xf32> to vector<8x128xf32>
    %782 = vector.extract_strided_slice %764 {offsets = [0, 256], sizes = [8, 128], strides = [1, 1]} : vector<8x384xf32> to vector<8x128xf32>
    %783 = arith.mulf %772, %782 : vector<8x128xf32>
    %784 = arith.addf %781, %783 : vector<8x128xf32>
    %785 = math.tanh %784 : vector<8x128xf32>
    %cst_184 = arith.constant 1.000000e+00 : f32
    %786 = vector.broadcast %cst_184 : f32 to vector<8x128xf32>
    %787 = arith.subf %786, %780 : vector<8x128xf32>
    %788 = arith.mulf %787, %785 : vector<8x128xf32>
    %789 = arith.mulf %780, %761 : vector<8x128xf32>
    %790 = arith.addf %788, %789 : vector<8x128xf32>
    %c0_185 = arith.constant 0 : index
    %c0_186 = arith.constant 0 : index
    %791 = vector.load %arg7[%c0_185, %c0_186] : memref<1x128xf32, #tpu.memory_space<vmem>>, vector<1x128xf32>
    %792 = vector.broadcast %791 : vector<1x128xf32> to vector<8x128xf32>
    %793 = arith.mulf %790, %792 : vector<8x128xf32>
    %cst_187 = arith.constant dense<0.000000e+00> : vector<8xf32>
    %794 = vector.multi_reduction <add>, %793, %cst_187 [1] : vector<8x128xf32> to vector<8xf32>
    %795 = vector.shape_cast %794 : vector<8xf32> to vector<8x1xf32>
    %c0_188 = arith.constant 0 : index
    %c0_189 = arith.constant 0 : index
    %796 = vector.load %arg8[%c0_188, %c0_189] : memref<1x1xf32, #tpu.memory_space<vmem>>, vector<1x1xf32>
    %797 = vector.broadcast %796 : vector<1x1xf32> to vector<8x1xf32>
    %798 = arith.addf %795, %797 : vector<8x1xf32>
    %c0_190 = arith.constant 0 : index
    %c0_191 = arith.constant 0 : index
    %799 = vector.load %arg9[%c0_190, %c0_191] : memref<8x1xf32, #tpu.memory_space<vmem>>, vector<8x1xf32>
    tpu.vector_store %arg9[%c0_190, %c0_191], %798 {strides = array<i32>} : memref<8x1xf32, #tpu.memory_space<vmem>>, vector<8x1xf32>,
    return
  }
  func.func @transform_0(%arg0: i32) -> (i32, i32, i32) {
    %c0_i32 = arith.constant 0 : i32
    %c0_i32_0 = arith.constant 0 : i32
    %c0_i32_1 = arith.constant 0 : i32
    return %c0_i32, %arg0, %c0_i32_0 : i32, i32, i32
  }
  func.func @transform_1(%arg0: i32) -> (i32, i32) {
    %c0_i32 = arith.constant 0 : i32
    %c0_i32_0 = arith.constant 0 : i32
    %c0_i32_1 = arith.constant 0 : i32
    return %c0_i32, %c0_i32_0 : i32, i32
  }
  func.func @transform_2(%arg0: i32) -> (i32, i32, i32) {
    %c0_i32 = arith.constant 0 : i32
    %c0_i32_0 = arith.constant 0 : i32
    %c0_i32_1 = arith.constant 0 : i32
    %c0_i32_2 = arith.constant 0 : i32
    return %c0_i32, %c0_i32_0, %c0_i32_1 : i32, i32, i32
  }
  func.func @transform_3(%arg0: i32) -> (i32, i32, i32) {
    %c0_i32 = arith.constant 0 : i32
    %c0_i32_0 = arith.constant 0 : i32
    %c0_i32_1 = arith.constant 0 : i32
    %c0_i32_2 = arith.constant 0 : i32
    return %c0_i32, %c0_i32_0, %c0_i32_1 : i32, i32, i32
  }
  func.func @transform_4(%arg0: i32) -> (i32, i32, i32) {
    %c0_i32 = arith.constant 0 : i32
    %c0_i32_0 = arith.constant 0 : i32
    %c0_i32_1 = arith.constant 0 : i32
    %c0_i32_2 = arith.constant 0 : i32
    return %c0_i32, %c0_i32_0, %c0_i32_1 : i32, i32, i32
  }
  func.func @transform_5(%arg0: i32) -> (i32, i32, i32) {
    %c0_i32 = arith.constant 0 : i32
    %c0_i32_0 = arith.constant 0 : i32
    %c0_i32_1 = arith.constant 0 : i32
    %c0_i32_2 = arith.constant 0 : i32
    return %c0_i32, %c0_i32_0, %c0_i32_1 : i32, i32, i32
  }
  func.func @transform_6(%arg0: i32) -> (i32, i32) {
    %c0_i32 = arith.constant 0 : i32
    %c0_i32_0 = arith.constant 0 : i32
    %c0_i32_1 = arith.constant 0 : i32
    return %c0_i32, %c0_i32_0 : i32, i32
  }
  func.func @transform_7(%arg0: i32) -> (i32, i32) {
    %c0_i32 = arith.constant 0 : i32
    %c0_i32_0 = arith.constant 0 : i32
    %c0_i32_1 = arith.constant 0 : i32
    return %c0_i32, %c0_i32_0 : i32, i32
  }
  func.func @transform_8(%arg0: i32) -> (i32, i32) {
    %c0_i32 = arith.constant 0 : i32
    %c0_i32_0 = arith.constant 0 : i32
    return %arg0, %c0_i32 : i32, i32
  }
}

</mosaic_0001>

<llo_original>
// kernel: _gru_forward_impl.1
$region0: #{_gru_forward_impl.1}
  #allocation0 [shape = 'u32[]', space=smem, size = 0x4, offset = 0x4, fixed_abs, tag = 'smem constant byte address 0x4 - core index']
  #allocation1 [shape = 'u32[72,128]{1,0:T(1,128)}', space=vmem, size = 0x9000, scoped, tag = 'internal scratch']
  #allocation2 [shape = 'f32[8,8,128]{2,1,0:T(8,128)}', space=vmem, size = 0x8000, scoped, tag = 'scratch operand']
  #allocation3 [shape = 'f32[1,1]{1,0:T(1,128)S(1)}', space=vmem, size = 0x200, scoped, tag = 'scoped memory for _gru_forward_impl.1']
  %s0 = inlined_call_operand.vmem [shape: f32[8,8,128], index: 0, kind: input, shape index: {}]
  %s1 = inlined_call_operand.hbm [shape: f32[128,384], index: 1, kind: input, shape index: {}]
  %s2 = inlined_call_operand.hbm [shape: f32[2,128,384], index: 2, kind: input, shape index: {}]
  %s3 = inlined_call_operand.hbm [shape: f32[3,128,384], index: 3, kind: input, shape index: {}]
  %s4 = inlined_call_operand.vmem [shape: f32[3,1,384], index: 4, kind: input, shape index: {}]
  %s5 = inlined_call_operand.vmem [shape: f32[3,1,384], index: 5, kind: input, shape index: {}]
  %s6 = inlined_call_operand.vmem [shape: f32[1,128], index: 6, kind: input, shape index: {}]
  %s7 = inlined_call_operand.<no memory space> [shape: f32[1,1], index: 7, kind: input, shape index: {}]
  %s8 = inlined_call_operand.vmem [shape: f32[8,1], index: 8, kind: output, shape index: {}]
  %s9 = sld [smem:[#allocation0]]
  $region54: #{_gru_forward_impl.1} parent=0
    _
  %s11 = ssub.s32 1, %s9
  %s12 = scalar_select 0, %s11, %s9
  %v13 = vstv %s7
  %14 = vst [vmem:[#allocation3] sm:$0x1] %v13
  $region1: #{_gru_forward_impl.1} parent=0
    #allocation4 [shape = 'u8[196608]{0}', space=vmem, size = 0x30000, scoped, tag = 'input window, operand 1, single buffered']
    #allocation5 [shape = 's32[1]{0}', space=sflag, size = 0x4, scoped, tag = 'scoped memory for _gru_forward_impl.1']
    #allocation6 [shape = 'u8[393216]{0}', space=vmem, size = 0x60000, scoped, tag = 'input window, operand 2, single buffered']
    #allocation7 [shape = 's32[1]{0}', space=sflag, size = 0x4, scoped, tag = 'scoped memory for _gru_forward_impl.1']
    #allocation8 [shape = 'u8[589824]{0}', space=vmem, size = 0x90000, scoped, tag = 'input window, operand 3, single buffered']
    %15 = vsyncpa [#allocation5], 0
    %16 = vsyncpa [#allocation7], 0
    // Predicated region
    $region2: #{_gru_forward_impl.1} parent=1 // pred_check
      _
    $region3: #{_gru_forward_impl.1} parent=1 // pred_check_branch
      %18 = sbr.rel (0) target = $region5
    $region4: #{_gru_forward_impl.1} parent=1 // pred_region
      _
    $region5: #{_gru_forward_impl.1} parent=1 // pred_fallthru
      _
    // Predicated region
    $region6: #{_gru_forward_impl.1} parent=1 // pred_check
      _
    $region7: #{_gru_forward_impl.1} parent=1 // pred_check_branch
      %20 = sbr.rel (0) target = $region9
    $region8: #{_gru_forward_impl.1} parent=1 // pred_region
      %22 = vsyncadd [#allocation5], 0
      %s23 = sshll.u32 %s1, 4
      %s24 = int_to_ptr.hbm [resolvable:$true] %s23
      %s25 = sshll.u32 [#allocation4], 4
      %s26 = int_to_ptr.vmem [resolvable:$true] %s25
      %31 = dma.hbm_to_vmem [thread:$0]  %s24, 6144, %s26, [#allocation5], 384, 384, 24
    $region9: #{_gru_forward_impl.1} parent=1 // pred_fallthru
      _
    // Predicated region
    $region10: #{_gru_forward_impl.1} parent=1 // pred_check
      _
    $region11: #{_gru_forward_impl.1} parent=1 // pred_check_branch
      %33 = sbr.rel (0) target = $region13
    $region12: #{_gru_forward_impl.1} parent=1 // pred_region
      %35 = vsyncadd [#allocation7], 0
      %s36 = sshll.u32 %s2, 4
      %s37 = int_to_ptr.hbm [resolvable:$true] %s36
      %s38 = sshll.u32 [#allocation6], 4
      %s39 = int_to_ptr.vmem [resolvable:$true] %s38
      %44 = dma.hbm_to_vmem [thread:$0]  %s37, 12288, %s39, [#allocation7], 384, 384, 24
    $region13: #{_gru_forward_impl.1} parent=1 // pred_fallthru
      _
    // Predicated region
    $region14: #{_gru_forward_impl.1} parent=1 // pred_check
      _
    $region15: #{_gru_forward_impl.1} parent=1 // pred_check_branch
      %46 = sbr.rel (0) target = $region17
    $region16: #{_gru_forward_impl.1} parent=1 // pred_region
      %48 = vsyncadd [#allocation7], 0
      %s49 = sshll.u32 %s3, 4
      %s50 = int_to_ptr.hbm [resolvable:$true] %s49
      %s51 = sshll.u32 [#allocation8], 4
      %s52 = int_to_ptr.vmem [resolvable:$true] %s51
      %57 = dma.hbm_to_vmem [thread:$0]  %s50, 18432, %s52, [#allocation7], 384, 384, 24
    $region17: #{_gru_forward_impl.1} parent=1 // pred_fallthru
      _
    // Predicated region
    $region18: #{_gru_forward_impl.1} parent=1 // pred_check
      _
    $region19: #{_gru_forward_impl.1} parent=1 // pred_check_branch
      %59 = sbr.rel (0) target = $region21
    $region20: #{_gru_forward_impl.1} parent=1 // pred_region
      _
    $region21: #{_gru_forward_impl.1} parent=1 // pred_fallthru
      _
    // Predicated region
    $region22: #{_gru_forward_impl.1} parent=1 // pred_check
      _
    $region23: #{_gru_forward_impl.1} parent=1 // pred_check_branch
      %61 = sbr.rel (0) target = $region25
    $region24: #{_gru_forward_impl.1} parent=1 // pred_region
      _
    $region25: #{_gru_forward_impl.1} parent=1 // pred_fallthru
      _
    // Predicated region
    $region26: #{_gru_forward_impl.1} parent=1 // pred_check
      _
    $region27: #{_gru_forward_impl.1} parent=1 // pred_check_branch
      %63 = sbr.rel (0) target = $region29
    $region28: #{_gru_forward_impl.1} parent=1 // pred_region
      _
    $region29: #{_gru_forward_impl.1} parent=1 // pred_fallthru
      _
    // Predicated region
    $region30: #{_gru_forward_impl.1} parent=1 // pred_check
      _
    $region31: #{_gru_forward_impl.1} parent=1 // pred_check_branch
      %65 = sbr.rel (0) target = $region33
    $region32: #{_gru_forward_impl.1} parent=1 // pred_region
      _
    $region33: #{_gru_forward_impl.1} parent=1 // pred_fallthru
      _
    // Predicated region
    $region34: #{_gru_forward_impl.1} parent=1 // pred_check
      _
    $region35: #{_gru_forward_impl.1} parent=1 // pred_check_branch
      %67 = sbr.rel (0) target = $region37
    $region36: #{_gru_forward_impl.1} parent=1 // pred_region
      %69 = dma.done [#allocation5], 6144
    $region37: #{_gru_forward_impl.1} parent=1 // pred_fallthru
      _
    // Predicated region
    $region38: #{_gru_forward_impl.1} parent=1 // pred_check
      _
    $region39: #{_gru_forward_impl.1} parent=1 // pred_check_branch
      %71 = sbr.rel (0) target = $region41
    $region40: #{_gru_forward_impl.1} parent=1 // pred_region
      %73 = dma.done [#allocation7], 12288
    $region41: #{_gru_forward_impl.1} parent=1 // pred_fallthru
      _
    // Predicated region
    $region42: #{_gru_forward_impl.1} parent=1 // pred_check
      _
    $region43: #{_gru_forward_impl.1} parent=1 // pred_check_branch
      %75 = sbr.rel (0) target = $region45
    $region44: #{_gru_forward_impl.1} parent=1 // pred_region
      %77 = dma.done [#allocation7], 18432
    $region45: #{_gru_forward_impl.1} parent=1 // pred_fallthru
      _
    %v78 = vld [vmem:[%s0] sm:$0xff]
    %v79 = vld [vmem:[%s0 + $0x8] sm:$0xff]
    %v80 = vld [vmem:[%s0 + $0x10] sm:$0xff]
    %v81 = vld [vmem:[%s0 + $0x18] sm:$0xff]
    %v82 = vld [vmem:[%s0 + $0x20] sm:$0xff]
    %v83 = vld [vmem:[%s0 + $0x28] sm:$0xff]
    %v84 = vld [vmem:[%s0 + $0x30] sm:$0xff]
    %v85 = vld [vmem:[%s0 + $0x38] sm:$0xff]
    %v86 = vld [vmem:[#allocation4] sm:$0xff]
    %v87 = vld [vmem:[#allocation4 + $0x8] sm:$0xff]
    %v88 = vld [vmem:[#allocation4 + $0x10] sm:$0xff]
    %v89 = vld [vmem:[#allocation4 + $0x18] sm:$0xff]
    %v90 = vld [vmem:[#allocation4 + $0x20] sm:$0xff]
    %v91 = vld [vmem:[#allocation4 + $0x28] sm:$0xff]
    %v92 = vld [vmem:[#allocation4 + $0x30] sm:$0xff]
    %v93 = vld [vmem:[#allocation4 + $0x38] sm:$0xff]
    %v94 = vld [vmem:[#allocation4 + $0x40] sm:$0xff]
    %v95 = vld [vmem:[#allocation4 + $0x48] sm:$0xff]
    %v96 = vld [vmem:[#allocation4 + $0x50] sm:$0xff]
    %v97 = vld [vmem:[#allocation4 + $0x58] sm:$0xff]
    %v98 = vld [vmem:[#allocation4 + $0x60] sm:$0xff]
    %v99 = vld [vmem:[#allocation4 + $0x68] sm:$0xff]
    %v100 = vld [vmem:[#allocation4 + $0x70] sm:$0xff]
    %v101 = vld [vmem:[#allocation4 + $0x78] sm:$0xff]
    %v102 = vld [vmem:[#allocation4 + $0x80] sm:$0xff]
    %v103 = vld [vmem:[#allocation4 + $0x88] sm:$0xff]
    %v104 = vld [vmem:[#allocation4 + $0x90] sm:$0xff]
    %v105 = vld [vmem:[#allocation4 + $0x98] sm:$0xff]
    %v106 = vld [vmem:[#allocation4 + $0xa0] sm:$0xff]
    %v107 = vld [vmem:[#allocation4 + $0xa8] sm:$0xff]
    %v108 = vld [vmem:[#allocation4 + $0xb0] sm:$0xff]
    %v109 = vld [vmem:[#allocation4 + $0xb8] sm:$0xff]
    %v110 = vld [vmem:[#allocation4 + $0xc0] sm:$0xff]
    %v111 = vld [vmem:[#allocation4 + $0xc8] sm:$0xff]
    %v112 = vld [vmem:[#allocation4 + $0xd0] sm:$0xff]
    %v113 = vld [vmem:[#allocation4 + $0xd8] sm:$0xff]
    %v114 = vld [vmem:[#allocation4 + $0xe0] sm:$0xff]
    %v115 = vld [vmem:[#allocation4 + $0xe8] sm:$0xff]
    %v116 = vld [vmem:[#allocation4 + $0xf0] sm:$0xff]
    %v117 = vld [vmem:[#allocation4 + $0xf8] sm:$0xff]
    %v118 = vld [vmem:[#allocation4 + $0x100] sm:$0xff]
    %v119 = vld [vmem:[#allocation4 + $0x108] sm:$0xff]
    %v120 = vld [vmem:[#allocation4 + $0x110] sm:$0xff]
    %v121 = vld [vmem:[#allocation4 + $0x118] sm:$0xff]
    %v122 = vld [vmem:[#allocation4 + $0x120] sm:$0xff]
    %v123 = vld [vmem:[#allocation4 + $0x128] sm:$0xff]
    %v124 = vld [vmem:[#allocation4 + $0x130] sm:$0xff]
    %v125 = vld [vmem:[#allocation4 + $0x138] sm:$0xff]
    %v126 = vld [vmem:[#allocation4 + $0x140] sm:$0xff]
    %v127 = vld [vmem:[#allocation4 + $0x148] sm:$0xff]
    %v128 = vld [vmem:[#allocation4 + $0x150] sm:$0xff]
    %v129 = vld [vmem:[#allocation4 + $0x158] sm:$0xff]
    %v130 = vld [vmem:[#allocation4 + $0x160] sm:$0xff]
    %v131 = vld [vmem:[#allocation4 + $0x168] sm:$0xff]
    %v132 = vld [vmem:[#allocation4 + $0x170] sm:$0xff]
    %v133 = vld [vmem:[#allocation4 + $0x178] sm:$0xff]
    %v134 = vld [vmem:[%s4] sm:$0x7]
    %v136 = vperm.slane %v134, 0
    %v137 = vperm.slane %v134, 1
    %v138 = vperm.slane %v134, 2
    %142 = vmatpush.msra.mxu0 %v131
    %143 = vmatpush.msra.mxu0 %v128
    %144 = vmatpush.msra.mxu0 %v125
    %145 = vmatpush.msra.mxu0 %v122
    %146 = vmatpush.msra.mxu0 %v119
    %147 = vmatpush.msra.mxu0 %v116
    %148 = vmatpush.msra.mxu0 %v113
    %149 = vmatpush.msra.mxu0 %v110
    %150 = vmatpush.msra.mxu0 %v107
    %151 = vmatpush.msra.mxu0 %v104
    %152 = vmatpush.msra.mxu0 %v101
    %153 = vmatpush.msra.mxu0 %v98
    %154 = vmatpush.msra.mxu0 %v95
    %155 = vmatpush.msra.mxu0 %v92
    %156 = vmatpush.msra.mxu0 %v89
    %157 = vmatpush.msra.mxu0 %v86
    %158 = vmatmul.f32.gmra.mxu0 %v78
    %v159 = vpop.f32.mrf.mxu0
    %v160 = vadd.f32 %v136, %v159
    %161 = vmatmul.f32.gmra.mxu0 %v79
    %v162 = vpop.f32.mrf.mxu0
    %v163 = vadd.f32 %v136, %v162
    %164 = vmatmul.f32.gmra.mxu0 %v80
    %v165 = vpop.f32.mrf.mxu0
    %v166 = vadd.f32 %v136, %v165
    %167 = vmatmul.f32.gmra.mxu0 %v81
    %v168 = vpop.f32.mrf.mxu0
    %v169 = vadd.f32 %v136, %v168
    %170 = vmatmul.f32.gmra.mxu0 %v82
    %v171 = vpop.f32.mrf.mxu0
    %v172 = vadd.f32 %v136, %v171
    %173 = vmatmul.f32.gmra.mxu0 %v83
    %v174 = vpop.f32.mrf.mxu0
    %v175 = vadd.f32 %v136, %v174
    %176 = vmatmul.f32.gmra.mxu0 %v84
    %v177 = vpop.f32.mrf.mxu0
    %v178 = vadd.f32 %v136, %v177
    %179 = vmatmul.f32.gmra.mxu0 %v85
    %v180 = vpop.f32.mrf.mxu0
    %v181 = vadd.f32 %v136, %v180
    %182 = vdwg.mxu0
    %183 = vmatpush.msra.mxu0 %v132
    %184 = vmatpush.msra.mxu0 %v129
    %185 = vmatpush.msra.mxu0 %v126
    %186 = vmatpush.msra.mxu0 %v123
    %187 = vmatpush.msra.mxu0 %v120
    %188 = vmatpush.msra.mxu0 %v117
    %189 = vmatpush.msra.mxu0 %v114
    %190 = vmatpush.msra.mxu0 %v111
    %191 = vmatpush.msra.mxu0 %v108
    %192 = vmatpush.msra.mxu0 %v105
    %193 = vmatpush.msra.mxu0 %v102
    %194 = vmatpush.msra.mxu0 %v99
    %195 = vmatpush.msra.mxu0 %v96
    %196 = vmatpush.msra.mxu0 %v93
    %197 = vmatpush.msra.mxu0 %v90
    %198 = vmatpush.msra.mxu0 %v87
    %199 = vmatmul.f32.gmra.mxu0 %v78
    %v200 = vpop.f32.mrf.mxu0
    %v201 = vadd.f32 %v137, %v200
    %202 = vmatmul.f32.gmra.mxu0 %v79
    %v203 = vpop.f32.mrf.mxu0
    %v204 = vadd.f32 %v137, %v203
    %205 = vmatmul.f32.gmra.mxu0 %v80
    %v206 = vpop.f32.mrf.mxu0
    %v207 = vadd.f32 %v137, %v206
    %208 = vmatmul.f32.gmra.mxu0 %v81
    %v209 = vpop.f32.mrf.mxu0
    %v210 = vadd.f32 %v137, %v209
    %211 = vmatmul.f32.gmra.mxu0 %v82
    %v212 = vpop.f32.mrf.mxu0
    %v213 = vadd.f32 %v137, %v212
    %214 = vmatmul.f32.gmra.mxu0 %v83
    %v215 = vpop.f32.mrf.mxu0
    %v216 = vadd.f32 %v137, %v215
    %217 = vmatmul.f32.gmra.mxu0 %v84
    %v218 = vpop.f32.mrf.mxu0
    %v219 = vadd.f32 %v137, %v218
    %220 = vmatmul.f32.gmra.mxu0 %v85
    %v221 = vpop.f32.mrf.mxu0
    %v222 = vadd.f32 %v137, %v221
    %223 = vdwg.mxu0
    %224 = vmatpush.msra.mxu0 %v133
    %225 = vmatpush.msra.mxu0 %v130
    %226 = vmatpush.msra.mxu0 %v127
    %227 = vmatpush.msra.mxu0 %v124
    %228 = vmatpush.msra.mxu0 %v121
    %229 = vmatpush.msra.mxu0 %v118
    %230 = vmatpush.msra.mxu0 %v115
    %231 = vmatpush.msra.mxu0 %v112
    %232 = vmatpush.msra.mxu0 %v109
    %233 = vmatpush.msra.mxu0 %v106
    %234 = vmatpush.msra.mxu0 %v103
    %235 = vmatpush.msra.mxu0 %v100
    %236 = vmatpush.msra.mxu0 %v97
    %237 = vmatpush.msra.mxu0 %v94
    %238 = vmatpush.msra.mxu0 %v91
    %239 = vmatpush.msra.mxu0 %v88
    %240 = vmatmul.f32.gmra.mxu0 %v78
    %v241 = vpop.f32.mrf.mxu0
    %v242 = vadd.f32 %v138, %v241
    %243 = vmatmul.f32.gmra.mxu0 %v79
    %v244 = vpop.f32.mrf.mxu0
    %v245 = vadd.f32 %v138, %v244
    %246 = vmatmul.f32.gmra.mxu0 %v80
    %v247 = vpop.f32.mrf.mxu0
    %v248 = vadd.f32 %v138, %v247
    %249 = vmatmul.f32.gmra.mxu0 %v81
    %v250 = vpop.f32.mrf.mxu0
    %v251 = vadd.f32 %v138, %v250
    %252 = vmatmul.f32.gmra.mxu0 %v82
    %v253 = vpop.f32.mrf.mxu0
    %v254 = vadd.f32 %v138, %v253
    %255 = vmatmul.f32.gmra.mxu0 %v83
    %v256 = vpop.f32.mrf.mxu0
    %v257 = vadd.f32 %v138, %v256
    %258 = vmatmul.f32.gmra.mxu0 %v84
    %v259 = vpop.f32.mrf.mxu0
    %v260 = vadd.f32 %v138, %v259
    %261 = vmatmul.f32.gmra.mxu0 %v85
    %v262 = vpop.f32.mrf.mxu0
    %v263 = vadd.f32 %v138, %v262
    %264 = vdwg.mxu0
    %v265 = vld [vmem:[#allocation8] sm:$0xff]
    %v266 = vld [vmem:[#allocation8 + $0x8] sm:$0xff]
    %v267 = vld [vmem:[#allocation8 + $0x10] sm:$0xff]
    %v268 = vld [vmem:[#allocation8 + $0x18] sm:$0xff]
    %v269 = vld [vmem:[#allocation8 + $0x20] sm:$0xff]
    %v270 = vld [vmem:[#allocation8 + $0x28] sm:$0xff]
    %v271 = vld [vmem:[#allocation8 + $0x30] sm:$0xff]
    %v272 = vld [vmem:[#allocation8 + $0x38] sm:$0xff]
    %v273 = vld [vmem:[#allocation8 + $0x40] sm:$0xff]
    %v274 = vld [vmem:[#allocation8 + $0x48] sm:$0xff]
    %v275 = vld [vmem:[#allocation8 + $0x50] sm:$0xff]
    %v276 = vld [vmem:[#allocation8 + $0x58] sm:$0xff]
    %v277 = vld [vmem:[#allocation8 + $0x60] sm:$0xff]
    %v278 = vld [vmem:[#allocation8 + $0x68] sm:$0xff]
    %v279 = vld [vmem:[#allocation8 + $0x70] sm:$0xff]
    %v280 = vld [vmem:[#allocation8 + $0x78] sm:$0xff]
    %v281 = vld [vmem:[#allocation8 + $0x80] sm:$0xff]
    %v282 = vld [vmem:[#allocation8 + $0x88] sm:$0xff]
    %v283 = vld [vmem:[#allocation8 + $0x90] sm:$0xff]
    %v284 = vld [vmem:[#allocation8 + $0x98] sm:$0xff]
    %v285 = vld [vmem:[#allocation8 + $0xa0] sm:$0xff]
    %v286 = vld [vmem:[#allocation8 + $0xa8] sm:$0xff]
    %v287 = vld [vmem:[#allocation8 + $0xb0] sm:$0xff]
    %v288 = vld [vmem:[#allocation8 + $0xb8] sm:$0xff]
    %v289 = vld [vmem:[#allocation8 + $0xc0] sm:$0xff]
    %v290 = vld [vmem:[#allocation8 + $0xc8] sm:$0xff]
    %v291 = vld [vmem:[#allocation8 + $0xd0] sm:$0xff]
    %v292 = vld [vmem:[#allocation8 + $0xd8] sm:$0xff]
    %v293 = vld [vmem:[#allocation8 + $0xe0] sm:$0xff]
    %v294 = vld [vmem:[#allocation8 + $0xe8] sm:$0xff]
    %v295 = vld [vmem:[#allocation8 + $0xf0] sm:$0xff]
    %v296 = vld [vmem:[#allocation8 + $0xf8] sm:$0xff]
    %v297 = vld [vmem:[#allocation8 + $0x100] sm:$0xff]
    %v298 = vld [vmem:[#allocation8 + $0x108] sm:$0xff]
    %v299 = vld [vmem:[#allocation8 + $0x110] sm:$0xff]
    %v300 = vld [vmem:[#allocation8 + $0x118] sm:$0xff]
    %v301 = vld [vmem:[#allocation8 + $0x120] sm:$0xff]
    %v302 = vld [vmem:[#allocation8 + $0x128] sm:$0xff]
    %v303 = vld [vmem:[#allocation8 + $0x130] sm:$0xff]
    %v304 = vld [vmem:[#allocation8 + $0x138] sm:$0xff]
    %v305 = vld [vmem:[#allocation8 + $0x140] sm:$0xff]
    %v306 = vld [vmem:[#allocation8 + $0x148] sm:$0xff]
    %v307 = vld [vmem:[#allocation8 + $0x150] sm:$0xff]
    %v308 = vld [vmem:[#allocation8 + $0x158] sm:$0xff]
    %v309 = vld [vmem:[#allocation8 + $0x160] sm:$0xff]
    %v310 = vld [vmem:[#allocation8 + $0x168] sm:$0xff]
    %v311 = vld [vmem:[#allocation8 + $0x170] sm:$0xff]
    %v312 = vld [vmem:[#allocation8 + $0x178] sm:$0xff]
    %v313 = vld [vmem:[%s5] sm:$0x7]
    %v315 = vperm.slane %v313, 0
    %v316 = vperm.slane %v313, 1
    %v317 = vperm.slane %v313, 2
    %321 = vmatpush.msra.mxu0 %v310
    %322 = vmatpush.msra.mxu0 %v307
    %323 = vmatpush.msra.mxu0 %v304
    %324 = vmatpush.msra.mxu0 %v301
    %325 = vmatpush.msra.mxu0 %v298
    %326 = vmatpush.msra.mxu0 %v295
    %327 = vmatpush.msra.mxu0 %v292
    %328 = vmatpush.msra.mxu0 %v289
    %329 = vmatpush.msra.mxu0 %v286
    %330 = vmatpush.msra.mxu0 %v283
    %331 = vmatpush.msra.mxu0 %v280
    %332 = vmatpush.msra.mxu0 %v277
    %333 = vmatpush.msra.mxu0 %v274
    %334 = vmatpush.msra.mxu0 %v271
    %335 = vmatpush.msra.mxu0 %v268
    %336 = vmatpush.msra.mxu0 %v265
    %337 = vmatmul.f32.gmra.mxu0 0.0
    %v338 = vpop.f32.mrf.mxu0
    %v339 = vadd.f32 %v315, %v338
    %340 = vdwg.mxu0
    %341 = vmatpush.msra.mxu0 %v311
    %342 = vmatpush.msra.mxu0 %v308
    %343 = vmatpush.msra.mxu0 %v305
    %344 = vmatpush.msra.mxu0 %v302
    %345 = vmatpush.msra.mxu0 %v299
    %346 = vmatpush.msra.mxu0 %v296
    %347 = vmatpush.msra.mxu0 %v293
    %348 = vmatpush.msra.mxu0 %v290
    %349 = vmatpush.msra.mxu0 %v287
    %350 = vmatpush.msra.mxu0 %v284
    %351 = vmatpush.msra.mxu0 %v281
    %352 = vmatpush.msra.mxu0 %v278
    %353 = vmatpush.msra.mxu0 %v275
    %354 = vmatpush.msra.mxu0 %v272
    %355 = vmatpush.msra.mxu0 %v269
    %356 = vmatpush.msra.mxu0 %v266
    %357 = vmatmul.f32.gmra.mxu0 0.0
    %v358 = vpop.f32.mrf.mxu0
    %v359 = vadd.f32 %v316, %v358
    %360 = vdwg.mxu0
    %361 = vmatpush.msra.mxu0 %v312
    %362 = vmatpush.msra.mxu0 %v309
    %363 = vmatpush.msra.mxu0 %v306
    %364 = vmatpush.msra.mxu0 %v303
    %365 = vmatpush.msra.mxu0 %v300
    %366 = vmatpush.msra.mxu0 %v297
    %367 = vmatpush.msra.mxu0 %v294
    %368 = vmatpush.msra.mxu0 %v291
    %369 = vmatpush.msra.mxu0 %v288
    %370 = vmatpush.msra.mxu0 %v285
    %371 = vmatpush.msra.mxu0 %v282
    %372 = vmatpush.msra.mxu0 %v279
    %373 = vmatpush.msra.mxu0 %v276
    %374 = vmatpush.msra.mxu0 %v273
    %375 = vmatpush.msra.mxu0 %v270
    %376 = vmatpush.msra.mxu0 %v267
    %377 = vmatmul.f32.gmra.mxu0 0.0
    %v378 = vpop.f32.mrf.mxu0
    %v379 = vadd.f32 %v317, %v378
    %380 = vdwg.mxu0
    %v381 = vadd.f32 %v160, %v339
    %v382 = vxor.u32 %v381, 2147483648
    %v383 = vmul.f32 %v382, 1.442695
    %v384 = vpow.pop %v383
    %v385 = vadd.f32 %v384, 1.0
    %v386 = vrcp.pop %v385
    %v387 = vmul.f32 %v385, %v386
    %v388 = vsub.f32 1.0, %v387
    %v389 = vmul.f32 %v386, %v388
    %v390 = vadd.f32 %v386, %v389
    %vm391 = vweird.f32 %v385
    %vm392 = vweird.f32 %v386
    %vm393 = vmor %vm391, %vm392
    %v394 = vsel %vm393, %v386, %v390
    %v395 = vand.u32 2147483647, %v385
    %vm396 = vcmp.eq.f32.partialorder %v395, 8.507059e+37
    %v397 = vand.u32 %v385, 2147483648
    %v398 = vor.u32 1.1754944e-38, %v397
    %v399 = vsel %vm396, %v398, %v394
    %v400 = vmul.f32 1.0, %v399
    %v401 = vadd.f32 %v201, %v359
    %v402 = vxor.u32 %v401, 2147483648
    %v403 = vmul.f32 %v402, 1.442695
    %v404 = vpow.pop %v403
    %v405 = vadd.f32 %v404, 1.0
    %v406 = vrcp.pop %v405
    %v407 = vmul.f32 %v405, %v406
    %v408 = vsub.f32 1.0, %v407
    %v409 = vmul.f32 %v406, %v408
    %v410 = vadd.f32 %v406, %v409
    %vm411 = vweird.f32 %v405
    %vm412 = vweird.f32 %v406
    %vm413 = vmor %vm411, %vm412
    %v414 = vsel %vm413, %v406, %v410
    %v415 = vand.u32 2147483647, %v405
    %vm416 = vcmp.eq.f32.partialorder %v415, 8.507059e+37
    %v417 = vand.u32 %v405, 2147483648
    %v418 = vor.u32 1.1754944e-38, %v417
    %v419 = vsel %vm416, %v418, %v414
    %v420 = vmul.f32 1.0, %v419
    %v421 = vmul.f32 %v400, %v379
    %v422 = vadd.f32 %v242, %v421
    %v423 = vtanh.pop %v422
    %v424 = vsub.f32 1.0, %v420
    %v425 = vmul.f32 %v424, %v423
    %v426 = vmul.f32 %v420, 0.0
    %v427 = vadd.f32 %v425, %v426
    %428 = vst [vmem:[#allocation2] sm:$0xff] %v427
    %429 = vmatpush.msra.mxu0 %v310
    %430 = vmatpush.msra.mxu0 %v307
    %431 = vmatpush.msra.mxu0 %v304
    %432 = vmatpush.msra.mxu0 %v301
    %433 = vmatpush.msra.mxu0 %v298
    %434 = vmatpush.msra.mxu0 %v295
    %435 = vmatpush.msra.mxu0 %v292
    %436 = vmatpush.msra.mxu0 %v289
    %437 = vmatpush.msra.mxu0 %v286
    %438 = vmatpush.msra.mxu0 %v283
    %439 = vmatpush.msra.mxu0 %v280
    %440 = vmatpush.msra.mxu0 %v277
    %441 = vmatpush.msra.mxu0 %v274
    %442 = vmatpush.msra.mxu0 %v271
    %443 = vmatpush.msra.mxu0 %v268
    %444 = vmatpush.msra.mxu0 %v265
    %445 = vmatmul.f32.gmra.mxu0 %v427
    %v446 = vpop.f32.mrf.mxu0
    %v447 = vadd.f32 %v315, %v446
    %448 = vdwg.mxu0
    %449 = vmatpush.msra.mxu0 %v311
    %450 = vmatpush.msra.mxu0 %v308
    %451 = vmatpush.msra.mxu0 %v305
    %452 = vmatpush.msra.mxu0 %v302
    %453 = vmatpush.msra.mxu0 %v299
    %454 = vmatpush.msra.mxu0 %v296
    %455 = vmatpush.msra.mxu0 %v293
    %456 = vmatpush.msra.mxu0 %v290
    %457 = vmatpush.msra.mxu0 %v287
    %458 = vmatpush.msra.mxu0 %v284
    %459 = vmatpush.msra.mxu0 %v281
    %460 = vmatpush.msra.mxu0 %v278
    %461 = vmatpush.msra.mxu0 %v275
    %462 = vmatpush.msra.mxu0 %v272
    %463 = vmatpush.msra.mxu0 %v269
    %464 = vmatpush.msra.mxu0 %v266
    %465 = vmatmul.f32.gmra.mxu0 %v427
    %v466 = vpop.f32.mrf.mxu0
    %v467 = vadd.f32 %v316, %v466
    %468 = vdwg.mxu0
    %469 = vmatpush.msra.mxu0 %v312
    %470 = vmatpush.msra.mxu0 %v309
    %471 = vmatpush.msra.mxu0 %v306
    %472 = vmatpush.msra.mxu0 %v303
    %473 = vmatpush.msra.mxu0 %v300
    %474 = vmatpush.msra.mxu0 %v297
    %475 = vmatpush.msra.mxu0 %v294
    %476 = vmatpush.msra.mxu0 %v291
    %477 = vmatpush.msra.mxu0 %v288
    %478 = vmatpush.msra.mxu0 %v285
    %479 = vmatpush.msra.mxu0 %v282
    %480 = vmatpush.msra.mxu0 %v279
    %481 = vmatpush.msra.mxu0 %v276
    %482 = vmatpush.msra.mxu0 %v273
    %483 = vmatpush.msra.mxu0 %v270
    %484 = vmatpush.msra.mxu0 %v267
    %485 = vmatmul.f32.gmra.mxu0 %v427
    %v486 = vpop.f32.mrf.mxu0
    %v487 = vadd.f32 %v317, %v486
    %488 = vdwg.mxu0
    %v489 = vadd.f32 %v163, %v447
    %v490 = vxor.u32 %v489, 2147483648
    %v491 = vmul.f32 %v490, 1.442695
    %v492 = vpow.pop %v491
    %v493 = vadd.f32 %v492, 1.0
    %v494 = vrcp.pop %v493
    %v495 = vmul.f32 %v493, %v494
    %v496 = vsub.f32 1.0, %v495
    %v497 = vmul.f32 %v494, %v496
    %v498 = vadd.f32 %v494, %v497
    %vm499 = vweird.f32 %v493
    %vm500 = vweird.f32 %v494
    %vm501 = vmor %vm499, %vm500
    %v502 = vsel %vm501, %v494, %v498
    %v503 = vand.u32 2147483647, %v493
    %vm504 = vcmp.eq.f32.partialorder %v503, 8.507059e+37
    %v505 = vand.u32 %v493, 2147483648
    %v506 = vor.u32 1.1754944e-38, %v505
    %v507 = vsel %vm504, %v506, %v502
    %v508 = vmul.f32 1.0, %v507
    %v509 = vadd.f32 %v204, %v467
    %v510 = vxor.u32 %v509, 2147483648
    %v511 = vmul.f32 %v510, 1.442695
    %v512 = vpow.pop %v511
    %v513 = vadd.f32 %v512, 1.0
    %v514 = vrcp.pop %v513
    %v515 = vmul.f32 %v513, %v514
    %v516 = vsub.f32 1.0, %v515
    %v517 = vmul.f32 %v514, %v516
    %v518 = vadd.f32 %v514, %v517
    %vm519 = vweird.f32 %v513
    %vm520 = vweird.f32 %v514
    %vm521 = vmor %vm519, %vm520
    %v522 = vsel %vm521, %v514, %v518
    %v523 = vand.u32 2147483647, %v513
    %vm524 = vcmp.eq.f32.partialorder %v523, 8.507059e+37
    %v525 = vand.u32 %v513, 2147483648
    %v526 = vor.u32 1.1754944e-38, %v525
    %v527 = vsel %vm524, %v526, %v522
    %v528 = vmul.f32 1.0, %v527
    %v529 = vmul.f32 %v508, %v487
    %v530 = vadd.f32 %v245, %v529
    %v531 = vtanh.pop %v530
    %v532 = vsub.f32 1.0, %v528
    %v533 = vmul.f32 %v532, %v531
    %v534 = vmul.f32 %v528, %v427
    %v535 = vadd.f32 %v533, %v534
    %s536 = scalar_lea.vmem [#allocation2], 8
    %537 = vst [vmem:[%s536] sm:$0xff] %v535
    %538 = vmatpush.msra.mxu0 %v310
    %539 = vmatpush.msra.mxu0 %v307
    %540 = vmatpush.msra.mxu0 %v304
    %541 = vmatpush.msra.mxu0 %v301
    %542 = vmatpush.msra.mxu0 %v298
    %543 = vmatpush.msra.mxu0 %v295
    %544 = vmatpush.msra.mxu0 %v292
    %545 = vmatpush.msra.mxu0 %v289
    %546 = vmatpush.msra.mxu0 %v286
    %547 = vmatpush.msra.mxu0 %v283
    %548 = vmatpush.msra.mxu0 %v280
    %549 = vmatpush.msra.mxu0 %v277
    %550 = vmatpush.msra.mxu0 %v274
    %551 = vmatpush.msra.mxu0 %v271
    %552 = vmatpush.msra.mxu0 %v268
    %553 = vmatpush.msra.mxu0 %v265
    %554 = vmatmul.f32.gmra.mxu0 %v535
    %v555 = vpop.f32.mrf.mxu0
    %v556 = vadd.f32 %v315, %v555
    %557 = vdwg.mxu0
    %558 = vmatpush.msra.mxu0 %v311
    %559 = vmatpush.msra.mxu0 %v308
    %560 = vmatpush.msra.mxu0 %v305
    %561 = vmatpush.msra.mxu0 %v302
    %562 = vmatpush.msra.mxu0 %v299
    %563 = vmatpush.msra.mxu0 %v296
    %564 = vmatpush.msra.mxu0 %v293
    %565 = vmatpush.msra.mxu0 %v290
    %566 = vmatpush.msra.mxu0 %v287
    %567 = vmatpush.msra.mxu0 %v284
    %568 = vmatpush.msra.mxu0 %v281
    %569 = vmatpush.msra.mxu0 %v278
    %570 = vmatpush.msra.mxu0 %v275
    %571 = vmatpush.msra.mxu0 %v272
    %572 = vmatpush.msra.mxu0 %v269
    %573 = vmatpush.msra.mxu0 %v266
    %574 = vmatmul.f32.gmra.mxu0 %v535
    %v575 = vpop.f32.mrf.mxu0
    %v576 = vadd.f32 %v316, %v575
    %577 = vdwg.mxu0
    %578 = vmatpush.msra.mxu0 %v312
    %579 = vmatpush.msra.mxu0 %v309
    %580 = vmatpush.msra.mxu0 %v306
    %581 = vmatpush.msra.mxu0 %v303
    %582 = vmatpush.msra.mxu0 %v300
    %583 = vmatpush.msra.mxu0 %v297
    %584 = vmatpush.msra.mxu0 %v294
    %585 = vmatpush.msra.mxu0 %v291
    %586 = vmatpush.msra.mxu0 %v288
    %587 = vmatpush.msra.mxu0 %v285
    %588 = vmatpush.msra.mxu0 %v282
    %589 = vmatpush.msra.mxu0 %v279
    %590 = vmatpush.msra.mxu0 %v276
    %591 = vmatpush.msra.mxu0 %v273
    %592 = vmatpush.msra.mxu0 %v270
    %593 = vmatpush.msra.mxu0 %v267
    %594 = vmatmul.f32.gmra.mxu0 %v535
    %v595 = vpop.f32.mrf.mxu0
    %v596 = vadd.f32 %v317, %v595
    %597 = vdwg.mxu0
    %v598 = vadd.f32 %v166, %v556
    %v599 = vxor.u32 %v598, 2147483648
    %v600 = vmul.f32 %v599, 1.442695
    %v601 = vpow.pop %v600
    %v602 = vadd.f32 %v601, 1.0
    %v603 = vrcp.pop %v602
    %v604 = vmul.f32 %v602, %v603
    %v605 = vsub.f32 1.0, %v604
    %v606 = vmul.f32 %v603, %v605
    %v607 = vadd.f32 %v603, %v606
    %vm608 = vweird.f32 %v602
    %vm609 = vweird.f32 %v603
    %vm610 = vmor %vm608, %vm609
    %v611 = vsel %vm610, %v603, %v607
    %v612 = vand.u32 2147483647, %v602
    %vm613 = vcmp.eq.f32.partialorder %v612, 8.507059e+37
    %v614 = vand.u32 %v602, 2147483648
    %v615 = vor.u32 1.1754944e-38, %v614
    %v616 = vsel %vm613, %v615, %v611
    %v617 = vmul.f32 1.0, %v616
    %v618 = vadd.f32 %v207, %v576
    %v619 = vxor.u32 %v618, 2147483648
    %v620 = vmul.f32 %v619, 1.442695
    %v621 = vpow.pop %v620
    %v622 = vadd.f32 %v621, 1.0
    %v623 = vrcp.pop %v622
    %v624 = vmul.f32 %v622, %v623
    %v625 = vsub.f32 1.0, %v624
    %v626 = vmul.f32 %v623, %v625
    %v627 = vadd.f32 %v623, %v626
    %vm628 = vweird.f32 %v622
    %vm629 = vweird.f32 %v623
    %vm630 = vmor %vm628, %vm629
    %v631 = vsel %vm630, %v623, %v627
    %v632 = vand.u32 2147483647, %v622
    %vm633 = vcmp.eq.f32.partialorder %v632, 8.507059e+37
    %v634 = vand.u32 %v622, 2147483648
    %v635 = vor.u32 1.1754944e-38, %v634
    %v636 = vsel %vm633, %v635, %v631
    %v637 = vmul.f32 1.0, %v636
    %v638 = vmul.f32 %v617, %v596
    %v639 = vadd.f32 %v248, %v638
    %v640 = vtanh.pop %v639
    %v641 = vsub.f32 1.0, %v637
    %v642 = vmul.f32 %v641, %v640
    %v643 = vmul.f32 %v637, %v535
    %v644 = vadd.f32 %v642, %v643
    %s645 = scalar_lea.vmem [#allocation2], 16
    %646 = vst [vmem:[%s645] sm:$0xff] %v644
    %647 = vmatpush.msra.mxu0 %v310
    %648 = vmatpush.msra.mxu0 %v307
    %649 = vmatpush.msra.mxu0 %v304
    %650 = vmatpush.msra.mxu0 %v301
    %651 = vmatpush.msra.mxu0 %v298
    %652 = vmatpush.msra.mxu0 %v295
    %653 = vmatpush.msra.mxu0 %v292
    %654 = vmatpush.msra.mxu0 %v289
    %655 = vmatpush.msra.mxu0 %v286
    %656 = vmatpush.msra.mxu0 %v283
    %657 = vmatpush.msra.mxu0 %v280
    %658 = vmatpush.msra.mxu0 %v277
    %659 = vmatpush.msra.mxu0 %v274
    %660 = vmatpush.msra.mxu0 %v271
    %661 = vmatpush.msra.mxu0 %v268
    %662 = vmatpush.msra.mxu0 %v265
    %663 = vmatmul.f32.gmra.mxu0 %v644
    %v664 = vpop.f32.mrf.mxu0
    %v665 = vadd.f32 %v315, %v664
    %666 = vdwg.mxu0
    %667 = vmatpush.msra.mxu0 %v311
    %668 = vmatpush.msra.mxu0 %v308
    %669 = vmatpush.msra.mxu0 %v305
    %670 = vmatpush.msra.mxu0 %v302
    %671 = vmatpush.msra.mxu0 %v299
    %672 = vmatpush.msra.mxu0 %v296
    %673 = vmatpush.msra.mxu0 %v293
    %674 = vmatpush.msra.mxu0 %v290
    %675 = vmatpush.msra.mxu0 %v287
    %676 = vmatpush.msra.mxu0 %v284
    %677 = vmatpush.msra.mxu0 %v281
    %678 = vmatpush.msra.mxu0 %v278
    %679 = vmatpush.msra.mxu0 %v275
    %680 = vmatpush.msra.mxu0 %v272
    %681 = vmatpush.msra.mxu0 %v269
    %682 = vmatpush.msra.mxu0 %v266
    %683 = vmatmul.f32.gmra.mxu0 %v644
    %v684 = vpop.f32.mrf.mxu0
    %v685 = vadd.f32 %v316, %v684
    %686 = vdwg.mxu0
    %687 = vmatpush.msra.mxu0 %v312
    %688 = vmatpush.msra.mxu0 %v309
    %689 = vmatpush.msra.mxu0 %v306
    %690 = vmatpush.msra.mxu0 %v303
    %691 = vmatpush.msra.mxu0 %v300
    %692 = vmatpush.msra.mxu0 %v297
    %693 = vmatpush.msra.mxu0 %v294
    %694 = vmatpush.msra.mxu0 %v291
    %695 = vmatpush.msra.mxu0 %v288
    %696 = vmatpush.msra.mxu0 %v285
    %697 = vmatpush.msra.mxu0 %v282
    %698 = vmatpush.msra.mxu0 %v279
    %699 = vmatpush.msra.mxu0 %v276
    %700 = vmatpush.msra.mxu0 %v273
    %701 = vmatpush.msra.mxu0 %v270
    %702 = vmatpush.msra.mxu0 %v267
    %703 = vmatmul.f32.gmra.mxu0 %v644
    %v704 = vpop.f32.mrf.mxu0
    %v705 = vadd.f32 %v317, %v704
    %706 = vdwg.mxu0
    %v707 = vadd.f32 %v169, %v665
    %v708 = vxor.u32 %v707, 2147483648
    %v709 = vmul.f32 %v708, 1.442695
    %v710 = vpow.pop %v709
    %v711 = vadd.f32 %v710, 1.0
    %v712 = vrcp.pop %v711
    %v713 = vmul.f32 %v711, %v712
    %v714 = vsub.f32 1.0, %v713
    %v715 = vmul.f32 %v712, %v714
    %v716 = vadd.f32 %v712, %v715
    %vm717 = vweird.f32 %v711
    %vm718 = vweird.f32 %v712
    %vm719 = vmor %vm717, %vm718
    %v720 = vsel %vm719, %v712, %v716
    %v721 = vand.u32 2147483647, %v711
    %vm722 = vcmp.eq.f32.partialorder %v721, 8.507059e+37
    %v723 = vand.u32 %v711, 2147483648
    %v724 = vor.u32 1.1754944e-38, %v723
    %v725 = vsel %vm722, %v724, %v720
    %v726 = vmul.f32 1.0, %v725
    %v727 = vadd.f32 %v210, %v685
    %v728 = vxor.u32 %v727, 2147483648
    %v729 = vmul.f32 %v728, 1.442695
    %v730 = vpow.pop %v729
    %v731 = vadd.f32 %v730, 1.0
    %v732 = vrcp.pop %v731
    %v733 = vmul.f32 %v731, %v732
    %v734 = vsub.f32 1.0, %v733
    %v735 = vmul.f32 %v732, %v734
    %v736 = vadd.f32 %v732, %v735
    %vm737 = vweird.f32 %v731
    %vm738 = vweird.f32 %v732
    %vm739 = vmor %vm737, %vm738
    %v740 = vsel %vm739, %v732, %v736
    %v741 = vand.u32 2147483647, %v731
    %vm742 = vcmp.eq.f32.partialorder %v741, 8.507059e+37
    %v743 = vand.u32 %v731, 2147483648
    %v744 = vor.u32 1.1754944e-38, %v743
    %v745 = vsel %vm742, %v744, %v740
    %v746 = vmul.f32 1.0, %v745
    %v747 = vmul.f32 %v726, %v705
    %v748 = vadd.f32 %v251, %v747
    %v749 = vtanh.pop %v748
    %v750 = vsub.f32 1.0, %v746
    %v751 = vmul.f32 %v750, %v749
    %v752 = vmul.f32 %v746, %v644
    %v753 = vadd.f32 %v751, %v752
    %s754 = scalar_lea.vmem [#allocation2], 24
    %755 = vst [vmem:[%s754] sm:$0xff] %v753
    %756 = vmatpush.msra.mxu0 %v310
    %757 = vmatpush.msra.mxu0 %v307
    %758 = vmatpush.msra.mxu0 %v304
    %759 = vmatpush.msra.mxu0 %v301
    %760 = vmatpush.msra.mxu0 %v298
    %761 = vmatpush.msra.mxu0 %v295
    %762 = vmatpush.msra.mxu0 %v292
    %763 = vmatpush.msra.mxu0 %v289
    %764 = vmatpush.msra.mxu0 %v286
    %765 = vmatpush.msra.mxu0 %v283
    %766 = vmatpush.msra.mxu0 %v280
    %767 = vmatpush.msra.mxu0 %v277
    %768 = vmatpush.msra.mxu0 %v274
    %769 = vmatpush.msra.mxu0 %v271
    %770 = vmatpush.msra.mxu0 %v268
    %771 = vmatpush.msra.mxu0 %v265
    %772 = vmatmul.f32.gmra.mxu0 %v753
    %v773 = vpop.f32.mrf.mxu0
    %v774 = vadd.f32 %v315, %v773
    %775 = vdwg.mxu0
    %776 = vmatpush.msra.mxu0 %v311
    %777 = vmatpush.msra.mxu0 %v308
    %778 = vmatpush.msra.mxu0 %v305
    %779 = vmatpush.msra.mxu0 %v302
    %780 = vmatpush.msra.mxu0 %v299
    %781 = vmatpush.msra.mxu0 %v296
    %782 = vmatpush.msra.mxu0 %v293
    %783 = vmatpush.msra.mxu0 %v290
    %784 = vmatpush.msra.mxu0 %v287
    %785 = vmatpush.msra.mxu0 %v284
    %786 = vmatpush.msra.mxu0 %v281
    %787 = vmatpush.msra.mxu0 %v278
    %788 = vmatpush.msra.mxu0 %v275
    %789 = vmatpush.msra.mxu0 %v272
    %790 = vmatpush.msra.mxu0 %v269
    %791 = vmatpush.msra.mxu0 %v266
    %792 = vmatmul.f32.gmra.mxu0 %v753
    %v793 = vpop.f32.mrf.mxu0
    %v794 = vadd.f32 %v316, %v793
    %795 = vdwg.mxu0
    %796 = vmatpush.msra.mxu0 %v312
    %797 = vmatpush.msra.mxu0 %v309
    %798 = vmatpush.msra.mxu0 %v306
    %799 = vmatpush.msra.mxu0 %v303
    %800 = vmatpush.msra.mxu0 %v300
    %801 = vmatpush.msra.mxu0 %v297
    %802 = vmatpush.msra.mxu0 %v294
    %803 = vmatpush.msra.mxu0 %v291
    %804 = vmatpush.msra.mxu0 %v288
    %805 = vmatpush.msra.mxu0 %v285
    %806 = vmatpush.msra.mxu0 %v282
    %807 = vmatpush.msra.mxu0 %v279
    %808 = vmatpush.msra.mxu0 %v276
    %809 = vmatpush.msra.mxu0 %v273
    %810 = vmatpush.msra.mxu0 %v270
    %811 = vmatpush.msra.mxu0 %v267
    %812 = vmatmul.f32.gmra.mxu0 %v753
    %v813 = vpop.f32.mrf.mxu0
    %v814 = vadd.f32 %v317, %v813
    %815 = vdwg.mxu0
    %v816 = vadd.f32 %v172, %v774
    %v817 = vxor.u32 %v816, 2147483648
    %v818 = vmul.f32 %v817, 1.442695
    %v819 = vpow.pop %v818
    %v820 = vadd.f32 %v819, 1.0
    %v821 = vrcp.pop %v820
    %v822 = vmul.f32 %v820, %v821
    %v823 = vsub.f32 1.0, %v822
    %v824 = vmul.f32 %v821, %v823
    %v825 = vadd.f32 %v821, %v824
    %vm826 = vweird.f32 %v820
    %vm827 = vweird.f32 %v821
    %vm828 = vmor %vm826, %vm827
    %v829 = vsel %vm828, %v821, %v825
    %v830 = vand.u32 2147483647, %v820
    %vm831 = vcmp.eq.f32.partialorder %v830, 8.507059e+37
    %v832 = vand.u32 %v820, 2147483648
    %v833 = vor.u32 1.1754944e-38, %v832
    %v834 = vsel %vm831, %v833, %v829
    %v835 = vmul.f32 1.0, %v834
    %v836 = vadd.f32 %v213, %v794
    %v837 = vxor.u32 %v836, 2147483648
    %v838 = vmul.f32 %v837, 1.442695
    %v839 = vpow.pop %v838
    %v840 = vadd.f32 %v839, 1.0
    %v841 = vrcp.pop %v840
    %v842 = vmul.f32 %v840, %v841
    %v843 = vsub.f32 1.0, %v842
    %v844 = vmul.f32 %v841, %v843
    %v845 = vadd.f32 %v841, %v844
    %vm846 = vweird.f32 %v840
    %vm847 = vweird.f32 %v841
    %vm848 = vmor %vm846, %vm847
    %v849 = vsel %vm848, %v841, %v845
    %v850 = vand.u32 2147483647, %v840
    %vm851 = vcmp.eq.f32.partialorder %v850, 8.507059e+37
    %v852 = vand.u32 %v840, 2147483648
    %v853 = vor.u32 1.1754944e-38, %v852
    %v854 = vsel %vm851, %v853, %v849
    %v855 = vmul.f32 1.0, %v854
    %v856 = vmul.f32 %v835, %v814
    %v857 = vadd.f32 %v254, %v856
    %v858 = vtanh.pop %v857
    %v859 = vsub.f32 1.0, %v855
    %v860 = vmul.f32 %v859, %v858
    %v861 = vmul.f32 %v855, %v753
    %v862 = vadd.f32 %v860, %v861
    %s863 = scalar_lea.vmem [#allocation2], 32
    %864 = vst [vmem:[%s863] sm:$0xff] %v862
    %865 = vmatpush.msra.mxu0 %v310
    %866 = vmatpush.msra.mxu0 %v307
    %867 = vmatpush.msra.mxu0 %v304
    %868 = vmatpush.msra.mxu0 %v301
    %869 = vmatpush.msra.mxu0 %v298
    %870 = vmatpush.msra.mxu0 %v295
    %871 = vmatpush.msra.mxu0 %v292
    %872 = vmatpush.msra.mxu0 %v289
    %873 = vmatpush.msra.mxu0 %v286
    %874 = vmatpush.msra.mxu0 %v283
    %875 = vmatpush.msra.mxu0 %v280
    %876 = vmatpush.msra.mxu0 %v277
    %877 = vmatpush.msra.mxu0 %v274
    %878 = vmatpush.msra.mxu0 %v271
    %879 = vmatpush.msra.mxu0 %v268
    %880 = vmatpush.msra.mxu0 %v265
    %881 = vmatmul.f32.gmra.mxu0 %v862
    %v882 = vpop.f32.mrf.mxu0
    %v883 = vadd.f32 %v315, %v882
    %884 = vdwg.mxu0
    %885 = vmatpush.msra.mxu0 %v311
    %886 = vmatpush.msra.mxu0 %v308
    %887 = vmatpush.msra.mxu0 %v305
    %888 = vmatpush.msra.mxu0 %v302
    %889 = vmatpush.msra.mxu0 %v299
    %890 = vmatpush.msra.mxu0 %v296
    %891 = vmatpush.msra.mxu0 %v293
    %892 = vmatpush.msra.mxu0 %v290
    %893 = vmatpush.msra.mxu0 %v287
    %894 = vmatpush.msra.mxu0 %v284
    %895 = vmatpush.msra.mxu0 %v281
    %896 = vmatpush.msra.mxu0 %v278
    %897 = vmatpush.msra.mxu0 %v275
    %898 = vmatpush.msra.mxu0 %v272
    %899 = vmatpush.msra.mxu0 %v269
    %900 = vmatpush.msra.mxu0 %v266
    %901 = vmatmul.f32.gmra.mxu0 %v862
    %v902 = vpop.f32.mrf.mxu0
    %v903 = vadd.f32 %v316, %v902
    %904 = vdwg.mxu0
    %905 = vmatpush.msra.mxu0 %v312
    %906 = vmatpush.msra.mxu0 %v309
    %907 = vmatpush.msra.mxu0 %v306
    %908 = vmatpush.msra.mxu0 %v303
    %909 = vmatpush.msra.mxu0 %v300
    %910 = vmatpush.msra.mxu0 %v297
    %911 = vmatpush.msra.mxu0 %v294
    %912 = vmatpush.msra.mxu0 %v291
    %913 = vmatpush.msra.mxu0 %v288
    %914 = vmatpush.msra.mxu0 %v285
    %915 = vmatpush.msra.mxu0 %v282
    %916 = vmatpush.msra.mxu0 %v279
    %917 = vmatpush.msra.mxu0 %v276
    %918 = vmatpush.msra.mxu0 %v273
    %919 = vmatpush.msra.mxu0 %v270
    %920 = vmatpush.msra.mxu0 %v267
    %921 = vmatmul.f32.gmra.mxu0 %v862
    %v922 = vpop.f32.mrf.mxu0
    %v923 = vadd.f32 %v317, %v922
    %924 = vdwg.mxu0
    %v925 = vadd.f32 %v175, %v883
    %v926 = vxor.u32 %v925, 2147483648
    %v927 = vmul.f32 %v926, 1.442695
    %v928 = vpow.pop %v927
    %v929 = vadd.f32 %v928, 1.0
    %v930 = vrcp.pop %v929
    %v931 = vmul.f32 %v929, %v930
    %v932 = vsub.f32 1.0, %v931
    %v933 = vmul.f32 %v930, %v932
    %v934 = vadd.f32 %v930, %v933
    %vm935 = vweird.f32 %v929
    %vm936 = vweird.f32 %v930
    %vm937 = vmor %vm935, %vm936
    %v938 = vsel %vm937, %v930, %v934
    %v939 = vand.u32 2147483647, %v929
    %vm940 = vcmp.eq.f32.partialorder %v939, 8.507059e+37
    %v941 = vand.u32 %v929, 2147483648
    %v942 = vor.u32 1.1754944e-38, %v941
    %v943 = vsel %vm940, %v942, %v938
    %v944 = vmul.f32 1.0, %v943
    %v945 = vadd.f32 %v216, %v903
    %v946 = vxor.u32 %v945, 2147483648
    %v947 = vmul.f32 %v946, 1.442695
    %v948 = vpow.pop %v947
    %v949 = vadd.f32 %v948, 1.0
    %v950 = vrcp.pop %v949
    %v951 = vmul.f32 %v949, %v950
    %v952 = vsub.f32 1.0, %v951
    %v953 = vmul.f32 %v950, %v952
    %v954 = vadd.f32 %v950, %v953
    %vm955 = vweird.f32 %v949
    %vm956 = vweird.f32 %v950
    %vm957 = vmor %vm955, %vm956
    %v958 = vsel %vm957, %v950, %v954
    %v959 = vand.u32 2147483647, %v949
    %vm960 = vcmp.eq.f32.partialorder %v959, 8.507059e+37
    %v961 = vand.u32 %v949, 2147483648
    %v962 = vor.u32 1.1754944e-38, %v961
    %v963 = vsel %vm960, %v962, %v958
    %v964 = vmul.f32 1.0, %v963
    %v965 = vmul.f32 %v944, %v923
    %v966 = vadd.f32 %v257, %v965
    %v967 = vtanh.pop %v966
    %v968 = vsub.f32 1.0, %v964
    %v969 = vmul.f32 %v968, %v967
    %v970 = vmul.f32 %v964, %v862
    %v971 = vadd.f32 %v969, %v970
    %s972 = scalar_lea.vmem [#allocation2], 40
    %973 = vst [vmem:[%s972] sm:$0xff] %v971
    %974 = vmatpush.msra.mxu0 %v310
    %975 = vmatpush.msra.mxu0 %v307
    %976 = vmatpush.msra.mxu0 %v304
    %977 = vmatpush.msra.mxu0 %v301
    %978 = vmatpush.msra.mxu0 %v298
    %979 = vmatpush.msra.mxu0 %v295
    %980 = vmatpush.msra.mxu0 %v292
    %981 = vmatpush.msra.mxu0 %v289
    %982 = vmatpush.msra.mxu0 %v286
    %983 = vmatpush.msra.mxu0 %v283
    %984 = vmatpush.msra.mxu0 %v280
    %985 = vmatpush.msra.mxu0 %v277
    %986 = vmatpush.msra.mxu0 %v274
    %987 = vmatpush.msra.mxu0 %v271
    %988 = vmatpush.msra.mxu0 %v268
    %989 = vmatpush.msra.mxu0 %v265
    %990 = vmatmul.f32.gmra.mxu0 %v971
    %v991 = vpop.f32.mrf.mxu0
    %v992 = vadd.f32 %v315, %v991
    %993 = vdwg.mxu0
    %994 = vmatpush.msra.mxu0 %v311
    %995 = vmatpush.msra.mxu0 %v308
    %996 = vmatpush.msra.mxu0 %v305
    %997 = vmatpush.msra.mxu0 %v302
    %998 = vmatpush.msra.mxu0 %v299
    %999 = vmatpush.msra.mxu0 %v296
    %1000 = vmatpush.msra.mxu0 %v293
    %1001 = vmatpush.msra.mxu0 %v290
    %1002 = vmatpush.msra.mxu0 %v287
    %1003 = vmatpush.msra.mxu0 %v284
    %1004 = vmatpush.msra.mxu0 %v281
    %1005 = vmatpush.msra.mxu0 %v278
    %1006 = vmatpush.msra.mxu0 %v275
    %1007 = vmatpush.msra.mxu0 %v272
    %1008 = vmatpush.msra.mxu0 %v269
    %1009 = vmatpush.msra.mxu0 %v266
    %1010 = vmatmul.f32.gmra.mxu0 %v971
    %v1011 = vpop.f32.mrf.mxu0
    %v1012 = vadd.f32 %v316, %v1011
    %1013 = vdwg.mxu0
    %1014 = vmatpush.msra.mxu0 %v312
    %1015 = vmatpush.msra.mxu0 %v309
    %1016 = vmatpush.msra.mxu0 %v306
    %1017 = vmatpush.msra.mxu0 %v303
    %1018 = vmatpush.msra.mxu0 %v300
    %1019 = vmatpush.msra.mxu0 %v297
    %1020 = vmatpush.msra.mxu0 %v294
    %1021 = vmatpush.msra.mxu0 %v291
    %1022 = vmatpush.msra.mxu0 %v288
    %1023 = vmatpush.msra.mxu0 %v285
    %1024 = vmatpush.msra.mxu0 %v282
    %1025 = vmatpush.msra.mxu0 %v279
    %1026 = vmatpush.msra.mxu0 %v276
    %1027 = vmatpush.msra.mxu0 %v273
    %1028 = vmatpush.msra.mxu0 %v270
    %1029 = vmatpush.msra.mxu0 %v267
    %1030 = vmatmul.f32.gmra.mxu0 %v971
    %v1031 = vpop.f32.mrf.mxu0
    %v1032 = vadd.f32 %v317, %v1031
    %1033 = vdwg.mxu0
    %v1034 = vadd.f32 %v178, %v992
    %v1035 = vxor.u32 %v1034, 2147483648
    %v1036 = vmul.f32 %v1035, 1.442695
    %v1037 = vpow.pop %v1036
    %v1038 = vadd.f32 %v1037, 1.0
    %v1039 = vrcp.pop %v1038
    %v1040 = vmul.f32 %v1038, %v1039
    %v1041 = vsub.f32 1.0, %v1040
    %v1042 = vmul.f32 %v1039, %v1041
    %v1043 = vadd.f32 %v1039, %v1042
    %vm1044 = vweird.f32 %v1038
    %vm1045 = vweird.f32 %v1039
    %vm1046 = vmor %vm1044, %vm1045
    %v1047 = vsel %vm1046, %v1039, %v1043
    %v1048 = vand.u32 2147483647, %v1038
    %vm1049 = vcmp.eq.f32.partialorder %v1048, 8.507059e+37
    %v1050 = vand.u32 %v1038, 2147483648
    %v1051 = vor.u32 1.1754944e-38, %v1050
    %v1052 = vsel %vm1049, %v1051, %v1047
    %v1053 = vmul.f32 1.0, %v1052
    %v1054 = vadd.f32 %v219, %v1012
    %v1055 = vxor.u32 %v1054, 2147483648
    %v1056 = vmul.f32 %v1055, 1.442695
    %v1057 = vpow.pop %v1056
    %v1058 = vadd.f32 %v1057, 1.0
    %v1059 = vrcp.pop %v1058
    %v1060 = vmul.f32 %v1058, %v1059
    %v1061 = vsub.f32 1.0, %v1060
    %v1062 = vmul.f32 %v1059, %v1061
    %v1063 = vadd.f32 %v1059, %v1062
    %vm1064 = vweird.f32 %v1058
    %vm1065 = vweird.f32 %v1059
    %vm1066 = vmor %vm1064, %vm1065
    %v1067 = vsel %vm1066, %v1059, %v1063
    %v1068 = vand.u32 2147483647, %v1058
    %vm1069 = vcmp.eq.f32.partialorder %v1068, 8.507059e+37
    %v1070 = vand.u32 %v1058, 2147483648
    %v1071 = vor.u32 1.1754944e-38, %v1070
    %v1072 = vsel %vm1069, %v1071, %v1067
    %v1073 = vmul.f32 1.0, %v1072
    %v1074 = vmul.f32 %v1053, %v1032
    %v1075 = vadd.f32 %v260, %v1074
    %v1076 = vtanh.pop %v1075
    %v1077 = vsub.f32 1.0, %v1073
    %v1078 = vmul.f32 %v1077, %v1076
    %v1079 = vmul.f32 %v1073, %v971
    %v1080 = vadd.f32 %v1078, %v1079
    %s1081 = scalar_lea.vmem [#allocation2], 48
    %1082 = vst [vmem:[%s1081] sm:$0xff] %v1080
    %1083 = vmatpush.msra.mxu0 %v310
    %1084 = vmatpush.msra.mxu0 %v307
    %1085 = vmatpush.msra.mxu0 %v304
    %1086 = vmatpush.msra.mxu0 %v301
    %1087 = vmatpush.msra.mxu0 %v298
    %1088 = vmatpush.msra.mxu0 %v295
    %1089 = vmatpush.msra.mxu0 %v292
    %1090 = vmatpush.msra.mxu0 %v289
    %1091 = vmatpush.msra.mxu0 %v286
    %1092 = vmatpush.msra.mxu0 %v283
    %1093 = vmatpush.msra.mxu0 %v280
    %1094 = vmatpush.msra.mxu0 %v277
    %1095 = vmatpush.msra.mxu0 %v274
    %1096 = vmatpush.msra.mxu0 %v271
    %1097 = vmatpush.msra.mxu0 %v268
    %1098 = vmatpush.msra.mxu0 %v265
    %1099 = vmatmul.f32.gmra.mxu0 %v1080
    %v1100 = vpop.f32.mrf.mxu0
    %v1101 = vadd.f32 %v315, %v1100
    %1102 = vdwg.mxu0
    %1103 = vmatpush.msra.mxu0 %v311
    %1104 = vmatpush.msra.mxu0 %v308
    %1105 = vmatpush.msra.mxu0 %v305
    %1106 = vmatpush.msra.mxu0 %v302
    %1107 = vmatpush.msra.mxu0 %v299
    %1108 = vmatpush.msra.mxu0 %v296
    %1109 = vmatpush.msra.mxu0 %v293
    %1110 = vmatpush.msra.mxu0 %v290
    %1111 = vmatpush.msra.mxu0 %v287
    %1112 = vmatpush.msra.mxu0 %v284
    %1113 = vmatpush.msra.mxu0 %v281
    %1114 = vmatpush.msra.mxu0 %v278
    %1115 = vmatpush.msra.mxu0 %v275
    %1116 = vmatpush.msra.mxu0 %v272
    %1117 = vmatpush.msra.mxu0 %v269
    %1118 = vmatpush.msra.mxu0 %v266
    %1119 = vmatmul.f32.gmra.mxu0 %v1080
    %v1120 = vpop.f32.mrf.mxu0
    %v1121 = vadd.f32 %v316, %v1120
    %1122 = vdwg.mxu0
    %1123 = vmatpush.msra.mxu0 %v312
    %1124 = vmatpush.msra.mxu0 %v309
    %1125 = vmatpush.msra.mxu0 %v306
    %1126 = vmatpush.msra.mxu0 %v303
    %1127 = vmatpush.msra.mxu0 %v300
    %1128 = vmatpush.msra.mxu0 %v297
    %1129 = vmatpush.msra.mxu0 %v294
    %1130 = vmatpush.msra.mxu0 %v291
    %1131 = vmatpush.msra.mxu0 %v288
    %1132 = vmatpush.msra.mxu0 %v285
    %1133 = vmatpush.msra.mxu0 %v282
    %1134 = vmatpush.msra.mxu0 %v279
    %1135 = vmatpush.msra.mxu0 %v276
    %1136 = vmatpush.msra.mxu0 %v273
    %1137 = vmatpush.msra.mxu0 %v270
    %1138 = vmatpush.msra.mxu0 %v267
    %1139 = vmatmul.f32.gmra.mxu0 %v1080
    %v1140 = vpop.f32.mrf.mxu0
    %v1141 = vadd.f32 %v317, %v1140
    %1142 = vdwg.mxu0
    %v1143 = vadd.f32 %v181, %v1101
    %v1144 = vxor.u32 %v1143, 2147483648
    %v1145 = vmul.f32 %v1144, 1.442695
    %v1146 = vpow.pop %v1145
    %v1147 = vadd.f32 %v1146, 1.0
    %v1148 = vrcp.pop %v1147
    %v1149 = vmul.f32 %v1147, %v1148
    %v1150 = vsub.f32 1.0, %v1149
    %v1151 = vmul.f32 %v1148, %v1150
    %v1152 = vadd.f32 %v1148, %v1151
    %vm1153 = vweird.f32 %v1147
    %vm1154 = vweird.f32 %v1148
    %vm1155 = vmor %vm1153, %vm1154
    %v1156 = vsel %vm1155, %v1148, %v1152
    %v1157 = vand.u32 2147483647, %v1147
    %vm1158 = vcmp.eq.f32.partialorder %v1157, 8.507059e+37
    %v1159 = vand.u32 %v1147, 2147483648
    %v1160 = vor.u32 1.1754944e-38, %v1159
    %v1161 = vsel %vm1158, %v1160, %v1156
    %v1162 = vmul.f32 1.0, %v1161
    %v1163 = vadd.f32 %v222, %v1121
    %v1164 = vxor.u32 %v1163, 2147483648
    %v1165 = vmul.f32 %v1164, 1.442695
    %v1166 = vpow.pop %v1165
    %v1167 = vadd.f32 %v1166, 1.0
    %v1168 = vrcp.pop %v1167
    %v1169 = vmul.f32 %v1167, %v1168
    %v1170 = vsub.f32 1.0, %v1169
    %v1171 = vmul.f32 %v1168, %v1170
    %v1172 = vadd.f32 %v1168, %v1171
    %vm1173 = vweird.f32 %v1167
    %vm1174 = vweird.f32 %v1168
    %vm1175 = vmor %vm1173, %vm1174
    %v1176 = vsel %vm1175, %v1168, %v1172
    %v1177 = vand.u32 2147483647, %v1167
    %vm1178 = vcmp.eq.f32.partialorder %v1177, 8.507059e+37
    %v1179 = vand.u32 %v1167, 2147483648
    %v1180 = vor.u32 1.1754944e-38, %v1179
    %v1181 = vsel %vm1178, %v1180, %v1176
    %v1182 = vmul.f32 1.0, %v1181
    %v1183 = vmul.f32 %v1162, %v1141
    %v1184 = vadd.f32 %v263, %v1183
    %v1185 = vtanh.pop %v1184
    %v1186 = vsub.f32 1.0, %v1182
    %v1187 = vmul.f32 %v1186, %v1185
    %v1188 = vmul.f32 %v1182, %v1080
    %v1189 = vadd.f32 %v1187, %v1188
    %s1190 = scalar_lea.vmem [#allocation2], 56
    %1191 = vst [vmem:[%s1190] sm:$0xff] %v1189
    %v1192 = vld [vmem:[#allocation2] sm:$0xff]
    %v1193 = vld [vmem:[#allocation2 + $0x8] sm:$0xff]
    %v1194 = vld [vmem:[#allocation2 + $0x10] sm:$0xff]
    %v1195 = vld [vmem:[#allocation2 + $0x18] sm:$0xff]
    %v1196 = vld [vmem:[#allocation2 + $0x20] sm:$0xff]
    %v1197 = vld [vmem:[#allocation2 + $0x28] sm:$0xff]
    %v1198 = vld [vmem:[#allocation2 + $0x30] sm:$0xff]
    %v1199 = vld [vmem:[#allocation2 + $0x38] sm:$0xff]
    %v1200 = vld [vmem:[#allocation6] sm:$0xff]
    %v1201 = vld [vmem:[#allocation6 + $0x8] sm:$0xff]
    %v1202 = vld [vmem:[#allocation6 + $0x10] sm:$0xff]
    %v1203 = vld [vmem:[#allocation6 + $0x18] sm:$0xff]
    %v1204 = vld [vmem:[#allocation6 + $0x20] sm:$0xff]
    %v1205 = vld [vmem:[#allocation6 + $0x28] sm:$0xff]
    %v1206 = vld [vmem:[#allocation6 + $0x30] sm:$0xff]
    %v1207 = vld [vmem:[#allocation6 + $0x38] sm:$0xff]
    %v1208 = vld [vmem:[#allocation6 + $0x40] sm:$0xff]
    %v1209 = vld [vmem:[#allocation6 + $0x48] sm:$0xff]
    %v1210 = vld [vmem:[#allocation6 + $0x50] sm:$0xff]
    %v1211 = vld [vmem:[#allocation6 + $0x58] sm:$0xff]
    %v1212 = vld [vmem:[#allocation6 + $0x60] sm:$0xff]
    %v1213 = vld [vmem:[#allocation6 + $0x68] sm:$0xff]
    %v1214 = vld [vmem:[#allocation6 + $0x70] sm:$0xff]
    %v1215 = vld [vmem:[#allocation6 + $0x78] sm:$0xff]
    %v1216 = vld [vmem:[#allocation6 + $0x80] sm:$0xff]
    %v1217 = vld [vmem:[#allocation6 + $0x88] sm:$0xff]
    %v1218 = vld [vmem:[#allocation6 + $0x90] sm:$0xff]
    %v1219 = vld [vmem:[#allocation6 + $0x98] sm:$0xff]
    %v1220 = vld [vmem:[#allocation6 + $0xa0] sm:$0xff]
    %v1221 = vld [vmem:[#allocation6 + $0xa8] sm:$0xff]
    %v1222 = vld [vmem:[#allocation6 + $0xb0] sm:$0xff]
    %v1223 = vld [vmem:[#allocation6 + $0xb8] sm:$0xff]
    %v1224 = vld [vmem:[#allocation6 + $0xc0] sm:$0xff]
    %v1225 = vld [vmem:[#allocation6 + $0xc8] sm:$0xff]
    %v1226 = vld [vmem:[#allocation6 + $0xd0] sm:$0xff]
    %v1227 = vld [vmem:[#allocation6 + $0xd8] sm:$0xff]
    %v1228 = vld [vmem:[#allocation6 + $0xe0] sm:$0xff]
    %v1229 = vld [vmem:[#allocation6 + $0xe8] sm:$0xff]
    %v1230 = vld [vmem:[#allocation6 + $0xf0] sm:$0xff]
    %v1231 = vld [vmem:[#allocation6 + $0xf8] sm:$0xff]
    %v1232 = vld [vmem:[#allocation6 + $0x100] sm:$0xff]
    %v1233 = vld [vmem:[#allocation6 + $0x108] sm:$0xff]
    %v1234 = vld [vmem:[#allocation6 + $0x110] sm:$0xff]
    %v1235 = vld [vmem:[#allocation6 + $0x118] sm:$0xff]
    %v1236 = vld [vmem:[#allocation6 + $0x120] sm:$0xff]
    %v1237 = vld [vmem:[#allocation6 + $0x128] sm:$0xff]
    %v1238 = vld [vmem:[#allocation6 + $0x130] sm:$0xff]
    %v1239 = vld [vmem:[#allocation6 + $0x138] sm:$0xff]
    %v1240 = vld [vmem:[#allocation6 + $0x140] sm:$0xff]
    %v1241 = vld [vmem:[#allocation6 + $0x148] sm:$0xff]
    %v1242 = vld [vmem:[#allocation6 + $0x150] sm:$0xff]
    %v1243 = vld [vmem:[#allocation6 + $0x158] sm:$0xff]
    %v1244 = vld [vmem:[#allocation6 + $0x160] sm:$0xff]
    %v1245 = vld [vmem:[#allocation6 + $0x168] sm:$0xff]
    %v1246 = vld [vmem:[#allocation6 + $0x170] sm:$0xff]
    %v1247 = vld [vmem:[#allocation6 + $0x178] sm:$0xff]
    %s1248 = scalar_lea.vmem %s4, 3
    %v1249 = vld [vmem:[%s1248] sm:$0x7]
    %v1251 = vperm.slane %v1249, 0
    %v1252 = vperm.slane %v1249, 1
    %v1253 = vperm.slane %v1249, 2
    %1257 = vmatpush.msra.mxu0 %v1245
    %1258 = vmatpush.msra.mxu0 %v1242
    %1259 = vmatpush.msra.mxu0 %v1239
    %1260 = vmatpush.msra.mxu0 %v1236
    %1261 = vmatpush.msra.mxu0 %v1233
    %1262 = vmatpush.msra.mxu0 %v1230
    %1263 = vmatpush.msra.mxu0 %v1227
    %1264 = vmatpush.msra.mxu0 %v1224
    %1265 = vmatpush.msra.mxu0 %v1221
    %1266 = vmatpush.msra.mxu0 %v1218
    %1267 = vmatpush.msra.mxu0 %v1215
    %1268 = vmatpush.msra.mxu0 %v1212
    %1269 = vmatpush.msra.mxu0 %v1209
    %1270 = vmatpush.msra.mxu0 %v1206
    %1271 = vmatpush.msra.mxu0 %v1203
    %1272 = vmatpush.msra.mxu0 %v1200
    %1273 = vmatmul.f32.gmra.mxu0 %v1192
    %v1274 = vpop.f32.mrf.mxu0
    %v1275 = vadd.f32 %v1251, %v1274
    %1276 = vmatmul.f32.gmra.mxu0 %v1193
    %v1277 = vpop.f32.mrf.mxu0
    %v1278 = vadd.f32 %v1251, %v1277
    %1279 = vmatmul.f32.gmra.mxu0 %v1194
    %v1280 = vpop.f32.mrf.mxu0
    %v1281 = vadd.f32 %v1251, %v1280
    %1282 = vmatmul.f32.gmra.mxu0 %v1195
    %v1283 = vpop.f32.mrf.mxu0
    %v1284 = vadd.f32 %v1251, %v1283
    %1285 = vmatmul.f32.gmra.mxu0 %v1196
    %v1286 = vpop.f32.mrf.mxu0
    %v1287 = vadd.f32 %v1251, %v1286
    %1288 = vmatmul.f32.gmra.mxu0 %v1197
    %v1289 = vpop.f32.mrf.mxu0
    %v1290 = vadd.f32 %v1251, %v1289
    %1291 = vmatmul.f32.gmra.mxu0 %v1198
    %v1292 = vpop.f32.mrf.mxu0
    %v1293 = vadd.f32 %v1251, %v1292
    %1294 = vmatmul.f32.gmra.mxu0 %v1199
    %v1295 = vpop.f32.mrf.mxu0
    %v1296 = vadd.f32 %v1251, %v1295
    %1297 = vdwg.mxu0
    %1298 = vmatpush.msra.mxu0 %v1246
    %1299 = vmatpush.msra.mxu0 %v1243
    %1300 = vmatpush.msra.mxu0 %v1240
    %1301 = vmatpush.msra.mxu0 %v1237
    %1302 = vmatpush.msra.mxu0 %v1234
    %1303 = vmatpush.msra.mxu0 %v1231
    %1304 = vmatpush.msra.mxu0 %v1228
    %1305 = vmatpush.msra.mxu0 %v1225
    %1306 = vmatpush.msra.mxu0 %v1222
    %1307 = vmatpush.msra.mxu0 %v1219
    %1308 = vmatpush.msra.mxu0 %v1216
    %1309 = vmatpush.msra.mxu0 %v1213
    %1310 = vmatpush.msra.mxu0 %v1210
    %1311 = vmatpush.msra.mxu0 %v1207
    %1312 = vmatpush.msra.mxu0 %v1204
    %1313 = vmatpush.msra.mxu0 %v1201
    %1314 = vmatmul.f32.gmra.mxu0 %v1192
    %v1315 = vpop.f32.mrf.mxu0
    %v1316 = vadd.f32 %v1252, %v1315
    %1317 = vmatmul.f32.gmra.mxu0 %v1193
    %v1318 = vpop.f32.mrf.mxu0
    %v1319 = vadd.f32 %v1252, %v1318
    %1320 = vmatmul.f32.gmra.mxu0 %v1194
    %v1321 = vpop.f32.mrf.mxu0
    %v1322 = vadd.f32 %v1252, %v1321
    %1323 = vmatmul.f32.gmra.mxu0 %v1195
    %v1324 = vpop.f32.mrf.mxu0
    %v1325 = vadd.f32 %v1252, %v1324
    %1326 = vmatmul.f32.gmra.mxu0 %v1196
    %v1327 = vpop.f32.mrf.mxu0
    %v1328 = vadd.f32 %v1252, %v1327
    %1329 = vmatmul.f32.gmra.mxu0 %v1197
    %v1330 = vpop.f32.mrf.mxu0
    %v1331 = vadd.f32 %v1252, %v1330
    %1332 = vmatmul.f32.gmra.mxu0 %v1198
    %v1333 = vpop.f32.mrf.mxu0
    %v1334 = vadd.f32 %v1252, %v1333
    %1335 = vmatmul.f32.gmra.mxu0 %v1199
    %v1336 = vpop.f32.mrf.mxu0
    %v1337 = vadd.f32 %v1252, %v1336
    %1338 = vdwg.mxu0
    %1339 = vmatpush.msra.mxu0 %v1247
    %1340 = vmatpush.msra.mxu0 %v1244
    %1341 = vmatpush.msra.mxu0 %v1241
    %1342 = vmatpush.msra.mxu0 %v1238
    %1343 = vmatpush.msra.mxu0 %v1235
    %1344 = vmatpush.msra.mxu0 %v1232
    %1345 = vmatpush.msra.mxu0 %v1229
    %1346 = vmatpush.msra.mxu0 %v1226
    %1347 = vmatpush.msra.mxu0 %v1223
    %1348 = vmatpush.msra.mxu0 %v1220
    %1349 = vmatpush.msra.mxu0 %v1217
    %1350 = vmatpush.msra.mxu0 %v1214
    %1351 = vmatpush.msra.mxu0 %v1211
    %1352 = vmatpush.msra.mxu0 %v1208
    %1353 = vmatpush.msra.mxu0 %v1205
    %1354 = vmatpush.msra.mxu0 %v1202
    %1355 = vmatmul.f32.gmra.mxu0 %v1192
    %v1356 = vpop.f32.mrf.mxu0
    %v1357 = vadd.f32 %v1253, %v1356
    %1358 = vmatmul.f32.gmra.mxu0 %v1193
    %v1359 = vpop.f32.mrf.mxu0
    %v1360 = vadd.f32 %v1253, %v1359
    %1361 = vmatmul.f32.gmra.mxu0 %v1194
    %v1362 = vpop.f32.mrf.mxu0
    %v1363 = vadd.f32 %v1253, %v1362
    %1364 = vmatmul.f32.gmra.mxu0 %v1195
    %v1365 = vpop.f32.mrf.mxu0
    %v1366 = vadd.f32 %v1253, %v1365
    %1367 = vmatmul.f32.gmra.mxu0 %v1196
    %v1368 = vpop.f32.mrf.mxu0
    %v1369 = vadd.f32 %v1253, %v1368
    %1370 = vmatmul.f32.gmra.mxu0 %v1197
    %v1371 = vpop.f32.mrf.mxu0
    %v1372 = vadd.f32 %v1253, %v1371
    %1373 = vmatmul.f32.gmra.mxu0 %v1198
    %v1374 = vpop.f32.mrf.mxu0
    %v1375 = vadd.f32 %v1253, %v1374
    %1376 = vmatmul.f32.gmra.mxu0 %v1199
    %v1377 = vpop.f32.mrf.mxu0
    %v1378 = vadd.f32 %v1253, %v1377
    %1379 = vdwg.mxu0
    %s1380 = scalar_lea.vmem [#allocation8], 384
    %v1381 = vld [vmem:[%s1380] sm:$0xff]
    %v1382 = vld [vmem:[%s1380 + $0x8] sm:$0xff]
    %v1383 = vld [vmem:[%s1380 + $0x10] sm:$0xff]
    %v1384 = vld [vmem:[%s1380 + $0x18] sm:$0xff]
    %v1385 = vld [vmem:[%s1380 + $0x20] sm:$0xff]
    %v1386 = vld [vmem:[%s1380 + $0x28] sm:$0xff]
    %v1387 = vld [vmem:[%s1380 + $0x30] sm:$0xff]
    %v1388 = vld [vmem:[%s1380 + $0x38] sm:$0xff]
    %v1389 = vld [vmem:[%s1380 + $0x40] sm:$0xff]
    %v1390 = vld [vmem:[%s1380 + $0x48] sm:$0xff]
    %v1391 = vld [vmem:[%s1380 + $0x50] sm:$0xff]
    %v1392 = vld [vmem:[%s1380 + $0x58] sm:$0xff]
    %v1393 = vld [vmem:[%s1380 + $0x60] sm:$0xff]
    %v1394 = vld [vmem:[%s1380 + $0x68] sm:$0xff]
    %v1395 = vld [vmem:[%s1380 + $0x70] sm:$0xff]
    %v1396 = vld [vmem:[%s1380 + $0x78] sm:$0xff]
    %v1397 = vld [vmem:[%s1380 + $0x80] sm:$0xff]
    %v1398 = vld [vmem:[%s1380 + $0x88] sm:$0xff]
    %v1399 = vld [vmem:[%s1380 + $0x90] sm:$0xff]
    %v1400 = vld [vmem:[%s1380 + $0x98] sm:$0xff]
    %v1401 = vld [vmem:[%s1380 + $0xa0] sm:$0xff]
    %v1402 = vld [vmem:[%s1380 + $0xa8] sm:$0xff]
    %v1403 = vld [vmem:[%s1380 + $0xb0] sm:$0xff]
    %v1404 = vld [vmem:[%s1380 + $0xb8] sm:$0xff]
    %v1405 = vld [vmem:[%s1380 + $0xc0] sm:$0xff]
    %v1406 = vld [vmem:[%s1380 + $0xc8] sm:$0xff]
    %v1407 = vld [vmem:[%s1380 + $0xd0] sm:$0xff]
    %v1408 = vld [vmem:[%s1380 + $0xd8] sm:$0xff]
    %v1409 = vld [vmem:[%s1380 + $0xe0] sm:$0xff]
    %v1410 = vld [vmem:[%s1380 + $0xe8] sm:$0xff]
    %v1411 = vld [vmem:[%s1380 + $0xf0] sm:$0xff]
    %v1412 = vld [vmem:[%s1380 + $0xf8] sm:$0xff]
    %v1413 = vld [vmem:[%s1380 + $0x100] sm:$0xff]
    %v1414 = vld [vmem:[%s1380 + $0x108] sm:$0xff]
    %v1415 = vld [vmem:[%s1380 + $0x110] sm:$0xff]
    %v1416 = vld [vmem:[%s1380 + $0x118] sm:$0xff]
    %v1417 = vld [vmem:[%s1380 + $0x120] sm:$0xff]
    %v1418 = vld [vmem:[%s1380 + $0x128] sm:$0xff]
    %v1419 = vld [vmem:[%s1380 + $0x130] sm:$0xff]
    %v1420 = vld [vmem:[%s1380 + $0x138] sm:$0xff]
    %v1421 = vld [vmem:[%s1380 + $0x140] sm:$0xff]
    %v1422 = vld [vmem:[%s1380 + $0x148] sm:$0xff]
    %v1423 = vld [vmem:[%s1380 + $0x150] sm:$0xff]
    %v1424 = vld [vmem:[%s1380 + $0x158] sm:$0xff]
    %v1425 = vld [vmem:[%s1380 + $0x160] sm:$0xff]
    %v1426 = vld [vmem:[%s1380 + $0x168] sm:$0xff]
    %v1427 = vld [vmem:[%s1380 + $0x170] sm:$0xff]
    %v1428 = vld [vmem:[%s1380 + $0x178] sm:$0xff]
    %s1429 = scalar_lea.vmem %s5, 3
    %v1430 = vld [vmem:[%s1429] sm:$0x7]
    %v1432 = vperm.slane %v1430, 0
    %v1433 = vperm.slane %v1430, 1
    %v1434 = vperm.slane %v1430, 2
    %1438 = vmatpush.msra.mxu0 %v1426
    %1439 = vmatpush.msra.mxu0 %v1423
    %1440 = vmatpush.msra.mxu0 %v1420
    %1441 = vmatpush.msra.mxu0 %v1417
    %1442 = vmatpush.msra.mxu0 %v1414
    %1443 = vmatpush.msra.mxu0 %v1411
    %1444 = vmatpush.msra.mxu0 %v1408
    %1445 = vmatpush.msra.mxu0 %v1405
    %1446 = vmatpush.msra.mxu0 %v1402
    %1447 = vmatpush.msra.mxu0 %v1399
    %1448 = vmatpush.msra.mxu0 %v1396
    %1449 = vmatpush.msra.mxu0 %v1393
    %1450 = vmatpush.msra.mxu0 %v1390
    %1451 = vmatpush.msra.mxu0 %v1387
    %1452 = vmatpush.msra.mxu0 %v1384
    %1453 = vmatpush.msra.mxu0 %v1381
    %1454 = vmatmul.f32.gmra.mxu0 0.0
    %v1455 = vpop.f32.mrf.mxu0
    %v1456 = vadd.f32 %v1432, %v1455
    %1457 = vdwg.mxu0
    %1458 = vmatpush.msra.mxu0 %v1427
    %1459 = vmatpush.msra.mxu0 %v1424
    %1460 = vmatpush.msra.mxu0 %v1421
    %1461 = vmatpush.msra.mxu0 %v1418
    %1462 = vmatpush.msra.mxu0 %v1415
    %1463 = vmatpush.msra.mxu0 %v1412
    %1464 = vmatpush.msra.mxu0 %v1409
    %1465 = vmatpush.msra.mxu0 %v1406
    %1466 = vmatpush.msra.mxu0 %v1403
    %1467 = vmatpush.msra.mxu0 %v1400
    %1468 = vmatpush.msra.mxu0 %v1397
    %1469 = vmatpush.msra.mxu0 %v1394
    %1470 = vmatpush.msra.mxu0 %v1391
    %1471 = vmatpush.msra.mxu0 %v1388
    %1472 = vmatpush.msra.mxu0 %v1385
    %1473 = vmatpush.msra.mxu0 %v1382
    %1474 = vmatmul.f32.gmra.mxu0 0.0
    %v1475 = vpop.f32.mrf.mxu0
    %v1476 = vadd.f32 %v1433, %v1475
    %1477 = vdwg.mxu0
    %1478 = vmatpush.msra.mxu0 %v1428
    %1479 = vmatpush.msra.mxu0 %v1425
    %1480 = vmatpush.msra.mxu0 %v1422
    %1481 = vmatpush.msra.mxu0 %v1419
    %1482 = vmatpush.msra.mxu0 %v1416
    %1483 = vmatpush.msra.mxu0 %v1413
    %1484 = vmatpush.msra.mxu0 %v1410
    %1485 = vmatpush.msra.mxu0 %v1407
    %1486 = vmatpush.msra.mxu0 %v1404
    %1487 = vmatpush.msra.mxu0 %v1401
    %1488 = vmatpush.msra.mxu0 %v1398
    %1489 = vmatpush.msra.mxu0 %v1395
    %1490 = vmatpush.msra.mxu0 %v1392
    %1491 = vmatpush.msra.mxu0 %v1389
    %1492 = vmatpush.msra.mxu0 %v1386
    %1493 = vmatpush.msra.mxu0 %v1383
    %1494 = vmatmul.f32.gmra.mxu0 0.0
    %v1495 = vpop.f32.mrf.mxu0
    %v1496 = vadd.f32 %v1434, %v1495
    %1497 = vdwg.mxu0
    %v1498 = vadd.f32 %v1275, %v1456
    %v1499 = vxor.u32 %v1498, 2147483648
    %v1500 = vmul.f32 %v1499, 1.442695
    %v1501 = vpow.pop %v1500
    %v1502 = vadd.f32 %v1501, 1.0
    %v1503 = vrcp.pop %v1502
    %v1504 = vmul.f32 %v1502, %v1503
    %v1505 = vsub.f32 1.0, %v1504
    %v1506 = vmul.f32 %v1503, %v1505
    %v1507 = vadd.f32 %v1503, %v1506
    %vm1508 = vweird.f32 %v1502
    %vm1509 = vweird.f32 %v1503
    %vm1510 = vmor %vm1508, %vm1509
    %v1511 = vsel %vm1510, %v1503, %v1507
    %v1512 = vand.u32 2147483647, %v1502
    %vm1513 = vcmp.eq.f32.partialorder %v1512, 8.507059e+37
    %v1514 = vand.u32 %v1502, 2147483648
    %v1515 = vor.u32 1.1754944e-38, %v1514
    %v1516 = vsel %vm1513, %v1515, %v1511
    %v1517 = vmul.f32 1.0, %v1516
    %v1518 = vadd.f32 %v1316, %v1476
    %v1519 = vxor.u32 %v1518, 2147483648
    %v1520 = vmul.f32 %v1519, 1.442695
    %v1521 = vpow.pop %v1520
    %v1522 = vadd.f32 %v1521, 1.0
    %v1523 = vrcp.pop %v1522
    %v1524 = vmul.f32 %v1522, %v1523
    %v1525 = vsub.f32 1.0, %v1524
    %v1526 = vmul.f32 %v1523, %v1525
    %v1527 = vadd.f32 %v1523, %v1526
    %vm1528 = vweird.f32 %v1522
    %vm1529 = vweird.f32 %v1523
    %vm1530 = vmor %vm1528, %vm1529
    %v1531 = vsel %vm1530, %v1523, %v1527
    %v1532 = vand.u32 2147483647, %v1522
    %vm1533 = vcmp.eq.f32.partialorder %v1532, 8.507059e+37
    %v1534 = vand.u32 %v1522, 2147483648
    %v1535 = vor.u32 1.1754944e-38, %v1534
    %v1536 = vsel %vm1533, %v1535, %v1531
    %v1537 = vmul.f32 1.0, %v1536
    %v1538 = vmul.f32 %v1517, %v1496
    %v1539 = vadd.f32 %v1357, %v1538
    %v1540 = vtanh.pop %v1539
    %v1541 = vsub.f32 1.0, %v1537
    %v1542 = vmul.f32 %v1541, %v1540
    %v1543 = vmul.f32 %v1537, 0.0
    %v1544 = vadd.f32 %v1542, %v1543
    %1545 = vst [vmem:[#allocation2] sm:$0xff] %v1544
    %1546 = vmatpush.msra.mxu0 %v1426
    %1547 = vmatpush.msra.mxu0 %v1423
    %1548 = vmatpush.msra.mxu0 %v1420
    %1549 = vmatpush.msra.mxu0 %v1417
    %1550 = vmatpush.msra.mxu0 %v1414
    %1551 = vmatpush.msra.mxu0 %v1411
    %1552 = vmatpush.msra.mxu0 %v1408
    %1553 = vmatpush.msra.mxu0 %v1405
    %1554 = vmatpush.msra.mxu0 %v1402
    %1555 = vmatpush.msra.mxu0 %v1399
    %1556 = vmatpush.msra.mxu0 %v1396
    %1557 = vmatpush.msra.mxu0 %v1393
    %1558 = vmatpush.msra.mxu0 %v1390
    %1559 = vmatpush.msra.mxu0 %v1387
    %1560 = vmatpush.msra.mxu0 %v1384
    %1561 = vmatpush.msra.mxu0 %v1381
    %1562 = vmatmul.f32.gmra.mxu0 %v1544
    %v1563 = vpop.f32.mrf.mxu0
    %v1564 = vadd.f32 %v1432, %v1563
    %1565 = vdwg.mxu0
    %1566 = vmatpush.msra.mxu0 %v1427
    %1567 = vmatpush.msra.mxu0 %v1424
    %1568 = vmatpush.msra.mxu0 %v1421
    %1569 = vmatpush.msra.mxu0 %v1418
    %1570 = vmatpush.msra.mxu0 %v1415
    %1571 = vmatpush.msra.mxu0 %v1412
    %1572 = vmatpush.msra.mxu0 %v1409
    %1573 = vmatpush.msra.mxu0 %v1406
    %1574 = vmatpush.msra.mxu0 %v1403
    %1575 = vmatpush.msra.mxu0 %v1400
    %1576 = vmatpush.msra.mxu0 %v1397
    %1577 = vmatpush.msra.mxu0 %v1394
    %1578 = vmatpush.msra.mxu0 %v1391
    %1579 = vmatpush.msra.mxu0 %v1388
    %1580 = vmatpush.msra.mxu0 %v1385
    %1581 = vmatpush.msra.mxu0 %v1382
    %1582 = vmatmul.f32.gmra.mxu0 %v1544
    %v1583 = vpop.f32.mrf.mxu0
    %v1584 = vadd.f32 %v1433, %v1583
    %1585 = vdwg.mxu0
    %1586 = vmatpush.msra.mxu0 %v1428
    %1587 = vmatpush.msra.mxu0 %v1425
    %1588 = vmatpush.msra.mxu0 %v1422
    %1589 = vmatpush.msra.mxu0 %v1419
    %1590 = vmatpush.msra.mxu0 %v1416
    %1591 = vmatpush.msra.mxu0 %v1413
    %1592 = vmatpush.msra.mxu0 %v1410
    %1593 = vmatpush.msra.mxu0 %v1407
    %1594 = vmatpush.msra.mxu0 %v1404
    %1595 = vmatpush.msra.mxu0 %v1401
    %1596 = vmatpush.msra.mxu0 %v1398
    %1597 = vmatpush.msra.mxu0 %v1395
    %1598 = vmatpush.msra.mxu0 %v1392
    %1599 = vmatpush.msra.mxu0 %v1389
    %1600 = vmatpush.msra.mxu0 %v1386
    %1601 = vmatpush.msra.mxu0 %v1383
    %1602 = vmatmul.f32.gmra.mxu0 %v1544
    %v1603 = vpop.f32.mrf.mxu0
    %v1604 = vadd.f32 %v1434, %v1603
    %1605 = vdwg.mxu0
    %v1606 = vadd.f32 %v1278, %v1564
    %v1607 = vxor.u32 %v1606, 2147483648
    %v1608 = vmul.f32 %v1607, 1.442695
    %v1609 = vpow.pop %v1608
    %v1610 = vadd.f32 %v1609, 1.0
    %v1611 = vrcp.pop %v1610
    %v1612 = vmul.f32 %v1610, %v1611
    %v1613 = vsub.f32 1.0, %v1612
    %v1614 = vmul.f32 %v1611, %v1613
    %v1615 = vadd.f32 %v1611, %v1614
    %vm1616 = vweird.f32 %v1610
    %vm1617 = vweird.f32 %v1611
    %vm1618 = vmor %vm1616, %vm1617
    %v1619 = vsel %vm1618, %v1611, %v1615
    %v1620 = vand.u32 2147483647, %v1610
    %vm1621 = vcmp.eq.f32.partialorder %v1620, 8.507059e+37
    %v1622 = vand.u32 %v1610, 2147483648
    %v1623 = vor.u32 1.1754944e-38, %v1622
    %v1624 = vsel %vm1621, %v1623, %v1619
    %v1625 = vmul.f32 1.0, %v1624
    %v1626 = vadd.f32 %v1319, %v1584
    %v1627 = vxor.u32 %v1626, 2147483648
    %v1628 = vmul.f32 %v1627, 1.442695
    %v1629 = vpow.pop %v1628
    %v1630 = vadd.f32 %v1629, 1.0
    %v1631 = vrcp.pop %v1630
    %v1632 = vmul.f32 %v1630, %v1631
    %v1633 = vsub.f32 1.0, %v1632
    %v1634 = vmul.f32 %v1631, %v1633
    %v1635 = vadd.f32 %v1631, %v1634
    %vm1636 = vweird.f32 %v1630
    %vm1637 = vweird.f32 %v1631
    %vm1638 = vmor %vm1636, %vm1637
    %v1639 = vsel %vm1638, %v1631, %v1635
    %v1640 = vand.u32 2147483647, %v1630
    %vm1641 = vcmp.eq.f32.partialorder %v1640, 8.507059e+37
    %v1642 = vand.u32 %v1630, 2147483648
    %v1643 = vor.u32 1.1754944e-38, %v1642
    %v1644 = vsel %vm1641, %v1643, %v1639
    %v1645 = vmul.f32 1.0, %v1644
    %v1646 = vmul.f32 %v1625, %v1604
    %v1647 = vadd.f32 %v1360, %v1646
    %v1648 = vtanh.pop %v1647
    %v1649 = vsub.f32 1.0, %v1645
    %v1650 = vmul.f32 %v1649, %v1648
    %v1651 = vmul.f32 %v1645, %v1544
    %v1652 = vadd.f32 %v1650, %v1651
    %1653 = vst [vmem:[%s536] sm:$0xff] %v1652
    %1654 = vmatpush.msra.mxu0 %v1426
    %1655 = vmatpush.msra.mxu0 %v1423
    %1656 = vmatpush.msra.mxu0 %v1420
    %1657 = vmatpush.msra.mxu0 %v1417
    %1658 = vmatpush.msra.mxu0 %v1414
    %1659 = vmatpush.msra.mxu0 %v1411
    %1660 = vmatpush.msra.mxu0 %v1408
    %1661 = vmatpush.msra.mxu0 %v1405
    %1662 = vmatpush.msra.mxu0 %v1402
    %1663 = vmatpush.msra.mxu0 %v1399
    %1664 = vmatpush.msra.mxu0 %v1396
    %1665 = vmatpush.msra.mxu0 %v1393
    %1666 = vmatpush.msra.mxu0 %v1390
    %1667 = vmatpush.msra.mxu0 %v1387
    %1668 = vmatpush.msra.mxu0 %v1384
    %1669 = vmatpush.msra.mxu0 %v1381
    %1670 = vmatmul.f32.gmra.mxu0 %v1652
    %v1671 = vpop.f32.mrf.mxu0
    %v1672 = vadd.f32 %v1432, %v1671
    %1673 = vdwg.mxu0
    %1674 = vmatpush.msra.mxu0 %v1427
    %1675 = vmatpush.msra.mxu0 %v1424
    %1676 = vmatpush.msra.mxu0 %v1421
    %1677 = vmatpush.msra.mxu0 %v1418
    %1678 = vmatpush.msra.mxu0 %v1415
    %1679 = vmatpush.msra.mxu0 %v1412
    %1680 = vmatpush.msra.mxu0 %v1409
    %1681 = vmatpush.msra.mxu0 %v1406
    %1682 = vmatpush.msra.mxu0 %v1403
    %1683 = vmatpush.msra.mxu0 %v1400
    %1684 = vmatpush.msra.mxu0 %v1397
    %1685 = vmatpush.msra.mxu0 %v1394
    %1686 = vmatpush.msra.mxu0 %v1391
    %1687 = vmatpush.msra.mxu0 %v1388
    %1688 = vmatpush.msra.mxu0 %v1385
    %1689 = vmatpush.msra.mxu0 %v1382
    %1690 = vmatmul.f32.gmra.mxu0 %v1652
    %v1691 = vpop.f32.mrf.mxu0
    %v1692 = vadd.f32 %v1433, %v1691
    %1693 = vdwg.mxu0
    %1694 = vmatpush.msra.mxu0 %v1428
    %1695 = vmatpush.msra.mxu0 %v1425
    %1696 = vmatpush.msra.mxu0 %v1422
    %1697 = vmatpush.msra.mxu0 %v1419
    %1698 = vmatpush.msra.mxu0 %v1416
    %1699 = vmatpush.msra.mxu0 %v1413
    %1700 = vmatpush.msra.mxu0 %v1410
    %1701 = vmatpush.msra.mxu0 %v1407
    %1702 = vmatpush.msra.mxu0 %v1404
    %1703 = vmatpush.msra.mxu0 %v1401
    %1704 = vmatpush.msra.mxu0 %v1398
    %1705 = vmatpush.msra.mxu0 %v1395
    %1706 = vmatpush.msra.mxu0 %v1392
    %1707 = vmatpush.msra.mxu0 %v1389
    %1708 = vmatpush.msra.mxu0 %v1386
    %1709 = vmatpush.msra.mxu0 %v1383
    %1710 = vmatmul.f32.gmra.mxu0 %v1652
    %v1711 = vpop.f32.mrf.mxu0
    %v1712 = vadd.f32 %v1434, %v1711
    %1713 = vdwg.mxu0
    %v1714 = vadd.f32 %v1281, %v1672
    %v1715 = vxor.u32 %v1714, 2147483648
    %v1716 = vmul.f32 %v1715, 1.442695
    %v1717 = vpow.pop %v1716
    %v1718 = vadd.f32 %v1717, 1.0
    %v1719 = vrcp.pop %v1718
    %v1720 = vmul.f32 %v1718, %v1719
    %v1721 = vsub.f32 1.0, %v1720
    %v1722 = vmul.f32 %v1719, %v1721
    %v1723 = vadd.f32 %v1719, %v1722
    %vm1724 = vweird.f32 %v1718
    %vm1725 = vweird.f32 %v1719
    %vm1726 = vmor %vm1724, %vm1725
    %v1727 = vsel %vm1726, %v1719, %v1723
    %v1728 = vand.u32 2147483647, %v1718
    %vm1729 = vcmp.eq.f32.partialorder %v1728, 8.507059e+37
    %v1730 = vand.u32 %v1718, 2147483648
    %v1731 = vor.u32 1.1754944e-38, %v1730
    %v1732 = vsel %vm1729, %v1731, %v1727
    %v1733 = vmul.f32 1.0, %v1732
    %v1734 = vadd.f32 %v1322, %v1692
    %v1735 = vxor.u32 %v1734, 2147483648
    %v1736 = vmul.f32 %v1735, 1.442695
    %v1737 = vpow.pop %v1736
    %v1738 = vadd.f32 %v1737, 1.0
    %v1739 = vrcp.pop %v1738
    %v1740 = vmul.f32 %v1738, %v1739
    %v1741 = vsub.f32 1.0, %v1740
    %v1742 = vmul.f32 %v1739, %v1741
    %v1743 = vadd.f32 %v1739, %v1742
    %vm1744 = vweird.f32 %v1738
    %vm1745 = vweird.f32 %v1739
    %vm1746 = vmor %vm1744, %vm1745
    %v1747 = vsel %vm1746, %v1739, %v1743
    %v1748 = vand.u32 2147483647, %v1738
    %vm1749 = vcmp.eq.f32.partialorder %v1748, 8.507059e+37
    %v1750 = vand.u32 %v1738, 2147483648
    %v1751 = vor.u32 1.1754944e-38, %v1750
    %v1752 = vsel %vm1749, %v1751, %v1747
    %v1753 = vmul.f32 1.0, %v1752
    %v1754 = vmul.f32 %v1733, %v1712
    %v1755 = vadd.f32 %v1363, %v1754
    %v1756 = vtanh.pop %v1755
    %v1757 = vsub.f32 1.0, %v1753
    %v1758 = vmul.f32 %v1757, %v1756
    %v1759 = vmul.f32 %v1753, %v1652
    %v1760 = vadd.f32 %v1758, %v1759
    %1761 = vst [vmem:[%s645] sm:$0xff] %v1760
    %1762 = vmatpush.msra.mxu0 %v1426
    %1763 = vmatpush.msra.mxu0 %v1423
    %1764 = vmatpush.msra.mxu0 %v1420
    %1765 = vmatpush.msra.mxu0 %v1417
    %1766 = vmatpush.msra.mxu0 %v1414
    %1767 = vmatpush.msra.mxu0 %v1411
    %1768 = vmatpush.msra.mxu0 %v1408
    %1769 = vmatpush.msra.mxu0 %v1405
    %1770 = vmatpush.msra.mxu0 %v1402
    %1771 = vmatpush.msra.mxu0 %v1399
    %1772 = vmatpush.msra.mxu0 %v1396
    %1773 = vmatpush.msra.mxu0 %v1393
    %1774 = vmatpush.msra.mxu0 %v1390
    %1775 = vmatpush.msra.mxu0 %v1387
    %1776 = vmatpush.msra.mxu0 %v1384
    %1777 = vmatpush.msra.mxu0 %v1381
    %1778 = vmatmul.f32.gmra.mxu0 %v1760
    %v1779 = vpop.f32.mrf.mxu0
    %v1780 = vadd.f32 %v1432, %v1779
    %1781 = vdwg.mxu0
    %1782 = vmatpush.msra.mxu0 %v1427
    %1783 = vmatpush.msra.mxu0 %v1424
    %1784 = vmatpush.msra.mxu0 %v1421
    %1785 = vmatpush.msra.mxu0 %v1418
    %1786 = vmatpush.msra.mxu0 %v1415
    %1787 = vmatpush.msra.mxu0 %v1412
    %1788 = vmatpush.msra.mxu0 %v1409
    %1789 = vmatpush.msra.mxu0 %v1406
    %1790 = vmatpush.msra.mxu0 %v1403
    %1791 = vmatpush.msra.mxu0 %v1400
    %1792 = vmatpush.msra.mxu0 %v1397
    %1793 = vmatpush.msra.mxu0 %v1394
    %1794 = vmatpush.msra.mxu0 %v1391
    %1795 = vmatpush.msra.mxu0 %v1388
    %1796 = vmatpush.msra.mxu0 %v1385
    %1797 = vmatpush.msra.mxu0 %v1382
    %1798 = vmatmul.f32.gmra.mxu0 %v1760
    %v1799 = vpop.f32.mrf.mxu0
    %v1800 = vadd.f32 %v1433, %v1799
    %1801 = vdwg.mxu0
    %1802 = vmatpush.msra.mxu0 %v1428
    %1803 = vmatpush.msra.mxu0 %v1425
    %1804 = vmatpush.msra.mxu0 %v1422
    %1805 = vmatpush.msra.mxu0 %v1419
    %1806 = vmatpush.msra.mxu0 %v1416
    %1807 = vmatpush.msra.mxu0 %v1413
    %1808 = vmatpush.msra.mxu0 %v1410
    %1809 = vmatpush.msra.mxu0 %v1407
    %1810 = vmatpush.msra.mxu0 %v1404
    %1811 = vmatpush.msra.mxu0 %v1401
    %1812 = vmatpush.msra.mxu0 %v1398
    %1813 = vmatpush.msra.mxu0 %v1395
    %1814 = vmatpush.msra.mxu0 %v1392
    %1815 = vmatpush.msra.mxu0 %v1389
    %1816 = vmatpush.msra.mxu0 %v1386
    %1817 = vmatpush.msra.mxu0 %v1383
    %1818 = vmatmul.f32.gmra.mxu0 %v1760
    %v1819 = vpop.f32.mrf.mxu0
    %v1820 = vadd.f32 %v1434, %v1819
    %1821 = vdwg.mxu0
    %v1822 = vadd.f32 %v1284, %v1780
    %v1823 = vxor.u32 %v1822, 2147483648
    %v1824 = vmul.f32 %v1823, 1.442695
    %v1825 = vpow.pop %v1824
    %v1826 = vadd.f32 %v1825, 1.0
    %v1827 = vrcp.pop %v1826
    %v1828 = vmul.f32 %v1826, %v1827
    %v1829 = vsub.f32 1.0, %v1828
    %v1830 = vmul.f32 %v1827, %v1829
    %v1831 = vadd.f32 %v1827, %v1830
    %vm1832 = vweird.f32 %v1826
    %vm1833 = vweird.f32 %v1827
    %vm1834 = vmor %vm1832, %vm1833
    %v1835 = vsel %vm1834, %v1827, %v1831
    %v1836 = vand.u32 2147483647, %v1826
    %vm1837 = vcmp.eq.f32.partialorder %v1836, 8.507059e+37
    %v1838 = vand.u32 %v1826, 2147483648
    %v1839 = vor.u32 1.1754944e-38, %v1838
    %v1840 = vsel %vm1837, %v1839, %v1835
    %v1841 = vmul.f32 1.0, %v1840
    %v1842 = vadd.f32 %v1325, %v1800
    %v1843 = vxor.u32 %v1842, 2147483648
    %v1844 = vmul.f32 %v1843, 1.442695
    %v1845 = vpow.pop %v1844
    %v1846 = vadd.f32 %v1845, 1.0
    %v1847 = vrcp.pop %v1846
    %v1848 = vmul.f32 %v1846, %v1847
    %v1849 = vsub.f32 1.0, %v1848
    %v1850 = vmul.f32 %v1847, %v1849
    %v1851 = vadd.f32 %v1847, %v1850
    %vm1852 = vweird.f32 %v1846
    %vm1853 = vweird.f32 %v1847
    %vm1854 = vmor %vm1852, %vm1853
    %v1855 = vsel %vm1854, %v1847, %v1851
    %v1856 = vand.u32 2147483647, %v1846
    %vm1857 = vcmp.eq.f32.partialorder %v1856, 8.507059e+37
    %v1858 = vand.u32 %v1846, 2147483648
    %v1859 = vor.u32 1.1754944e-38, %v1858
    %v1860 = vsel %vm1857, %v1859, %v1855
    %v1861 = vmul.f32 1.0, %v1860
    %v1862 = vmul.f32 %v1841, %v1820
    %v1863 = vadd.f32 %v1366, %v1862
    %v1864 = vtanh.pop %v1863
    %v1865 = vsub.f32 1.0, %v1861
    %v1866 = vmul.f32 %v1865, %v1864
    %v1867 = vmul.f32 %v1861, %v1760
    %v1868 = vadd.f32 %v1866, %v1867
    %1869 = vst [vmem:[%s754] sm:$0xff] %v1868
    %1870 = vmatpush.msra.mxu0 %v1426
    %1871 = vmatpush.msra.mxu0 %v1423
    %1872 = vmatpush.msra.mxu0 %v1420
    %1873 = vmatpush.msra.mxu0 %v1417
    %1874 = vmatpush.msra.mxu0 %v1414
    %1875 = vmatpush.msra.mxu0 %v1411
    %1876 = vmatpush.msra.mxu0 %v1408
    %1877 = vmatpush.msra.mxu0 %v1405
    %1878 = vmatpush.msra.mxu0 %v1402
    %1879 = vmatpush.msra.mxu0 %v1399
    %1880 = vmatpush.msra.mxu0 %v1396
    %1881 = vmatpush.msra.mxu0 %v1393
    %1882 = vmatpush.msra.mxu0 %v1390
    %1883 = vmatpush.msra.mxu0 %v1387
    %1884 = vmatpush.msra.mxu0 %v1384
    %1885 = vmatpush.msra.mxu0 %v1381
    %1886 = vmatmul.f32.gmra.mxu0 %v1868
    %v1887 = vpop.f32.mrf.mxu0
    %v1888 = vadd.f32 %v1432, %v1887
    %1889 = vdwg.mxu0
    %1890 = vmatpush.msra.mxu0 %v1427
    %1891 = vmatpush.msra.mxu0 %v1424
    %1892 = vmatpush.msra.mxu0 %v1421
    %1893 = vmatpush.msra.mxu0 %v1418
    %1894 = vmatpush.msra.mxu0 %v1415
    %1895 = vmatpush.msra.mxu0 %v1412
    %1896 = vmatpush.msra.mxu0 %v1409
    %1897 = vmatpush.msra.mxu0 %v1406
    %1898 = vmatpush.msra.mxu0 %v1403
    %1899 = vmatpush.msra.mxu0 %v1400
    %1900 = vmatpush.msra.mxu0 %v1397
    %1901 = vmatpush.msra.mxu0 %v1394
    %1902 = vmatpush.msra.mxu0 %v1391
    %1903 = vmatpush.msra.mxu0 %v1388
    %1904 = vmatpush.msra.mxu0 %v1385
    %1905 = vmatpush.msra.mxu0 %v1382
    %1906 = vmatmul.f32.gmra.mxu0 %v1868
    %v1907 = vpop.f32.mrf.mxu0
    %v1908 = vadd.f32 %v1433, %v1907
    %1909 = vdwg.mxu0
    %1910 = vmatpush.msra.mxu0 %v1428
    %1911 = vmatpush.msra.mxu0 %v1425
    %1912 = vmatpush.msra.mxu0 %v1422
    %1913 = vmatpush.msra.mxu0 %v1419
    %1914 = vmatpush.msra.mxu0 %v1416
    %1915 = vmatpush.msra.mxu0 %v1413
    %1916 = vmatpush.msra.mxu0 %v1410
    %1917 = vmatpush.msra.mxu0 %v1407
    %1918 = vmatpush.msra.mxu0 %v1404
    %1919 = vmatpush.msra.mxu0 %v1401
    %1920 = vmatpush.msra.mxu0 %v1398
    %1921 = vmatpush.msra.mxu0 %v1395
    %1922 = vmatpush.msra.mxu0 %v1392
    %1923 = vmatpush.msra.mxu0 %v1389
    %1924 = vmatpush.msra.mxu0 %v1386
    %1925 = vmatpush.msra.mxu0 %v1383
    %1926 = vmatmul.f32.gmra.mxu0 %v1868
    %v1927 = vpop.f32.mrf.mxu0
    %v1928 = vadd.f32 %v1434, %v1927
    %1929 = vdwg.mxu0
    %v1930 = vadd.f32 %v1287, %v1888
    %v1931 = vxor.u32 %v1930, 2147483648
    %v1932 = vmul.f32 %v1931, 1.442695
    %v1933 = vpow.pop %v1932
    %v1934 = vadd.f32 %v1933, 1.0
    %v1935 = vrcp.pop %v1934
    %v1936 = vmul.f32 %v1934, %v1935
    %v1937 = vsub.f32 1.0, %v1936
    %v1938 = vmul.f32 %v1935, %v1937
    %v1939 = vadd.f32 %v1935, %v1938
    %vm1940 = vweird.f32 %v1934
    %vm1941 = vweird.f32 %v1935
    %vm1942 = vmor %vm1940, %vm1941
    %v1943 = vsel %vm1942, %v1935, %v1939
    %v1944 = vand.u32 2147483647, %v1934
    %vm1945 = vcmp.eq.f32.partialorder %v1944, 8.507059e+37
    %v1946 = vand.u32 %v1934, 2147483648
    %v1947 = vor.u32 1.1754944e-38, %v1946
    %v1948 = vsel %vm1945, %v1947, %v1943
    %v1949 = vmul.f32 1.0, %v1948
    %v1950 = vadd.f32 %v1328, %v1908
    %v1951 = vxor.u32 %v1950, 2147483648
    %v1952 = vmul.f32 %v1951, 1.442695
    %v1953 = vpow.pop %v1952
    %v1954 = vadd.f32 %v1953, 1.0
    %v1955 = vrcp.pop %v1954
    %v1956 = vmul.f32 %v1954, %v1955
    %v1957 = vsub.f32 1.0, %v1956
    %v1958 = vmul.f32 %v1955, %v1957
    %v1959 = vadd.f32 %v1955, %v1958
    %vm1960 = vweird.f32 %v1954
    %vm1961 = vweird.f32 %v1955
    %vm1962 = vmor %vm1960, %vm1961
    %v1963 = vsel %vm1962, %v1955, %v1959
    %v1964 = vand.u32 2147483647, %v1954
    %vm1965 = vcmp.eq.f32.partialorder %v1964, 8.507059e+37
    %v1966 = vand.u32 %v1954, 2147483648
    %v1967 = vor.u32 1.1754944e-38, %v1966
    %v1968 = vsel %vm1965, %v1967, %v1963
    %v1969 = vmul.f32 1.0, %v1968
    %v1970 = vmul.f32 %v1949, %v1928
    %v1971 = vadd.f32 %v1369, %v1970
    %v1972 = vtanh.pop %v1971
    %v1973 = vsub.f32 1.0, %v1969
    %v1974 = vmul.f32 %v1973, %v1972
    %v1975 = vmul.f32 %v1969, %v1868
    %v1976 = vadd.f32 %v1974, %v1975
    %1977 = vst [vmem:[%s863] sm:$0xff] %v1976
    %1978 = vmatpush.msra.mxu0 %v1426
    %1979 = vmatpush.msra.mxu0 %v1423
    %1980 = vmatpush.msra.mxu0 %v1420
    %1981 = vmatpush.msra.mxu0 %v1417
    %1982 = vmatpush.msra.mxu0 %v1414
    %1983 = vmatpush.msra.mxu0 %v1411
    %1984 = vmatpush.msra.mxu0 %v1408
    %1985 = vmatpush.msra.mxu0 %v1405
    %1986 = vmatpush.msra.mxu0 %v1402
    %1987 = vmatpush.msra.mxu0 %v1399
    %1988 = vmatpush.msra.mxu0 %v1396
    %1989 = vmatpush.msra.mxu0 %v1393
    %1990 = vmatpush.msra.mxu0 %v1390
    %1991 = vmatpush.msra.mxu0 %v1387
    %1992 = vmatpush.msra.mxu0 %v1384
    %1993 = vmatpush.msra.mxu0 %v1381
    %1994 = vmatmul.f32.gmra.mxu0 %v1976
    %v1995 = vpop.f32.mrf.mxu0
    %v1996 = vadd.f32 %v1432, %v1995
    %1997 = vdwg.mxu0
    %1998 = vmatpush.msra.mxu0 %v1427
    %1999 = vmatpush.msra.mxu0 %v1424
    %2000 = vmatpush.msra.mxu0 %v1421
    %2001 = vmatpush.msra.mxu0 %v1418
    %2002 = vmatpush.msra.mxu0 %v1415
    %2003 = vmatpush.msra.mxu0 %v1412
    %2004 = vmatpush.msra.mxu0 %v1409
    %2005 = vmatpush.msra.mxu0 %v1406
    %2006 = vmatpush.msra.mxu0 %v1403
    %2007 = vmatpush.msra.mxu0 %v1400
    %2008 = vmatpush.msra.mxu0 %v1397
    %2009 = vmatpush.msra.mxu0 %v1394
    %2010 = vmatpush.msra.mxu0 %v1391
    %2011 = vmatpush.msra.mxu0 %v1388
    %2012 = vmatpush.msra.mxu0 %v1385
    %2013 = vmatpush.msra.mxu0 %v1382
    %2014 = vmatmul.f32.gmra.mxu0 %v1976
    %v2015 = vpop.f32.mrf.mxu0
    %v2016 = vadd.f32 %v1433, %v2015
    %2017 = vdwg.mxu0
    %2018 = vmatpush.msra.mxu0 %v1428
    %2019 = vmatpush.msra.mxu0 %v1425
    %2020 = vmatpush.msra.mxu0 %v1422
    %2021 = vmatpush.msra.mxu0 %v1419
    %2022 = vmatpush.msra.mxu0 %v1416
    %2023 = vmatpush.msra.mxu0 %v1413
    %2024 = vmatpush.msra.mxu0 %v1410
    %2025 = vmatpush.msra.mxu0 %v1407
    %2026 = vmatpush.msra.mxu0 %v1404
    %2027 = vmatpush.msra.mxu0 %v1401
    %2028 = vmatpush.msra.mxu0 %v1398
    %2029 = vmatpush.msra.mxu0 %v1395
    %2030 = vmatpush.msra.mxu0 %v1392
    %2031 = vmatpush.msra.mxu0 %v1389
    %2032 = vmatpush.msra.mxu0 %v1386
    %2033 = vmatpush.msra.mxu0 %v1383
    %2034 = vmatmul.f32.gmra.mxu0 %v1976
    %v2035 = vpop.f32.mrf.mxu0
    %v2036 = vadd.f32 %v1434, %v2035
    %2037 = vdwg.mxu0
    %v2038 = vadd.f32 %v1290, %v1996
    %v2039 = vxor.u32 %v2038, 2147483648
    %v2040 = vmul.f32 %v2039, 1.442695
    %v2041 = vpow.pop %v2040
    %v2042 = vadd.f32 %v2041, 1.0
    %v2043 = vrcp.pop %v2042
    %v2044 = vmul.f32 %v2042, %v2043
    %v2045 = vsub.f32 1.0, %v2044
    %v2046 = vmul.f32 %v2043, %v2045
    %v2047 = vadd.f32 %v2043, %v2046
    %vm2048 = vweird.f32 %v2042
    %vm2049 = vweird.f32 %v2043
    %vm2050 = vmor %vm2048, %vm2049
    %v2051 = vsel %vm2050, %v2043, %v2047
    %v2052 = vand.u32 2147483647, %v2042
    %vm2053 = vcmp.eq.f32.partialorder %v2052, 8.507059e+37
    %v2054 = vand.u32 %v2042, 2147483648
    %v2055 = vor.u32 1.1754944e-38, %v2054
    %v2056 = vsel %vm2053, %v2055, %v2051
    %v2057 = vmul.f32 1.0, %v2056
    %v2058 = vadd.f32 %v1331, %v2016
    %v2059 = vxor.u32 %v2058, 2147483648
    %v2060 = vmul.f32 %v2059, 1.442695
    %v2061 = vpow.pop %v2060
    %v2062 = vadd.f32 %v2061, 1.0
    %v2063 = vrcp.pop %v2062
    %v2064 = vmul.f32 %v2062, %v2063
    %v2065 = vsub.f32 1.0, %v2064
    %v2066 = vmul.f32 %v2063, %v2065
    %v2067 = vadd.f32 %v2063, %v2066
    %vm2068 = vweird.f32 %v2062
    %vm2069 = vweird.f32 %v2063
    %vm2070 = vmor %vm2068, %vm2069
    %v2071 = vsel %vm2070, %v2063, %v2067
    %v2072 = vand.u32 2147483647, %v2062
    %vm2073 = vcmp.eq.f32.partialorder %v2072, 8.507059e+37
    %v2074 = vand.u32 %v2062, 2147483648
    %v2075 = vor.u32 1.1754944e-38, %v2074
    %v2076 = vsel %vm2073, %v2075, %v2071
    %v2077 = vmul.f32 1.0, %v2076
    %v2078 = vmul.f32 %v2057, %v2036
    %v2079 = vadd.f32 %v1372, %v2078
    %v2080 = vtanh.pop %v2079
    %v2081 = vsub.f32 1.0, %v2077
    %v2082 = vmul.f32 %v2081, %v2080
    %v2083 = vmul.f32 %v2077, %v1976
    %v2084 = vadd.f32 %v2082, %v2083
    %2085 = vst [vmem:[%s972] sm:$0xff] %v2084
    %2086 = vmatpush.msra.mxu0 %v1426
    %2087 = vmatpush.msra.mxu0 %v1423
    %2088 = vmatpush.msra.mxu0 %v1420
    %2089 = vmatpush.msra.mxu0 %v1417
    %2090 = vmatpush.msra.mxu0 %v1414
    %2091 = vmatpush.msra.mxu0 %v1411
    %2092 = vmatpush.msra.mxu0 %v1408
    %2093 = vmatpush.msra.mxu0 %v1405
    %2094 = vmatpush.msra.mxu0 %v1402
    %2095 = vmatpush.msra.mxu0 %v1399
    %2096 = vmatpush.msra.mxu0 %v1396
    %2097 = vmatpush.msra.mxu0 %v1393
    %2098 = vmatpush.msra.mxu0 %v1390
    %2099 = vmatpush.msra.mxu0 %v1387
    %2100 = vmatpush.msra.mxu0 %v1384
    %2101 = vmatpush.msra.mxu0 %v1381
    %2102 = vmatmul.f32.gmra.mxu0 %v2084
    %v2103 = vpop.f32.mrf.mxu0
    %v2104 = vadd.f32 %v1432, %v2103
    %2105 = vdwg.mxu0
    %2106 = vmatpush.msra.mxu0 %v1427
    %2107 = vmatpush.msra.mxu0 %v1424
    %2108 = vmatpush.msra.mxu0 %v1421
    %2109 = vmatpush.msra.mxu0 %v1418
    %2110 = vmatpush.msra.mxu0 %v1415
    %2111 = vmatpush.msra.mxu0 %v1412
    %2112 = vmatpush.msra.mxu0 %v1409
    %2113 = vmatpush.msra.mxu0 %v1406
    %2114 = vmatpush.msra.mxu0 %v1403
    %2115 = vmatpush.msra.mxu0 %v1400
    %2116 = vmatpush.msra.mxu0 %v1397
    %2117 = vmatpush.msra.mxu0 %v1394
    %2118 = vmatpush.msra.mxu0 %v1391
    %2119 = vmatpush.msra.mxu0 %v1388
    %2120 = vmatpush.msra.mxu0 %v1385
    %2121 = vmatpush.msra.mxu0 %v1382
    %2122 = vmatmul.f32.gmra.mxu0 %v2084
    %v2123 = vpop.f32.mrf.mxu0
    %v2124 = vadd.f32 %v1433, %v2123
    %2125 = vdwg.mxu0
    %2126 = vmatpush.msra.mxu0 %v1428
    %2127 = vmatpush.msra.mxu0 %v1425
    %2128 = vmatpush.msra.mxu0 %v1422
    %2129 = vmatpush.msra.mxu0 %v1419
    %2130 = vmatpush.msra.mxu0 %v1416
    %2131 = vmatpush.msra.mxu0 %v1413
    %2132 = vmatpush.msra.mxu0 %v1410
    %2133 = vmatpush.msra.mxu0 %v1407
    %2134 = vmatpush.msra.mxu0 %v1404
    %2135 = vmatpush.msra.mxu0 %v1401
    %2136 = vmatpush.msra.mxu0 %v1398
    %2137 = vmatpush.msra.mxu0 %v1395
    %2138 = vmatpush.msra.mxu0 %v1392
    %2139 = vmatpush.msra.mxu0 %v1389
    %2140 = vmatpush.msra.mxu0 %v1386
    %2141 = vmatpush.msra.mxu0 %v1383
    %2142 = vmatmul.f32.gmra.mxu0 %v2084
    %v2143 = vpop.f32.mrf.mxu0
    %v2144 = vadd.f32 %v1434, %v2143
    %2145 = vdwg.mxu0
    %v2146 = vadd.f32 %v1293, %v2104
    %v2147 = vxor.u32 %v2146, 2147483648
    %v2148 = vmul.f32 %v2147, 1.442695
    %v2149 = vpow.pop %v2148
    %v2150 = vadd.f32 %v2149, 1.0
    %v2151 = vrcp.pop %v2150
    %v2152 = vmul.f32 %v2150, %v2151
    %v2153 = vsub.f32 1.0, %v2152
    %v2154 = vmul.f32 %v2151, %v2153
    %v2155 = vadd.f32 %v2151, %v2154
    %vm2156 = vweird.f32 %v2150
    %vm2157 = vweird.f32 %v2151
    %vm2158 = vmor %vm2156, %vm2157
    %v2159 = vsel %vm2158, %v2151, %v2155
    %v2160 = vand.u32 2147483647, %v2150
    %vm2161 = vcmp.eq.f32.partialorder %v2160, 8.507059e+37
    %v2162 = vand.u32 %v2150, 2147483648
    %v2163 = vor.u32 1.1754944e-38, %v2162
    %v2164 = vsel %vm2161, %v2163, %v2159
    %v2165 = vmul.f32 1.0, %v2164
    %v2166 = vadd.f32 %v1334, %v2124
    %v2167 = vxor.u32 %v2166, 2147483648
    %v2168 = vmul.f32 %v2167, 1.442695
    %v2169 = vpow.pop %v2168
    %v2170 = vadd.f32 %v2169, 1.0
    %v2171 = vrcp.pop %v2170
    %v2172 = vmul.f32 %v2170, %v2171
    %v2173 = vsub.f32 1.0, %v2172
    %v2174 = vmul.f32 %v2171, %v2173
    %v2175 = vadd.f32 %v2171, %v2174
    %vm2176 = vweird.f32 %v2170
    %vm2177 = vweird.f32 %v2171
    %vm2178 = vmor %vm2176, %vm2177
    %v2179 = vsel %vm2178, %v2171, %v2175
    %v2180 = vand.u32 2147483647, %v2170
    %vm2181 = vcmp.eq.f32.partialorder %v2180, 8.507059e+37
    %v2182 = vand.u32 %v2170, 2147483648
    %v2183 = vor.u32 1.1754944e-38, %v2182
    %v2184 = vsel %vm2181, %v2183, %v2179
    %v2185 = vmul.f32 1.0, %v2184
    %v2186 = vmul.f32 %v2165, %v2144
    %v2187 = vadd.f32 %v1375, %v2186
    %v2188 = vtanh.pop %v2187
    %v2189 = vsub.f32 1.0, %v2185
    %v2190 = vmul.f32 %v2189, %v2188
    %v2191 = vmul.f32 %v2185, %v2084
    %v2192 = vadd.f32 %v2190, %v2191
    %2193 = vst [vmem:[%s1081] sm:$0xff] %v2192
    %2194 = vmatpush.msra.mxu0 %v1426
    %2195 = vmatpush.msra.mxu0 %v1423
    %2196 = vmatpush.msra.mxu0 %v1420
    %2197 = vmatpush.msra.mxu0 %v1417
    %2198 = vmatpush.msra.mxu0 %v1414
    %2199 = vmatpush.msra.mxu0 %v1411
    %2200 = vmatpush.msra.mxu0 %v1408
    %2201 = vmatpush.msra.mxu0 %v1405
    %2202 = vmatpush.msra.mxu0 %v1402
    %2203 = vmatpush.msra.mxu0 %v1399
    %2204 = vmatpush.msra.mxu0 %v1396
    %2205 = vmatpush.msra.mxu0 %v1393
    %2206 = vmatpush.msra.mxu0 %v1390
    %2207 = vmatpush.msra.mxu0 %v1387
    %2208 = vmatpush.msra.mxu0 %v1384
    %2209 = vmatpush.msra.mxu0 %v1381
    %2210 = vmatmul.f32.gmra.mxu0 %v2192
    %v2211 = vpop.f32.mrf.mxu0
    %v2212 = vadd.f32 %v1432, %v2211
    %2213 = vdwg.mxu0
    %2214 = vmatpush.msra.mxu0 %v1427
    %2215 = vmatpush.msra.mxu0 %v1424
    %2216 = vmatpush.msra.mxu0 %v1421
    %2217 = vmatpush.msra.mxu0 %v1418
    %2218 = vmatpush.msra.mxu0 %v1415
    %2219 = vmatpush.msra.mxu0 %v1412
    %2220 = vmatpush.msra.mxu0 %v1409
    %2221 = vmatpush.msra.mxu0 %v1406
    %2222 = vmatpush.msra.mxu0 %v1403
    %2223 = vmatpush.msra.mxu0 %v1400
    %2224 = vmatpush.msra.mxu0 %v1397
    %2225 = vmatpush.msra.mxu0 %v1394
    %2226 = vmatpush.msra.mxu0 %v1391
    %2227 = vmatpush.msra.mxu0 %v1388
    %2228 = vmatpush.msra.mxu0 %v1385
    %2229 = vmatpush.msra.mxu0 %v1382
    %2230 = vmatmul.f32.gmra.mxu0 %v2192
    %v2231 = vpop.f32.mrf.mxu0
    %v2232 = vadd.f32 %v1433, %v2231
    %2233 = vdwg.mxu0
    %2234 = vmatpush.msra.mxu0 %v1428
    %2235 = vmatpush.msra.mxu0 %v1425
    %2236 = vmatpush.msra.mxu0 %v1422
    %2237 = vmatpush.msra.mxu0 %v1419
    %2238 = vmatpush.msra.mxu0 %v1416
    %2239 = vmatpush.msra.mxu0 %v1413
    %2240 = vmatpush.msra.mxu0 %v1410
    %2241 = vmatpush.msra.mxu0 %v1407
    %2242 = vmatpush.msra.mxu0 %v1404
    %2243 = vmatpush.msra.mxu0 %v1401
    %2244 = vmatpush.msra.mxu0 %v1398
    %2245 = vmatpush.msra.mxu0 %v1395
    %2246 = vmatpush.msra.mxu0 %v1392
    %2247 = vmatpush.msra.mxu0 %v1389
    %2248 = vmatpush.msra.mxu0 %v1386
    %2249 = vmatpush.msra.mxu0 %v1383
    %2250 = vmatmul.f32.gmra.mxu0 %v2192
    %v2251 = vpop.f32.mrf.mxu0
    %v2252 = vadd.f32 %v1434, %v2251
    %2253 = vdwg.mxu0
    %v2254 = vadd.f32 %v1296, %v2212
    %v2255 = vxor.u32 %v2254, 2147483648
    %v2256 = vmul.f32 %v2255, 1.442695
    %v2257 = vpow.pop %v2256
    %v2258 = vadd.f32 %v2257, 1.0
    %v2259 = vrcp.pop %v2258
    %v2260 = vmul.f32 %v2258, %v2259
    %v2261 = vsub.f32 1.0, %v2260
    %v2262 = vmul.f32 %v2259, %v2261
    %v2263 = vadd.f32 %v2259, %v2262
    %vm2264 = vweird.f32 %v2258
    %vm2265 = vweird.f32 %v2259
    %vm2266 = vmor %vm2264, %vm2265
    %v2267 = vsel %vm2266, %v2259, %v2263
    %v2268 = vand.u32 2147483647, %v2258
    %vm2269 = vcmp.eq.f32.partialorder %v2268, 8.507059e+37
    %v2270 = vand.u32 %v2258, 2147483648
    %v2271 = vor.u32 1.1754944e-38, %v2270
    %v2272 = vsel %vm2269, %v2271, %v2267
    %v2273 = vmul.f32 1.0, %v2272
    %v2274 = vadd.f32 %v1337, %v2232
    %v2275 = vxor.u32 %v2274, 2147483648
    %v2276 = vmul.f32 %v2275, 1.442695
    %v2277 = vpow.pop %v2276
    %v2278 = vadd.f32 %v2277, 1.0
    %v2279 = vrcp.pop %v2278
    %v2280 = vmul.f32 %v2278, %v2279
    %v2281 = vsub.f32 1.0, %v2280
    %v2282 = vmul.f32 %v2279, %v2281
    %v2283 = vadd.f32 %v2279, %v2282
    %vm2284 = vweird.f32 %v2278
    %vm2285 = vweird.f32 %v2279
    %vm2286 = vmor %vm2284, %vm2285
    %v2287 = vsel %vm2286, %v2279, %v2283
    %v2288 = vand.u32 2147483647, %v2278
    %vm2289 = vcmp.eq.f32.partialorder %v2288, 8.507059e+37
    %v2290 = vand.u32 %v2278, 2147483648
    %v2291 = vor.u32 1.1754944e-38, %v2290
    %v2292 = vsel %vm2289, %v2291, %v2287
    %v2293 = vmul.f32 1.0, %v2292
    %v2294 = vmul.f32 %v2273, %v2252
    %v2295 = vadd.f32 %v1378, %v2294
    %v2296 = vtanh.pop %v2295
    %v2297 = vsub.f32 1.0, %v2293
    %v2298 = vmul.f32 %v2297, %v2296
    %v2299 = vmul.f32 %v2293, %v2192
    %v2300 = vadd.f32 %v2298, %v2299
    %2301 = vst [vmem:[%s1190] sm:$0xff] %v2300
    %v2302 = vld [vmem:[#allocation2] sm:$0xff]
    %v2303 = vld [vmem:[#allocation2 + $0x8] sm:$0xff]
    %v2304 = vld [vmem:[#allocation2 + $0x10] sm:$0xff]
    %v2305 = vld [vmem:[#allocation2 + $0x18] sm:$0xff]
    %v2306 = vld [vmem:[#allocation2 + $0x20] sm:$0xff]
    %v2307 = vld [vmem:[#allocation2 + $0x28] sm:$0xff]
    %v2308 = vld [vmem:[#allocation2 + $0x30] sm:$0xff]
    %v2309 = vld [vmem:[#allocation2 + $0x38] sm:$0xff]
    %s2310 = scalar_lea.vmem [#allocation6], 384
    %v2311 = vld [vmem:[%s2310] sm:$0xff]
    %v2312 = vld [vmem:[%s2310 + $0x8] sm:$0xff]
    %v2313 = vld [vmem:[%s2310 + $0x10] sm:$0xff]
    %v2314 = vld [vmem:[%s2310 + $0x18] sm:$0xff]
    %v2315 = vld [vmem:[%s2310 + $0x20] sm:$0xff]
    %v2316 = vld [vmem:[%s2310 + $0x28] sm:$0xff]
    %v2317 = vld [vmem:[%s2310 + $0x30] sm:$0xff]
    %v2318 = vld [vmem:[%s2310 + $0x38] sm:$0xff]
    %v2319 = vld [vmem:[%s2310 + $0x40] sm:$0xff]
    %v2320 = vld [vmem:[%s2310 + $0x48] sm:$0xff]
    %v2321 = vld [vmem:[%s2310 + $0x50] sm:$0xff]
    %v2322 = vld [vmem:[%s2310 + $0x58] sm:$0xff]
    %v2323 = vld [vmem:[%s2310 + $0x60] sm:$0xff]
    %v2324 = vld [vmem:[%s2310 + $0x68] sm:$0xff]
    %v2325 = vld [vmem:[%s2310 + $0x70] sm:$0xff]
    %v2326 = vld [vmem:[%s2310 + $0x78] sm:$0xff]
    %v2327 = vld [vmem:[%s2310 + $0x80] sm:$0xff]
    %v2328 = vld [vmem:[%s2310 + $0x88] sm:$0xff]
    %v2329 = vld [vmem:[%s2310 + $0x90] sm:$0xff]
    %v2330 = vld [vmem:[%s2310 + $0x98] sm:$0xff]
    %v2331 = vld [vmem:[%s2310 + $0xa0] sm:$0xff]
    %v2332 = vld [vmem:[%s2310 + $0xa8] sm:$0xff]
    %v2333 = vld [vmem:[%s2310 + $0xb0] sm:$0xff]
    %v2334 = vld [vmem:[%s2310 + $0xb8] sm:$0xff]
    %v2335 = vld [vmem:[%s2310 + $0xc0] sm:$0xff]
    %v2336 = vld [vmem:[%s2310 + $0xc8] sm:$0xff]
    %v2337 = vld [vmem:[%s2310 + $0xd0] sm:$0xff]
    %v2338 = vld [vmem:[%s2310 + $0xd8] sm:$0xff]
    %v2339 = vld [vmem:[%s2310 + $0xe0] sm:$0xff]
    %v2340 = vld [vmem:[%s2310 + $0xe8] sm:$0xff]
    %v2341 = vld [vmem:[%s2310 + $0xf0] sm:$0xff]
    %v2342 = vld [vmem:[%s2310 + $0xf8] sm:$0xff]
    %v2343 = vld [vmem:[%s2310 + $0x100] sm:$0xff]
    %v2344 = vld [vmem:[%s2310 + $0x108] sm:$0xff]
    %v2345 = vld [vmem:[%s2310 + $0x110] sm:$0xff]
    %v2346 = vld [vmem:[%s2310 + $0x118] sm:$0xff]
    %v2347 = vld [vmem:[%s2310 + $0x120] sm:$0xff]
    %v2348 = vld [vmem:[%s2310 + $0x128] sm:$0xff]
    %v2349 = vld [vmem:[%s2310 + $0x130] sm:$0xff]
    %v2350 = vld [vmem:[%s2310 + $0x138] sm:$0xff]
    %v2351 = vld [vmem:[%s2310 + $0x140] sm:$0xff]
    %v2352 = vld [vmem:[%s2310 + $0x148] sm:$0xff]
    %v2353 = vld [vmem:[%s2310 + $0x150] sm:$0xff]
    %v2354 = vld [vmem:[%s2310 + $0x158] sm:$0xff]
    %v2355 = vld [vmem:[%s2310 + $0x160] sm:$0xff]
    %v2356 = vld [vmem:[%s2310 + $0x168] sm:$0xff]
    %v2357 = vld [vmem:[%s2310 + $0x170] sm:$0xff]
    %v2358 = vld [vmem:[%s2310 + $0x178] sm:$0xff]
    %s2359 = scalar_lea.vmem %s4, 6
    %v2360 = vld [vmem:[%s2359] sm:$0x7]
    %v2362 = vperm.slane %v2360, 0
    %v2363 = vperm.slane %v2360, 1
    %v2364 = vperm.slane %v2360, 2
    %2368 = vmatpush.msra.mxu0 %v2356
    %2369 = vmatpush.msra.mxu0 %v2353
    %2370 = vmatpush.msra.mxu0 %v2350
    %2371 = vmatpush.msra.mxu0 %v2347
    %2372 = vmatpush.msra.mxu0 %v2344
    %2373 = vmatpush.msra.mxu0 %v2341
    %2374 = vmatpush.msra.mxu0 %v2338
    %2375 = vmatpush.msra.mxu0 %v2335
    %2376 = vmatpush.msra.mxu0 %v2332
    %2377 = vmatpush.msra.mxu0 %v2329
    %2378 = vmatpush.msra.mxu0 %v2326
    %2379 = vmatpush.msra.mxu0 %v2323
    %2380 = vmatpush.msra.mxu0 %v2320
    %2381 = vmatpush.msra.mxu0 %v2317
    %2382 = vmatpush.msra.mxu0 %v2314
    %2383 = vmatpush.msra.mxu0 %v2311
    %2384 = vmatmul.f32.gmra.mxu0 %v2302
    %v2385 = vpop.f32.mrf.mxu0
    %v2386 = vadd.f32 %v2362, %v2385
    %2387 = vmatmul.f32.gmra.mxu0 %v2303
    %v2388 = vpop.f32.mrf.mxu0
    %v2389 = vadd.f32 %v2362, %v2388
    %2390 = vmatmul.f32.gmra.mxu0 %v2304
    %v2391 = vpop.f32.mrf.mxu0
    %v2392 = vadd.f32 %v2362, %v2391
    %2393 = vmatmul.f32.gmra.mxu0 %v2305
    %v2394 = vpop.f32.mrf.mxu0
    %v2395 = vadd.f32 %v2362, %v2394
    %2396 = vmatmul.f32.gmra.mxu0 %v2306
    %v2397 = vpop.f32.mrf.mxu0
    %v2398 = vadd.f32 %v2362, %v2397
    %2399 = vmatmul.f32.gmra.mxu0 %v2307
    %v2400 = vpop.f32.mrf.mxu0
    %v2401 = vadd.f32 %v2362, %v2400
    %2402 = vmatmul.f32.gmra.mxu0 %v2308
    %v2403 = vpop.f32.mrf.mxu0
    %v2404 = vadd.f32 %v2362, %v2403
    %2405 = vmatmul.f32.gmra.mxu0 %v2309
    %v2406 = vpop.f32.mrf.mxu0
    %v2407 = vadd.f32 %v2362, %v2406
    %2408 = vdwg.mxu0
    %2409 = vmatpush.msra.mxu0 %v2357
    %2410 = vmatpush.msra.mxu0 %v2354
    %2411 = vmatpush.msra.mxu0 %v2351
    %2412 = vmatpush.msra.mxu0 %v2348
    %2413 = vmatpush.msra.mxu0 %v2345
    %2414 = vmatpush.msra.mxu0 %v2342
    %2415 = vmatpush.msra.mxu0 %v2339
    %2416 = vmatpush.msra.mxu0 %v2336
    %2417 = vmatpush.msra.mxu0 %v2333
    %2418 = vmatpush.msra.mxu0 %v2330
    %2419 = vmatpush.msra.mxu0 %v2327
    %2420 = vmatpush.msra.mxu0 %v2324
    %2421 = vmatpush.msra.mxu0 %v2321
    %2422 = vmatpush.msra.mxu0 %v2318
    %2423 = vmatpush.msra.mxu0 %v2315
    %2424 = vmatpush.msra.mxu0 %v2312
    %2425 = vmatmul.f32.gmra.mxu0 %v2302
    %v2426 = vpop.f32.mrf.mxu0
    %v2427 = vadd.f32 %v2363, %v2426
    %2428 = vmatmul.f32.gmra.mxu0 %v2303
    %v2429 = vpop.f32.mrf.mxu0
    %v2430 = vadd.f32 %v2363, %v2429
    %2431 = vmatmul.f32.gmra.mxu0 %v2304
    %v2432 = vpop.f32.mrf.mxu0
    %v2433 = vadd.f32 %v2363, %v2432
    %2434 = vmatmul.f32.gmra.mxu0 %v2305
    %v2435 = vpop.f32.mrf.mxu0
    %v2436 = vadd.f32 %v2363, %v2435
    %2437 = vmatmul.f32.gmra.mxu0 %v2306
    %v2438 = vpop.f32.mrf.mxu0
    %v2439 = vadd.f32 %v2363, %v2438
    %2440 = vmatmul.f32.gmra.mxu0 %v2307
    %v2441 = vpop.f32.mrf.mxu0
    %v2442 = vadd.f32 %v2363, %v2441
    %2443 = vmatmul.f32.gmra.mxu0 %v2308
    %v2444 = vpop.f32.mrf.mxu0
    %v2445 = vadd.f32 %v2363, %v2444
    %2446 = vmatmul.f32.gmra.mxu0 %v2309
    %v2447 = vpop.f32.mrf.mxu0
    %v2448 = vadd.f32 %v2363, %v2447
    %2449 = vdwg.mxu0
    %2450 = vmatpush.msra.mxu0 %v2358
    %2451 = vmatpush.msra.mxu0 %v2355
    %2452 = vmatpush.msra.mxu0 %v2352
    %2453 = vmatpush.msra.mxu0 %v2349
    %2454 = vmatpush.msra.mxu0 %v2346
    %2455 = vmatpush.msra.mxu0 %v2343
    %2456 = vmatpush.msra.mxu0 %v2340
    %2457 = vmatpush.msra.mxu0 %v2337
    %2458 = vmatpush.msra.mxu0 %v2334
    %2459 = vmatpush.msra.mxu0 %v2331
    %2460 = vmatpush.msra.mxu0 %v2328
    %2461 = vmatpush.msra.mxu0 %v2325
    %2462 = vmatpush.msra.mxu0 %v2322
    %2463 = vmatpush.msra.mxu0 %v2319
    %2464 = vmatpush.msra.mxu0 %v2316
    %2465 = vmatpush.msra.mxu0 %v2313
    %2466 = vmatmul.f32.gmra.mxu0 %v2302
    %v2467 = vpop.f32.mrf.mxu0
    %v2468 = vadd.f32 %v2364, %v2467
    %2469 = vmatmul.f32.gmra.mxu0 %v2303
    %v2470 = vpop.f32.mrf.mxu0
    %v2471 = vadd.f32 %v2364, %v2470
    %2472 = vmatmul.f32.gmra.mxu0 %v2304
    %v2473 = vpop.f32.mrf.mxu0
    %v2474 = vadd.f32 %v2364, %v2473
    %2475 = vmatmul.f32.gmra.mxu0 %v2305
    %v2476 = vpop.f32.mrf.mxu0
    %v2477 = vadd.f32 %v2364, %v2476
    %2478 = vmatmul.f32.gmra.mxu0 %v2306
    %v2479 = vpop.f32.mrf.mxu0
    %v2480 = vadd.f32 %v2364, %v2479
    %2481 = vmatmul.f32.gmra.mxu0 %v2307
    %v2482 = vpop.f32.mrf.mxu0
    %v2483 = vadd.f32 %v2364, %v2482
    %2484 = vmatmul.f32.gmra.mxu0 %v2308
    %v2485 = vpop.f32.mrf.mxu0
    %v2486 = vadd.f32 %v2364, %v2485
    %2487 = vmatmul.f32.gmra.mxu0 %v2309
    %v2488 = vpop.f32.mrf.mxu0
    %v2489 = vadd.f32 %v2364, %v2488
    %2490 = vdwg.mxu0
    %s2491 = scalar_lea.vmem [#allocation8], 768
    %v2492 = vld [vmem:[%s2491] sm:$0xff]
    %v2493 = vld [vmem:[%s2491 + $0x8] sm:$0xff]
    %v2494 = vld [vmem:[%s2491 + $0x10] sm:$0xff]
    %v2495 = vld [vmem:[%s2491 + $0x18] sm:$0xff]
    %v2496 = vld [vmem:[%s2491 + $0x20] sm:$0xff]
    %v2497 = vld [vmem:[%s2491 + $0x28] sm:$0xff]
    %v2498 = vld [vmem:[%s2491 + $0x30] sm:$0xff]
    %v2499 = vld [vmem:[%s2491 + $0x38] sm:$0xff]
    %v2500 = vld [vmem:[%s2491 + $0x40] sm:$0xff]
    %v2501 = vld [vmem:[%s2491 + $0x48] sm:$0xff]
    %v2502 = vld [vmem:[%s2491 + $0x50] sm:$0xff]
    %v2503 = vld [vmem:[%s2491 + $0x58] sm:$0xff]
    %v2504 = vld [vmem:[%s2491 + $0x60] sm:$0xff]
    %v2505 = vld [vmem:[%s2491 + $0x68] sm:$0xff]
    %v2506 = vld [vmem:[%s2491 + $0x70] sm:$0xff]
    %v2507 = vld [vmem:[%s2491 + $0x78] sm:$0xff]
    %v2508 = vld [vmem:[%s2491 + $0x80] sm:$0xff]
    %v2509 = vld [vmem:[%s2491 + $0x88] sm:$0xff]
    %v2510 = vld [vmem:[%s2491 + $0x90] sm:$0xff]
    %v2511 = vld [vmem:[%s2491 + $0x98] sm:$0xff]
    %v2512 = vld [vmem:[%s2491 + $0xa0] sm:$0xff]
    %v2513 = vld [vmem:[%s2491 + $0xa8] sm:$0xff]
    %v2514 = vld [vmem:[%s2491 + $0xb0] sm:$0xff]
    %v2515 = vld [vmem:[%s2491 + $0xb8] sm:$0xff]
    %v2516 = vld [vmem:[%s2491 + $0xc0] sm:$0xff]
    %v2517 = vld [vmem:[%s2491 + $0xc8] sm:$0xff]
    %v2518 = vld [vmem:[%s2491 + $0xd0] sm:$0xff]
    %v2519 = vld [vmem:[%s2491 + $0xd8] sm:$0xff]
    %v2520 = vld [vmem:[%s2491 + $0xe0] sm:$0xff]
    %v2521 = vld [vmem:[%s2491 + $0xe8] sm:$0xff]
    %v2522 = vld [vmem:[%s2491 + $0xf0] sm:$0xff]
    %v2523 = vld [vmem:[%s2491 + $0xf8] sm:$0xff]
    %v2524 = vld [vmem:[%s2491 + $0x100] sm:$0xff]
    %v2525 = vld [vmem:[%s2491 + $0x108] sm:$0xff]
    %v2526 = vld [vmem:[%s2491 + $0x110] sm:$0xff]
    %v2527 = vld [vmem:[%s2491 + $0x118] sm:$0xff]
    %v2528 = vld [vmem:[%s2491 + $0x120] sm:$0xff]
    %v2529 = vld [vmem:[%s2491 + $0x128] sm:$0xff]
    %v2530 = vld [vmem:[%s2491 + $0x130] sm:$0xff]
    %v2531 = vld [vmem:[%s2491 + $0x138] sm:$0xff]
    %v2532 = vld [vmem:[%s2491 + $0x140] sm:$0xff]
    %v2533 = vld [vmem:[%s2491 + $0x148] sm:$0xff]
    %v2534 = vld [vmem:[%s2491 + $0x150] sm:$0xff]
    %v2535 = vld [vmem:[%s2491 + $0x158] sm:$0xff]
    %v2536 = vld [vmem:[%s2491 + $0x160] sm:$0xff]
    %v2537 = vld [vmem:[%s2491 + $0x168] sm:$0xff]
    %v2538 = vld [vmem:[%s2491 + $0x170] sm:$0xff]
    %v2539 = vld [vmem:[%s2491 + $0x178] sm:$0xff]
    %s2540 = scalar_lea.vmem %s5, 6
    %v2541 = vld [vmem:[%s2540] sm:$0x7]
    %v2543 = vperm.slane %v2541, 0
    %v2544 = vperm.slane %v2541, 1
    %v2545 = vperm.slane %v2541, 2
    %2549 = vmatpush.msra.mxu0 %v2537
    %2550 = vmatpush.msra.mxu0 %v2534
    %2551 = vmatpush.msra.mxu0 %v2531
    %2552 = vmatpush.msra.mxu0 %v2528
    %2553 = vmatpush.msra.mxu0 %v2525
    %2554 = vmatpush.msra.mxu0 %v2522
    %2555 = vmatpush.msra.mxu0 %v2519
    %2556 = vmatpush.msra.mxu0 %v2516
    %2557 = vmatpush.msra.mxu0 %v2513
    %2558 = vmatpush.msra.mxu0 %v2510
    %2559 = vmatpush.msra.mxu0 %v2507
    %2560 = vmatpush.msra.mxu0 %v2504
    %2561 = vmatpush.msra.mxu0 %v2501
    %2562 = vmatpush.msra.mxu0 %v2498
    %2563 = vmatpush.msra.mxu0 %v2495
    %2564 = vmatpush.msra.mxu0 %v2492
    %2565 = vmatmul.f32.gmra.mxu0 0.0
    %v2566 = vpop.f32.mrf.mxu0
    %v2567 = vadd.f32 %v2543, %v2566
    %2568 = vdwg.mxu0
    %2569 = vmatpush.msra.mxu0 %v2538
    %2570 = vmatpush.msra.mxu0 %v2535
    %2571 = vmatpush.msra.mxu0 %v2532
    %2572 = vmatpush.msra.mxu0 %v2529
    %2573 = vmatpush.msra.mxu0 %v2526
    %2574 = vmatpush.msra.mxu0 %v2523
    %2575 = vmatpush.msra.mxu0 %v2520
    %2576 = vmatpush.msra.mxu0 %v2517
    %2577 = vmatpush.msra.mxu0 %v2514
    %2578 = vmatpush.msra.mxu0 %v2511
    %2579 = vmatpush.msra.mxu0 %v2508
    %2580 = vmatpush.msra.mxu0 %v2505
    %2581 = vmatpush.msra.mxu0 %v2502
    %2582 = vmatpush.msra.mxu0 %v2499
    %2583 = vmatpush.msra.mxu0 %v2496
    %2584 = vmatpush.msra.mxu0 %v2493
    %2585 = vmatmul.f32.gmra.mxu0 0.0
    %v2586 = vpop.f32.mrf.mxu0
    %v2587 = vadd.f32 %v2544, %v2586
    %2588 = vdwg.mxu0
    %2589 = vmatpush.msra.mxu0 %v2539
    %2590 = vmatpush.msra.mxu0 %v2536
    %2591 = vmatpush.msra.mxu0 %v2533
    %2592 = vmatpush.msra.mxu0 %v2530
    %2593 = vmatpush.msra.mxu0 %v2527
    %2594 = vmatpush.msra.mxu0 %v2524
    %2595 = vmatpush.msra.mxu0 %v2521
    %2596 = vmatpush.msra.mxu0 %v2518
    %2597 = vmatpush.msra.mxu0 %v2515
    %2598 = vmatpush.msra.mxu0 %v2512
    %2599 = vmatpush.msra.mxu0 %v2509
    %2600 = vmatpush.msra.mxu0 %v2506
    %2601 = vmatpush.msra.mxu0 %v2503
    %2602 = vmatpush.msra.mxu0 %v2500
    %2603 = vmatpush.msra.mxu0 %v2497
    %2604 = vmatpush.msra.mxu0 %v2494
    %2605 = vmatmul.f32.gmra.mxu0 0.0
    %v2606 = vpop.f32.mrf.mxu0
    %v2607 = vadd.f32 %v2545, %v2606
    %2608 = vdwg.mxu0
    %v2609 = vadd.f32 %v2386, %v2567
    %v2610 = vxor.u32 %v2609, 2147483648
    %v2611 = vmul.f32 %v2610, 1.442695
    %v2612 = vpow.pop %v2611
    %v2613 = vadd.f32 %v2612, 1.0
    %v2614 = vrcp.pop %v2613
    %v2615 = vmul.f32 %v2613, %v2614
    %v2616 = vsub.f32 1.0, %v2615
    %v2617 = vmul.f32 %v2614, %v2616
    %v2618 = vadd.f32 %v2614, %v2617
    %vm2619 = vweird.f32 %v2613
    %vm2620 = vweird.f32 %v2614
    %vm2621 = vmor %vm2619, %vm2620
    %v2622 = vsel %vm2621, %v2614, %v2618
    %v2623 = vand.u32 2147483647, %v2613
    %vm2624 = vcmp.eq.f32.partialorder %v2623, 8.507059e+37
    %v2625 = vand.u32 %v2613, 2147483648
    %v2626 = vor.u32 1.1754944e-38, %v2625
    %v2627 = vsel %vm2624, %v2626, %v2622
    %v2628 = vmul.f32 1.0, %v2627
    %v2629 = vadd.f32 %v2427, %v2587
    %v2630 = vxor.u32 %v2629, 2147483648
    %v2631 = vmul.f32 %v2630, 1.442695
    %v2632 = vpow.pop %v2631
    %v2633 = vadd.f32 %v2632, 1.0
    %v2634 = vrcp.pop %v2633
    %v2635 = vmul.f32 %v2633, %v2634
    %v2636 = vsub.f32 1.0, %v2635
    %v2637 = vmul.f32 %v2634, %v2636
    %v2638 = vadd.f32 %v2634, %v2637
    %vm2639 = vweird.f32 %v2633
    %vm2640 = vweird.f32 %v2634
    %vm2641 = vmor %vm2639, %vm2640
    %v2642 = vsel %vm2641, %v2634, %v2638
    %v2643 = vand.u32 2147483647, %v2633
    %vm2644 = vcmp.eq.f32.partialorder %v2643, 8.507059e+37
    %v2645 = vand.u32 %v2633, 2147483648
    %v2646 = vor.u32 1.1754944e-38, %v2645
    %v2647 = vsel %vm2644, %v2646, %v2642
    %v2648 = vmul.f32 1.0, %v2647
    %v2649 = vmul.f32 %v2628, %v2607
    %v2650 = vadd.f32 %v2468, %v2649
    %v2651 = vtanh.pop %v2650
    %v2652 = vsub.f32 1.0, %v2648
    %v2653 = vmul.f32 %v2652, %v2651
    %v2654 = vmul.f32 %v2648, 0.0
    %v2655 = vadd.f32 %v2653, %v2654
    %2656 = vmatpush.msra.mxu0 %v2537
    %2657 = vmatpush.msra.mxu0 %v2534
    %2658 = vmatpush.msra.mxu0 %v2531
    %2659 = vmatpush.msra.mxu0 %v2528
    %2660 = vmatpush.msra.mxu0 %v2525
    %2661 = vmatpush.msra.mxu0 %v2522
    %2662 = vmatpush.msra.mxu0 %v2519
    %2663 = vmatpush.msra.mxu0 %v2516
    %2664 = vmatpush.msra.mxu0 %v2513
    %2665 = vmatpush.msra.mxu0 %v2510
    %2666 = vmatpush.msra.mxu0 %v2507
    %2667 = vmatpush.msra.mxu0 %v2504
    %2668 = vmatpush.msra.mxu0 %v2501
    %2669 = vmatpush.msra.mxu0 %v2498
    %2670 = vmatpush.msra.mxu0 %v2495
    %2671 = vmatpush.msra.mxu0 %v2492
    %2672 = vmatmul.f32.gmra.mxu0 %v2655
    %v2673 = vpop.f32.mrf.mxu0
    %v2674 = vadd.f32 %v2543, %v2673
    %2675 = vdwg.mxu0
    %2676 = vmatpush.msra.mxu0 %v2538
    %2677 = vmatpush.msra.mxu0 %v2535
    %2678 = vmatpush.msra.mxu0 %v2532
    %2679 = vmatpush.msra.mxu0 %v2529
    %2680 = vmatpush.msra.mxu0 %v2526
    %2681 = vmatpush.msra.mxu0 %v2523
    %2682 = vmatpush.msra.mxu0 %v2520
    %2683 = vmatpush.msra.mxu0 %v2517
    %2684 = vmatpush.msra.mxu0 %v2514
    %2685 = vmatpush.msra.mxu0 %v2511
    %2686 = vmatpush.msra.mxu0 %v2508
    %2687 = vmatpush.msra.mxu0 %v2505
    %2688 = vmatpush.msra.mxu0 %v2502
    %2689 = vmatpush.msra.mxu0 %v2499
    %2690 = vmatpush.msra.mxu0 %v2496
    %2691 = vmatpush.msra.mxu0 %v2493
    %2692 = vmatmul.f32.gmra.mxu0 %v2655
    %v2693 = vpop.f32.mrf.mxu0
    %v2694 = vadd.f32 %v2544, %v2693
    %2695 = vdwg.mxu0
    %2696 = vmatpush.msra.mxu0 %v2539
    %2697 = vmatpush.msra.mxu0 %v2536
    %2698 = vmatpush.msra.mxu0 %v2533
    %2699 = vmatpush.msra.mxu0 %v2530
    %2700 = vmatpush.msra.mxu0 %v2527
    %2701 = vmatpush.msra.mxu0 %v2524
    %2702 = vmatpush.msra.mxu0 %v2521
    %2703 = vmatpush.msra.mxu0 %v2518
    %2704 = vmatpush.msra.mxu0 %v2515
    %2705 = vmatpush.msra.mxu0 %v2512
    %2706 = vmatpush.msra.mxu0 %v2509
    %2707 = vmatpush.msra.mxu0 %v2506
    %2708 = vmatpush.msra.mxu0 %v2503
    %2709 = vmatpush.msra.mxu0 %v2500
    %2710 = vmatpush.msra.mxu0 %v2497
    %2711 = vmatpush.msra.mxu0 %v2494
    %2712 = vmatmul.f32.gmra.mxu0 %v2655
    %v2713 = vpop.f32.mrf.mxu0
    %v2714 = vadd.f32 %v2545, %v2713
    %2715 = vdwg.mxu0
    %v2716 = vadd.f32 %v2389, %v2674
    %v2717 = vxor.u32 %v2716, 2147483648
    %v2718 = vmul.f32 %v2717, 1.442695
    %v2719 = vpow.pop %v2718
    %v2720 = vadd.f32 %v2719, 1.0
    %v2721 = vrcp.pop %v2720
    %v2722 = vmul.f32 %v2720, %v2721
    %v2723 = vsub.f32 1.0, %v2722
    %v2724 = vmul.f32 %v2721, %v2723
    %v2725 = vadd.f32 %v2721, %v2724
    %vm2726 = vweird.f32 %v2720
    %vm2727 = vweird.f32 %v2721
    %vm2728 = vmor %vm2726, %vm2727
    %v2729 = vsel %vm2728, %v2721, %v2725
    %v2730 = vand.u32 2147483647, %v2720
    %vm2731 = vcmp.eq.f32.partialorder %v2730, 8.507059e+37
    %v2732 = vand.u32 %v2720, 2147483648
    %v2733 = vor.u32 1.1754944e-38, %v2732
    %v2734 = vsel %vm2731, %v2733, %v2729
    %v2735 = vmul.f32 1.0, %v2734
    %v2736 = vadd.f32 %v2430, %v2694
    %v2737 = vxor.u32 %v2736, 2147483648
    %v2738 = vmul.f32 %v2737, 1.442695
    %v2739 = vpow.pop %v2738
    %v2740 = vadd.f32 %v2739, 1.0
    %v2741 = vrcp.pop %v2740
    %v2742 = vmul.f32 %v2740, %v2741
    %v2743 = vsub.f32 1.0, %v2742
    %v2744 = vmul.f32 %v2741, %v2743
    %v2745 = vadd.f32 %v2741, %v2744
    %vm2746 = vweird.f32 %v2740
    %vm2747 = vweird.f32 %v2741
    %vm2748 = vmor %vm2746, %vm2747
    %v2749 = vsel %vm2748, %v2741, %v2745
    %v2750 = vand.u32 2147483647, %v2740
    %vm2751 = vcmp.eq.f32.partialorder %v2750, 8.507059e+37
    %v2752 = vand.u32 %v2740, 2147483648
    %v2753 = vor.u32 1.1754944e-38, %v2752
    %v2754 = vsel %vm2751, %v2753, %v2749
    %v2755 = vmul.f32 1.0, %v2754
    %v2756 = vmul.f32 %v2735, %v2714
    %v2757 = vadd.f32 %v2471, %v2756
    %v2758 = vtanh.pop %v2757
    %v2759 = vsub.f32 1.0, %v2755
    %v2760 = vmul.f32 %v2759, %v2758
    %v2761 = vmul.f32 %v2755, %v2655
    %v2762 = vadd.f32 %v2760, %v2761
    %2763 = vmatpush.msra.mxu0 %v2537
    %2764 = vmatpush.msra.mxu0 %v2534
    %2765 = vmatpush.msra.mxu0 %v2531
    %2766 = vmatpush.msra.mxu0 %v2528
    %2767 = vmatpush.msra.mxu0 %v2525
    %2768 = vmatpush.msra.mxu0 %v2522
    %2769 = vmatpush.msra.mxu0 %v2519
    %2770 = vmatpush.msra.mxu0 %v2516
    %2771 = vmatpush.msra.mxu0 %v2513
    %2772 = vmatpush.msra.mxu0 %v2510
    %2773 = vmatpush.msra.mxu0 %v2507
    %2774 = vmatpush.msra.mxu0 %v2504
    %2775 = vmatpush.msra.mxu0 %v2501
    %2776 = vmatpush.msra.mxu0 %v2498
    %2777 = vmatpush.msra.mxu0 %v2495
    %2778 = vmatpush.msra.mxu0 %v2492
    %2779 = vmatmul.f32.gmra.mxu0 %v2762
    %v2780 = vpop.f32.mrf.mxu0
    %v2781 = vadd.f32 %v2543, %v2780
    %2782 = vdwg.mxu0
    %2783 = vmatpush.msra.mxu0 %v2538
    %2784 = vmatpush.msra.mxu0 %v2535
    %2785 = vmatpush.msra.mxu0 %v2532
    %2786 = vmatpush.msra.mxu0 %v2529
    %2787 = vmatpush.msra.mxu0 %v2526
    %2788 = vmatpush.msra.mxu0 %v2523
    %2789 = vmatpush.msra.mxu0 %v2520
    %2790 = vmatpush.msra.mxu0 %v2517
    %2791 = vmatpush.msra.mxu0 %v2514
    %2792 = vmatpush.msra.mxu0 %v2511
    %2793 = vmatpush.msra.mxu0 %v2508
    %2794 = vmatpush.msra.mxu0 %v2505
    %2795 = vmatpush.msra.mxu0 %v2502
    %2796 = vmatpush.msra.mxu0 %v2499
    %2797 = vmatpush.msra.mxu0 %v2496
    %2798 = vmatpush.msra.mxu0 %v2493
    %2799 = vmatmul.f32.gmra.mxu0 %v2762
    %v2800 = vpop.f32.mrf.mxu0
    %v2801 = vadd.f32 %v2544, %v2800
    %2802 = vdwg.mxu0
    %2803 = vmatpush.msra.mxu0 %v2539
    %2804 = vmatpush.msra.mxu0 %v2536
    %2805 = vmatpush.msra.mxu0 %v2533
    %2806 = vmatpush.msra.mxu0 %v2530
    %2807 = vmatpush.msra.mxu0 %v2527
    %2808 = vmatpush.msra.mxu0 %v2524
    %2809 = vmatpush.msra.mxu0 %v2521
    %2810 = vmatpush.msra.mxu0 %v2518
    %2811 = vmatpush.msra.mxu0 %v2515
    %2812 = vmatpush.msra.mxu0 %v2512
    %2813 = vmatpush.msra.mxu0 %v2509
    %2814 = vmatpush.msra.mxu0 %v2506
    %2815 = vmatpush.msra.mxu0 %v2503
    %2816 = vmatpush.msra.mxu0 %v2500
    %2817 = vmatpush.msra.mxu0 %v2497
    %2818 = vmatpush.msra.mxu0 %v2494
    %2819 = vmatmul.f32.gmra.mxu0 %v2762
    %v2820 = vpop.f32.mrf.mxu0
    %v2821 = vadd.f32 %v2545, %v2820
    %2822 = vdwg.mxu0
    %v2823 = vadd.f32 %v2392, %v2781
    %v2824 = vxor.u32 %v2823, 2147483648
    %v2825 = vmul.f32 %v2824, 1.442695
    %v2826 = vpow.pop %v2825
    %v2827 = vadd.f32 %v2826, 1.0
    %v2828 = vrcp.pop %v2827
    %v2829 = vmul.f32 %v2827, %v2828
    %v2830 = vsub.f32 1.0, %v2829
    %v2831 = vmul.f32 %v2828, %v2830
    %v2832 = vadd.f32 %v2828, %v2831
    %vm2833 = vweird.f32 %v2827
    %vm2834 = vweird.f32 %v2828
    %vm2835 = vmor %vm2833, %vm2834
    %v2836 = vsel %vm2835, %v2828, %v2832
    %v2837 = vand.u32 2147483647, %v2827
    %vm2838 = vcmp.eq.f32.partialorder %v2837, 8.507059e+37
    %v2839 = vand.u32 %v2827, 2147483648
    %v2840 = vor.u32 1.1754944e-38, %v2839
    %v2841 = vsel %vm2838, %v2840, %v2836
    %v2842 = vmul.f32 1.0, %v2841
    %v2843 = vadd.f32 %v2433, %v2801
    %v2844 = vxor.u32 %v2843, 2147483648
    %v2845 = vmul.f32 %v2844, 1.442695
    %v2846 = vpow.pop %v2845
    %v2847 = vadd.f32 %v2846, 1.0
    %v2848 = vrcp.pop %v2847
    %v2849 = vmul.f32 %v2847, %v2848
    %v2850 = vsub.f32 1.0, %v2849
    %v2851 = vmul.f32 %v2848, %v2850
    %v2852 = vadd.f32 %v2848, %v2851
    %vm2853 = vweird.f32 %v2847
    %vm2854 = vweird.f32 %v2848
    %vm2855 = vmor %vm2853, %vm2854
    %v2856 = vsel %vm2855, %v2848, %v2852
    %v2857 = vand.u32 2147483647, %v2847
    %vm2858 = vcmp.eq.f32.partialorder %v2857, 8.507059e+37
    %v2859 = vand.u32 %v2847, 2147483648
    %v2860 = vor.u32 1.1754944e-38, %v2859
    %v2861 = vsel %vm2858, %v2860, %v2856
    %v2862 = vmul.f32 1.0, %v2861
    %v2863 = vmul.f32 %v2842, %v2821
    %v2864 = vadd.f32 %v2474, %v2863
    %v2865 = vtanh.pop %v2864
    %v2866 = vsub.f32 1.0, %v2862
    %v2867 = vmul.f32 %v2866, %v2865
    %v2868 = vmul.f32 %v2862, %v2762
    %v2869 = vadd.f32 %v2867, %v2868
    %2870 = vmatpush.msra.mxu0 %v2537
    %2871 = vmatpush.msra.mxu0 %v2534
    %2872 = vmatpush.msra.mxu0 %v2531
    %2873 = vmatpush.msra.mxu0 %v2528
    %2874 = vmatpush.msra.mxu0 %v2525
    %2875 = vmatpush.msra.mxu0 %v2522
    %2876 = vmatpush.msra.mxu0 %v2519
    %2877 = vmatpush.msra.mxu0 %v2516
    %2878 = vmatpush.msra.mxu0 %v2513
    %2879 = vmatpush.msra.mxu0 %v2510
    %2880 = vmatpush.msra.mxu0 %v2507
    %2881 = vmatpush.msra.mxu0 %v2504
    %2882 = vmatpush.msra.mxu0 %v2501
    %2883 = vmatpush.msra.mxu0 %v2498
    %2884 = vmatpush.msra.mxu0 %v2495
    %2885 = vmatpush.msra.mxu0 %v2492
    %2886 = vmatmul.f32.gmra.mxu0 %v2869
    %v2887 = vpop.f32.mrf.mxu0
    %v2888 = vadd.f32 %v2543, %v2887
    %2889 = vdwg.mxu0
    %2890 = vmatpush.msra.mxu0 %v2538
    %2891 = vmatpush.msra.mxu0 %v2535
    %2892 = vmatpush.msra.mxu0 %v2532
    %2893 = vmatpush.msra.mxu0 %v2529
    %2894 = vmatpush.msra.mxu0 %v2526
    %2895 = vmatpush.msra.mxu0 %v2523
    %2896 = vmatpush.msra.mxu0 %v2520
    %2897 = vmatpush.msra.mxu0 %v2517
    %2898 = vmatpush.msra.mxu0 %v2514
    %2899 = vmatpush.msra.mxu0 %v2511
    %2900 = vmatpush.msra.mxu0 %v2508
    %2901 = vmatpush.msra.mxu0 %v2505
    %2902 = vmatpush.msra.mxu0 %v2502
    %2903 = vmatpush.msra.mxu0 %v2499
    %2904 = vmatpush.msra.mxu0 %v2496
    %2905 = vmatpush.msra.mxu0 %v2493
    %2906 = vmatmul.f32.gmra.mxu0 %v2869
    %v2907 = vpop.f32.mrf.mxu0
    %v2908 = vadd.f32 %v2544, %v2907
    %2909 = vdwg.mxu0
    %2910 = vmatpush.msra.mxu0 %v2539
    %2911 = vmatpush.msra.mxu0 %v2536
    %2912 = vmatpush.msra.mxu0 %v2533
    %2913 = vmatpush.msra.mxu0 %v2530
    %2914 = vmatpush.msra.mxu0 %v2527
    %2915 = vmatpush.msra.mxu0 %v2524
    %2916 = vmatpush.msra.mxu0 %v2521
    %2917 = vmatpush.msra.mxu0 %v2518
    %2918 = vmatpush.msra.mxu0 %v2515
    %2919 = vmatpush.msra.mxu0 %v2512
    %2920 = vmatpush.msra.mxu0 %v2509
    %2921 = vmatpush.msra.mxu0 %v2506
    %2922 = vmatpush.msra.mxu0 %v2503
    %2923 = vmatpush.msra.mxu0 %v2500
    %2924 = vmatpush.msra.mxu0 %v2497
    %2925 = vmatpush.msra.mxu0 %v2494
    %2926 = vmatmul.f32.gmra.mxu0 %v2869
    %v2927 = vpop.f32.mrf.mxu0
    %v2928 = vadd.f32 %v2545, %v2927
    %2929 = vdwg.mxu0
    %v2930 = vadd.f32 %v2395, %v2888
    %v2931 = vxor.u32 %v2930, 2147483648
    %v2932 = vmul.f32 %v2931, 1.442695
    %v2933 = vpow.pop %v2932
    %v2934 = vadd.f32 %v2933, 1.0
    %v2935 = vrcp.pop %v2934
    %v2936 = vmul.f32 %v2934, %v2935
    %v2937 = vsub.f32 1.0, %v2936
    %v2938 = vmul.f32 %v2935, %v2937
    %v2939 = vadd.f32 %v2935, %v2938
    %vm2940 = vweird.f32 %v2934
    %vm2941 = vweird.f32 %v2935
    %vm2942 = vmor %vm2940, %vm2941
    %v2943 = vsel %vm2942, %v2935, %v2939
    %v2944 = vand.u32 2147483647, %v2934
    %vm2945 = vcmp.eq.f32.partialorder %v2944, 8.507059e+37
    %v2946 = vand.u32 %v2934, 2147483648
    %v2947 = vor.u32 1.1754944e-38, %v2946
    %v2948 = vsel %vm2945, %v2947, %v2943
    %v2949 = vmul.f32 1.0, %v2948
    %v2950 = vadd.f32 %v2436, %v2908
    %v2951 = vxor.u32 %v2950, 2147483648
    %v2952 = vmul.f32 %v2951, 1.442695
    %v2953 = vpow.pop %v2952
    %v2954 = vadd.f32 %v2953, 1.0
    %v2955 = vrcp.pop %v2954
    %v2956 = vmul.f32 %v2954, %v2955
    %v2957 = vsub.f32 1.0, %v2956
    %v2958 = vmul.f32 %v2955, %v2957
    %v2959 = vadd.f32 %v2955, %v2958
    %vm2960 = vweird.f32 %v2954
    %vm2961 = vweird.f32 %v2955
    %vm2962 = vmor %vm2960, %vm2961
    %v2963 = vsel %vm2962, %v2955, %v2959
    %v2964 = vand.u32 2147483647, %v2954
    %vm2965 = vcmp.eq.f32.partialorder %v2964, 8.507059e+37
    %v2966 = vand.u32 %v2954, 2147483648
    %v2967 = vor.u32 1.1754944e-38, %v2966
    %v2968 = vsel %vm2965, %v2967, %v2963
    %v2969 = vmul.f32 1.0, %v2968
    %v2970 = vmul.f32 %v2949, %v2928
    %v2971 = vadd.f32 %v2477, %v2970
    %v2972 = vtanh.pop %v2971
    %v2973 = vsub.f32 1.0, %v2969
    %v2974 = vmul.f32 %v2973, %v2972
    %v2975 = vmul.f32 %v2969, %v2869
    %v2976 = vadd.f32 %v2974, %v2975
    %2977 = vmatpush.msra.mxu0 %v2537
    %2978 = vmatpush.msra.mxu0 %v2534
    %2979 = vmatpush.msra.mxu0 %v2531
    %2980 = vmatpush.msra.mxu0 %v2528
    %2981 = vmatpush.msra.mxu0 %v2525
    %2982 = vmatpush.msra.mxu0 %v2522
    %2983 = vmatpush.msra.mxu0 %v2519
    %2984 = vmatpush.msra.mxu0 %v2516
    %2985 = vmatpush.msra.mxu0 %v2513
    %2986 = vmatpush.msra.mxu0 %v2510
    %2987 = vmatpush.msra.mxu0 %v2507
    %2988 = vmatpush.msra.mxu0 %v2504
    %2989 = vmatpush.msra.mxu0 %v2501
    %2990 = vmatpush.msra.mxu0 %v2498
    %2991 = vmatpush.msra.mxu0 %v2495
    %2992 = vmatpush.msra.mxu0 %v2492
    %2993 = vmatmul.f32.gmra.mxu0 %v2976
    %v2994 = vpop.f32.mrf.mxu0
    %v2995 = vadd.f32 %v2543, %v2994
    %2996 = vdwg.mxu0
    %2997 = vmatpush.msra.mxu0 %v2538
    %2998 = vmatpush.msra.mxu0 %v2535
    %2999 = vmatpush.msra.mxu0 %v2532
    %3000 = vmatpush.msra.mxu0 %v2529
    %3001 = vmatpush.msra.mxu0 %v2526
    %3002 = vmatpush.msra.mxu0 %v2523
    %3003 = vmatpush.msra.mxu0 %v2520
    %3004 = vmatpush.msra.mxu0 %v2517
    %3005 = vmatpush.msra.mxu0 %v2514
    %3006 = vmatpush.msra.mxu0 %v2511
    %3007 = vmatpush.msra.mxu0 %v2508
    %3008 = vmatpush.msra.mxu0 %v2505
    %3009 = vmatpush.msra.mxu0 %v2502
    %3010 = vmatpush.msra.mxu0 %v2499
    %3011 = vmatpush.msra.mxu0 %v2496
    %3012 = vmatpush.msra.mxu0 %v2493
    %3013 = vmatmul.f32.gmra.mxu0 %v2976
    %v3014 = vpop.f32.mrf.mxu0
    %v3015 = vadd.f32 %v2544, %v3014
    %3016 = vdwg.mxu0
    %3017 = vmatpush.msra.mxu0 %v2539
    %3018 = vmatpush.msra.mxu0 %v2536
    %3019 = vmatpush.msra.mxu0 %v2533
    %3020 = vmatpush.msra.mxu0 %v2530
    %3021 = vmatpush.msra.mxu0 %v2527
    %3022 = vmatpush.msra.mxu0 %v2524
    %3023 = vmatpush.msra.mxu0 %v2521
    %3024 = vmatpush.msra.mxu0 %v2518
    %3025 = vmatpush.msra.mxu0 %v2515
    %3026 = vmatpush.msra.mxu0 %v2512
    %3027 = vmatpush.msra.mxu0 %v2509
    %3028 = vmatpush.msra.mxu0 %v2506
    %3029 = vmatpush.msra.mxu0 %v2503
    %3030 = vmatpush.msra.mxu0 %v2500
    %3031 = vmatpush.msra.mxu0 %v2497
    %3032 = vmatpush.msra.mxu0 %v2494
    %3033 = vmatmul.f32.gmra.mxu0 %v2976
    %v3034 = vpop.f32.mrf.mxu0
    %v3035 = vadd.f32 %v2545, %v3034
    %3036 = vdwg.mxu0
    %v3037 = vadd.f32 %v2398, %v2995
    %v3038 = vxor.u32 %v3037, 2147483648
    %v3039 = vmul.f32 %v3038, 1.442695
    %v3040 = vpow.pop %v3039
    %v3041 = vadd.f32 %v3040, 1.0
    %v3042 = vrcp.pop %v3041
    %v3043 = vmul.f32 %v3041, %v3042
    %v3044 = vsub.f32 1.0, %v3043
    %v3045 = vmul.f32 %v3042, %v3044
    %v3046 = vadd.f32 %v3042, %v3045
    %vm3047 = vweird.f32 %v3041
    %vm3048 = vweird.f32 %v3042
    %vm3049 = vmor %vm3047, %vm3048
    %v3050 = vsel %vm3049, %v3042, %v3046
    %v3051 = vand.u32 2147483647, %v3041
    %vm3052 = vcmp.eq.f32.partialorder %v3051, 8.507059e+37
    %v3053 = vand.u32 %v3041, 2147483648
    %v3054 = vor.u32 1.1754944e-38, %v3053
    %v3055 = vsel %vm3052, %v3054, %v3050
    %v3056 = vmul.f32 1.0, %v3055
    %v3057 = vadd.f32 %v2439, %v3015
    %v3058 = vxor.u32 %v3057, 2147483648
    %v3059 = vmul.f32 %v3058, 1.442695
    %v3060 = vpow.pop %v3059
    %v3061 = vadd.f32 %v3060, 1.0
    %v3062 = vrcp.pop %v3061
    %v3063 = vmul.f32 %v3061, %v3062
    %v3064 = vsub.f32 1.0, %v3063
    %v3065 = vmul.f32 %v3062, %v3064
    %v3066 = vadd.f32 %v3062, %v3065
    %vm3067 = vweird.f32 %v3061
    %vm3068 = vweird.f32 %v3062
    %vm3069 = vmor %vm3067, %vm3068
    %v3070 = vsel %vm3069, %v3062, %v3066
    %v3071 = vand.u32 2147483647, %v3061
    %vm3072 = vcmp.eq.f32.partialorder %v3071, 8.507059e+37
    %v3073 = vand.u32 %v3061, 2147483648
    %v3074 = vor.u32 1.1754944e-38, %v3073
    %v3075 = vsel %vm3072, %v3074, %v3070
    %v3076 = vmul.f32 1.0, %v3075
    %v3077 = vmul.f32 %v3056, %v3035
    %v3078 = vadd.f32 %v2480, %v3077
    %v3079 = vtanh.pop %v3078
    %v3080 = vsub.f32 1.0, %v3076
    %v3081 = vmul.f32 %v3080, %v3079
    %v3082 = vmul.f32 %v3076, %v2976
    %v3083 = vadd.f32 %v3081, %v3082
    %3084 = vmatpush.msra.mxu0 %v2537
    %3085 = vmatpush.msra.mxu0 %v2534
    %3086 = vmatpush.msra.mxu0 %v2531
    %3087 = vmatpush.msra.mxu0 %v2528
    %3088 = vmatpush.msra.mxu0 %v2525
    %3089 = vmatpush.msra.mxu0 %v2522
    %3090 = vmatpush.msra.mxu0 %v2519
    %3091 = vmatpush.msra.mxu0 %v2516
    %3092 = vmatpush.msra.mxu0 %v2513
    %3093 = vmatpush.msra.mxu0 %v2510
    %3094 = vmatpush.msra.mxu0 %v2507
    %3095 = vmatpush.msra.mxu0 %v2504
    %3096 = vmatpush.msra.mxu0 %v2501
    %3097 = vmatpush.msra.mxu0 %v2498
    %3098 = vmatpush.msra.mxu0 %v2495
    %3099 = vmatpush.msra.mxu0 %v2492
    %3100 = vmatmul.f32.gmra.mxu0 %v3083
    %v3101 = vpop.f32.mrf.mxu0
    %v3102 = vadd.f32 %v2543, %v3101
    %3103 = vdwg.mxu0
    %3104 = vmatpush.msra.mxu0 %v2538
    %3105 = vmatpush.msra.mxu0 %v2535
    %3106 = vmatpush.msra.mxu0 %v2532
    %3107 = vmatpush.msra.mxu0 %v2529
    %3108 = vmatpush.msra.mxu0 %v2526
    %3109 = vmatpush.msra.mxu0 %v2523
    %3110 = vmatpush.msra.mxu0 %v2520
    %3111 = vmatpush.msra.mxu0 %v2517
    %3112 = vmatpush.msra.mxu0 %v2514
    %3113 = vmatpush.msra.mxu0 %v2511
    %3114 = vmatpush.msra.mxu0 %v2508
    %3115 = vmatpush.msra.mxu0 %v2505
    %3116 = vmatpush.msra.mxu0 %v2502
    %3117 = vmatpush.msra.mxu0 %v2499
    %3118 = vmatpush.msra.mxu0 %v2496
    %3119 = vmatpush.msra.mxu0 %v2493
    %3120 = vmatmul.f32.gmra.mxu0 %v3083
    %v3121 = vpop.f32.mrf.mxu0
    %v3122 = vadd.f32 %v2544, %v3121
    %3123 = vdwg.mxu0
    %3124 = vmatpush.msra.mxu0 %v2539
    %3125 = vmatpush.msra.mxu0 %v2536
    %3126 = vmatpush.msra.mxu0 %v2533
    %3127 = vmatpush.msra.mxu0 %v2530
    %3128 = vmatpush.msra.mxu0 %v2527
    %3129 = vmatpush.msra.mxu0 %v2524
    %3130 = vmatpush.msra.mxu0 %v2521
    %3131 = vmatpush.msra.mxu0 %v2518
    %3132 = vmatpush.msra.mxu0 %v2515
    %3133 = vmatpush.msra.mxu0 %v2512
    %3134 = vmatpush.msra.mxu0 %v2509
    %3135 = vmatpush.msra.mxu0 %v2506
    %3136 = vmatpush.msra.mxu0 %v2503
    %3137 = vmatpush.msra.mxu0 %v2500
    %3138 = vmatpush.msra.mxu0 %v2497
    %3139 = vmatpush.msra.mxu0 %v2494
    %3140 = vmatmul.f32.gmra.mxu0 %v3083
    %v3141 = vpop.f32.mrf.mxu0
    %v3142 = vadd.f32 %v2545, %v3141
    %3143 = vdwg.mxu0
    %v3144 = vadd.f32 %v2401, %v3102
    %v3145 = vxor.u32 %v3144, 2147483648
    %v3146 = vmul.f32 %v3145, 1.442695
    %v3147 = vpow.pop %v3146
    %v3148 = vadd.f32 %v3147, 1.0
    %v3149 = vrcp.pop %v3148
    %v3150 = vmul.f32 %v3148, %v3149
    %v3151 = vsub.f32 1.0, %v3150
    %v3152 = vmul.f32 %v3149, %v3151
    %v3153 = vadd.f32 %v3149, %v3152
    %vm3154 = vweird.f32 %v3148
    %vm3155 = vweird.f32 %v3149
    %vm3156 = vmor %vm3154, %vm3155
    %v3157 = vsel %vm3156, %v3149, %v3153
    %v3158 = vand.u32 2147483647, %v3148
    %vm3159 = vcmp.eq.f32.partialorder %v3158, 8.507059e+37
    %v3160 = vand.u32 %v3148, 2147483648
    %v3161 = vor.u32 1.1754944e-38, %v3160
    %v3162 = vsel %vm3159, %v3161, %v3157
    %v3163 = vmul.f32 1.0, %v3162
    %v3164 = vadd.f32 %v2442, %v3122
    %v3165 = vxor.u32 %v3164, 2147483648
    %v3166 = vmul.f32 %v3165, 1.442695
    %v3167 = vpow.pop %v3166
    %v3168 = vadd.f32 %v3167, 1.0
    %v3169 = vrcp.pop %v3168
    %v3170 = vmul.f32 %v3168, %v3169
    %v3171 = vsub.f32 1.0, %v3170
    %v3172 = vmul.f32 %v3169, %v3171
    %v3173 = vadd.f32 %v3169, %v3172
    %vm3174 = vweird.f32 %v3168
    %vm3175 = vweird.f32 %v3169
    %vm3176 = vmor %vm3174, %vm3175
    %v3177 = vsel %vm3176, %v3169, %v3173
    %v3178 = vand.u32 2147483647, %v3168
    %vm3179 = vcmp.eq.f32.partialorder %v3178, 8.507059e+37
    %v3180 = vand.u32 %v3168, 2147483648
    %v3181 = vor.u32 1.1754944e-38, %v3180
    %v3182 = vsel %vm3179, %v3181, %v3177
    %v3183 = vmul.f32 1.0, %v3182
    %v3184 = vmul.f32 %v3163, %v3142
    %v3185 = vadd.f32 %v2483, %v3184
    %v3186 = vtanh.pop %v3185
    %v3187 = vsub.f32 1.0, %v3183
    %v3188 = vmul.f32 %v3187, %v3186
    %v3189 = vmul.f32 %v3183, %v3083
    %v3190 = vadd.f32 %v3188, %v3189
    %3191 = vmatpush.msra.mxu0 %v2537
    %3192 = vmatpush.msra.mxu0 %v2534
    %3193 = vmatpush.msra.mxu0 %v2531
    %3194 = vmatpush.msra.mxu0 %v2528
    %3195 = vmatpush.msra.mxu0 %v2525
    %3196 = vmatpush.msra.mxu0 %v2522
    %3197 = vmatpush.msra.mxu0 %v2519
    %3198 = vmatpush.msra.mxu0 %v2516
    %3199 = vmatpush.msra.mxu0 %v2513
    %3200 = vmatpush.msra.mxu0 %v2510
    %3201 = vmatpush.msra.mxu0 %v2507
    %3202 = vmatpush.msra.mxu0 %v2504
    %3203 = vmatpush.msra.mxu0 %v2501
    %3204 = vmatpush.msra.mxu0 %v2498
    %3205 = vmatpush.msra.mxu0 %v2495
    %3206 = vmatpush.msra.mxu0 %v2492
    %3207 = vmatmul.f32.gmra.mxu0 %v3190
    %v3208 = vpop.f32.mrf.mxu0
    %v3209 = vadd.f32 %v2543, %v3208
    %3210 = vdwg.mxu0
    %3211 = vmatpush.msra.mxu0 %v2538
    %3212 = vmatpush.msra.mxu0 %v2535
    %3213 = vmatpush.msra.mxu0 %v2532
    %3214 = vmatpush.msra.mxu0 %v2529
    %3215 = vmatpush.msra.mxu0 %v2526
    %3216 = vmatpush.msra.mxu0 %v2523
    %3217 = vmatpush.msra.mxu0 %v2520
    %3218 = vmatpush.msra.mxu0 %v2517
    %3219 = vmatpush.msra.mxu0 %v2514
    %3220 = vmatpush.msra.mxu0 %v2511
    %3221 = vmatpush.msra.mxu0 %v2508
    %3222 = vmatpush.msra.mxu0 %v2505
    %3223 = vmatpush.msra.mxu0 %v2502
    %3224 = vmatpush.msra.mxu0 %v2499
    %3225 = vmatpush.msra.mxu0 %v2496
    %3226 = vmatpush.msra.mxu0 %v2493
    %3227 = vmatmul.f32.gmra.mxu0 %v3190
    %v3228 = vpop.f32.mrf.mxu0
    %v3229 = vadd.f32 %v2544, %v3228
    %3230 = vdwg.mxu0
    %3231 = vmatpush.msra.mxu0 %v2539
    %3232 = vmatpush.msra.mxu0 %v2536
    %3233 = vmatpush.msra.mxu0 %v2533
    %3234 = vmatpush.msra.mxu0 %v2530
    %3235 = vmatpush.msra.mxu0 %v2527
    %3236 = vmatpush.msra.mxu0 %v2524
    %3237 = vmatpush.msra.mxu0 %v2521
    %3238 = vmatpush.msra.mxu0 %v2518
    %3239 = vmatpush.msra.mxu0 %v2515
    %3240 = vmatpush.msra.mxu0 %v2512
    %3241 = vmatpush.msra.mxu0 %v2509
    %3242 = vmatpush.msra.mxu0 %v2506
    %3243 = vmatpush.msra.mxu0 %v2503
    %3244 = vmatpush.msra.mxu0 %v2500
    %3245 = vmatpush.msra.mxu0 %v2497
    %3246 = vmatpush.msra.mxu0 %v2494
    %3247 = vmatmul.f32.gmra.mxu0 %v3190
    %v3248 = vpop.f32.mrf.mxu0
    %v3249 = vadd.f32 %v2545, %v3248
    %3250 = vdwg.mxu0
    %v3251 = vadd.f32 %v2404, %v3209
    %v3252 = vxor.u32 %v3251, 2147483648
    %v3253 = vmul.f32 %v3252, 1.442695
    %v3254 = vpow.pop %v3253
    %v3255 = vadd.f32 %v3254, 1.0
    %v3256 = vrcp.pop %v3255
    %v3257 = vmul.f32 %v3255, %v3256
    %v3258 = vsub.f32 1.0, %v3257
    %v3259 = vmul.f32 %v3256, %v3258
    %v3260 = vadd.f32 %v3256, %v3259
    %vm3261 = vweird.f32 %v3255
    %vm3262 = vweird.f32 %v3256
    %vm3263 = vmor %vm3261, %vm3262
    %v3264 = vsel %vm3263, %v3256, %v3260
    %v3265 = vand.u32 2147483647, %v3255
    %vm3266 = vcmp.eq.f32.partialorder %v3265, 8.507059e+37
    %v3267 = vand.u32 %v3255, 2147483648
    %v3268 = vor.u32 1.1754944e-38, %v3267
    %v3269 = vsel %vm3266, %v3268, %v3264
    %v3270 = vmul.f32 1.0, %v3269
    %v3271 = vadd.f32 %v2445, %v3229
    %v3272 = vxor.u32 %v3271, 2147483648
    %v3273 = vmul.f32 %v3272, 1.442695
    %v3274 = vpow.pop %v3273
    %v3275 = vadd.f32 %v3274, 1.0
    %v3276 = vrcp.pop %v3275
    %v3277 = vmul.f32 %v3275, %v3276
    %v3278 = vsub.f32 1.0, %v3277
    %v3279 = vmul.f32 %v3276, %v3278
    %v3280 = vadd.f32 %v3276, %v3279
    %vm3281 = vweird.f32 %v3275
    %vm3282 = vweird.f32 %v3276
    %vm3283 = vmor %vm3281, %vm3282
    %v3284 = vsel %vm3283, %v3276, %v3280
    %v3285 = vand.u32 2147483647, %v3275
    %vm3286 = vcmp.eq.f32.partialorder %v3285, 8.507059e+37
    %v3287 = vand.u32 %v3275, 2147483648
    %v3288 = vor.u32 1.1754944e-38, %v3287
    %v3289 = vsel %vm3286, %v3288, %v3284
    %v3290 = vmul.f32 1.0, %v3289
    %v3291 = vmul.f32 %v3270, %v3249
    %v3292 = vadd.f32 %v2486, %v3291
    %v3293 = vtanh.pop %v3292
    %v3294 = vsub.f32 1.0, %v3290
    %v3295 = vmul.f32 %v3294, %v3293
    %v3296 = vmul.f32 %v3290, %v3190
    %v3297 = vadd.f32 %v3295, %v3296
    %3298 = vmatpush.msra.mxu0 %v2537
    %3299 = vmatpush.msra.mxu0 %v2534
    %3300 = vmatpush.msra.mxu0 %v2531
    %3301 = vmatpush.msra.mxu0 %v2528
    %3302 = vmatpush.msra.mxu0 %v2525
    %3303 = vmatpush.msra.mxu0 %v2522
    %3304 = vmatpush.msra.mxu0 %v2519
    %3305 = vmatpush.msra.mxu0 %v2516
    %3306 = vmatpush.msra.mxu0 %v2513
    %3307 = vmatpush.msra.mxu0 %v2510
    %3308 = vmatpush.msra.mxu0 %v2507
    %3309 = vmatpush.msra.mxu0 %v2504
    %3310 = vmatpush.msra.mxu0 %v2501
    %3311 = vmatpush.msra.mxu0 %v2498
    %3312 = vmatpush.msra.mxu0 %v2495
    %3313 = vmatpush.msra.mxu0 %v2492
    %3314 = vmatmul.f32.gmra.mxu0 %v3297
    %v3315 = vpop.f32.mrf.mxu0
    %v3316 = vadd.f32 %v2543, %v3315
    %3317 = vdwg.mxu0
    %3318 = vmatpush.msra.mxu0 %v2538
    %3319 = vmatpush.msra.mxu0 %v2535
    %3320 = vmatpush.msra.mxu0 %v2532
    %3321 = vmatpush.msra.mxu0 %v2529
    %3322 = vmatpush.msra.mxu0 %v2526
    %3323 = vmatpush.msra.mxu0 %v2523
    %3324 = vmatpush.msra.mxu0 %v2520
    %3325 = vmatpush.msra.mxu0 %v2517
    %3326 = vmatpush.msra.mxu0 %v2514
    %3327 = vmatpush.msra.mxu0 %v2511
    %3328 = vmatpush.msra.mxu0 %v2508
    %3329 = vmatpush.msra.mxu0 %v2505
    %3330 = vmatpush.msra.mxu0 %v2502
    %3331 = vmatpush.msra.mxu0 %v2499
    %3332 = vmatpush.msra.mxu0 %v2496
    %3333 = vmatpush.msra.mxu0 %v2493
    %3334 = vmatmul.f32.gmra.mxu0 %v3297
    %v3335 = vpop.f32.mrf.mxu0
    %v3336 = vadd.f32 %v2544, %v3335
    %3337 = vdwg.mxu0
    %3338 = vmatpush.msra.mxu0 %v2539
    %3339 = vmatpush.msra.mxu0 %v2536
    %3340 = vmatpush.msra.mxu0 %v2533
    %3341 = vmatpush.msra.mxu0 %v2530
    %3342 = vmatpush.msra.mxu0 %v2527
    %3343 = vmatpush.msra.mxu0 %v2524
    %3344 = vmatpush.msra.mxu0 %v2521
    %3345 = vmatpush.msra.mxu0 %v2518
    %3346 = vmatpush.msra.mxu0 %v2515
    %3347 = vmatpush.msra.mxu0 %v2512
    %3348 = vmatpush.msra.mxu0 %v2509
    %3349 = vmatpush.msra.mxu0 %v2506
    %3350 = vmatpush.msra.mxu0 %v2503
    %3351 = vmatpush.msra.mxu0 %v2500
    %3352 = vmatpush.msra.mxu0 %v2497
    %3353 = vmatpush.msra.mxu0 %v2494
    %3354 = vmatmul.f32.gmra.mxu0 %v3297
    %v3355 = vpop.f32.mrf.mxu0
    %v3356 = vadd.f32 %v2545, %v3355
    %3357 = vdwg.mxu0
    %v3358 = vadd.f32 %v2407, %v3316
    %v3359 = vxor.u32 %v3358, 2147483648
    %v3360 = vmul.f32 %v3359, 1.442695
    %v3361 = vpow.pop %v3360
    %v3362 = vadd.f32 %v3361, 1.0
    %v3363 = vrcp.pop %v3362
    %v3364 = vmul.f32 %v3362, %v3363
    %v3365 = vsub.f32 1.0, %v3364
    %v3366 = vmul.f32 %v3363, %v3365
    %v3367 = vadd.f32 %v3363, %v3366
    %vm3368 = vweird.f32 %v3362
    %vm3369 = vweird.f32 %v3363
    %vm3370 = vmor %vm3368, %vm3369
    %v3371 = vsel %vm3370, %v3363, %v3367
    %v3372 = vand.u32 2147483647, %v3362
    %vm3373 = vcmp.eq.f32.partialorder %v3372, 8.507059e+37
    %v3374 = vand.u32 %v3362, 2147483648
    %v3375 = vor.u32 1.1754944e-38, %v3374
    %v3376 = vsel %vm3373, %v3375, %v3371
    %v3377 = vmul.f32 1.0, %v3376
    %v3378 = vadd.f32 %v2448, %v3336
    %v3379 = vxor.u32 %v3378, 2147483648
    %v3380 = vmul.f32 %v3379, 1.442695
    %v3381 = vpow.pop %v3380
    %v3382 = vadd.f32 %v3381, 1.0
    %v3383 = vrcp.pop %v3382
    %v3384 = vmul.f32 %v3382, %v3383
    %v3385 = vsub.f32 1.0, %v3384
    %v3386 = vmul.f32 %v3383, %v3385
    %v3387 = vadd.f32 %v3383, %v3386
    %vm3388 = vweird.f32 %v3382
    %vm3389 = vweird.f32 %v3383
    %vm3390 = vmor %vm3388, %vm3389
    %v3391 = vsel %vm3390, %v3383, %v3387
    %v3392 = vand.u32 2147483647, %v3382
    %vm3393 = vcmp.eq.f32.partialorder %v3392, 8.507059e+37
    %v3394 = vand.u32 %v3382, 2147483648
    %v3395 = vor.u32 1.1754944e-38, %v3394
    %v3396 = vsel %vm3393, %v3395, %v3391
    %v3397 = vmul.f32 1.0, %v3396
    %v3398 = vmul.f32 %v3377, %v3356
    %v3399 = vadd.f32 %v2489, %v3398
    %v3400 = vtanh.pop %v3399
    %v3401 = vsub.f32 1.0, %v3397
    %v3402 = vmul.f32 %v3401, %v3400
    %v3403 = vmul.f32 %v3397, %v3297
    %v3404 = vadd.f32 %v3402, %v3403
    %v3405 = vld [vmem:[%s6] sm:$0x1]
    %v3407 = vperm.slane %v3405, 0
    %v3409 = vmul.f32 %v3404, %v3407
    %3410 = vadd.xlane.f32.xlu0 %v3409
    %v3411 = vpop.xlane.xlu0 %3410
    %v3412 = vld [vmem:[#allocation3] sm:$0x1]
    %v3414 = vperm.slane %v3412, 0
    %v3416 = vadd.f32 %v3411, %v3414
    %vm3417 = vcmask 7168
    %3418 = vst.msk [vmem:[%s8] sm:$0xff] %vm3417, %v3416
    // Predicated region
    $region46: #{_gru_forward_impl.1} parent=1 // pred_check
      _
    $region47: #{_gru_forward_impl.1} parent=1 // pred_check_branch
      %3420 = sbr.rel (0) target = $region49
    $region48: #{_gru_forward_impl.1} parent=1 // pred_region
      _
    $region49: #{_gru_forward_impl.1} parent=1 // pred_fallthru
      _
    // Predicated region
    $region50: #{_gru_forward_impl.1} parent=1 // pred_check
      _
    $region51: #{_gru_forward_impl.1} parent=1 // pred_check_branch
      %3422 = sbr.rel (0) target = $region53
    $region52: #{_gru_forward_impl.1} parent=1 // pred_region
      _
    $region53: #{_gru_forward_impl.1} parent=1 // pred_fallthru
      _
    %3423 = vsyncpa [#allocation5], 1
    %3424 = vsyncpa [#allocation7], 1

// kernel: _gru_forward_impl.1
$region0: #{_gru_forward_impl.1}
  #allocation0 [shape = 'u32[]', space=smem, size = 0x4, offset = 0x4, fixed_abs, tag = 'smem constant byte address 0x4 - core index']
  #allocation1 [shape = 'u32[72,128]{1,0:T(1,128)}', space=vmem, size = 0x9000, scoped, tag = 'internal scratch']
  #allocation2 [shape = 'f32[8,8,128]{2,1,0:T(8,128)}', space=vmem, size = 0x8000, scoped, tag = 'scratch operand']
  #allocation3 [shape = 'f32[1,1]{1,0:T(1,128)S(1)}', space=vmem, size = 0x200, scoped, tag = 'scoped memory for _gru_forward_impl.1']
  %s0 = inlined_call_operand.vmem [shape: f32[8,8,128], index: 0, kind: input, shape index: {}]
  %s1 = inlined_call_operand.hbm [shape: f32[128,384], index: 1, kind: input, shape index: {}]
  %s2 = inlined_call_operand.hbm [shape: f32[2,128,384], index: 2, kind: input, shape index: {}]
  %s3 = inlined_call_operand.hbm [shape: f32[3,128,384], index: 3, kind: input, shape index: {}]
  %s4 = inlined_call_operand.vmem [shape: f32[3,1,384], index: 4, kind: input, shape index: {}]
  %s5 = inlined_call_operand.vmem [shape: f32[3,1,384], index: 5, kind: input, shape index: {}]
  %s6 = inlined_call_operand.vmem [shape: f32[1,128], index: 6, kind: input, shape index: {}]
  %s7 = inlined_call_operand.<no memory space> [shape: f32[1,1], index: 7, kind: input, shape index: {}]
  %s8 = inlined_call_operand.vmem [shape: f32[8,1], index: 8, kind: output, shape index: {}]
  %s9 = sld [smem:[#allocation0]]
  $region54: #{_gru_forward_impl.1} parent=0
    _
  %s11 = ssub.s32 1, %s9
  %s12 = scalar_select 0, %s11, %s9
  %v13 = vstv %s7
  %14 = vst [vmem:[#allocation3] sm:$0x1] %v13
  $region1: #{_gru_forward_impl.1} parent=0
    #allocation4 [shape = 'u8[196608]{0}', space=vmem, size = 0x30000, scoped, tag = 'input window, operand 1, single buffered']
    #allocation5 [shape = 's32[1]{0}', space=sflag, size = 0x4, scoped, tag = 'scoped memory for _gru_forward_impl.1']
    #allocation6 [shape = 'u8[393216]{0}', space=vmem, size = 0x60000, scoped, tag = 'input window, operand 2, single buffered']
    #allocation7 [shape = 's32[1]{0}', space=sflag, size = 0x4, scoped, tag = 'scoped memory for _gru_forward_impl.1']
    #allocation8 [shape = 'u8[589824]{0}', space=vmem, size = 0x90000, scoped, tag = 'input window, operand 3, single buffered']
    %15 = vsyncpa [#allocation5], 0
    %16 = vsyncpa [#allocation7], 0
    // Predicated region
    $region2: #{_gru_forward_impl.1} parent=1 // pred_check
      _
    $region3: #{_gru_forward_impl.1} parent=1 // pred_check_branch
      %18 = sbr.rel (0) target = $region5
    $region4: #{_gru_forward_impl.1} parent=1 // pred_region
      _
    $region5: #{_gru_forward_impl.1} parent=1 // pred_fallthru
      _
    // Predicated region
    $region6: #{_gru_forward_impl.1} parent=1 // pred_check
      _
    $region7: #{_gru_forward_impl.1} parent=1 // pred_check_branch
      %20 = sbr.rel (0) target = $region9
    $region8: #{_gru_forward_impl.1} parent=1 // pred_region
      %22 = vsyncadd [#allocation5], 0
      %s23 = sshll.u32 %s1, 4
      %s24 = int_to_ptr.hbm [resolvable:$true] %s23
      %s25 = sshll.u32 [#allocation4], 4
      %s26 = int_to_ptr.vmem [resolvable:$true] %s25
      %31 = dma.hbm_to_vmem [thread:$0]  %s24, 6144, %s26, [#allocation5], 384, 384, 24
    $region9: #{_gru_forward_impl.1} parent=1 // pred_fallthru
      _
    // Predicated region
    $region10: #{_gru_forward_impl.1} parent=1 // pred_check
      _
    $region11: #{_gru_forward_impl.1} parent=1 // pred_check_branch
      %33 = sbr.rel (0) target = $region13
    $region12: #{_gru_forward_impl.1} parent=1 // pred_region
      %35 = vsyncadd [#allocation7], 0
      %s36 = sshll.u32 %s2, 4
      %s37 = int_to_ptr.hbm [resolvable:$true] %s36
      %s38 = sshll.u32 [#allocation6], 4
      %s39 = int_to_ptr.vmem [resolvable:$true] %s38
      %44 = dma.hbm_to_vmem [thread:$0]  %s37, 12288, %s39, [#allocation7], 384, 384, 24
    $region13: #{_gru_forward_impl.1} parent=1 // pred_fallthru
      _
    // Predicated region
    $region14: #{_gru_forward_impl.1} parent=1 // pred_check
      _
    $region15: #{_gru_forward_impl.1} parent=1 // pred_check_branch
      %46 = sbr.rel (0) target = $region17
    $region16: #{_gru_forward_impl.1} parent=1 // pred_region
      %48 = vsyncadd [#allocation7], 0
      %s49 = sshll.u32 %s3, 4
      %s50 = int_to_ptr.hbm [resolvable:$true] %s49
      %s51 = sshll.u32 [#allocation8], 4
      %s52 = int_to_ptr.vmem [resolvable:$true] %s51
      %57 = dma.hbm_to_vmem [thread:$0]  %s50, 18432, %s52, [#allocation7], 384, 384, 24
    $region17: #{_gru_forward_impl.1} parent=1 // pred_fallthru
      _
    // Predicated region
    $region18: #{_gru_forward_impl.1} parent=1 // pred_check
      _
    $region19: #{_gru_forward_impl.1} parent=1 // pred_check_branch
      %59 = sbr.rel (0) target = $region21
    $region20: #{_gru_forward_impl.1} parent=1 // pred_region
      _
    $region21: #{_gru_forward_impl.1} parent=1 // pred_fallthru
      _
    // Predicated region
    $region22: #{_gru_forward_impl.1} parent=1 // pred_check
      _
    $region23: #{_gru_forward_impl.1} parent=1 // pred_check_branch
      %61 = sbr.rel (0) target = $region25
    $region24: #{_gru_forward_impl.1} parent=1 // pred_region
      _
    $region25: #{_gru_forward_impl.1} parent=1 // pred_fallthru
      _
    // Predicated region
    $region26: #{_gru_forward_impl.1} parent=1 // pred_check
      _
    $region27: #{_gru_forward_impl.1} parent=1 // pred_check_branch
      %63 = sbr.rel (0) target = $region29
    $region28: #{_gru_forward_impl.1} parent=1 // pred_region
      _
    $region29: #{_gru_forward_impl.1} parent=1 // pred_fallthru
      _
    // Predicated region
    $region30: #{_gru_forward_impl.1} parent=1 // pred_check
      _
    $region31: #{_gru_forward_impl.1} parent=1 // pred_check_branch
      %65 = sbr.rel (0) target = $region33
    $region32: #{_gru_forward_impl.1} parent=1 // pred_region
      _
    $region33: #{_gru_forward_impl.1} parent=1 // pred_fallthru
      _
    // Predicated region
    $region34: #{_gru_forward_impl.1} parent=1 // pred_check
      _
    $region35: #{_gru_forward_impl.1} parent=1 // pred_check_branch
      %67 = sbr.rel (0) target = $region37
    $region36: #{_gru_forward_impl.1} parent=1 // pred_region
      %69 = dma.done [#allocation5], 6144
    $region37: #{_gru_forward_impl.1} parent=1 // pred_fallthru
      _
    // Predicated region
    $region38: #{_gru_forward_impl.1} parent=1 // pred_check
      _
    $region39: #{_gru_forward_impl.1} parent=1 // pred_check_branch
      %71 = sbr.rel (0) target = $region41
    $region40: #{_gru_forward_impl.1} parent=1 // pred_region
      %73 = dma.done [#allocation7], 12288
    $region41: #{_gru_forward_impl.1} parent=1 // pred_fallthru
      _
    // Predicated region
    $region42: #{_gru_forward_impl.1} parent=1 // pred_check
      _
    $region43: #{_gru_forward_impl.1} parent=1 // pred_check_branch
      %75 = sbr.rel (0) target = $region45
    $region44: #{_gru_forward_impl.1} parent=1 // pred_region
      %77 = dma.done [#allocation7], 18432
    $region45: #{_gru_forward_impl.1} parent=1 // pred_fallthru
      _
    %v78 = vld [vmem:[%s0] sm:$0xff]
    %v79 = vld [vmem:[%s0 + $0x8] sm:$0xff]
    %v80 = vld [vmem:[%s0 + $0x10] sm:$0xff]
    %v81 = vld [vmem:[%s0 + $0x18] sm:$0xff]
    %v82 = vld [vmem:[%s0 + $0x20] sm:$0xff]
    %v83 = vld [vmem:[%s0 + $0x28] sm:$0xff]
    %v84 = vld [vmem:[%s0 + $0x30] sm:$0xff]
    %v85 = vld [vmem:[%s0 + $0x38] sm:$0xff]
    %v86 = vld [vmem:[#allocation4] sm:$0xff]
    %v87 = vld [vmem:[#allocation4 + $0x8] sm:$0xff]
    %v88 = vld [vmem:[#allocation4 + $0x10] sm:$0xff]
    %v89 = vld [vmem:[#allocation4 + $0x18] sm:$0xff]
    %v90 = vld [vmem:[#allocation4 + $0x20] sm:$0xff]
    %v91 = vld [vmem:[#allocation4 + $0x28] sm:$0xff]
    %v92 = vld [vmem:[#allocation4 + $0x30] sm:$0xff]
    %v93 = vld [vmem:[#allocation4 + $0x38] sm:$0xff]
    %v94 = vld [vmem:[#allocation4 + $0x40] sm:$0xff]
    %v95 = vld [vmem:[#allocation4 + $0x48] sm:$0xff]
    %v96 = vld [vmem:[#allocation4 + $0x50] sm:$0xff]
    %v97 = vld [vmem:[#allocation4 + $0x58] sm:$0xff]
    %v98 = vld [vmem:[#allocation4 + $0x60] sm:$0xff]
    %v99 = vld [vmem:[#allocation4 + $0x68] sm:$0xff]
    %v100 = vld [vmem:[#allocation4 + $0x70] sm:$0xff]
    %v101 = vld [vmem:[#allocation4 + $0x78] sm:$0xff]
    %v102 = vld [vmem:[#allocation4 + $0x80] sm:$0xff]
    %v103 = vld [vmem:[#allocation4 + $0x88] sm:$0xff]
    %v104 = vld [vmem:[#allocation4 + $0x90] sm:$0xff]
    %v105 = vld [vmem:[#allocation4 + $0x98] sm:$0xff]
    %v106 = vld [vmem:[#allocation4 + $0xa0] sm:$0xff]
    %v107 = vld [vmem:[#allocation4 + $0xa8] sm:$0xff]
    %v108 = vld [vmem:[#allocation4 + $0xb0] sm:$0xff]
    %v109 = vld [vmem:[#allocation4 + $0xb8] sm:$0xff]
    %v110 = vld [vmem:[#allocation4 + $0xc0] sm:$0xff]
    %v111 = vld [vmem:[#allocation4 + $0xc8] sm:$0xff]
    %v112 = vld [vmem:[#allocation4 + $0xd0] sm:$0xff]
    %v113 = vld [vmem:[#allocation4 + $0xd8] sm:$0xff]
    %v114 = vld [vmem:[#allocation4 + $0xe0] sm:$0xff]
    %v115 = vld [vmem:[#allocation4 + $0xe8] sm:$0xff]
    %v116 = vld [vmem:[#allocation4 + $0xf0] sm:$0xff]
    %v117 = vld [vmem:[#allocation4 + $0xf8] sm:$0xff]
    %v118 = vld [vmem:[#allocation4 + $0x100] sm:$0xff]
    %v119 = vld [vmem:[#allocation4 + $0x108] sm:$0xff]
    %v120 = vld [vmem:[#allocation4 + $0x110] sm:$0xff]
    %v121 = vld [vmem:[#allocation4 + $0x118] sm:$0xff]
    %v122 = vld [vmem:[#allocation4 + $0x120] sm:$0xff]
    %v123 = vld [vmem:[#allocation4 + $0x128] sm:$0xff]
    %v124 = vld [vmem:[#allocation4 + $0x130] sm:$0xff]
    %v125 = vld [vmem:[#allocation4 + $0x138] sm:$0xff]
    %v126 = vld [vmem:[#allocation4 + $0x140] sm:$0xff]
    %v127 = vld [vmem:[#allocation4 + $0x148] sm:$0xff]
    %v128 = vld [vmem:[#allocation4 + $0x150] sm:$0xff]
    %v129 = vld [vmem:[#allocation4 + $0x158] sm:$0xff]
    %v130 = vld [vmem:[#allocation4 + $0x160] sm:$0xff]
    %v131 = vld [vmem:[#allocation4 + $0x168] sm:$0xff]
    %v132 = vld [vmem:[#allocation4 + $0x170] sm:$0xff]
    %v133 = vld [vmem:[#allocation4 + $0x178] sm:$0xff]
    %v134 = vld [vmem:[%s4] sm:$0x7]
    %v136 = vperm.slane %v134, 0
    %v137 = vperm.slane %v134, 1
    %v138 = vperm.slane %v134, 2
    %142 = vmatpush.msra.mxu0 %v131
    %143 = vmatpush.msra.mxu0 %v128
    %144 = vmatpush.msra.mxu0 %v125
    %145 = vmatpush.msra.mxu0 %v122
    %146 = vmatpush.msra.mxu0 %v119
    %147 = vmatpush.msra.mxu0 %v116
    %148 = vmatpush.msra.mxu0 %v113
    %149 = vmatpush.msra.mxu0 %v110
    %150 = vmatpush.msra.mxu0 %v107
    %151 = vmatpush.msra.mxu0 %v104
    %152 = vmatpush.msra.mxu0 %v101
    %153 = vmatpush.msra.mxu0 %v98
    %154 = vmatpush.msra.mxu0 %v95
    %155 = vmatpush.msra.mxu0 %v92
    %156 = vmatpush.msra.mxu0 %v89
    %157 = vmatpush.msra.mxu0 %v86
    %158 = vmatmul.f32.gmra.mxu0 %v78
    %v159 = vpop.f32.mrf.mxu0
    %v160 = vadd.f32 %v136, %v159
    %161 = vmatmul.f32.gmra.mxu0 %v79
    %v162 = vpop.f32.mrf.mxu0
    %v163 = vadd.f32 %v136, %v162
    %164 = vmatmul.f32.gmra.mxu0 %v80
    %v165 = vpop.f32.mrf.mxu0
    %v166 = vadd.f32 %v136, %v165
    %167 = vmatmul.f32.gmra.mxu0 %v81
    %v168 = vpop.f32.mrf.mxu0
    %v169 = vadd.f32 %v136, %v168
    %170 = vmatmul.f32.gmra.mxu0 %v82
    %v171 = vpop.f32.mrf.mxu0
    %v172 = vadd.f32 %v136, %v171
    %173 = vmatmul.f32.gmra.mxu0 %v83
    %v174 = vpop.f32.mrf.mxu0
    %v175 = vadd.f32 %v136, %v174
    %176 = vmatmul.f32.gmra.mxu0 %v84
    %v177 = vpop.f32.mrf.mxu0
    %v178 = vadd.f32 %v136, %v177
    %179 = vmatmul.f32.gmra.mxu0 %v85
    %v180 = vpop.f32.mrf.mxu0
    %v181 = vadd.f32 %v136, %v180
    %182 = vdwg.mxu0
    %183 = vmatpush.msra.mxu0 %v132
    %184 = vmatpush.msra.mxu0 %v129
    %185 = vmatpush.msra.mxu0 %v126
    %186 = vmatpush.msra.mxu0 %v123
    %187 = vmatpush.msra.mxu0 %v120
    %188 = vmatpush.msra.mxu0 %v117
    %189 = vmatpush.msra.mxu0 %v114
    %190 = vmatpush.msra.mxu0 %v111
    %191 = vmatpush.msra.mxu0 %v108
    %192 = vmatpush.msra.mxu0 %v105
    %193 = vmatpush.msra.mxu0 %v102
    %194 = vmatpush.msra.mxu0 %v99
    %195 = vmatpush.msra.mxu0 %v96
    %196 = vmatpush.msra.mxu0 %v93
    %197 = vmatpush.msra.mxu0 %v90
    %198 = vmatpush.msra.mxu0 %v87
    %199 = vmatmul.f32.gmra.mxu0 %v78
    %v200 = vpop.f32.mrf.mxu0
    %v201 = vadd.f32 %v137, %v200
    %202 = vmatmul.f32.gmra.mxu0 %v79
    %v203 = vpop.f32.mrf.mxu0
    %v204 = vadd.f32 %v137, %v203
    %205 = vmatmul.f32.gmra.mxu0 %v80
    %v206 = vpop.f32.mrf.mxu0
    %v207 = vadd.f32 %v137, %v206
    %208 = vmatmul.f32.gmra.mxu0 %v81
    %v209 = vpop.f32.mrf.mxu0
    %v210 = vadd.f32 %v137, %v209
    %211 = vmatmul.f32.gmra.mxu0 %v82
    %v212 = vpop.f32.mrf.mxu0
    %v213 = vadd.f32 %v137, %v212
    %214 = vmatmul.f32.gmra.mxu0 %v83
    %v215 = vpop.f32.mrf.mxu0
    %v216 = vadd.f32 %v137, %v215
    %217 = vmatmul.f32.gmra.mxu0 %v84
    %v218 = vpop.f32.mrf.mxu0
    %v219 = vadd.f32 %v137, %v218
    %220 = vmatmul.f32.gmra.mxu0 %v85
    %v221 = vpop.f32.mrf.mxu0
    %v222 = vadd.f32 %v137, %v221
    %223 = vdwg.mxu0
    %224 = vmatpush.msra.mxu0 %v133
    %225 = vmatpush.msra.mxu0 %v130
    %226 = vmatpush.msra.mxu0 %v127
    %227 = vmatpush.msra.mxu0 %v124
    %228 = vmatpush.msra.mxu0 %v121
    %229 = vmatpush.msra.mxu0 %v118
    %230 = vmatpush.msra.mxu0 %v115
    %231 = vmatpush.msra.mxu0 %v112
    %232 = vmatpush.msra.mxu0 %v109
    %233 = vmatpush.msra.mxu0 %v106
    %234 = vmatpush.msra.mxu0 %v103
    %235 = vmatpush.msra.mxu0 %v100
    %236 = vmatpush.msra.mxu0 %v97
    %237 = vmatpush.msra.mxu0 %v94
    %238 = vmatpush.msra.mxu0 %v91
    %239 = vmatpush.msra.mxu0 %v88
    %240 = vmatmul.f32.gmra.mxu0 %v78
    %v241 = vpop.f32.mrf.mxu0
    %v242 = vadd.f32 %v138, %v241
    %243 = vmatmul.f32.gmra.mxu0 %v79
    %v244 = vpop.f32.mrf.mxu0
    %v245 = vadd.f32 %v138, %v244
    %246 = vmatmul.f32.gmra.mxu0 %v80
    %v247 = vpop.f32.mrf.mxu0
    %v248 = vadd.f32 %v138, %v247
    %249 = vmatmul.f32.gmra.mxu0 %v81
    %v250 = vpop.f32.mrf.mxu0
    %v251 = vadd.f32 %v138, %v250
    %252 = vmatmul.f32.gmra.mxu0 %v82
    %v253 = vpop.f32.mrf.mxu0
    %v254 = vadd.f32 %v138, %v253
    %255 = vmatmul.f32.gmra.mxu0 %v83
    %v256 = vpop.f32.mrf.mxu0
    %v257 = vadd.f32 %v138, %v256
    %258 = vmatmul.f32.gmra.mxu0 %v84
    %v259 = vpop.f32.mrf.mxu0
    %v260 = vadd.f32 %v138, %v259
    %261 = vmatmul.f32.gmra.mxu0 %v85
    %v262 = vpop.f32.mrf.mxu0
    %v263 = vadd.f32 %v138, %v262
    %264 = vdwg.mxu0
    %v265 = vld [vmem:[#allocation8] sm:$0xff]
    %v266 = vld [vmem:[#allocation8 + $0x8] sm:$0xff]
    %v267 = vld [vmem:[#allocation8 + $0x10] sm:$0xff]
    %v268 = vld [vmem:[#allocation8 + $0x18] sm:$0xff]
    %v269 = vld [vmem:[#allocation8 + $0x20] sm:$0xff]
    %v270 = vld [vmem:[#allocation8 + $0x28] sm:$0xff]
    %v271 = vld [vmem:[#allocation8 + $0x30] sm:$0xff]
    %v272 = vld [vmem:[#allocation8 + $0x38] sm:$0xff]
    %v273 = vld [vmem:[#allocation8 + $0x40] sm:$0xff]
    %v274 = vld [vmem:[#allocation8 + $0x48] sm:$0xff]
    %v275 = vld [vmem:[#allocation8 + $0x50] sm:$0xff]
    %v276 = vld [vmem:[#allocation8 + $0x58] sm:$0xff]
    %v277 = vld [vmem:[#allocation8 + $0x60] sm:$0xff]
    %v278 = vld [vmem:[#allocation8 + $0x68] sm:$0xff]
    %v279 = vld [vmem:[#allocation8 + $0x70] sm:$0xff]
    %v280 = vld [vmem:[#allocation8 + $0x78] sm:$0xff]
    %v281 = vld [vmem:[#allocation8 + $0x80] sm:$0xff]
    %v282 = vld [vmem:[#allocation8 + $0x88] sm:$0xff]
    %v283 = vld [vmem:[#allocation8 + $0x90] sm:$0xff]
    %v284 = vld [vmem:[#allocation8 + $0x98] sm:$0xff]
    %v285 = vld [vmem:[#allocation8 + $0xa0] sm:$0xff]
    %v286 = vld [vmem:[#allocation8 + $0xa8] sm:$0xff]
    %v287 = vld [vmem:[#allocation8 + $0xb0] sm:$0xff]
    %v288 = vld [vmem:[#allocation8 + $0xb8] sm:$0xff]
    %v289 = vld [vmem:[#allocation8 + $0xc0] sm:$0xff]
    %v290 = vld [vmem:[#allocation8 + $0xc8] sm:$0xff]
    %v291 = vld [vmem:[#allocation8 + $0xd0] sm:$0xff]
    %v292 = vld [vmem:[#allocation8 + $0xd8] sm:$0xff]
    %v293 = vld [vmem:[#allocation8 + $0xe0] sm:$0xff]
    %v294 = vld [vmem:[#allocation8 + $0xe8] sm:$0xff]
    %v295 = vld [vmem:[#allocation8 + $0xf0] sm:$0xff]
    %v296 = vld [vmem:[#allocation8 + $0xf8] sm:$0xff]
    %v297 = vld [vmem:[#allocation8 + $0x100] sm:$0xff]
    %v298 = vld [vmem:[#allocation8 + $0x108] sm:$0xff]
    %v299 = vld [vmem:[#allocation8 + $0x110] sm:$0xff]
    %v300 = vld [vmem:[#allocation8 + $0x118] sm:$0xff]
    %v301 = vld [vmem:[#allocation8 + $0x120] sm:$0xff]
    %v302 = vld [vmem:[#allocation8 + $0x128] sm:$0xff]
    %v303 = vld [vmem:[#allocation8 + $0x130] sm:$0xff]
    %v304 = vld [vmem:[#allocation8 + $0x138] sm:$0xff]
    %v305 = vld [vmem:[#allocation8 + $0x140] sm:$0xff]
    %v306 = vld [vmem:[#allocation8 + $0x148] sm:$0xff]
    %v307 = vld [vmem:[#allocation8 + $0x150] sm:$0xff]
    %v308 = vld [vmem:[#allocation8 + $0x158] sm:$0xff]
    %v309 = vld [vmem:[#allocation8 + $0x160] sm:$0xff]
    %v310 = vld [vmem:[#allocation8 + $0x168] sm:$0xff]
    %v311 = vld [vmem:[#allocation8 + $0x170] sm:$0xff]
    %v312 = vld [vmem:[#allocation8 + $0x178] sm:$0xff]
    %v313 = vld [vmem:[%s5] sm:$0x7]
    %v315 = vperm.slane %v313, 0
    %v316 = vperm.slane %v313, 1
    %v317 = vperm.slane %v313, 2
    %321 = vmatpush.msra.mxu0 %v310
    %322 = vmatpush.msra.mxu0 %v307
    %323 = vmatpush.msra.mxu0 %v304
    %324 = vmatpush.msra.mxu0 %v301
    %325 = vmatpush.msra.mxu0 %v298
    %326 = vmatpush.msra.mxu0 %v295
    %327 = vmatpush.msra.mxu0 %v292
    %328 = vmatpush.msra.mxu0 %v289
    %329 = vmatpush.msra.mxu0 %v286
    %330 = vmatpush.msra.mxu0 %v283
    %331 = vmatpush.msra.mxu0 %v280
    %332 = vmatpush.msra.mxu0 %v277
    %333 = vmatpush.msra.mxu0 %v274
    %334 = vmatpush.msra.mxu0 %v271
    %335 = vmatpush.msra.mxu0 %v268
    %336 = vmatpush.msra.mxu0 %v265
    %337 = vmatmul.f32.gmra.mxu0 0.0
    %v338 = vpop.f32.mrf.mxu0
    %v339 = vadd.f32 %v315, %v338
    %340 = vdwg.mxu0
    %341 = vmatpush.msra.mxu0 %v311
    %342 = vmatpush.msra.mxu0 %v308
    %343 = vmatpush.msra.mxu0 %v305
    %344 = vmatpush.msra.mxu0 %v302
    %345 = vmatpush.msra.mxu0 %v299
    %346 = vmatpush.msra.mxu0 %v296
    %347 = vmatpush.msra.mxu0 %v293
    %348 = vmatpush.msra.mxu0 %v290
    %349 = vmatpush.msra.mxu0 %v287
    %350 = vmatpush.msra.mxu0 %v284
    %351 = vmatpush.msra.mxu0 %v281
    %352 = vmatpush.msra.mxu0 %v278
    %353 = vmatpush.msra.mxu0 %v275
    %354 = vmatpush.msra.mxu0 %v272
    %355 = vmatpush.msra.mxu0 %v269
    %356 = vmatpush.msra.mxu0 %v266
    %357 = vmatmul.f32.gmra.mxu0 0.0
    %v358 = vpop.f32.mrf.mxu0
    %v359 = vadd.f32 %v316, %v358
    %360 = vdwg.mxu0
    %361 = vmatpush.msra.mxu0 %v312
    %362 = vmatpush.msra.mxu0 %v309
    %363 = vmatpush.msra.mxu0 %v306
    %364 = vmatpush.msra.mxu0 %v303
    %365 = vmatpush.msra.mxu0 %v300
    %366 = vmatpush.msra.mxu0 %v297
    %367 = vmatpush.msra.mxu0 %v294
    %368 = vmatpush.msra.mxu0 %v291
    %369 = vmatpush.msra.mxu0 %v288
    %370 = vmatpush.msra.mxu0 %v285
    %371 = vmatpush.msra.mxu0 %v282
    %372 = vmatpush.msra.mxu0 %v279
    %373 = vmatpush.msra.mxu0 %v276
    %374 = vmatpush.msra.mxu0 %v273
    %375 = vmatpush.msra.mxu0 %v270
    %376 = vmatpush.msra.mxu0 %v267
    %377 = vmatmul.f32.gmra.mxu0 0.0
    %v378 = vpop.f32.mrf.mxu0
    %v379 = vadd.f32 %v317, %v378
    %380 = vdwg.mxu0
    %v381 = vadd.f32 %v160, %v339
    %v382 = vxor.u32 %v381, 2147483648
    %v383 = vmul.f32 %v382, 1.442695
    %v384 = vpow.pop %v383
    %v385 = vadd.f32 %v384, 1.0
    %v386 = vrcp.pop %v385
    %v387 = vmul.f32 %v385, %v386
    %v388 = vsub.f32 1.0, %v387
    %v389 = vmul.f32 %v386, %v388
    %v390 = vadd.f32 %v386, %v389
    %vm391 = vweird.f32 %v385
    %vm392 = vweird.f32 %v386
    %vm393 = vmor %vm391, %vm392
    %v394 = vsel %vm393, %v386, %v390
    %v395 = vand.u32 2147483647, %v385
    %vm396 = vcmp.eq.f32.partialorder %v395, 8.507059e+37
    %v397 = vand.u32 %v385, 2147483648
    %v398 = vor.u32 1.1754944e-38, %v397
    %v399 = vsel %vm396, %v398, %v394
    %v400 = vmul.f32 1.0, %v399
    %v401 = vadd.f32 %v201, %v359
    %v402 = vxor.u32 %v401, 2147483648
    %v403 = vmul.f32 %v402, 1.442695
    %v404 = vpow.pop %v403
    %v405 = vadd.f32 %v404, 1.0
    %v406 = vrcp.pop %v405
    %v407 = vmul.f32 %v405, %v406
    %v408 = vsub.f32 1.0, %v407
    %v409 = vmul.f32 %v406, %v408
    %v410 = vadd.f32 %v406, %v409
    %vm411 = vweird.f32 %v405
    %vm412 = vweird.f32 %v406
    %vm413 = vmor %vm411, %vm412
    %v414 = vsel %vm413, %v406, %v410
    %v415 = vand.u32 2147483647, %v405
    %vm416 = vcmp.eq.f32.partialorder %v415, 8.507059e+37
    %v417 = vand.u32 %v405, 2147483648
    %v418 = vor.u32 1.1754944e-38, %v417
    %v419 = vsel %vm416, %v418, %v414
    %v420 = vmul.f32 1.0, %v419
    %v421 = vmul.f32 %v400, %v379
    %v422 = vadd.f32 %v242, %v421
    %v423 = vtanh.pop %v422
    %v424 = vsub.f32 1.0, %v420
    %v425 = vmul.f32 %v424, %v423
    %v426 = vmul.f32 %v420, 0.0
    %v427 = vadd.f32 %v425, %v426
    %428 = vst [vmem:[#allocation2] sm:$0xff] %v427
    %429 = vmatpush.msra.mxu0 %v310
    %430 = vmatpush.msra.mxu0 %v307
    %431 = vmatpush.msra.mxu0 %v304
    %432 = vmatpush.msra.mxu0 %v301
    %433 = vmatpush.msra.mxu0 %v298
    %434 = vmatpush.msra.mxu0 %v295
    %435 = vmatpush.msra.mxu0 %v292
    %436 = vmatpush.msra.mxu0 %v289
    %437 = vmatpush.msra.mxu0 %v286
    %438 = vmatpush.msra.mxu0 %v283
    %439 = vmatpush.msra.mxu0 %v280
    %440 = vmatpush.msra.mxu0 %v277
    %441 = vmatpush.msra.mxu0 %v274
    %442 = vmatpush.msra.mxu0 %v271
    %443 = vmatpush.msra.mxu0 %v268
    %444 = vmatpush.msra.mxu0 %v265
    %445 = vmatmul.f32.gmra.mxu0 %v427
    %v446 = vpop.f32.mrf.mxu0
    %v447 = vadd.f32 %v315, %v446
    %448 = vdwg.mxu0
    %449 = vmatpush.msra.mxu0 %v311
    %450 = vmatpush.msra.mxu0 %v308
    %451 = vmatpush.msra.mxu0 %v305
    %452 = vmatpush.msra.mxu0 %v302
    %453 = vmatpush.msra.mxu0 %v299
    %454 = vmatpush.msra.mxu0 %v296
    %455 = vmatpush.msra.mxu0 %v293
    %456 = vmatpush.msra.mxu0 %v290
    %457 = vmatpush.msra.mxu0 %v287
    %458 = vmatpush.msra.mxu0 %v284
    %459 = vmatpush.msra.mxu0 %v281
    %460 = vmatpush.msra.mxu0 %v278
    %461 = vmatpush.msra.mxu0 %v275
    %462 = vmatpush.msra.mxu0 %v272
    %463 = vmatpush.msra.mxu0 %v269
    %464 = vmatpush.msra.mxu0 %v266
    %465 = vmatmul.f32.gmra.mxu0 %v427
    %v466 = vpop.f32.mrf.mxu0
    %v467 = vadd.f32 %v316, %v466
    %468 = vdwg.mxu0
    %469 = vmatpush.msra.mxu0 %v312
    %470 = vmatpush.msra.mxu0 %v309
    %471 = vmatpush.msra.mxu0 %v306
    %472 = vmatpush.msra.mxu0 %v303
    %473 = vmatpush.msra.mxu0 %v300
    %474 = vmatpush.msra.mxu0 %v297
    %475 = vmatpush.msra.mxu0 %v294
    %476 = vmatpush.msra.mxu0 %v291
    %477 = vmatpush.msra.mxu0 %v288
    %478 = vmatpush.msra.mxu0 %v285
    %479 = vmatpush.msra.mxu0 %v282
    %480 = vmatpush.msra.mxu0 %v279
    %481 = vmatpush.msra.mxu0 %v276
    %482 = vmatpush.msra.mxu0 %v273
    %483 = vmatpush.msra.mxu0 %v270
    %484 = vmatpush.msra.mxu0 %v267
    %485 = vmatmul.f32.gmra.mxu0 %v427
    %v486 = vpop.f32.mrf.mxu0
    %v487 = vadd.f32 %v317, %v486
    %488 = vdwg.mxu0
    %v489 = vadd.f32 %v163, %v447
    %v490 = vxor.u32 %v489, 2147483648
    %v491 = vmul.f32 %v490, 1.442695
    %v492 = vpow.pop %v491
    %v493 = vadd.f32 %v492, 1.0
    %v494 = vrcp.pop %v493
    %v495 = vmul.f32 %v493, %v494
    %v496 = vsub.f32 1.0, %v495
    %v497 = vmul.f32 %v494, %v496
    %v498 = vadd.f32 %v494, %v497
    %vm499 = vweird.f32 %v493
    %vm500 = vweird.f32 %v494
    %vm501 = vmor %vm499, %vm500
    %v502 = vsel %vm501, %v494, %v498
    %v503 = vand.u32 2147483647, %v493
    %vm504 = vcmp.eq.f32.partialorder %v503, 8.507059e+37
    %v505 = vand.u32 %v493, 2147483648
    %v506 = vor.u32 1.1754944e-38, %v505
    %v507 = vsel %vm504, %v506, %v502
    %v508 = vmul.f32 1.0, %v507
    %v509 = vadd.f32 %v204, %v467
    %v510 = vxor.u32 %v509, 2147483648
    %v511 = vmul.f32 %v510, 1.442695
    %v512 = vpow.pop %v511
    %v513 = vadd.f32 %v512, 1.0
    %v514 = vrcp.pop %v513
    %v515 = vmul.f32 %v513, %v514
    %v516 = vsub.f32 1.0, %v515
    %v517 = vmul.f32 %v514, %v516
    %v518 = vadd.f32 %v514, %v517
    %vm519 = vweird.f32 %v513
    %vm520 = vweird.f32 %v514
    %vm521 = vmor %vm519, %vm520
    %v522 = vsel %vm521, %v514, %v518
    %v523 = vand.u32 2147483647, %v513
    %vm524 = vcmp.eq.f32.partialorder %v523, 8.507059e+37
    %v525 = vand.u32 %v513, 2147483648
    %v526 = vor.u32 1.1754944e-38, %v525
    %v527 = vsel %vm524, %v526, %v522
    %v528 = vmul.f32 1.0, %v527
    %v529 = vmul.f32 %v508, %v487
    %v530 = vadd.f32 %v245, %v529
    %v531 = vtanh.pop %v530
    %v532 = vsub.f32 1.0, %v528
    %v533 = vmul.f32 %v532, %v531
    %v534 = vmul.f32 %v528, %v427
    %v535 = vadd.f32 %v533, %v534
    %s536 = scalar_lea.vmem [#allocation2], 8
    %537 = vst [vmem:[%s536] sm:$0xff] %v535
    %538 = vmatpush.msra.mxu0 %v310
    %539 = vmatpush.msra.mxu0 %v307
    %540 = vmatpush.msra.mxu0 %v304
    %541 = vmatpush.msra.mxu0 %v301
    %542 = vmatpush.msra.mxu0 %v298
    %543 = vmatpush.msra.mxu0 %v295
    %544 = vmatpush.msra.mxu0 %v292
    %545 = vmatpush.msra.mxu0 %v289
    %546 = vmatpush.msra.mxu0 %v286
    %547 = vmatpush.msra.mxu0 %v283
    %548 = vmatpush.msra.mxu0 %v280
    %549 = vmatpush.msra.mxu0 %v277
    %550 = vmatpush.msra.mxu0 %v274
    %551 = vmatpush.msra.mxu0 %v271
    %552 = vmatpush.msra.mxu0 %v268
    %553 = vmatpush.msra.mxu0 %v265
    %554 = vmatmul.f32.gmra.mxu0 %v535
    %v555 = vpop.f32.mrf.mxu0
    %v556 = vadd.f32 %v315, %v555
    %557 = vdwg.mxu0
    %558 = vmatpush.msra.mxu0 %v311
    %559 = vmatpush.msra.mxu0 %v308
    %560 = vmatpush.msra.mxu0 %v305
    %561 = vmatpush.msra.mxu0 %v302
    %562 = vmatpush.msra.mxu0 %v299
    %563 = vmatpush.msra.mxu0 %v296
    %564 = vmatpush.msra.mxu0 %v293
    %565 = vmatpush.msra.mxu0 %v290
    %566 = vmatpush.msra.mxu0 %v287
    %567 = vmatpush.msra.mxu0 %v284
    %568 = vmatpush.msra.mxu0 %v281
    %569 = vmatpush.msra.mxu0 %v278
    %570 = vmatpush.msra.mxu0 %v275
    %571 = vmatpush.msra.mxu0 %v272
    %572 = vmatpush.msra.mxu0 %v269
    %573 = vmatpush.msra.mxu0 %v266
    %574 = vmatmul.f32.gmra.mxu0 %v535
    %v575 = vpop.f32.mrf.mxu0
    %v576 = vadd.f32 %v316, %v575
    %577 = vdwg.mxu0
    %578 = vmatpush.msra.mxu0 %v312
    %579 = vmatpush.msra.mxu0 %v309
    %580 = vmatpush.msra.mxu0 %v306
    %581 = vmatpush.msra.mxu0 %v303
    %582 = vmatpush.msra.mxu0 %v300
    %583 = vmatpush.msra.mxu0 %v297
    %584 = vmatpush.msra.mxu0 %v294
    %585 = vmatpush.msra.mxu0 %v291
    %586 = vmatpush.msra.mxu0 %v288
    %587 = vmatpush.msra.mxu0 %v285
    %588 = vmatpush.msra.mxu0 %v282
    %589 = vmatpush.msra.mxu0 %v279
    %590 = vmatpush.msra.mxu0 %v276
    %591 = vmatpush.msra.mxu0 %v273
    %592 = vmatpush.msra.mxu0 %v270
    %593 = vmatpush.msra.mxu0 %v267
    %594 = vmatmul.f32.gmra.mxu0 %v535
    %v595 = vpop.f32.mrf.mxu0
    %v596 = vadd.f32 %v317, %v595
    %597 = vdwg.mxu0
    %v598 = vadd.f32 %v166, %v556
    %v599 = vxor.u32 %v598, 2147483648
    %v600 = vmul.f32 %v599, 1.442695
    %v601 = vpow.pop %v600
    %v602 = vadd.f32 %v601, 1.0
    %v603 = vrcp.pop %v602
    %v604 = vmul.f32 %v602, %v603
    %v605 = vsub.f32 1.0, %v604
    %v606 = vmul.f32 %v603, %v605
    %v607 = vadd.f32 %v603, %v606
    %vm608 = vweird.f32 %v602
    %vm609 = vweird.f32 %v603
    %vm610 = vmor %vm608, %vm609
    %v611 = vsel %vm610, %v603, %v607
    %v612 = vand.u32 2147483647, %v602
    %vm613 = vcmp.eq.f32.partialorder %v612, 8.507059e+37
    %v614 = vand.u32 %v602, 2147483648
    %v615 = vor.u32 1.1754944e-38, %v614
    %v616 = vsel %vm613, %v615, %v611
    %v617 = vmul.f32 1.0, %v616
    %v618 = vadd.f32 %v207, %v576
    %v619 = vxor.u32 %v618, 2147483648
    %v620 = vmul.f32 %v619, 1.442695
    %v621 = vpow.pop %v620
    %v622 = vadd.f32 %v621, 1.0
    %v623 = vrcp.pop %v622
    %v624 = vmul.f32 %v622, %v623
    %v625 = vsub.f32 1.0, %v624
    %v626 = vmul.f32 %v623, %v625
    %v627 = vadd.f32 %v623, %v626
    %vm628 = vweird.f32 %v622
    %vm629 = vweird.f32 %v623
    %vm630 = vmor %vm628, %vm629
    %v631 = vsel %vm630, %v623, %v627
    %v632 = vand.u32 2147483647, %v622
    %vm633 = vcmp.eq.f32.partialorder %v632, 8.507059e+37
    %v634 = vand.u32 %v622, 2147483648
    %v635 = vor.u32 1.1754944e-38, %v634
    %v636 = vsel %vm633, %v635, %v631
    %v637 = vmul.f32 1.0, %v636
    %v638 = vmul.f32 %v617, %v596
    %v639 = vadd.f32 %v248, %v638
    %v640 = vtanh.pop %v639
    %v641 = vsub.f32 1.0, %v637
    %v642 = vmul.f32 %v641, %v640
    %v643 = vmul.f32 %v637, %v535
    %v644 = vadd.f32 %v642, %v643
    %s645 = scalar_lea.vmem [#allocation2], 16
    %646 = vst [vmem:[%s645] sm:$0xff] %v644
    %647 = vmatpush.msra.mxu0 %v310
    %648 = vmatpush.msra.mxu0 %v307
    %649 = vmatpush.msra.mxu0 %v304
    %650 = vmatpush.msra.mxu0 %v301
    %651 = vmatpush.msra.mxu0 %v298
    %652 = vmatpush.msra.mxu0 %v295
    %653 = vmatpush.msra.mxu0 %v292
    %654 = vmatpush.msra.mxu0 %v289
    %655 = vmatpush.msra.mxu0 %v286
    %656 = vmatpush.msra.mxu0 %v283
    %657 = vmatpush.msra.mxu0 %v280
    %658 = vmatpush.msra.mxu0 %v277
    %659 = vmatpush.msra.mxu0 %v274
    %660 = vmatpush.msra.mxu0 %v271
    %661 = vmatpush.msra.mxu0 %v268
    %662 = vmatpush.msra.mxu0 %v265
    %663 = vmatmul.f32.gmra.mxu0 %v644
    %v664 = vpop.f32.mrf.mxu0
    %v665 = vadd.f32 %v315, %v664
    %666 = vdwg.mxu0
    %667 = vmatpush.msra.mxu0 %v311
    %668 = vmatpush.msra.mxu0 %v308
    %669 = vmatpush.msra.mxu0 %v305
    %670 = vmatpush.msra.mxu0 %v302
    %671 = vmatpush.msra.mxu0 %v299
    %672 = vmatpush.msra.mxu0 %v296
    %673 = vmatpush.msra.mxu0 %v293
    %674 = vmatpush.msra.mxu0 %v290
    %675 = vmatpush.msra.mxu0 %v287
    %676 = vmatpush.msra.mxu0 %v284
    %677 = vmatpush.msra.mxu0 %v281
    %678 = vmatpush.msra.mxu0 %v278
    %679 = vmatpush.msra.mxu0 %v275
    %680 = vmatpush.msra.mxu0 %v272
    %681 = vmatpush.msra.mxu0 %v269
    %682 = vmatpush.msra.mxu0 %v266
    %683 = vmatmul.f32.gmra.mxu0 %v644
    %v684 = vpop.f32.mrf.mxu0
    %v685 = vadd.f32 %v316, %v684
    %686 = vdwg.mxu0
    %687 = vmatpush.msra.mxu0 %v312
    %688 = vmatpush.msra.mxu0 %v309
    %689 = vmatpush.msra.mxu0 %v306
    %690 = vmatpush.msra.mxu0 %v303
    %691 = vmatpush.msra.mxu0 %v300
    %692 = vmatpush.msra.mxu0 %v297
    %693 = vmatpush.msra.mxu0 %v294
    %694 = vmatpush.msra.mxu0 %v291
    %695 = vmatpush.msra.mxu0 %v288
    %696 = vmatpush.msra.mxu0 %v285
    %697 = vmatpush.msra.mxu0 %v282
    %698 = vmatpush.msra.mxu0 %v279
    %699 = vmatpush.msra.mxu0 %v276
    %700 = vmatpush.msra.mxu0 %v273
    %701 = vmatpush.msra.mxu0 %v270
    %702 = vmatpush.msra.mxu0 %v267
    %703 = vmatmul.f32.gmra.mxu0 %v644
    %v704 = vpop.f32.mrf.mxu0
    %v705 = vadd.f32 %v317, %v704
    %706 = vdwg.mxu0
    %v707 = vadd.f32 %v169, %v665
    %v708 = vxor.u32 %v707, 2147483648
    %v709 = vmul.f32 %v708, 1.442695
    %v710 = vpow.pop %v709
    %v711 = vadd.f32 %v710, 1.0
    %v712 = vrcp.pop %v711
    %v713 = vmul.f32 %v711, %v712
    %v714 = vsub.f32 1.0, %v713
    %v715 = vmul.f32 %v712, %v714
    %v716 = vadd.f32 %v712, %v715
    %vm717 = vweird.f32 %v711
    %vm718 = vweird.f32 %v712
    %vm719 = vmor %vm717, %vm718
    %v720 = vsel %vm719, %v712, %v716
    %v721 = vand.u32 2147483647, %v711
    %vm722 = vcmp.eq.f32.partialorder %v721, 8.507059e+37
    %v723 = vand.u32 %v711, 2147483648
    %v724 = vor.u32 1.1754944e-38, %v723
    %v725 = vsel %vm722, %v724, %v720
    %v726 = vmul.f32 1.0, %v725
    %v727 = vadd.f32 %v210, %v685
    %v728 = vxor.u32 %v727, 2147483648
    %v729 = vmul.f32 %v728, 1.442695
    %v730 = vpow.pop %v729
    %v731 = vadd.f32 %v730, 1.0
    %v732 = vrcp.pop %v731
    %v733 = vmul.f32 %v731, %v732
    %v734 = vsub.f32 1.0, %v733
    %v735 = vmul.f32 %v732, %v734
    %v736 = vadd.f32 %v732, %v735
    %vm737 = vweird.f32 %v731
    %vm738 = vweird.f32 %v732
    %vm739 = vmor %vm737, %vm738
    %v740 = vsel %vm739, %v732, %v736
    %v741 = vand.u32 2147483647, %v731
    %vm742 = vcmp.eq.f32.partialorder %v741, 8.507059e+37
    %v743 = vand.u32 %v731, 2147483648
    %v744 = vor.u32 1.1754944e-38, %v743
    %v745 = vsel %vm742, %v744, %v740
    %v746 = vmul.f32 1.0, %v745
    %v747 = vmul.f32 %v726, %v705
    %v748 = vadd.f32 %v251, %v747
    %v749 = vtanh.pop %v748
    %v750 = vsub.f32 1.0, %v746
    %v751 = vmul.f32 %v750, %v749
    %v752 = vmul.f32 %v746, %v644
    %v753 = vadd.f32 %v751, %v752
    %s754 = scalar_lea.vmem [#allocation2], 24
    %755 = vst [vmem:[%s754] sm:$0xff] %v753
    %756 = vmatpush.msra.mxu0 %v310
    %757 = vmatpush.msra.mxu0 %v307
    %758 = vmatpush.msra.mxu0 %v304
    %759 = vmatpush.msra.mxu0 %v301
    %760 = vmatpush.msra.mxu0 %v298
    %761 = vmatpush.msra.mxu0 %v295
    %762 = vmatpush.msra.mxu0 %v292
    %763 = vmatpush.msra.mxu0 %v289
    %764 = vmatpush.msra.mxu0 %v286
    %765 = vmatpush.msra.mxu0 %v283
    %766 = vmatpush.msra.mxu0 %v280
    %767 = vmatpush.msra.mxu0 %v277
    %768 = vmatpush.msra.mxu0 %v274
    %769 = vmatpush.msra.mxu0 %v271
    %770 = vmatpush.msra.mxu0 %v268
    %771 = vmatpush.msra.mxu0 %v265
    %772 = vmatmul.f32.gmra.mxu0 %v753
    %v773 = vpop.f32.mrf.mxu0
    %v774 = vadd.f32 %v315, %v773
    %775 = vdwg.mxu0
    %776 = vmatpush.msra.mxu0 %v311
    %777 = vmatpush.msra.mxu0 %v308
    %778 = vmatpush.msra.mxu0 %v305
    %779 = vmatpush.msra.mxu0 %v302
    %780 = vmatpush.msra.mxu0 %v299
    %781 = vmatpush.msra.mxu0 %v296
    %782 = vmatpush.msra.mxu0 %v293
    %783 = vmatpush.msra.mxu0 %v290
    %784 = vmatpush.msra.mxu0 %v287
    %785 = vmatpush.msra.mxu0 %v284
    %786 = vmatpush.msra.mxu0 %v281
    %787 = vmatpush.msra.mxu0 %v278
    %788 = vmatpush.msra.mxu0 %v275
    %789 = vmatpush.msra.mxu0 %v272
    %790 = vmatpush.msra.mxu0 %v269
    %791 = vmatpush.msra.mxu0 %v266
    %792 = vmatmul.f32.gmra.mxu0 %v753
    %v793 = vpop.f32.mrf.mxu0
    %v794 = vadd.f32 %v316, %v793
    %795 = vdwg.mxu0
    %796 = vmatpush.msra.mxu0 %v312
    %797 = vmatpush.msra.mxu0 %v309
    %798 = vmatpush.msra.mxu0 %v306
    %799 = vmatpush.msra.mxu0 %v303
    %800 = vmatpush.msra.mxu0 %v300
    %801 = vmatpush.msra.mxu0 %v297
    %802 = vmatpush.msra.mxu0 %v294
    %803 = vmatpush.msra.mxu0 %v291
    %804 = vmatpush.msra.mxu0 %v288
    %805 = vmatpush.msra.mxu0 %v285
    %806 = vmatpush.msra.mxu0 %v282
    %807 = vmatpush.msra.mxu0 %v279
    %808 = vmatpush.msra.mxu0 %v276
    %809 = vmatpush.msra.mxu0 %v273
    %810 = vmatpush.msra.mxu0 %v270
    %811 = vmatpush.msra.mxu0 %v267
    %812 = vmatmul.f32.gmra.mxu0 %v753
    %v813 = vpop.f32.mrf.mxu0
    %v814 = vadd.f32 %v317, %v813
    %815 = vdwg.mxu0
    %v816 = vadd.f32 %v172, %v774
    %v817 = vxor.u32 %v816, 2147483648
    %v818 = vmul.f32 %v817, 1.442695
    %v819 = vpow.pop %v818
    %v820 = vadd.f32 %v819, 1.0
    %v821 = vrcp.pop %v820
    %v822 = vmul.f32 %v820, %v821
    %v823 = vsub.f32 1.0, %v822
    %v824 = vmul.f32 %v821, %v823
    %v825 = vadd.f32 %v821, %v824
    %vm826 = vweird.f32 %v820
    %vm827 = vweird.f32 %v821
    %vm828 = vmor %vm826, %vm827
    %v829 = vsel %vm828, %v821, %v825
    %v830 = vand.u32 2147483647, %v820
    %vm831 = vcmp.eq.f32.partialorder %v830, 8.507059e+37
    %v832 = vand.u32 %v820, 2147483648
    %v833 = vor.u32 1.1754944e-38, %v832
    %v834 = vsel %vm831, %v833, %v829
    %v835 = vmul.f32 1.0, %v834
    %v836 = vadd.f32 %v213, %v794
    %v837 = vxor.u32 %v836, 2147483648
    %v838 = vmul.f32 %v837, 1.442695
    %v839 = vpow.pop %v838
    %v840 = vadd.f32 %v839, 1.0
    %v841 = vrcp.pop %v840
    %v842 = vmul.f32 %v840, %v841
    %v843 = vsub.f32 1.0, %v842
    %v844 = vmul.f32 %v841, %v843
    %v845 = vadd.f32 %v841, %v844
    %vm846 = vweird.f32 %v840
    %vm847 = vweird.f32 %v841
    %vm848 = vmor %vm846, %vm847
    %v849 = vsel %vm848, %v841, %v845
    %v850 = vand.u32 2147483647, %v840
    %vm851 = vcmp.eq.f32.partialorder %v850, 8.507059e+37
    %v852 = vand.u32 %v840, 2147483648
    %v853 = vor.u32 1.1754944e-38, %v852
    %v854 = vsel %vm851, %v853, %v849
    %v855 = vmul.f32 1.0, %v854
    %v856 = vmul.f32 %v835, %v814
    %v857 = vadd.f32 %v254, %v856
    %v858 = vtanh.pop %v857
    %v859 = vsub.f32 1.0, %v855
    %v860 = vmul.f32 %v859, %v858
    %v861 = vmul.f32 %v855, %v753
    %v862 = vadd.f32 %v860, %v861
    %s863 = scalar_lea.vmem [#allocation2], 32
    %864 = vst [vmem:[%s863] sm:$0xff] %v862
    %865 = vmatpush.msra.mxu0 %v310
    %866 = vmatpush.msra.mxu0 %v307
    %867 = vmatpush.msra.mxu0 %v304
    %868 = vmatpush.msra.mxu0 %v301
    %869 = vmatpush.msra.mxu0 %v298
    %870 = vmatpush.msra.mxu0 %v295
    %871 = vmatpush.msra.mxu0 %v292
    %872 = vmatpush.msra.mxu0 %v289
    %873 = vmatpush.msra.mxu0 %v286
    %874 = vmatpush.msra.mxu0 %v283
    %875 = vmatpush.msra.mxu0 %v280
    %876 = vmatpush.msra.mxu0 %v277
    %877 = vmatpush.msra.mxu0 %v274
    %878 = vmatpush.msra.mxu0 %v271
    %879 = vmatpush.msra.mxu0 %v268
    %880 = vmatpush.msra.mxu0 %v265
    %881 = vmatmul.f32.gmra.mxu0 %v862
    %v882 = vpop.f32.mrf.mxu0
    %v883 = vadd.f32 %v315, %v882
    %884 = vdwg.mxu0
    %885 = vmatpush.msra.mxu0 %v311
    %886 = vmatpush.msra.mxu0 %v308
    %887 = vmatpush.msra.mxu0 %v305
    %888 = vmatpush.msra.mxu0 %v302
    %889 = vmatpush.msra.mxu0 %v299
    %890 = vmatpush.msra.mxu0 %v296
    %891 = vmatpush.msra.mxu0 %v293
    %892 = vmatpush.msra.mxu0 %v290
    %893 = vmatpush.msra.mxu0 %v287
    %894 = vmatpush.msra.mxu0 %v284
    %895 = vmatpush.msra.mxu0 %v281
    %896 = vmatpush.msra.mxu0 %v278
    %897 = vmatpush.msra.mxu0 %v275
    %898 = vmatpush.msra.mxu0 %v272
    %899 = vmatpush.msra.mxu0 %v269
    %900 = vmatpush.msra.mxu0 %v266
    %901 = vmatmul.f32.gmra.mxu0 %v862
    %v902 = vpop.f32.mrf.mxu0
    %v903 = vadd.f32 %v316, %v902
    %904 = vdwg.mxu0
    %905 = vmatpush.msra.mxu0 %v312
    %906 = vmatpush.msra.mxu0 %v309
    %907 = vmatpush.msra.mxu0 %v306
    %908 = vmatpush.msra.mxu0 %v303
    %909 = vmatpush.msra.mxu0 %v300
    %910 = vmatpush.msra.mxu0 %v297
    %911 = vmatpush.msra.mxu0 %v294
    %912 = vmatpush.msra.mxu0 %v291
    %913 = vmatpush.msra.mxu0 %v288
    %914 = vmatpush.msra.mxu0 %v285
    %915 = vmatpush.msra.mxu0 %v282
    %916 = vmatpush.msra.mxu0 %v279
    %917 = vmatpush.msra.mxu0 %v276
    %918 = vmatpush.msra.mxu0 %v273
    %919 = vmatpush.msra.mxu0 %v270
    %920 = vmatpush.msra.mxu0 %v267
    %921 = vmatmul.f32.gmra.mxu0 %v862
    %v922 = vpop.f32.mrf.mxu0
    %v923 = vadd.f32 %v317, %v922
    %924 = vdwg.mxu0
    %v925 = vadd.f32 %v175, %v883
    %v926 = vxor.u32 %v925, 2147483648
    %v927 = vmul.f32 %v926, 1.442695
    %v928 = vpow.pop %v927
    %v929 = vadd.f32 %v928, 1.0
    %v930 = vrcp.pop %v929
    %v931 = vmul.f32 %v929, %v930
    %v932 = vsub.f32 1.0, %v931
    %v933 = vmul.f32 %v930, %v932
    %v934 = vadd.f32 %v930, %v933
    %vm935 = vweird.f32 %v929
    %vm936 = vweird.f32 %v930
    %vm937 = vmor %vm935, %vm936
    %v938 = vsel %vm937, %v930, %v934
    %v939 = vand.u32 2147483647, %v929
    %vm940 = vcmp.eq.f32.partialorder %v939, 8.507059e+37
    %v941 = vand.u32 %v929, 2147483648
    %v942 = vor.u32 1.1754944e-38, %v941
    %v943 = vsel %vm940, %v942, %v938
    %v944 = vmul.f32 1.0, %v943
    %v945 = vadd.f32 %v216, %v903
    %v946 = vxor.u32 %v945, 2147483648
    %v947 = vmul.f32 %v946, 1.442695
    %v948 = vpow.pop %v947
    %v949 = vadd.f32 %v948, 1.0
    %v950 = vrcp.pop %v949
    %v951 = vmul.f32 %v949, %v950
    %v952 = vsub.f32 1.0, %v951
    %v953 = vmul.f32 %v950, %v952
    %v954 = vadd.f32 %v950, %v953
    %vm955 = vweird.f32 %v949
    %vm956 = vweird.f32 %v950
    %vm957 = vmor %vm955, %vm956
    %v958 = vsel %vm957, %v950, %v954
    %v959 = vand.u32 2147483647, %v949
    %vm960 = vcmp.eq.f32.partialorder %v959, 8.507059e+37
    %v961 = vand.u32 %v949, 2147483648
    %v962 = vor.u32 1.1754944e-38, %v961
    %v963 = vsel %vm960, %v962, %v958
    %v964 = vmul.f32 1.0, %v963
    %v965 = vmul.f32 %v944, %v923
    %v966 = vadd.f32 %v257, %v965
    %v967 = vtanh.pop %v966
    %v968 = vsub.f32 1.0, %v964
    %v969 = vmul.f32 %v968, %v967
    %v970 = vmul.f32 %v964, %v862
    %v971 = vadd.f32 %v969, %v970
    %s972 = scalar_lea.vmem [#allocation2], 40
    %973 = vst [vmem:[%s972] sm:$0xff] %v971
    %974 = vmatpush.msra.mxu0 %v310
    %975 = vmatpush.msra.mxu0 %v307
    %976 = vmatpush.msra.mxu0 %v304
    %977 = vmatpush.msra.mxu0 %v301
    %978 = vmatpush.msra.mxu0 %v298
    %979 = vmatpush.msra.mxu0 %v295
    %980 = vmatpush.msra.mxu0 %v292
    %981 = vmatpush.msra.mxu0 %v289
    %982 = vmatpush.msra.mxu0 %v286
    %983 = vmatpush.msra.mxu0 %v283
    %984 = vmatpush.msra.mxu0 %v280
    %985 = vmatpush.msra.mxu0 %v277
    %986 = vmatpush.msra.mxu0 %v274
    %987 = vmatpush.msra.mxu0 %v271
    %988 = vmatpush.msra.mxu0 %v268
    %989 = vmatpush.msra.mxu0 %v265
    %990 = vmatmul.f32.gmra.mxu0 %v971
    %v991 = vpop.f32.mrf.mxu0
    %v992 = vadd.f32 %v315, %v991
    %993 = vdwg.mxu0
    %994 = vmatpush.msra.mxu0 %v311
    %995 = vmatpush.msra.mxu0 %v308
    %996 = vmatpush.msra.mxu0 %v305
    %997 = vmatpush.msra.mxu0 %v302
    %998 = vmatpush.msra.mxu0 %v299
    %999 = vmatpush.msra.mxu0 %v296
    %1000 = vmatpush.msra.mxu0 %v293
    %1001 = vmatpush.msra.mxu0 %v290
    %1002 = vmatpush.msra.mxu0 %v287
    %1003 = vmatpush.msra.mxu0 %v284
    %1004 = vmatpush.msra.mxu0 %v281
    %1005 = vmatpush.msra.mxu0 %v278
    %1006 = vmatpush.msra.mxu0 %v275
    %1007 = vmatpush.msra.mxu0 %v272
    %1008 = vmatpush.msra.mxu0 %v269
    %1009 = vmatpush.msra.mxu0 %v266
    %1010 = vmatmul.f32.gmra.mxu0 %v971
    %v1011 = vpop.f32.mrf.mxu0
    %v1012 = vadd.f32 %v316, %v1011
    %1013 = vdwg.mxu0
    %1014 = vmatpush.msra.mxu0 %v312
    %1015 = vmatpush.msra.mxu0 %v309
    %1016 = vmatpush.msra.mxu0 %v306
    %1017 = vmatpush.msra.mxu0 %v303
    %1018 = vmatpush.msra.mxu0 %v300
    %1019 = vmatpush.msra.mxu0 %v297
    %1020 = vmatpush.msra.mxu0 %v294
    %1021 = vmatpush.msra.mxu0 %v291
    %1022 = vmatpush.msra.mxu0 %v288
    %1023 = vmatpush.msra.mxu0 %v285
    %1024 = vmatpush.msra.mxu0 %v282
    %1025 = vmatpush.msra.mxu0 %v279
    %1026 = vmatpush.msra.mxu0 %v276
    %1027 = vmatpush.msra.mxu0 %v273
    %1028 = vmatpush.msra.mxu0 %v270
    %1029 = vmatpush.msra.mxu0 %v267
    %1030 = vmatmul.f32.gmra.mxu0 %v971
    %v1031 = vpop.f32.mrf.mxu0
    %v1032 = vadd.f32 %v317, %v1031
    %1033 = vdwg.mxu0
    %v1034 = vadd.f32 %v178, %v992
    %v1035 = vxor.u32 %v1034, 2147483648
    %v1036 = vmul.f32 %v1035, 1.442695
    %v1037 = vpow.pop %v1036
    %v1038 = vadd.f32 %v1037, 1.0
    %v1039 = vrcp.pop %v1038
    %v1040 = vmul.f32 %v1038, %v1039
    %v1041 = vsub.f32 1.0, %v1040
    %v1042 = vmul.f32 %v1039, %v1041
    %v1043 = vadd.f32 %v1039, %v1042
    %vm1044 = vweird.f32 %v1038
    %vm1045 = vweird.f32 %v1039
    %vm1046 = vmor %vm1044, %vm1045
    %v1047 = vsel %vm1046, %v1039, %v1043
    %v1048 = vand.u32 2147483647, %v1038
    %vm1049 = vcmp.eq.f32.partialorder %v1048, 8.507059e+37
    %v1050 = vand.u32 %v1038, 2147483648
    %v1051 = vor.u32 1.1754944e-38, %v1050
    %v1052 = vsel %vm1049, %v1051, %v1047
    %v1053 = vmul.f32 1.0, %v1052
    %v1054 = vadd.f32 %v219, %v1012
    %v1055 = vxor.u32 %v1054, 2147483648
    %v1056 = vmul.f32 %v1055, 1.442695
    %v1057 = vpow.pop %v1056
    %v1058 = vadd.f32 %v1057, 1.0
    %v1059 = vrcp.pop %v1058
    %v1060 = vmul.f32 %v1058, %v1059
    %v1061 = vsub.f32 1.0, %v1060
    %v1062 = vmul.f32 %v1059, %v1061
    %v1063 = vadd.f32 %v1059, %v1062
    %vm1064 = vweird.f32 %v1058
    %vm1065 = vweird.f32 %v1059
    %vm1066 = vmor %vm1064, %vm1065
    %v1067 = vsel %vm1066, %v1059, %v1063
    %v1068 = vand.u32 2147483647, %v1058
    %vm1069 = vcmp.eq.f32.partialorder %v1068, 8.507059e+37
    %v1070 = vand.u32 %v1058, 2147483648
    %v1071 = vor.u32 1.1754944e-38, %v1070
    %v1072 = vsel %vm1069, %v1071, %v1067
    %v1073 = vmul.f32 1.0, %v1072
    %v1074 = vmul.f32 %v1053, %v1032
    %v1075 = vadd.f32 %v260, %v1074
    %v1076 = vtanh.pop %v1075
    %v1077 = vsub.f32 1.0, %v1073
    %v1078 = vmul.f32 %v1077, %v1076
    %v1079 = vmul.f32 %v1073, %v971
    %v1080 = vadd.f32 %v1078, %v1079
    %s1081 = scalar_lea.vmem [#allocation2], 48
    %1082 = vst [vmem:[%s1081] sm:$0xff] %v1080
    %1083 = vmatpush.msra.mxu0 %v310
    %1084 = vmatpush.msra.mxu0 %v307
    %1085 = vmatpush.msra.mxu0 %v304
    %1086 = vmatpush.msra.mxu0 %v301
    %1087 = vmatpush.msra.mxu0 %v298
    %1088 = vmatpush.msra.mxu0 %v295
    %1089 = vmatpush.msra.mxu0 %v292
    %1090 = vmatpush.msra.mxu0 %v289
    %1091 = vmatpush.msra.mxu0 %v286
    %1092 = vmatpush.msra.mxu0 %v283
    %1093 = vmatpush.msra.mxu0 %v280
    %1094 = vmatpush.msra.mxu0 %v277
    %1095 = vmatpush.msra.mxu0 %v274
    %1096 = vmatpush.msra.mxu0 %v271
    %1097 = vmatpush.msra.mxu0 %v268
    %1098 = vmatpush.msra.mxu0 %v265
    %1099 = vmatmul.f32.gmra.mxu0 %v1080
    %v1100 = vpop.f32.mrf.mxu0
    %v1101 = vadd.f32 %v315, %v1100
    %1102 = vdwg.mxu0
    %1103 = vmatpush.msra.mxu0 %v311
    %1104 = vmatpush.msra.mxu0 %v308
    %1105 = vmatpush.msra.mxu0 %v305
    %1106 = vmatpush.msra.mxu0 %v302
    %1107 = vmatpush.msra.mxu0 %v299
    %1108 = vmatpush.msra.mxu0 %v296
    %1109 = vmatpush.msra.mxu0 %v293
    %1110 = vmatpush.msra.mxu0 %v290
    %1111 = vmatpush.msra.mxu0 %v287
    %1112 = vmatpush.msra.mxu0 %v284
    %1113 = vmatpush.msra.mxu0 %v281
    %1114 = vmatpush.msra.mxu0 %v278
    %1115 = vmatpush.msra.mxu0 %v275
    %1116 = vmatpush.msra.mxu0 %v272
    %1117 = vmatpush.msra.mxu0 %v269
    %1118 = vmatpush.msra.mxu0 %v266
    %1119 = vmatmul.f32.gmra.mxu0 %v1080
    %v1120 = vpop.f32.mrf.mxu0
    %v1121 = vadd.f32 %v316, %v1120
    %1122 = vdwg.mxu0
    %1123 = vmatpush.msra.mxu0 %v312
    %1124 = vmatpush.msra.mxu0 %v309
    %1125 = vmatpush.msra.mxu0 %v306
    %1126 = vmatpush.msra.mxu0 %v303
    %1127 = vmatpush.msra.mxu0 %v300
    %1128 = vmatpush.msra.mxu0 %v297
    %1129 = vmatpush.msra.mxu0 %v294
    %1130 = vmatpush.msra.mxu0 %v291
    %1131 = vmatpush.msra.mxu0 %v288
    %1132 = vmatpush.msra.mxu0 %v285
    %1133 = vmatpush.msra.mxu0 %v282
    %1134 = vmatpush.msra.mxu0 %v279
    %1135 = vmatpush.msra.mxu0 %v276
    %1136 = vmatpush.msra.mxu0 %v273
    %1137 = vmatpush.msra.mxu0 %v270
    %1138 = vmatpush.msra.mxu0 %v267
    %1139 = vmatmul.f32.gmra.mxu0 %v1080
    %v1140 = vpop.f32.mrf.mxu0
    %v1141 = vadd.f32 %v317, %v1140
    %1142 = vdwg.mxu0
    %v1143 = vadd.f32 %v181, %v1101
    %v1144 = vxor.u32 %v1143, 2147483648
    %v1145 = vmul.f32 %v1144, 1.442695
    %v1146 = vpow.pop %v1145
    %v1147 = vadd.f32 %v1146, 1.0
    %v1148 = vrcp.pop %v1147
    %v1149 = vmul.f32 %v1147, %v1148
    %v1150 = vsub.f32 1.0, %v1149
    %v1151 = vmul.f32 %v1148, %v1150
    %v1152 = vadd.f32 %v1148, %v1151
    %vm1153 = vweird.f32 %v1147
    %vm1154 = vweird.f32 %v1148
    %vm1155 = vmor %vm1153, %vm1154
    %v1156 = vsel %vm1155, %v1148, %v1152
    %v1157 = vand.u32 2147483647, %v1147
    %vm1158 = vcmp.eq.f32.partialorder %v1157, 8.507059e+37
    %v1159 = vand.u32 %v1147, 2147483648
    %v1160 = vor.u32 1.1754944e-38, %v1159
    %v1161 = vsel %vm1158, %v1160, %v1156
    %v1162 = vmul.f32 1.0, %v1161
    %v1163 = vadd.f32 %v222, %v1121
    %v1164 = vxor.u32 %v1163, 2147483648
    %v1165 = vmul.f32 %v1164, 1.442695
    %v1166 = vpow.pop %v1165
    %v1167 = vadd.f32 %v1166, 1.0
    %v1168 = vrcp.pop %v1167
    %v1169 = vmul.f32 %v1167, %v1168
    %v1170 = vsub.f32 1.0, %v1169
    %v1171 = vmul.f32 %v1168, %v1170
    %v1172 = vadd.f32 %v1168, %v1171
    %vm1173 = vweird.f32 %v1167
    %vm1174 = vweird.f32 %v1168
    %vm1175 = vmor %vm1173, %vm1174
    %v1176 = vsel %vm1175, %v1168, %v1172
    %v1177 = vand.u32 2147483647, %v1167
    %vm1178 = vcmp.eq.f32.partialorder %v1177, 8.507059e+37
    %v1179 = vand.u32 %v1167, 2147483648
    %v1180 = vor.u32 1.1754944e-38, %v1179
    %v1181 = vsel %vm1178, %v1180, %v1176
    %v1182 = vmul.f32 1.0, %v1181
    %v1183 = vmul.f32 %v1162, %v1141
    %v1184 = vadd.f32 %v263, %v1183
    %v1185 = vtanh.pop %v1184
    %v1186 = vsub.f32 1.0, %v1182
    %v1187 = vmul.f32 %v1186, %v1185
    %v1188 = vmul.f32 %v1182, %v1080
    %v1189 = vadd.f32 %v1187, %v1188
    %s1190 = scalar_lea.vmem [#allocation2], 56
    %1191 = vst [vmem:[%s1190] sm:$0xff] %v1189
    %v1192 = vld [vmem:[#allocation2] sm:$0xff]
    %v1193 = vld [vmem:[#allocation2 + $0x8] sm:$0xff]
    %v1194 = vld [vmem:[#allocation2 + $0x10] sm:$0xff]
    %v1195 = vld [vmem:[#allocation2 + $0x18] sm:$0xff]
    %v1196 = vld [vmem:[#allocation2 + $0x20] sm:$0xff]
    %v1197 = vld [vmem:[#allocation2 + $0x28] sm:$0xff]
    %v1198 = vld [vmem:[#allocation2 + $0x30] sm:$0xff]
    %v1199 = vld [vmem:[#allocation2 + $0x38] sm:$0xff]
    %v1200 = vld [vmem:[#allocation6] sm:$0xff]
    %v1201 = vld [vmem:[#allocation6 + $0x8] sm:$0xff]
    %v1202 = vld [vmem:[#allocation6 + $0x10] sm:$0xff]
    %v1203 = vld [vmem:[#allocation6 + $0x18] sm:$0xff]
    %v1204 = vld [vmem:[#allocation6 + $0x20] sm:$0xff]
    %v1205 = vld [vmem:[#allocation6 + $0x28] sm:$0xff]
    %v1206 = vld [vmem:[#allocation6 + $0x30] sm:$0xff]
    %v1207 = vld [vmem:[#allocation6 + $0x38] sm:$0xff]
    %v1208 = vld [vmem:[#allocation6 + $0x40] sm:$0xff]
    %v1209 = vld [vmem:[#allocation6 + $0x48] sm:$0xff]
    %v1210 = vld [vmem:[#allocation6 + $0x50] sm:$0xff]
    %v1211 = vld [vmem:[#allocation6 + $0x58] sm:$0xff]
    %v1212 = vld [vmem:[#allocation6 + $0x60] sm:$0xff]
    %v1213 = vld [vmem:[#allocation6 + $0x68] sm:$0xff]
    %v1214 = vld [vmem:[#allocation6 + $0x70] sm:$0xff]
    %v1215 = vld [vmem:[#allocation6 + $0x78] sm:$0xff]
    %v1216 = vld [vmem:[#allocation6 + $0x80] sm:$0xff]
    %v1217 = vld [vmem:[#allocation6 + $0x88] sm:$0xff]
    %v1218 = vld [vmem:[#allocation6 + $0x90] sm:$0xff]
    %v1219 = vld [vmem:[#allocation6 + $0x98] sm:$0xff]
    %v1220 = vld [vmem:[#allocation6 + $0xa0] sm:$0xff]
    %v1221 = vld [vmem:[#allocation6 + $0xa8] sm:$0xff]
    %v1222 = vld [vmem:[#allocation6 + $0xb0] sm:$0xff]
    %v1223 = vld [vmem:[#allocation6 + $0xb8] sm:$0xff]
    %v1224 = vld [vmem:[#allocation6 + $0xc0] sm:$0xff]
    %v1225 = vld [vmem:[#allocation6 + $0xc8] sm:$0xff]
    %v1226 = vld [vmem:[#allocation6 + $0xd0] sm:$0xff]
    %v1227 = vld [vmem:[#allocation6 + $0xd8] sm:$0xff]
    %v1228 = vld [vmem:[#allocation6 + $0xe0] sm:$0xff]
    %v1229 = vld [vmem:[#allocation6 + $0xe8] sm:$0xff]
    %v1230 = vld [vmem:[#allocation6 + $0xf0] sm:$0xff]
    %v1231 = vld [vmem:[#allocation6 + $0xf8] sm:$0xff]
    %v1232 = vld [vmem:[#allocation6 + $0x100] sm:$0xff]
    %v1233 = vld [vmem:[#allocation6 + $0x108] sm:$0xff]
    %v1234 = vld [vmem:[#allocation6 + $0x110] sm:$0xff]
    %v1235 = vld [vmem:[#allocation6 + $0x118] sm:$0xff]
    %v1236 = vld [vmem:[#allocation6 + $0x120] sm:$0xff]
    %v1237 = vld [vmem:[#allocation6 + $0x128] sm:$0xff]
    %v1238 = vld [vmem:[#allocation6 + $0x130] sm:$0xff]
    %v1239 = vld [vmem:[#allocation6 + $0x138] sm:$0xff]
    %v1240 = vld [vmem:[#allocation6 + $0x140] sm:$0xff]
    %v1241 = vld [vmem:[#allocation6 + $0x148] sm:$0xff]
    %v1242 = vld [vmem:[#allocation6 + $0x150] sm:$0xff]
    %v1243 = vld [vmem:[#allocation6 + $0x158] sm:$0xff]
    %v1244 = vld [vmem:[#allocation6 + $0x160] sm:$0xff]
    %v1245 = vld [vmem:[#allocation6 + $0x168] sm:$0xff]
    %v1246 = vld [vmem:[#allocation6 + $0x170] sm:$0xff]
    %v1247 = vld [vmem:[#allocation6 + $0x178] sm:$0xff]
    %s1248 = scalar_lea.vmem %s4, 3
    %v1249 = vld [vmem:[%s1248] sm:$0x7]
    %v1251 = vperm.slane %v1249, 0
    %v1252 = vperm.slane %v1249, 1
    %v1253 = vperm.slane %v1249, 2
    %1257 = vmatpush.msra.mxu0 %v1245
    %1258 = vmatpush.msra.mxu0 %v1242
    %1259 = vmatpush.msra.mxu0 %v1239
    %1260 = vmatpush.msra.mxu0 %v1236
    %1261 = vmatpush.msra.mxu0 %v1233
    %1262 = vmatpush.msra.mxu0 %v1230
    %1263 = vmatpush.msra.mxu0 %v1227
    %1264 = vmatpush.msra.mxu0 %v1224
    %1265 = vmatpush.msra.mxu0 %v1221
    %1266 = vmatpush.msra.mxu0 %v1218
    %1267 = vmatpush.msra.mxu0 %v1215
    %1268 = vmatpush.msra.mxu0 %v1212
    %1269 = vmatpush.msra.mxu0 %v1209
    %1270 = vmatpush.msra.mxu0 %v1206
    %1271 = vmatpush.msra.mxu0 %v1203
    %1272 = vmatpush.msra.mxu0 %v1200
    %1273 = vmatmul.f32.gmra.mxu0 %v1192
    %v1274 = vpop.f32.mrf.mxu0
    %v1275 = vadd.f32 %v1251, %v1274
    %1276 = vmatmul.f32.gmra.mxu0 %v1193
    %v1277 = vpop.f32.mrf.mxu0
    %v1278 = vadd.f32 %v1251, %v1277
    %1279 = vmatmul.f32.gmra.mxu0 %v1194
    %v1280 = vpop.f32.mrf.mxu0
    %v1281 = vadd.f32 %v1251, %v1280
    %1282 = vmatmul.f32.gmra.mxu0 %v1195
    %v1283 = vpop.f32.mrf.mxu0
    %v1284 = vadd.f32 %v1251, %v1283
    %1285 = vmatmul.f32.gmra.mxu0 %v1196
    %v1286 = vpop.f32.mrf.mxu0
    %v1287 = vadd.f32 %v1251, %v1286
    %1288 = vmatmul.f32.gmra.mxu0 %v1197
    %v1289 = vpop.f32.mrf.mxu0
    %v1290 = vadd.f32 %v1251, %v1289
    %1291 = vmatmul.f32.gmra.mxu0 %v1198
    %v1292 = vpop.f32.mrf.mxu0
    %v1293 = vadd.f32 %v1251, %v1292
    %1294 = vmatmul.f32.gmra.mxu0 %v1199
    %v1295 = vpop.f32.mrf.mxu0
    %v1296 = vadd.f32 %v1251, %v1295
    %1297 = vdwg.mxu0
    %1298 = vmatpush.msra.mxu0 %v1246
    %1299 = vmatpush.msra.mxu0 %v1243
    %1300 = vmatpush.msra.mxu0 %v1240
    %1301 = vmatpush.msra.mxu0 %v1237
    %1302 = vmatpush.msra.mxu0 %v1234
    %1303 = vmatpush.msra.mxu0 %v1231
    %1304 = vmatpush.msra.mxu0 %v1228
    %1305 = vmatpush.msra.mxu0 %v1225
    %1306 = vmatpush.msra.mxu0 %v1222
    %1307 = vmatpush.msra.mxu0 %v1219
    %1308 = vmatpush.msra.mxu0 %v1216
    %1309 = vmatpush.msra.mxu0 %v1213
    %1310 = vmatpush.msra.mxu0 %v1210
    %1311 = vmatpush.msra.mxu0 %v1207
    %1312 = vmatpush.msra.mxu0 %v1204
    %1313 = vmatpush.msra.mxu0 %v1201
    %1314 = vmatmul.f32.gmra.mxu0 %v1192
    %v1315 = vpop.f32.mrf.mxu0
    %v1316 = vadd.f32 %v1252, %v1315
    %1317 = vmatmul.f32.gmra.mxu0 %v1193
    %v1318 = vpop.f32.mrf.mxu0
    %v1319 = vadd.f32 %v1252, %v1318
    %1320 = vmatmul.f32.gmra.mxu0 %v1194
    %v1321 = vpop.f32.mrf.mxu0
    %v1322 = vadd.f32 %v1252, %v1321
    %1323 = vmatmul.f32.gmra.mxu0 %v1195
    %v1324 = vpop.f32.mrf.mxu0
    %v1325 = vadd.f32 %v1252, %v1324
    %1326 = vmatmul.f32.gmra.mxu0 %v1196
    %v1327 = vpop.f32.mrf.mxu0
    %v1328 = vadd.f32 %v1252, %v1327
    %1329 = vmatmul.f32.gmra.mxu0 %v1197
    %v1330 = vpop.f32.mrf.mxu0
    %v1331 = vadd.f32 %v1252, %v1330
    %1332 = vmatmul.f32.gmra.mxu0 %v1198
    %v1333 = vpop.f32.mrf.mxu0
    %v1334 = vadd.f32 %v1252, %v1333
    %1335 = vmatmul.f32.gmra.mxu0 %v1199
    %v1336 = vpop.f32.mrf.mxu0
    %v1337 = vadd.f32 %v1252, %v1336
    %1338 = vdwg.mxu0
    %1339 = vmatpush.msra.mxu0 %v1247
    %1340 = vmatpush.msra.mxu0 %v1244
    %1341 = vmatpush.msra.mxu0 %v1241
    %1342 = vmatpush.msra.mxu0 %v1238
    %1343 = vmatpush.msra.mxu0 %v1235
    %1344 = vmatpush.msra.mxu0 %v1232
    %1345 = vmatpush.msra.mxu0 %v1229
    %1346 = vmatpush.msra.mxu0 %v1226
    %1347 = vmatpush.msra.mxu0 %v1223
    %1348 = vmatpush.msra.mxu0 %v1220
    %1349 = vmatpush.msra.mxu0 %v1217
    %1350 = vmatpush.msra.mxu0 %v1214
    %1351 = vmatpush.msra.mxu0 %v1211
    %1352 = vmatpush.msra.mxu0 %v1208
    %1353 = vmatpush.msra.mxu0 %v1205
    %1354 = vmatpush.msra.mxu0 %v1202
    %1355 = vmatmul.f32.gmra.mxu0 %v1192
    %v1356 = vpop.f32.mrf.mxu0
    %v1357 = vadd.f32 %v1253, %v1356
    %1358 = vmatmul.f32.gmra.mxu0 %v1193
    %v1359 = vpop.f32.mrf.mxu0
    %v1360 = vadd.f32 %v1253, %v1359
    %1361 = vmatmul.f32.gmra.mxu0 %v1194
    %v1362 = vpop.f32.mrf.mxu0
    %v1363 = vadd.f32 %v1253, %v1362
    %1364 = vmatmul.f32.gmra.mxu0 %v1195
    %v1365 = vpop.f32.mrf.mxu0
    %v1366 = vadd.f32 %v1253, %v1365
    %1367 = vmatmul.f32.gmra.mxu0 %v1196
    %v1368 = vpop.f32.mrf.mxu0
    %v1369 = vadd.f32 %v1253, %v1368
    %1370 = vmatmul.f32.gmra.mxu0 %v1197
    %v1371 = vpop.f32.mrf.mxu0
    %v1372 = vadd.f32 %v1253, %v1371
    %1373 = vmatmul.f32.gmra.mxu0 %v1198
    %v1374 = vpop.f32.mrf.mxu0
    %v1375 = vadd.f32 %v1253, %v1374
    %1376 = vmatmul.f32.gmra.mxu0 %v1199
    %v1377 = vpop.f32.mrf.mxu0
    %v1378 = vadd.f32 %v1253, %v1377
    %1379 = vdwg.mxu0
    %s1380 = scalar_lea.vmem [#allocation8], 384
    %v1381 = vld [vmem:[%s1380] sm:$0xff]
    %v1382 = vld [vmem:[%s1380 + $0x8] sm:$0xff]
    %v1383 = vld [vmem:[%s1380 + $0x10] sm:$0xff]
    %v1384 = vld [vmem:[%s1380 + $0x18] sm:$0xff]
    %v1385 = vld [vmem:[%s1380 + $0x20] sm:$0xff]
    %v1386 = vld [vmem:[%s1380 + $0x28] sm:$0xff]
    %v1387 = vld [vmem:[%s1380 + $0x30] sm:$0xff]
    %v1388 = vld [vmem:[%s1380 + $0x38] sm:$0xff]
    %v1389 = vld [vmem:[%s1380 + $0x40] sm:$0xff]
    %v1390 = vld [vmem:[%s1380 + $0x48] sm:$0xff]
    %v1391 = vld [vmem:[%s1380 + $0x50] sm:$0xff]
    %v1392 = vld [vmem:[%s1380 + $0x58] sm:$0xff]
    %v1393 = vld [vmem:[%s1380 + $0x60] sm:$0xff]
    %v1394 = vld [vmem:[%s1380 + $0x68] sm:$0xff]
    %v1395 = vld [vmem:[%s1380 + $0x70] sm:$0xff]
    %v1396 = vld [vmem:[%s1380 + $0x78] sm:$0xff]
    %v1397 = vld [vmem:[%s1380 + $0x80] sm:$0xff]
    %v1398 = vld [vmem:[%s1380 + $0x88] sm:$0xff]
    %v1399 = vld [vmem:[%s1380 + $0x90] sm:$0xff]
    %v1400 = vld [vmem:[%s1380 + $0x98] sm:$0xff]
    %v1401 = vld [vmem:[%s1380 + $0xa0] sm:$0xff]
    %v1402 = vld [vmem:[%s1380 + $0xa8] sm:$0xff]
    %v1403 = vld [vmem:[%s1380 + $0xb0] sm:$0xff]
    %v1404 = vld [vmem:[%s1380 + $0xb8] sm:$0xff]
    %v1405 = vld [vmem:[%s1380 + $0xc0] sm:$0xff]
    %v1406 = vld [vmem:[%s1380 + $0xc8] sm:$0xff]
    %v1407 = vld [vmem:[%s1380 + $0xd0] sm:$0xff]
    %v1408 = vld [vmem:[%s1380 + $0xd8] sm:$0xff]
    %v1409 = vld [vmem:[%s1380 + $0xe0] sm:$0xff]
    %v1410 = vld [vmem:[%s1380 + $0xe8] sm:$0xff]
    %v1411 = vld [vmem:[%s1380 + $0xf0] sm:$0xff]
    %v1412 = vld [vmem:[%s1380 + $0xf8] sm:$0xff]
    %v1413 = vld [vmem:[%s1380 + $0x100] sm:$0xff]
    %v1414 = vld [vmem:[%s1380 + $0x108] sm:$0xff]
    %v1415 = vld [vmem:[%s1380 + $0x110] sm:$0xff]
    %v1416 = vld [vmem:[%s1380 + $0x118] sm:$0xff]
    %v1417 = vld [vmem:[%s1380 + $0x120] sm:$0xff]
    %v1418 = vld [vmem:[%s1380 + $0x128] sm:$0xff]
    %v1419 = vld [vmem:[%s1380 + $0x130] sm:$0xff]
    %v1420 = vld [vmem:[%s1380 + $0x138] sm:$0xff]
    %v1421 = vld [vmem:[%s1380 + $0x140] sm:$0xff]
    %v1422 = vld [vmem:[%s1380 + $0x148] sm:$0xff]
    %v1423 = vld [vmem:[%s1380 + $0x150] sm:$0xff]
    %v1424 = vld [vmem:[%s1380 + $0x158] sm:$0xff]
    %v1425 = vld [vmem:[%s1380 + $0x160] sm:$0xff]
    %v1426 = vld [vmem:[%s1380 + $0x168] sm:$0xff]
    %v1427 = vld [vmem:[%s1380 + $0x170] sm:$0xff]
    %v1428 = vld [vmem:[%s1380 + $0x178] sm:$0xff]
    %s1429 = scalar_lea.vmem %s5, 3
    %v1430 = vld [vmem:[%s1429] sm:$0x7]
    %v1432 = vperm.slane %v1430, 0
    %v1433 = vperm.slane %v1430, 1
    %v1434 = vperm.slane %v1430, 2
    %1438 = vmatpush.msra.mxu0 %v1426
    %1439 = vmatpush.msra.mxu0 %v1423
    %1440 = vmatpush.msra.mxu0 %v1420
    %1441 = vmatpush.msra.mxu0 %v1417
    %1442 = vmatpush.msra.mxu0 %v1414
    %1443 = vmatpush.msra.mxu0 %v1411
    %1444 = vmatpush.msra.mxu0 %v1408
    %1445 = vmatpush.msra.mxu0 %v1405
    %1446 = vmatpush.msra.mxu0 %v1402
    %1447 = vmatpush.msra.mxu0 %v1399
    %1448 = vmatpush.msra.mxu0 %v1396
    %1449 = vmatpush.msra.mxu0 %v1393
    %1450 = vmatpush.msra.mxu0 %v1390
    %1451 = vmatpush.msra.mxu0 %v1387
    %1452 = vmatpush.msra.mxu0 %v1384
    %1453 = vmatpush.msra.mxu0 %v1381
    %1454 = vmatmul.f32.gmra.mxu0 0.0
    %v1455 = vpop.f32.mrf.mxu0
    %v1456 = vadd.f32 %v1432, %v1455
    %1457 = vdwg.mxu0
    %1458 = vmatpush.msra.mxu0 %v1427
    %1459 = vmatpush.msra.mxu0 %v1424
    %1460 = vmatpush.msra.mxu0 %v1421
    %1461 = vmatpush.msra.mxu0 %v1418
    %1462 = vmatpush.msra.mxu0 %v1415
    %1463 = vmatpush.msra.mxu0 %v1412
    %1464 = vmatpush.msra.mxu0 %v1409
    %1465 = vmatpush.msra.mxu0 %v1406
    %1466 = vmatpush.msra.mxu0 %v1403
    %1467 = vmatpush.msra.mxu0 %v1400
    %1468 = vmatpush.msra.mxu0 %v1397
    %1469 = vmatpush.msra.mxu0 %v1394
    %1470 = vmatpush.msra.mxu0 %v1391
    %1471 = vmatpush.msra.mxu0 %v1388
    %1472 = vmatpush.msra.mxu0 %v1385
    %1473 = vmatpush.msra.mxu0 %v1382
    %1474 = vmatmul.f32.gmra.mxu0 0.0
    %v1475 = vpop.f32.mrf.mxu0
    %v1476 = vadd.f32 %v1433, %v1475
    %1477 = vdwg.mxu0
    %1478 = vmatpush.msra.mxu0 %v1428
    %1479 = vmatpush.msra.mxu0 %v1425
    %1480 = vmatpush.msra.mxu0 %v1422
    %1481 = vmatpush.msra.mxu0 %v1419
    %1482 = vmatpush.msra.mxu0 %v1416
    %1483 = vmatpush.msra.mxu0 %v1413
    %1484 = vmatpush.msra.mxu0 %v1410
    %1485 = vmatpush.msra.mxu0 %v1407
    %1486 = vmatpush.msra.mxu0 %v1404
    %1487 = vmatpush.msra.mxu0 %v1401
    %1488 = vmatpush.msra.mxu0 %v1398
    %1489 = vmatpush.msra.mxu0 %v1395
    %1490 = vmatpush.msra.mxu0 %v1392
    %1491 = vmatpush.msra.mxu0 %v1389
    %1492 = vmatpush.msra.mxu0 %v1386
    %1493 = vmatpush.msra.mxu0 %v1383
    %1494 = vmatmul.f32.gmra.mxu0 0.0
    %v1495 = vpop.f32.mrf.mxu0
    %v1496 = vadd.f32 %v1434, %v1495
    %1497 = vdwg.mxu0
    %v1498 = vadd.f32 %v1275, %v1456
    %v1499 = vxor.u32 %v1498, 2147483648
    %v1500 = vmul.f32 %v1499, 1.442695
    %v1501 = vpow.pop %v1500
    %v1502 = vadd.f32 %v1501, 1.0
    %v1503 = vrcp.pop %v1502
    %v1504 = vmul.f32 %v1502, %v1503
    %v1505 = vsub.f32 1.0, %v1504
    %v1506 = vmul.f32 %v1503, %v1505
    %v1507 = vadd.f32 %v1503, %v1506
    %vm1508 = vweird.f32 %v1502
    %vm1509 = vweird.f32 %v1503
    %vm1510 = vmor %vm1508, %vm1509
    %v1511 = vsel %vm1510, %v1503, %v1507
    %v1512 = vand.u32 2147483647, %v1502
    %vm1513 = vcmp.eq.f32.partialorder %v1512, 8.507059e+37
    %v1514 = vand.u32 %v1502, 2147483648
    %v1515 = vor.u32 1.1754944e-38, %v1514
    %v1516 = vsel %vm1513, %v1515, %v1511
    %v1517 = vmul.f32 1.0, %v1516
    %v1518 = vadd.f32 %v1316, %v1476
    %v1519 = vxor.u32 %v1518, 2147483648
    %v1520 = vmul.f32 %v1519, 1.442695
    %v1521 = vpow.pop %v1520
    %v1522 = vadd.f32 %v1521, 1.0
    %v1523 = vrcp.pop %v1522
    %v1524 = vmul.f32 %v1522, %v1523
    %v1525 = vsub.f32 1.0, %v1524
    %v1526 = vmul.f32 %v1523, %v1525
    %v1527 = vadd.f32 %v1523, %v1526
    %vm1528 = vweird.f32 %v1522
    %vm1529 = vweird.f32 %v1523
    %vm1530 = vmor %vm1528, %vm1529
    %v1531 = vsel %vm1530, %v1523, %v1527
    %v1532 = vand.u32 2147483647, %v1522
    %vm1533 = vcmp.eq.f32.partialorder %v1532, 8.507059e+37
    %v1534 = vand.u32 %v1522, 2147483648
    %v1535 = vor.u32 1.1754944e-38, %v1534
    %v1536 = vsel %vm1533, %v1535, %v1531
    %v1537 = vmul.f32 1.0, %v1536
    %v1538 = vmul.f32 %v1517, %v1496
    %v1539 = vadd.f32 %v1357, %v1538
    %v1540 = vtanh.pop %v1539
    %v1541 = vsub.f32 1.0, %v1537
    %v1542 = vmul.f32 %v1541, %v1540
    %v1543 = vmul.f32 %v1537, 0.0
    %v1544 = vadd.f32 %v1542, %v1543
    %1545 = vst [vmem:[#allocation2] sm:$0xff] %v1544
    %1546 = vmatpush.msra.mxu0 %v1426
    %1547 = vmatpush.msra.mxu0 %v1423
    %1548 = vmatpush.msra.mxu0 %v1420
    %1549 = vmatpush.msra.mxu0 %v1417
    %1550 = vmatpush.msra.mxu0 %v1414
    %1551 = vmatpush.msra.mxu0 %v1411
    %1552 = vmatpush.msra.mxu0 %v1408
    %1553 = vmatpush.msra.mxu0 %v1405
    %1554 = vmatpush.msra.mxu0 %v1402
    %1555 = vmatpush.msra.mxu0 %v1399
    %1556 = vmatpush.msra.mxu0 %v1396
    %1557 = vmatpush.msra.mxu0 %v1393
    %1558 = vmatpush.msra.mxu0 %v1390
    %1559 = vmatpush.msra.mxu0 %v1387
    %1560 = vmatpush.msra.mxu0 %v1384
    %1561 = vmatpush.msra.mxu0 %v1381
    %1562 = vmatmul.f32.gmra.mxu0 %v1544
    %v1563 = vpop.f32.mrf.mxu0
    %v1564 = vadd.f32 %v1432, %v1563
    %1565 = vdwg.mxu0
    %1566 = vmatpush.msra.mxu0 %v1427
    %1567 = vmatpush.msra.mxu0 %v1424
    %1568 = vmatpush.msra.mxu0 %v1421
    %1569 = vmatpush.msra.mxu0 %v1418
    %1570 = vmatpush.msra.mxu0 %v1415
    %1571 = vmatpush.msra.mxu0 %v1412
    %1572 = vmatpush.msra.mxu0 %v1409
    %1573 = vmatpush.msra.mxu0 %v1406
    %1574 = vmatpush.msra.mxu0 %v1403
    %1575 = vmatpush.msra.mxu0 %v1400
    %1576 = vmatpush.msra.mxu0 %v1397
    %1577 = vmatpush.msra.mxu0 %v1394
    %1578 = vmatpush.msra.mxu0 %v1391
    %1579 = vmatpush.msra.mxu0 %v1388
    %1580 = vmatpush.msra.mxu0 %v1385
    %1581 = vmatpush.msra.mxu0 %v1382
    %1582 = vmatmul.f32.gmra.mxu0 %v1544
    %v1583 = vpop.f32.mrf.mxu0
    %v1584 = vadd.f32 %v1433, %v1583
    %1585 = vdwg.mxu0
    %1586 = vmatpush.msra.mxu0 %v1428
    %1587 = vmatpush.msra.mxu0 %v1425
    %1588 = vmatpush.msra.mxu0 %v1422
    %1589 = vmatpush.msra.mxu0 %v1419
    %1590 = vmatpush.msra.mxu0 %v1416
    %1591 = vmatpush.msra.mxu0 %v1413
    %1592 = vmatpush.msra.mxu0 %v1410
    %1593 = vmatpush.msra.mxu0 %v1407
    %1594 = vmatpush.msra.mxu0 %v1404
    %1595 = vmatpush.msra.mxu0 %v1401
    %1596 = vmatpush.msra.mxu0 %v1398
    %1597 = vmatpush.msra.mxu0 %v1395
    %1598 = vmatpush.msra.mxu0 %v1392
    %1599 = vmatpush.msra.mxu0 %v1389
    %1600 = vmatpush.msra.mxu0 %v1386
    %1601 = vmatpush.msra.mxu0 %v1383
    %1602 = vmatmul.f32.gmra.mxu0 %v1544
    %v1603 = vpop.f32.mrf.mxu0
    %v1604 = vadd.f32 %v1434, %v1603
    %1605 = vdwg.mxu0
    %v1606 = vadd.f32 %v1278, %v1564
    %v1607 = vxor.u32 %v1606, 2147483648
    %v1608 = vmul.f32 %v1607, 1.442695
    %v1609 = vpow.pop %v1608
    %v1610 = vadd.f32 %v1609, 1.0
    %v1611 = vrcp.pop %v1610
    %v1612 = vmul.f32 %v1610, %v1611
    %v1613 = vsub.f32 1.0, %v1612
    %v1614 = vmul.f32 %v1611, %v1613
    %v1615 = vadd.f32 %v1611, %v1614
    %vm1616 = vweird.f32 %v1610
    %vm1617 = vweird.f32 %v1611
    %vm1618 = vmor %vm1616, %vm1617
    %v1619 = vsel %vm1618, %v1611, %v1615
    %v1620 = vand.u32 2147483647, %v1610
    %vm1621 = vcmp.eq.f32.partialorder %v1620, 8.507059e+37
    %v1622 = vand.u32 %v1610, 2147483648
    %v1623 = vor.u32 1.1754944e-38, %v1622
    %v1624 = vsel %vm1621, %v1623, %v1619
    %v1625 = vmul.f32 1.0, %v1624
    %v1626 = vadd.f32 %v1319, %v1584
    %v1627 = vxor.u32 %v1626, 2147483648
    %v1628 = vmul.f32 %v1627, 1.442695
    %v1629 = vpow.pop %v1628
    %v1630 = vadd.f32 %v1629, 1.0
    %v1631 = vrcp.pop %v1630
    %v1632 = vmul.f32 %v1630, %v1631
    %v1633 = vsub.f32 1.0, %v1632
    %v1634 = vmul.f32 %v1631, %v1633
    %v1635 = vadd.f32 %v1631, %v1634
    %vm1636 = vweird.f32 %v1630
    %vm1637 = vweird.f32 %v1631
    %vm1638 = vmor %vm1636, %vm1637
    %v1639 = vsel %vm1638, %v1631, %v1635
    %v1640 = vand.u32 2147483647, %v1630
    %vm1641 = vcmp.eq.f32.partialorder %v1640, 8.507059e+37
    %v1642 = vand.u32 %v1630, 2147483648
    %v1643 = vor.u32 1.1754944e-38, %v1642
    %v1644 = vsel %vm1641, %v1643, %v1639
    %v1645 = vmul.f32 1.0, %v1644
    %v1646 = vmul.f32 %v1625, %v1604
    %v1647 = vadd.f32 %v1360, %v1646
    %v1648 = vtanh.pop %v1647
    %v1649 = vsub.f32 1.0, %v1645
    %v1650 = vmul.f32 %v1649, %v1648
    %v1651 = vmul.f32 %v1645, %v1544
    %v1652 = vadd.f32 %v1650, %v1651
    %1653 = vst [vmem:[%s536] sm:$0xff] %v1652
    %1654 = vmatpush.msra.mxu0 %v1426
    %1655 = vmatpush.msra.mxu0 %v1423
    %1656 = vmatpush.msra.mxu0 %v1420
    %1657 = vmatpush.msra.mxu0 %v1417
    %1658 = vmatpush.msra.mxu0 %v1414
    %1659 = vmatpush.msra.mxu0 %v1411
    %1660 = vmatpush.msra.mxu0 %v1408
    %1661 = vmatpush.msra.mxu0 %v1405
    %1662 = vmatpush.msra.mxu0 %v1402
    %1663 = vmatpush.msra.mxu0 %v1399
    %1664 = vmatpush.msra.mxu0 %v1396
    %1665 = vmatpush.msra.mxu0 %v1393
    %1666 = vmatpush.msra.mxu0 %v1390
    %1667 = vmatpush.msra.mxu0 %v1387
    %1668 = vmatpush.msra.mxu0 %v1384
    %1669 = vmatpush.msra.mxu0 %v1381
    %1670 = vmatmul.f32.gmra.mxu0 %v1652
    %v1671 = vpop.f32.mrf.mxu0
    %v1672 = vadd.f32 %v1432, %v1671
    %1673 = vdwg.mxu0
    %1674 = vmatpush.msra.mxu0 %v1427
    %1675 = vmatpush.msra.mxu0 %v1424
    %1676 = vmatpush.msra.mxu0 %v1421
    %1677 = vmatpush.msra.mxu0 %v1418
    %1678 = vmatpush.msra.mxu0 %v1415
    %1679 = vmatpush.msra.mxu0 %v1412
    %1680 = vmatpush.msra.mxu0 %v1409
    %1681 = vmatpush.msra.mxu0 %v1406
    %1682 = vmatpush.msra.mxu0 %v1403
    %1683 = vmatpush.msra.mxu0 %v1400
    %1684 = vmatpush.msra.mxu0 %v1397
    %1685 = vmatpush.msra.mxu0 %v1394
    %1686 = vmatpush.msra.mxu0 %v1391
    %1687 = vmatpush.msra.mxu0 %v1388
    %1688 = vmatpush.msra.mxu0 %v1385
    %1689 = vmatpush.msra.mxu0 %v1382
    %1690 = vmatmul.f32.gmra.mxu0 %v1652
    %v1691 = vpop.f32.mrf.mxu0
    %v1692 = vadd.f32 %v1433, %v1691
    %1693 = vdwg.mxu0
    %1694 = vmatpush.msra.mxu0 %v1428
    %1695 = vmatpush.msra.mxu0 %v1425
    %1696 = vmatpush.msra.mxu0 %v1422
    %1697 = vmatpush.msra.mxu0 %v1419
    %1698 = vmatpush.msra.mxu0 %v1416
    %1699 = vmatpush.msra.mxu0 %v1413
    %1700 = vmatpush.msra.mxu0 %v1410
    %1701 = vmatpush.msra.mxu0 %v1407
    %1702 = vmatpush.msra.mxu0 %v1404
    %1703 = vmatpush.msra.mxu0 %v1401
    %1704 = vmatpush.msra.mxu0 %v1398
    %1705 = vmatpush.msra.mxu0 %v1395
    %1706 = vmatpush.msra.mxu0 %v1392
    %1707 = vmatpush.msra.mxu0 %v1389
    %1708 = vmatpush.msra.mxu0 %v1386
    %1709 = vmatpush.msra.mxu0 %v1383
    %1710 = vmatmul.f32.gmra.mxu0 %v1652
    %v1711 = vpop.f32.mrf.mxu0
    %v1712 = vadd.f32 %v1434, %v1711
    %1713 = vdwg.mxu0
    %v1714 = vadd.f32 %v1281, %v1672
    %v1715 = vxor.u32 %v1714, 2147483648
    %v1716 = vmul.f32 %v1715, 1.442695
    %v1717 = vpow.pop %v1716
    %v1718 = vadd.f32 %v1717, 1.0
    %v1719 = vrcp.pop %v1718
    %v1720 = vmul.f32 %v1718, %v1719
    %v1721 = vsub.f32 1.0, %v1720
    %v1722 = vmul.f32 %v1719, %v1721
    %v1723 = vadd.f32 %v1719, %v1722
    %vm1724 = vweird.f32 %v1718
    %vm1725 = vweird.f32 %v1719
    %vm1726 = vmor %vm1724, %vm1725
    %v1727 = vsel %vm1726, %v1719, %v1723
    %v1728 = vand.u32 2147483647, %v1718
    %vm1729 = vcmp.eq.f32.partialorder %v1728, 8.507059e+37
    %v1730 = vand.u32 %v1718, 2147483648
    %v1731 = vor.u32 1.1754944e-38, %v1730
    %v1732 = vsel %vm1729, %v1731, %v1727
    %v1733 = vmul.f32 1.0, %v1732
    %v1734 = vadd.f32 %v1322, %v1692
    %v1735 = vxor.u32 %v1734, 2147483648
    %v1736 = vmul.f32 %v1735, 1.442695
    %v1737 = vpow.pop %v1736
    %v1738 = vadd.f32 %v1737, 1.0
    %v1739 = vrcp.pop %v1738
    %v1740 = vmul.f32 %v1738, %v1739
    %v1741 = vsub.f32 1.0, %v1740
    %v1742 = vmul.f32 %v1739, %v1741
    %v1743 = vadd.f32 %v1739, %v1742
    %vm1744 = vweird.f32 %v1738
    %vm1745 = vweird.f32 %v1739
    %vm1746 = vmor %vm1744, %vm1745
    %v1747 = vsel %vm1746, %v1739, %v1743
    %v1748 = vand.u32 2147483647, %v1738
    %vm1749 = vcmp.eq.f32.partialorder %v1748, 8.507059e+37
    %v1750 = vand.u32 %v1738, 2147483648
    %v1751 = vor.u32 1.1754944e-38, %v1750
    %v1752 = vsel %vm1749, %v1751, %v1747
    %v1753 = vmul.f32 1.0, %v1752
    %v1754 = vmul.f32 %v1733, %v1712
    %v1755 = vadd.f32 %v1363, %v1754
    %v1756 = vtanh.pop %v1755
    %v1757 = vsub.f32 1.0, %v1753
    %v1758 = vmul.f32 %v1757, %v1756
    %v1759 = vmul.f32 %v1753, %v1652
    %v1760 = vadd.f32 %v1758, %v1759
    %1761 = vst [vmem:[%s645] sm:$0xff] %v1760
    %1762 = vmatpush.msra.mxu0 %v1426
    %1763 = vmatpush.msra.mxu0 %v1423
    %1764 = vmatpush.msra.mxu0 %v1420
    %1765 = vmatpush.msra.mxu0 %v1417
    %1766 = vmatpush.msra.mxu0 %v1414
    %1767 = vmatpush.msra.mxu0 %v1411
    %1768 = vmatpush.msra.mxu0 %v1408
    %1769 = vmatpush.msra.mxu0 %v1405
    %1770 = vmatpush.msra.mxu0 %v1402
    %1771 = vmatpush.msra.mxu0 %v1399
    %1772 = vmatpush.msra.mxu0 %v1396
    %1773 = vmatpush.msra.mxu0 %v1393
    %1774 = vmatpush.msra.mxu0 %v1390
    %1775 = vmatpush.msra.mxu0 %v1387
    %1776 = vmatpush.msra.mxu0 %v1384
    %1777 = vmatpush.msra.mxu0 %v1381
    %1778 = vmatmul.f32.gmra.mxu0 %v1760
    %v1779 = vpop.f32.mrf.mxu0
    %v1780 = vadd.f32 %v1432, %v1779
    %1781 = vdwg.mxu0
    %1782 = vmatpush.msra.mxu0 %v1427
    %1783 = vmatpush.msra.mxu0 %v1424
    %1784 = vmatpush.msra.mxu0 %v1421
    %1785 = vmatpush.msra.mxu0 %v1418
    %1786 = vmatpush.msra.mxu0 %v1415
    %1787 = vmatpush.msra.mxu0 %v1412
    %1788 = vmatpush.msra.mxu0 %v1409
    %1789 = vmatpush.msra.mxu0 %v1406
    %1790 = vmatpush.msra.mxu0 %v1403
    %1791 = vmatpush.msra.mxu0 %v1400
    %1792 = vmatpush.msra.mxu0 %v1397
    %1793 = vmatpush.msra.mxu0 %v1394
    %1794 = vmatpush.msra.mxu0 %v1391
    %1795 = vmatpush.msra.mxu0 %v1388
    %1796 = vmatpush.msra.mxu0 %v1385
    %1797 = vmatpush.msra.mxu0 %v1382
    %1798 = vmatmul.f32.gmra.mxu0 %v1760
    %v1799 = vpop.f32.mrf.mxu0
    %v1800 = vadd.f32 %v1433, %v1799
    %1801 = vdwg.mxu0
    %1802 = vmatpush.msra.mxu0 %v1428
    %1803 = vmatpush.msra.mxu0 %v1425
    %1804 = vmatpush.msra.mxu0 %v1422
    %1805 = vmatpush.msra.mxu0 %v1419
    %1806 = vmatpush.msra.mxu0 %v1416
    %1807 = vmatpush.msra.mxu0 %v1413
    %1808 = vmatpush.msra.mxu0 %v1410
    %1809 = vmatpush.msra.mxu0 %v1407
    %1810 = vmatpush.msra.mxu0 %v1404
    %1811 = vmatpush.msra.mxu0 %v1401
    %1812 = vmatpush.msra.mxu0 %v1398
    %1813 = vmatpush.msra.mxu0 %v1395
    %1814 = vmatpush.msra.mxu0 %v1392
    %1815 = vmatpush.msra.mxu0 %v1389
    %1816 = vmatpush.msra.mxu0 %v1386
    %1817 = vmatpush.msra.mxu0 %v1383
    %1818 = vmatmul.f32.gmra.mxu0 %v1760
    %v1819 = vpop.f32.mrf.mxu0
    %v1820 = vadd.f32 %v1434, %v1819
    %1821 = vdwg.mxu0
    %v1822 = vadd.f32 %v1284, %v1780
    %v1823 = vxor.u32 %v1822, 2147483648
    %v1824 = vmul.f32 %v1823, 1.442695
    %v1825 = vpow.pop %v1824
    %v1826 = vadd.f32 %v1825, 1.0
    %v1827 = vrcp.pop %v1826
    %v1828 = vmul.f32 %v1826, %v1827
    %v1829 = vsub.f32 1.0, %v1828
    %v1830 = vmul.f32 %v1827, %v1829
    %v1831 = vadd.f32 %v1827, %v1830
    %vm1832 = vweird.f32 %v1826
    %vm1833 = vweird.f32 %v1827
    %vm1834 = vmor %vm1832, %vm1833
    %v1835 = vsel %vm1834, %v1827, %v1831
    %v1836 = vand.u32 2147483647, %v1826
    %vm1837 = vcmp.eq.f32.partialorder %v1836, 8.507059e+37
    %v1838 = vand.u32 %v1826, 2147483648
    %v1839 = vor.u32 1.1754944e-38, %v1838
    %v1840 = vsel %vm1837, %v1839, %v1835
    %v1841 = vmul.f32 1.0, %v1840
    %v1842 = vadd.f32 %v1325, %v1800
    %v1843 = vxor.u32 %v1842, 2147483648
    %v1844 = vmul.f32 %v1843, 1.442695
    %v1845 = vpow.pop %v1844
    %v1846 = vadd.f32 %v1845, 1.0
    %v1847 = vrcp.pop %v1846
    %v1848 = vmul.f32 %v1846, %v1847
    %v1849 = vsub.f32 1.0, %v1848
    %v1850 = vmul.f32 %v1847, %v1849
    %v1851 = vadd.f32 %v1847, %v1850
    %vm1852 = vweird.f32 %v1846
    %vm1853 = vweird.f32 %v1847
    %vm1854 = vmor %vm1852, %vm1853
    %v1855 = vsel %vm1854, %v1847, %v1851
    %v1856 = vand.u32 2147483647, %v1846
    %vm1857 = vcmp.eq.f32.partialorder %v1856, 8.507059e+37
    %v1858 = vand.u32 %v1846, 2147483648
    %v1859 = vor.u32 1.1754944e-38, %v1858
    %v1860 = vsel %vm1857, %v1859, %v1855
    %v1861 = vmul.f32 1.0, %v1860
    %v1862 = vmul.f32 %v1841, %v1820
    %v1863 = vadd.f32 %v1366, %v1862
    %v1864 = vtanh.pop %v1863
    %v1865 = vsub.f32 1.0, %v1861
    %v1866 = vmul.f32 %v1865, %v1864
    %v1867 = vmul.f32 %v1861, %v1760
    %v1868 = vadd.f32 %v1866, %v1867
    %1869 = vst [vmem:[%s754] sm:$0xff] %v1868
    %1870 = vmatpush.msra.mxu0 %v1426
    %1871 = vmatpush.msra.mxu0 %v1423
    %1872 = vmatpush.msra.mxu0 %v1420
    %1873 = vmatpush.msra.mxu0 %v1417
    %1874 = vmatpush.msra.mxu0 %v1414
    %1875 = vmatpush.msra.mxu0 %v1411
    %1876 = vmatpush.msra.mxu0 %v1408
    %1877 = vmatpush.msra.mxu0 %v1405
    %1878 = vmatpush.msra.mxu0 %v1402
    %1879 = vmatpush.msra.mxu0 %v1399
    %1880 = vmatpush.msra.mxu0 %v1396
    %1881 = vmatpush.msra.mxu0 %v1393
    %1882 = vmatpush.msra.mxu0 %v1390
    %1883 = vmatpush.msra.mxu0 %v1387
    %1884 = vmatpush.msra.mxu0 %v1384
    %1885 = vmatpush.msra.mxu0 %v1381
    %1886 = vmatmul.f32.gmra.mxu0 %v1868
    %v1887 = vpop.f32.mrf.mxu0
    %v1888 = vadd.f32 %v1432, %v1887
    %1889 = vdwg.mxu0
    %1890 = vmatpush.msra.mxu0 %v1427
    %1891 = vmatpush.msra.mxu0 %v1424
    %1892 = vmatpush.msra.mxu0 %v1421
    %1893 = vmatpush.msra.mxu0 %v1418
    %1894 = vmatpush.msra.mxu0 %v1415
    %1895 = vmatpush.msra.mxu0 %v1412
    %1896 = vmatpush.msra.mxu0 %v1409
    %1897 = vmatpush.msra.mxu0 %v1406
    %1898 = vmatpush.msra.mxu0 %v1403
    %1899 = vmatpush.msra.mxu0 %v1400
    %1900 = vmatpush.msra.mxu0 %v1397
    %1901 = vmatpush.msra.mxu0 %v1394
    %1902 = vmatpush.msra.mxu0 %v1391
    %1903 = vmatpush.msra.mxu0 %v1388
    %1904 = vmatpush.msra.mxu0 %v1385
    %1905 = vmatpush.msra.mxu0 %v1382
    %1906 = vmatmul.f32.gmra.mxu0 %v1868
    %v1907 = vpop.f32.mrf.mxu0
    %v1908 = vadd.f32 %v1433, %v1907
    %1909 = vdwg.mxu0
    %1910 = vmatpush.msra.mxu0 %v1428
    %1911 = vmatpush.msra.mxu0 %v1425
    %1912 = vmatpush.msra.mxu0 %v1422
    %1913 = vmatpush.msra.mxu0 %v1419
    %1914 = vmatpush.msra.mxu0 %v1416
    %1915 = vmatpush.msra.mxu0 %v1413
    %1916 = vmatpush.msra.mxu0 %v1410
    %1917 = vmatpush.msra.mxu0 %v1407
    %1918 = vmatpush.msra.mxu0 %v1404
    %1919 = vmatpush.msra.mxu0 %v1401
    %1920 = vmatpush.msra.mxu0 %v1398
    %1921 = vmatpush.msra.mxu0 %v1395
    %1922 = vmatpush.msra.mxu0 %v1392
    %1923 = vmatpush.msra.mxu0 %v1389
    %1924 = vmatpush.msra.mxu0 %v1386
    %1925 = vmatpush.msra.mxu0 %v1383
    %1926 = vmatmul.f32.gmra.mxu0 %v1868
    %v1927 = vpop.f32.mrf.mxu0
    %v1928 = vadd.f32 %v1434, %v1927
    %1929 = vdwg.mxu0
    %v1930 = vadd.f32 %v1287, %v1888
    %v1931 = vxor.u32 %v1930, 2147483648
    %v1932 = vmul.f32 %v1931, 1.442695
    %v1933 = vpow.pop %v1932
    %v1934 = vadd.f32 %v1933, 1.0
    %v1935 = vrcp.pop %v1934
    %v1936 = vmul.f32 %v1934, %v1935
    %v1937 = vsub.f32 1.0, %v1936
    %v1938 = vmul.f32 %v1935, %v1937
    %v1939 = vadd.f32 %v1935, %v1938
    %vm1940 = vweird.f32 %v1934
    %vm1941 = vweird.f32 %v1935
    %vm1942 = vmor %vm1940, %vm1941
    %v1943 = vsel %vm1942, %v1935, %v1939
    %v1944 = vand.u32 2147483647, %v1934
    %vm1945 = vcmp.eq.f32.partialorder %v1944, 8.507059e+37
    %v1946 = vand.u32 %v1934, 2147483648
    %v1947 = vor.u32 1.1754944e-38, %v1946
    %v1948 = vsel %vm1945, %v1947, %v1943
    %v1949 = vmul.f32 1.0, %v1948
    %v1950 = vadd.f32 %v1328, %v1908
    %v1951 = vxor.u32 %v1950, 2147483648
    %v1952 = vmul.f32 %v1951, 1.442695
    %v1953 = vpow.pop %v1952
    %v1954 = vadd.f32 %v1953, 1.0
    %v1955 = vrcp.pop %v1954
    %v1956 = vmul.f32 %v1954, %v1955
    %v1957 = vsub.f32 1.0, %v1956
    %v1958 = vmul.f32 %v1955, %v1957
    %v1959 = vadd.f32 %v1955, %v1958
    %vm1960 = vweird.f32 %v1954
    %vm1961 = vweird.f32 %v1955
    %vm1962 = vmor %vm1960, %vm1961
    %v1963 = vsel %vm1962, %v1955, %v1959
    %v1964 = vand.u32 2147483647, %v1954
    %vm1965 = vcmp.eq.f32.partialorder %v1964, 8.507059e+37
    %v1966 = vand.u32 %v1954, 2147483648
    %v1967 = vor.u32 1.1754944e-38, %v1966
    %v1968 = vsel %vm1965, %v1967, %v1963
    %v1969 = vmul.f32 1.0, %v1968
    %v1970 = vmul.f32 %v1949, %v1928
    %v1971 = vadd.f32 %v1369, %v1970
    %v1972 = vtanh.pop %v1971
    %v1973 = vsub.f32 1.0, %v1969
    %v1974 = vmul.f32 %v1973, %v1972
    %v1975 = vmul.f32 %v1969, %v1868
    %v1976 = vadd.f32 %v1974, %v1975
    %1977 = vst [vmem:[%s863] sm:$0xff] %v1976
    %1978 = vmatpush.msra.mxu0 %v1426
    %1979 = vmatpush.msra.mxu0 %v1423
    %1980 = vmatpush.msra.mxu0 %v1420
    %1981 = vmatpush.msra.mxu0 %v1417
    %1982 = vmatpush.msra.mxu0 %v1414
    %1983 = vmatpush.msra.mxu0 %v1411
    %1984 = vmatpush.msra.mxu0 %v1408
    %1985 = vmatpush.msra.mxu0 %v1405
    %1986 = vmatpush.msra.mxu0 %v1402
    %1987 = vmatpush.msra.mxu0 %v1399
    %1988 = vmatpush.msra.mxu0 %v1396
    %1989 = vmatpush.msra.mxu0 %v1393
    %1990 = vmatpush.msra.mxu0 %v1390
    %1991 = vmatpush.msra.mxu0 %v1387
    %1992 = vmatpush.msra.mxu0 %v1384
    %1993 = vmatpush.msra.mxu0 %v1381
    %1994 = vmatmul.f32.gmra.mxu0 %v1976
    %v1995 = vpop.f32.mrf.mxu0
    %v1996 = vadd.f32 %v1432, %v1995
    %1997 = vdwg.mxu0
    %1998 = vmatpush.msra.mxu0 %v1427
    %1999 = vmatpush.msra.mxu0 %v1424
    %2000 = vmatpush.msra.mxu0 %v1421
    %2001 = vmatpush.msra.mxu0 %v1418
    %2002 = vmatpush.msra.mxu0 %v1415
    %2003 = vmatpush.msra.mxu0 %v1412
    %2004 = vmatpush.msra.mxu0 %v1409
    %2005 = vmatpush.msra.mxu0 %v1406
    %2006 = vmatpush.msra.mxu0 %v1403
    %2007 = vmatpush.msra.mxu0 %v1400
    %2008 = vmatpush.msra.mxu0 %v1397
    %2009 = vmatpush.msra.mxu0 %v1394
    %2010 = vmatpush.msra.mxu0 %v1391
    %2011 = vmatpush.msra.mxu0 %v1388
    %2012 = vmatpush.msra.mxu0 %v1385
    %2013 = vmatpush.msra.mxu0 %v1382
    %2014 = vmatmul.f32.gmra.mxu0 %v1976
    %v2015 = vpop.f32.mrf.mxu0
    %v2016 = vadd.f32 %v1433, %v2015
    %2017 = vdwg.mxu0
    %2018 = vmatpush.msra.mxu0 %v1428
    %2019 = vmatpush.msra.mxu0 %v1425
    %2020 = vmatpush.msra.mxu0 %v1422
    %2021 = vmatpush.msra.mxu0 %v1419
    %2022 = vmatpush.msra.mxu0 %v1416
    %2023 = vmatpush.msra.mxu0 %v1413
    %2024 = vmatpush.msra.mxu0 %v1410
    %2025 = vmatpush.msra.mxu0 %v1407
    %2026 = vmatpush.msra.mxu0 %v1404
    %2027 = vmatpush.msra.mxu0 %v1401
    %2028 = vmatpush.msra.mxu0 %v1398
    %2029 = vmatpush.msra.mxu0 %v1395
    %2030 = vmatpush.msra.mxu0 %v1392
    %2031 = vmatpush.msra.mxu0 %v1389
    %2032 = vmatpush.msra.mxu0 %v1386
    %2033 = vmatpush.msra.mxu0 %v1383
    %2034 = vmatmul.f32.gmra.mxu0 %v1976
    %v2035 = vpop.f32.mrf.mxu0
    %v2036 = vadd.f32 %v1434, %v2035
    %2037 = vdwg.mxu0
    %v2038 = vadd.f32 %v1290, %v1996
    %v2039 = vxor.u32 %v2038, 2147483648
    %v2040 = vmul.f32 %v2039, 1.442695
    %v2041 = vpow.pop %v2040
    %v2042 = vadd.f32 %v2041, 1.0
    %v2043 = vrcp.pop %v2042
    %v2044 = vmul.f32 %v2042, %v2043
    %v2045 = vsub.f32 1.0, %v2044
    %v2046 = vmul.f32 %v2043, %v2045
    %v2047 = vadd.f32 %v2043, %v2046
    %vm2048 = vweird.f32 %v2042
    %vm2049 = vweird.f32 %v2043
    %vm2050 = vmor %vm2048, %vm2049
    %v2051 = vsel %vm2050, %v2043, %v2047
    %v2052 = vand.u32 2147483647, %v2042
    %vm2053 = vcmp.eq.f32.partialorder %v2052, 8.507059e+37
    %v2054 = vand.u32 %v2042, 2147483648
    %v2055 = vor.u32 1.1754944e-38, %v2054
    %v2056 = vsel %vm2053, %v2055, %v2051
    %v2057 = vmul.f32 1.0, %v2056
    %v2058 = vadd.f32 %v1331, %v2016
    %v2059 = vxor.u32 %v2058, 2147483648
    %v2060 = vmul.f32 %v2059, 1.442695
    %v2061 = vpow.pop %v2060
    %v2062 = vadd.f32 %v2061, 1.0
    %v2063 = vrcp.pop %v2062
    %v2064 = vmul.f32 %v2062, %v2063
    %v2065 = vsub.f32 1.0, %v2064
    %v2066 = vmul.f32 %v2063, %v2065
    %v2067 = vadd.f32 %v2063, %v2066
    %vm2068 = vweird.f32 %v2062
    %vm2069 = vweird.f32 %v2063
    %vm2070 = vmor %vm2068, %vm2069
    %v2071 = vsel %vm2070, %v2063, %v2067
    %v2072 = vand.u32 2147483647, %v2062
    %vm2073 = vcmp.eq.f32.partialorder %v2072, 8.507059e+37
    %v2074 = vand.u32 %v2062, 2147483648
    %v2075 = vor.u32 1.1754944e-38, %v2074
    %v2076 = vsel %vm2073, %v2075, %v2071
    %v2077 = vmul.f32 1.0, %v2076
    %v2078 = vmul.f32 %v2057, %v2036
    %v2079 = vadd.f32 %v1372, %v2078
    %v2080 = vtanh.pop %v2079
    %v2081 = vsub.f32 1.0, %v2077
    %v2082 = vmul.f32 %v2081, %v2080
    %v2083 = vmul.f32 %v2077, %v1976
    %v2084 = vadd.f32 %v2082, %v2083
    %2085 = vst [vmem:[%s972] sm:$0xff] %v2084
    %2086 = vmatpush.msra.mxu0 %v1426
    %2087 = vmatpush.msra.mxu0 %v1423
    %2088 = vmatpush.msra.mxu0 %v1420
    %2089 = vmatpush.msra.mxu0 %v1417
    %2090 = vmatpush.msra.mxu0 %v1414
    %2091 = vmatpush.msra.mxu0 %v1411
    %2092 = vmatpush.msra.mxu0 %v1408
    %2093 = vmatpush.msra.mxu0 %v1405
    %2094 = vmatpush.msra.mxu0 %v1402
    %2095 = vmatpush.msra.mxu0 %v1399
    %2096 = vmatpush.msra.mxu0 %v1396
    %2097 = vmatpush.msra.mxu0 %v1393
    %2098 = vmatpush.msra.mxu0 %v1390
    %2099 = vmatpush.msra.mxu0 %v1387
    %2100 = vmatpush.msra.mxu0 %v1384
    %2101 = vmatpush.msra.mxu0 %v1381
    %2102 = vmatmul.f32.gmra.mxu0 %v2084
    %v2103 = vpop.f32.mrf.mxu0
    %v2104 = vadd.f32 %v1432, %v2103
    %2105 = vdwg.mxu0
    %2106 = vmatpush.msra.mxu0 %v1427
    %2107 = vmatpush.msra.mxu0 %v1424
    %2108 = vmatpush.msra.mxu0 %v1421
    %2109 = vmatpush.msra.mxu0 %v1418
    %2110 = vmatpush.msra.mxu0 %v1415
    %2111 = vmatpush.msra.mxu0 %v1412
    %2112 = vmatpush.msra.mxu0 %v1409
    %2113 = vmatpush.msra.mxu0 %v1406
    %2114 = vmatpush.msra.mxu0 %v1403
    %2115 = vmatpush.msra.mxu0 %v1400
    %2116 = vmatpush.msra.mxu0 %v1397
    %2117 = vmatpush.msra.mxu0 %v1394
    %2118 = vmatpush.msra.mxu0 %v1391
    %2119 = vmatpush.msra.mxu0 %v1388
    %2120 = vmatpush.msra.mxu0 %v1385
    %2121 = vmatpush.msra.mxu0 %v1382
    %2122 = vmatmul.f32.gmra.mxu0 %v2084
    %v2123 = vpop.f32.mrf.mxu0
    %v2124 = vadd.f32 %v1433, %v2123
    %2125 = vdwg.mxu0
    %2126 = vmatpush.msra.mxu0 %v1428
    %2127 = vmatpush.msra.mxu0 %v1425
    %2128 = vmatpush.msra.mxu0 %v1422
    %2129 = vmatpush.msra.mxu0 %v1419
    %2130 = vmatpush.msra.mxu0 %v1416
    %2131 = vmatpush.msra.mxu0 %v1413
    %2132 = vmatpush.msra.mxu0 %v1410
    %2133 = vmatpush.msra.mxu0 %v1407
    %2134 = vmatpush.msra.mxu0 %v1404
    %2135 = vmatpush.msra.mxu0 %v1401
    %2136 = vmatpush.msra.mxu0 %v1398
    %2137 = vmatpush.msra.mxu0 %v1395
    %2138 = vmatpush.msra.mxu0 %v1392
    %2139 = vmatpush.msra.mxu0 %v1389
    %2140 = vmatpush.msra.mxu0 %v1386
    %2141 = vmatpush.msra.mxu0 %v1383
    %2142 = vmatmul.f32.gmra.mxu0 %v2084
    %v2143 = vpop.f32.mrf.mxu0
    %v2144 = vadd.f32 %v1434, %v2143
    %2145 = vdwg.mxu0
    %v2146 = vadd.f32 %v1293, %v2104
    %v2147 = vxor.u32 %v2146, 2147483648
    %v2148 = vmul.f32 %v2147, 1.442695
    %v2149 = vpow.pop %v2148
    %v2150 = vadd.f32 %v2149, 1.0
    %v2151 = vrcp.pop %v2150
    %v2152 = vmul.f32 %v2150, %v2151
    %v2153 = vsub.f32 1.0, %v2152
    %v2154 = vmul.f32 %v2151, %v2153
    %v2155 = vadd.f32 %v2151, %v2154
    %vm2156 = vweird.f32 %v2150
    %vm2157 = vweird.f32 %v2151
    %vm2158 = vmor %vm2156, %vm2157
    %v2159 = vsel %vm2158, %v2151, %v2155
    %v2160 = vand.u32 2147483647, %v2150
    %vm2161 = vcmp.eq.f32.partialorder %v2160, 8.507059e+37
    %v2162 = vand.u32 %v2150, 2147483648
    %v2163 = vor.u32 1.1754944e-38, %v2162
    %v2164 = vsel %vm2161, %v2163, %v2159
    %v2165 = vmul.f32 1.0, %v2164
    %v2166 = vadd.f32 %v1334, %v2124
    %v2167 = vxor.u32 %v2166, 2147483648
    %v2168 = vmul.f32 %v2167, 1.442695
    %v2169 = vpow.pop %v2168
    %v2170 = vadd.f32 %v2169, 1.0
    %v2171 = vrcp.pop %v2170
    %v2172 = vmul.f32 %v2170, %v2171
    %v2173 = vsub.f32 1.0, %v2172
    %v2174 = vmul.f32 %v2171, %v2173
    %v2175 = vadd.f32 %v2171, %v2174
    %vm2176 = vweird.f32 %v2170
    %vm2177 = vweird.f32 %v2171
    %vm2178 = vmor %vm2176, %vm2177
    %v2179 = vsel %vm2178, %v2171, %v2175
    %v2180 = vand.u32 2147483647, %v2170
    %vm2181 = vcmp.eq.f32.partialorder %v2180, 8.507059e+37
    %v2182 = vand.u32 %v2170, 2147483648
    %v2183 = vor.u32 1.1754944e-38, %v2182
    %v2184 = vsel %vm2181, %v2183, %v2179
    %v2185 = vmul.f32 1.0, %v2184
    %v2186 = vmul.f32 %v2165, %v2144
    %v2187 = vadd.f32 %v1375, %v2186
    %v2188 = vtanh.pop %v2187
    %v2189 = vsub.f32 1.0, %v2185
    %v2190 = vmul.f32 %v2189, %v2188
    %v2191 = vmul.f32 %v2185, %v2084
    %v2192 = vadd.f32 %v2190, %v2191
    %2193 = vst [vmem:[%s1081] sm:$0xff] %v2192
    %2194 = vmatpush.msra.mxu0 %v1426
    %2195 = vmatpush.msra.mxu0 %v1423
    %2196 = vmatpush.msra.mxu0 %v1420
    %2197 = vmatpush.msra.mxu0 %v1417
    %2198 = vmatpush.msra.mxu0 %v1414
    %2199 = vmatpush.msra.mxu0 %v1411
    %2200 = vmatpush.msra.mxu0 %v1408
    %2201 = vmatpush.msra.mxu0 %v1405
    %2202 = vmatpush.msra.mxu0 %v1402
    %2203 = vmatpush.msra.mxu0 %v1399
    %2204 = vmatpush.msra.mxu0 %v1396
    %2205 = vmatpush.msra.mxu0 %v1393
    %2206 = vmatpush.msra.mxu0 %v1390
    %2207 = vmatpush.msra.mxu0 %v1387
    %2208 = vmatpush.msra.mxu0 %v1384
    %2209 = vmatpush.msra.mxu0 %v1381
    %2210 = vmatmul.f32.gmra.mxu0 %v2192
    %v2211 = vpop.f32.mrf.mxu0
    %v2212 = vadd.f32 %v1432, %v2211
    %2213 = vdwg.mxu0
    %2214 = vmatpush.msra.mxu0 %v1427
    %2215 = vmatpush.msra.mxu0 %v1424
    %2216 = vmatpush.msra.mxu0 %v1421
    %2217 = vmatpush.msra.mxu0 %v1418
    %2218 = vmatpush.msra.mxu0 %v1415
    %2219 = vmatpush.msra.mxu0 %v1412
    %2220 = vmatpush.msra.mxu0 %v1409
    %2221 = vmatpush.msra.mxu0 %v1406
    %2222 = vmatpush.msra.mxu0 %v1403
    %2223 = vmatpush.msra.mxu0 %v1400
    %2224 = vmatpush.msra.mxu0 %v1397
    %2225 = vmatpush.msra.mxu0 %v1394
    %2226 = vmatpush.msra.mxu0 %v1391
    %2227 = vmatpush.msra.mxu0 %v1388
    %2228 = vmatpush.msra.mxu0 %v1385
    %2229 = vmatpush.msra.mxu0 %v1382
    %2230 = vmatmul.f32.gmra.mxu0 %v2192
    %v2231 = vpop.f32.mrf.mxu0
    %v2232 = vadd.f32 %v1433, %v2231
    %2233 = vdwg.mxu0
    %2234 = vmatpush.msra.mxu0 %v1428
    %2235 = vmatpush.msra.mxu0 %v1425
    %2236 = vmatpush.msra.mxu0 %v1422
    %2237 = vmatpush.msra.mxu0 %v1419
    %2238 = vmatpush.msra.mxu0 %v1416
    %2239 = vmatpush.msra.mxu0 %v1413
    %2240 = vmatpush.msra.mxu0 %v1410
    %2241 = vmatpush.msra.mxu0 %v1407
    %2242 = vmatpush.msra.mxu0 %v1404
    %2243 = vmatpush.msra.mxu0 %v1401
    %2244 = vmatpush.msra.mxu0 %v1398
    %2245 = vmatpush.msra.mxu0 %v1395
    %2246 = vmatpush.msra.mxu0 %v1392
    %2247 = vmatpush.msra.mxu0 %v1389
    %2248 = vmatpush.msra.mxu0 %v1386
    %2249 = vmatpush.msra.mxu0 %v1383
    %2250 = vmatmul.f32.gmra.mxu0 %v2192
    %v2251 = vpop.f32.mrf.mxu0
    %v2252 = vadd.f32 %v1434, %v2251
    %2253 = vdwg.mxu0
    %v2254 = vadd.f32 %v1296, %v2212
    %v2255 = vxor.u32 %v2254, 2147483648
    %v2256 = vmul.f32 %v2255, 1.442695
    %v2257 = vpow.pop %v2256
    %v2258 = vadd.f32 %v2257, 1.0
    %v2259 = vrcp.pop %v2258
    %v2260 = vmul.f32 %v2258, %v2259
    %v2261 = vsub.f32 1.0, %v2260
    %v2262 = vmul.f32 %v2259, %v2261
    %v2263 = vadd.f32 %v2259, %v2262
    %vm2264 = vweird.f32 %v2258
    %vm2265 = vweird.f32 %v2259
    %vm2266 = vmor %vm2264, %vm2265
    %v2267 = vsel %vm2266, %v2259, %v2263
    %v2268 = vand.u32 2147483647, %v2258
    %vm2269 = vcmp.eq.f32.partialorder %v2268, 8.507059e+37
    %v2270 = vand.u32 %v2258, 2147483648
    %v2271 = vor.u32 1.1754944e-38, %v2270
    %v2272 = vsel %vm2269, %v2271, %v2267
    %v2273 = vmul.f32 1.0, %v2272
    %v2274 = vadd.f32 %v1337, %v2232
    %v2275 = vxor.u32 %v2274, 2147483648
    %v2276 = vmul.f32 %v2275, 1.442695
    %v2277 = vpow.pop %v2276
    %v2278 = vadd.f32 %v2277, 1.0
    %v2279 = vrcp.pop %v2278
    %v2280 = vmul.f32 %v2278, %v2279
    %v2281 = vsub.f32 1.0, %v2280
    %v2282 = vmul.f32 %v2279, %v2281
    %v2283 = vadd.f32 %v2279, %v2282
    %vm2284 = vweird.f32 %v2278
    %vm2285 = vweird.f32 %v2279
    %vm2286 = vmor %vm2284, %vm2285
    %v2287 = vsel %vm2286, %v2279, %v2283
    %v2288 = vand.u32 2147483647, %v2278
    %vm2289 = vcmp.eq.f32.partialorder %v2288, 8.507059e+37
    %v2290 = vand.u32 %v2278, 2147483648
    %v2291 = vor.u32 1.1754944e-38, %v2290
    %v2292 = vsel %vm2289, %v2291, %v2287
    %v2293 = vmul.f32 1.0, %v2292
    %v2294 = vmul.f32 %v2273, %v2252
    %v2295 = vadd.f32 %v1378, %v2294
    %v2296 = vtanh.pop %v2295
    %v2297 = vsub.f32 1.0, %v2293
    %v2298 = vmul.f32 %v2297, %v2296
    %v2299 = vmul.f32 %v2293, %v2192
    %v2300 = vadd.f32 %v2298, %v2299
    %2301 = vst [vmem:[%s1190] sm:$0xff] %v2300
    %v2302 = vld [vmem:[#allocation2] sm:$0xff]
    %v2303 = vld [vmem:[#allocation2 + $0x8] sm:$0xff]
    %v2304 = vld [vmem:[#allocation2 + $0x10] sm:$0xff]
    %v2305 = vld [vmem:[#allocation2 + $0x18] sm:$0xff]
    %v2306 = vld [vmem:[#allocation2 + $0x20] sm:$0xff]
    %v2307 = vld [vmem:[#allocation2 + $0x28] sm:$0xff]
    %v2308 = vld [vmem:[#allocation2 + $0x30] sm:$0xff]
    %v2309 = vld [vmem:[#allocation2 + $0x38] sm:$0xff]
    %s2310 = scalar_lea.vmem [#allocation6], 384
    %v2311 = vld [vmem:[%s2310] sm:$0xff]
    %v2312 = vld [vmem:[%s2310 + $0x8] sm:$0xff]
    %v2313 = vld [vmem:[%s2310 + $0x10] sm:$0xff]
    %v2314 = vld [vmem:[%s2310 + $0x18] sm:$0xff]
    %v2315 = vld [vmem:[%s2310 + $0x20] sm:$0xff]
    %v2316 = vld [vmem:[%s2310 + $0x28] sm:$0xff]
    %v2317 = vld [vmem:[%s2310 + $0x30] sm:$0xff]
    %v2318 = vld [vmem:[%s2310 + $0x38] sm:$0xff]
    %v2319 = vld [vmem:[%s2310 + $0x40] sm:$0xff]
    %v2320 = vld [vmem:[%s2310 + $0x48] sm:$0xff]
    %v2321 = vld [vmem:[%s2310 + $0x50] sm:$0xff]
    %v2322 = vld [vmem:[%s2310 + $0x58] sm:$0xff]
    %v2323 = vld [vmem:[%s2310 + $0x60] sm:$0xff]
    %v2324 = vld [vmem:[%s2310 + $0x68] sm:$0xff]
    %v2325 = vld [vmem:[%s2310 + $0x70] sm:$0xff]
    %v2326 = vld [vmem:[%s2310 + $0x78] sm:$0xff]
    %v2327 = vld [vmem:[%s2310 + $0x80] sm:$0xff]
    %v2328 = vld [vmem:[%s2310 + $0x88] sm:$0xff]
    %v2329 = vld [vmem:[%s2310 + $0x90] sm:$0xff]
    %v2330 = vld [vmem:[%s2310 + $0x98] sm:$0xff]
    %v2331 = vld [vmem:[%s2310 + $0xa0] sm:$0xff]
    %v2332 = vld [vmem:[%s2310 + $0xa8] sm:$0xff]
    %v2333 = vld [vmem:[%s2310 + $0xb0] sm:$0xff]
    %v2334 = vld [vmem:[%s2310 + $0xb8] sm:$0xff]
    %v2335 = vld [vmem:[%s2310 + $0xc0] sm:$0xff]
    %v2336 = vld [vmem:[%s2310 + $0xc8] sm:$0xff]
    %v2337 = vld [vmem:[%s2310 + $0xd0] sm:$0xff]
    %v2338 = vld [vmem:[%s2310 + $0xd8] sm:$0xff]
    %v2339 = vld [vmem:[%s2310 + $0xe0] sm:$0xff]
    %v2340 = vld [vmem:[%s2310 + $0xe8] sm:$0xff]
    %v2341 = vld [vmem:[%s2310 + $0xf0] sm:$0xff]
    %v2342 = vld [vmem:[%s2310 + $0xf8] sm:$0xff]
    %v2343 = vld [vmem:[%s2310 + $0x100] sm:$0xff]
    %v2344 = vld [vmem:[%s2310 + $0x108] sm:$0xff]
    %v2345 = vld [vmem:[%s2310 + $0x110] sm:$0xff]
    %v2346 = vld [vmem:[%s2310 + $0x118] sm:$0xff]
    %v2347 = vld [vmem:[%s2310 + $0x120] sm:$0xff]
    %v2348 = vld [vmem:[%s2310 + $0x128] sm:$0xff]
    %v2349 = vld [vmem:[%s2310 + $0x130] sm:$0xff]
    %v2350 = vld [vmem:[%s2310 + $0x138] sm:$0xff]
    %v2351 = vld [vmem:[%s2310 + $0x140] sm:$0xff]
    %v2352 = vld [vmem:[%s2310 + $0x148] sm:$0xff]
    %v2353 = vld [vmem:[%s2310 + $0x150] sm:$0xff]
    %v2354 = vld [vmem:[%s2310 + $0x158] sm:$0xff]
    %v2355 = vld [vmem:[%s2310 + $0x160] sm:$0xff]
    %v2356 = vld [vmem:[%s2310 + $0x168] sm:$0xff]
    %v2357 = vld [vmem:[%s2310 + $0x170] sm:$0xff]
    %v2358 = vld [vmem:[%s2310 + $0x178] sm:$0xff]
    %s2359 = scalar_lea.vmem %s4, 6
    %v2360 = vld [vmem:[%s2359] sm:$0x7]
    %v2362 = vperm.slane %v2360, 0
    %v2363 = vperm.slane %v2360, 1
    %v2364 = vperm.slane %v2360, 2
    %2368 = vmatpush.msra.mxu0 %v2356
    %2369 = vmatpush.msra.mxu0 %v2353
    %2370 = vmatpush.msra.mxu0 %v2350
    %2371 = vmatpush.msra.mxu0 %v2347
    %2372 = vmatpush.msra.mxu0 %v2344
    %2373 = vmatpush.msra.mxu0 %v2341
    %2374 = vmatpush.msra.mxu0 %v2338
    %2375 = vmatpush.msra.mxu0 %v2335
    %2376 = vmatpush.msra.mxu0 %v2332
    %2377 = vmatpush.msra.mxu0 %v2329
    %2378 = vmatpush.msra.mxu0 %v2326
    %2379 = vmatpush.msra.mxu0 %v2323
    %2380 = vmatpush.msra.mxu0 %v2320
    %2381 = vmatpush.msra.mxu0 %v2317
    %2382 = vmatpush.msra.mxu0 %v2314
    %2383 = vmatpush.msra.mxu0 %v2311
    %2384 = vmatmul.f32.gmra.mxu0 %v2302
    %v2385 = vpop.f32.mrf.mxu0
    %v2386 = vadd.f32 %v2362, %v2385
    %2387 = vmatmul.f32.gmra.mxu0 %v2303
    %v2388 = vpop.f32.mrf.mxu0
    %v2389 = vadd.f32 %v2362, %v2388
    %2390 = vmatmul.f32.gmra.mxu0 %v2304
    %v2391 = vpop.f32.mrf.mxu0
    %v2392 = vadd.f32 %v2362, %v2391
    %2393 = vmatmul.f32.gmra.mxu0 %v2305
    %v2394 = vpop.f32.mrf.mxu0
    %v2395 = vadd.f32 %v2362, %v2394
    %2396 = vmatmul.f32.gmra.mxu0 %v2306
    %v2397 = vpop.f32.mrf.mxu0
    %v2398 = vadd.f32 %v2362, %v2397
    %2399 = vmatmul.f32.gmra.mxu0 %v2307
    %v2400 = vpop.f32.mrf.mxu0
    %v2401 = vadd.f32 %v2362, %v2400
    %2402 = vmatmul.f32.gmra.mxu0 %v2308
    %v2403 = vpop.f32.mrf.mxu0
    %v2404 = vadd.f32 %v2362, %v2403
    %2405 = vmatmul.f32.gmra.mxu0 %v2309
    %v2406 = vpop.f32.mrf.mxu0
    %v2407 = vadd.f32 %v2362, %v2406
    %2408 = vdwg.mxu0
    %2409 = vmatpush.msra.mxu0 %v2357
    %2410 = vmatpush.msra.mxu0 %v2354
    %2411 = vmatpush.msra.mxu0 %v2351
    %2412 = vmatpush.msra.mxu0 %v2348
    %2413 = vmatpush.msra.mxu0 %v2345
    %2414 = vmatpush.msra.mxu0 %v2342
    %2415 = vmatpush.msra.mxu0 %v2339
    %2416 = vmatpush.msra.mxu0 %v2336
    %2417 = vmatpush.msra.mxu0 %v2333
    %2418 = vmatpush.msra.mxu0 %v2330
    %2419 = vmatpush.msra.mxu0 %v2327
    %2420 = vmatpush.msra.mxu0 %v2324
    %2421 = vmatpush.msra.mxu0 %v2321
    %2422 = vmatpush.msra.mxu0 %v2318
    %2423 = vmatpush.msra.mxu0 %v2315
    %2424 = vmatpush.msra.mxu0 %v2312
    %2425 = vmatmul.f32.gmra.mxu0 %v2302
    %v2426 = vpop.f32.mrf.mxu0
    %v2427 = vadd.f32 %v2363, %v2426
    %2428 = vmatmul.f32.gmra.mxu0 %v2303
    %v2429 = vpop.f32.mrf.mxu0
    %v2430 = vadd.f32 %v2363, %v2429
    %2431 = vmatmul.f32.gmra.mxu0 %v2304
    %v2432 = vpop.f32.mrf.mxu0
    %v2433 = vadd.f32 %v2363, %v2432
    %2434 = vmatmul.f32.gmra.mxu0 %v2305
    %v2435 = vpop.f32.mrf.mxu0
    %v2436 = vadd.f32 %v2363, %v2435
    %2437 = vmatmul.f32.gmra.mxu0 %v2306
    %v2438 = vpop.f32.mrf.mxu0
    %v2439 = vadd.f32 %v2363, %v2438
    %2440 = vmatmul.f32.gmra.mxu0 %v2307
    %v2441 = vpop.f32.mrf.mxu0
    %v2442 = vadd.f32 %v2363, %v2441
    %2443 = vmatmul.f32.gmra.mxu0 %v2308
    %v2444 = vpop.f32.mrf.mxu0
    %v2445 = vadd.f32 %v2363, %v2444
    %2446 = vmatmul.f32.gmra.mxu0 %v2309
    %v2447 = vpop.f32.mrf.mxu0
    %v2448 = vadd.f32 %v2363, %v2447
    %2449 = vdwg.mxu0
    %2450 = vmatpush.msra.mxu0 %v2358
    %2451 = vmatpush.msra.mxu0 %v2355
    %2452 = vmatpush.msra.mxu0 %v2352
    %2453 = vmatpush.msra.mxu0 %v2349
    %2454 = vmatpush.msra.mxu0 %v2346
    %2455 = vmatpush.msra.mxu0 %v2343
    %2456 = vmatpush.msra.mxu0 %v2340
    %2457 = vmatpush.msra.mxu0 %v2337
    %2458 = vmatpush.msra.mxu0 %v2334
    %2459 = vmatpush.msra.mxu0 %v2331
    %2460 = vmatpush.msra.mxu0 %v2328
    %2461 = vmatpush.msra.mxu0 %v2325
    %2462 = vmatpush.msra.mxu0 %v2322
    %2463 = vmatpush.msra.mxu0 %v2319
    %2464 = vmatpush.msra.mxu0 %v2316
    %2465 = vmatpush.msra.mxu0 %v2313
    %2466 = vmatmul.f32.gmra.mxu0 %v2302
    %v2467 = vpop.f32.mrf.mxu0
    %v2468 = vadd.f32 %v2364, %v2467
    %2469 = vmatmul.f32.gmra.mxu0 %v2303
    %v2470 = vpop.f32.mrf.mxu0
    %v2471 = vadd.f32 %v2364, %v2470
    %2472 = vmatmul.f32.gmra.mxu0 %v2304
    %v2473 = vpop.f32.mrf.mxu0
    %v2474 = vadd.f32 %v2364, %v2473
    %2475 = vmatmul.f32.gmra.mxu0 %v2305
    %v2476 = vpop.f32.mrf.mxu0
    %v2477 = vadd.f32 %v2364, %v2476
    %2478 = vmatmul.f32.gmra.mxu0 %v2306
    %v2479 = vpop.f32.mrf.mxu0
    %v2480 = vadd.f32 %v2364, %v2479
    %2481 = vmatmul.f32.gmra.mxu0 %v2307
    %v2482 = vpop.f32.mrf.mxu0
    %v2483 = vadd.f32 %v2364, %v2482
    %2484 = vmatmul.f32.gmra.mxu0 %v2308
    %v2485 = vpop.f32.mrf.mxu0
    %v2486 = vadd.f32 %v2364, %v2485
    %2487 = vmatmul.f32.gmra.mxu0 %v2309
    %v2488 = vpop.f32.mrf.mxu0
    %v2489 = vadd.f32 %v2364, %v2488
    %2490 = vdwg.mxu0
    %s2491 = scalar_lea.vmem [#allocation8], 768
    %v2492 = vld [vmem:[%s2491] sm:$0xff]
    %v2493 = vld [vmem:[%s2491 + $0x8] sm:$0xff]
    %v2494 = vld [vmem:[%s2491 + $0x10] sm:$0xff]
    %v2495 = vld [vmem:[%s2491 + $0x18] sm:$0xff]
    %v2496 = vld [vmem:[%s2491 + $0x20] sm:$0xff]
    %v2497 = vld [vmem:[%s2491 + $0x28] sm:$0xff]
    %v2498 = vld [vmem:[%s2491 + $0x30] sm:$0xff]
    %v2499 = vld [vmem:[%s2491 + $0x38] sm:$0xff]
    %v2500 = vld [vmem:[%s2491 + $0x40] sm:$0xff]
    %v2501 = vld [vmem:[%s2491 + $0x48] sm:$0xff]
    %v2502 = vld [vmem:[%s2491 + $0x50] sm:$0xff]
    %v2503 = vld [vmem:[%s2491 + $0x58] sm:$0xff]
    %v2504 = vld [vmem:[%s2491 + $0x60] sm:$0xff]
    %v2505 = vld [vmem:[%s2491 + $0x68] sm:$0xff]
    %v2506 = vld [vmem:[%s2491 + $0x70] sm:$0xff]
    %v2507 = vld [vmem:[%s2491 + $0x78] sm:$0xff]
    %v2508 = vld [vmem:[%s2491 + $0x80] sm:$0xff]
    %v2509 = vld [vmem:[%s2491 + $0x88] sm:$0xff]
    %v2510 = vld [vmem:[%s2491 + $0x90] sm:$0xff]
    %v2511 = vld [vmem:[%s2491 + $0x98] sm:$0xff]
    %v2512 = vld [vmem:[%s2491 + $0xa0] sm:$0xff]
    %v2513 = vld [vmem:[%s2491 + $0xa8] sm:$0xff]
    %v2514 = vld [vmem:[%s2491 + $0xb0] sm:$0xff]
    %v2515 = vld [vmem:[%s2491 + $0xb8] sm:$0xff]
    %v2516 = vld [vmem:[%s2491 + $0xc0] sm:$0xff]
    %v2517 = vld [vmem:[%s2491 + $0xc8] sm:$0xff]
    %v2518 = vld [vmem:[%s2491 + $0xd0] sm:$0xff]
    %v2519 = vld [vmem:[%s2491 + $0xd8] sm:$0xff]
    %v2520 = vld [vmem:[%s2491 + $0xe0] sm:$0xff]
    %v2521 = vld [vmem:[%s2491 + $0xe8] sm:$0xff]
    %v2522 = vld [vmem:[%s2491 + $0xf0] sm:$0xff]
    %v2523 = vld [vmem:[%s2491 + $0xf8] sm:$0xff]
    %v2524 = vld [vmem:[%s2491 + $0x100] sm:$0xff]
    %v2525 = vld [vmem:[%s2491 + $0x108] sm:$0xff]
    %v2526 = vld [vmem:[%s2491 + $0x110] sm:$0xff]
    %v2527 = vld [vmem:[%s2491 + $0x118] sm:$0xff]
    %v2528 = vld [vmem:[%s2491 + $0x120] sm:$0xff]
    %v2529 = vld [vmem:[%s2491 + $0x128] sm:$0xff]
    %v2530 = vld [vmem:[%s2491 + $0x130] sm:$0xff]
    %v2531 = vld [vmem:[%s2491 + $0x138] sm:$0xff]
    %v2532 = vld [vmem:[%s2491 + $0x140] sm:$0xff]
    %v2533 = vld [vmem:[%s2491 + $0x148] sm:$0xff]
    %v2534 = vld [vmem:[%s2491 + $0x150] sm:$0xff]
    %v2535 = vld [vmem:[%s2491 + $0x158] sm:$0xff]
    %v2536 = vld [vmem:[%s2491 + $0x160] sm:$0xff]
    %v2537 = vld [vmem:[%s2491 + $0x168] sm:$0xff]
    %v2538 = vld [vmem:[%s2491 + $0x170] sm:$0xff]
    %v2539 = vld [vmem:[%s2491 + $0x178] sm:$0xff]
    %s2540 = scalar_lea.vmem %s5, 6
    %v2541 = vld [vmem:[%s2540] sm:$0x7]
    %v2543 = vperm.slane %v2541, 0
    %v2544 = vperm.slane %v2541, 1
    %v2545 = vperm.slane %v2541, 2
    %2549 = vmatpush.msra.mxu0 %v2537
    %2550 = vmatpush.msra.mxu0 %v2534
    %2551 = vmatpush.msra.mxu0 %v2531
    %2552 = vmatpush.msra.mxu0 %v2528
    %2553 = vmatpush.msra.mxu0 %v2525
    %2554 = vmatpush.msra.mxu0 %v2522
    %2555 = vmatpush.msra.mxu0 %v2519
    %2556 = vmatpush.msra.mxu0 %v2516
    %2557 = vmatpush.msra.mxu0 %v2513
    %2558 = vmatpush.msra.mxu0 %v2510
    %2559 = vmatpush.msra.mxu0 %v2507
    %2560 = vmatpush.msra.mxu0 %v2504
    %2561 = vmatpush.msra.mxu0 %v2501
    %2562 = vmatpush.msra.mxu0 %v2498
    %2563 = vmatpush.msra.mxu0 %v2495
    %2564 = vmatpush.msra.mxu0 %v2492
    %2565 = vmatmul.f32.gmra.mxu0 0.0
    %v2566 = vpop.f32.mrf.mxu0
    %v2567 = vadd.f32 %v2543, %v2566
    %2568 = vdwg.mxu0
    %2569 = vmatpush.msra.mxu0 %v2538
    %2570 = vmatpush.msra.mxu0 %v2535
    %2571 = vmatpush.msra.mxu0 %v2532
    %2572 = vmatpush.msra.mxu0 %v2529
    %2573 = vmatpush.msra.mxu0 %v2526
    %2574 = vmatpush.msra.mxu0 %v2523
    %2575 = vmatpush.msra.mxu0 %v2520
    %2576 = vmatpush.msra.mxu0 %v2517
    %2577 = vmatpush.msra.mxu0 %v2514
    %2578 = vmatpush.msra.mxu0 %v2511
    %2579 = vmatpush.msra.mxu0 %v2508
    %2580 = vmatpush.msra.mxu0 %v2505
    %2581 = vmatpush.msra.mxu0 %v2502
    %2582 = vmatpush.msra.mxu0 %v2499
    %2583 = vmatpush.msra.mxu0 %v2496
    %2584 = vmatpush.msra.mxu0 %v2493
    %2585 = vmatmul.f32.gmra.mxu0 0.0
    %v2586 = vpop.f32.mrf.mxu0
    %v2587 = vadd.f32 %v2544, %v2586
    %2588 = vdwg.mxu0
    %2589 = vmatpush.msra.mxu0 %v2539
    %2590 = vmatpush.msra.mxu0 %v2536
    %2591 = vmatpush.msra.mxu0 %v2533
    %2592 = vmatpush.msra.mxu0 %v2530
    %2593 = vmatpush.msra.mxu0 %v2527
    %2594 = vmatpush.msra.mxu0 %v2524
    %2595 = vmatpush.msra.mxu0 %v2521
    %2596 = vmatpush.msra.mxu0 %v2518
    %2597 = vmatpush.msra.mxu0 %v2515
    %2598 = vmatpush.msra.mxu0 %v2512
    %2599 = vmatpush.msra.mxu0 %v2509
    %2600 = vmatpush.msra.mxu0 %v2506
    %2601 = vmatpush.msra.mxu0 %v2503
    %2602 = vmatpush.msra.mxu0 %v2500
    %2603 = vmatpush.msra.mxu0 %v2497
    %2604 = vmatpush.msra.mxu0 %v2494
    %2605 = vmatmul.f32.gmra.mxu0 0.0
    %v2606 = vpop.f32.mrf.mxu0
    %v2607 = vadd.f32 %v2545, %v2606
    %2608 = vdwg.mxu0
    %v2609 = vadd.f32 %v2386, %v2567
    %v2610 = vxor.u32 %v2609, 2147483648
    %v2611 = vmul.f32 %v2610, 1.442695
    %v2612 = vpow.pop %v2611
    %v2613 = vadd.f32 %v2612, 1.0
    %v2614 = vrcp.pop %v2613
    %v2615 = vmul.f32 %v2613, %v2614
    %v2616 = vsub.f32 1.0, %v2615
    %v2617 = vmul.f32 %v2614, %v2616
    %v2618 = vadd.f32 %v2614, %v2617
    %vm2619 = vweird.f32 %v2613
    %vm2620 = vweird.f32 %v2614
    %vm2621 = vmor %vm2619, %vm2620
    %v2622 = vsel %vm2621, %v2614, %v2618
    %v2623 = vand.u32 2147483647, %v2613
    %vm2624 = vcmp.eq.f32.partialorder %v2623, 8.507059e+37
    %v2625 = vand.u32 %v2613, 2147483648
    %v2626 = vor.u32 1.1754944e-38, %v2625
    %v2627 = vsel %vm2624, %v2626, %v2622
    %v2628 = vmul.f32 1.0, %v2627
    %v2629 = vadd.f32 %v2427, %v2587
    %v2630 = vxor.u32 %v2629, 2147483648
    %v2631 = vmul.f32 %v2630, 1.442695
    %v2632 = vpow.pop %v2631
    %v2633 = vadd.f32 %v2632, 1.0
    %v2634 = vrcp.pop %v2633
    %v2635 = vmul.f32 %v2633, %v2634
    %v2636 = vsub.f32 1.0, %v2635
    %v2637 = vmul.f32 %v2634, %v2636
    %v2638 = vadd.f32 %v2634, %v2637
    %vm2639 = vweird.f32 %v2633
    %vm2640 = vweird.f32 %v2634
    %vm2641 = vmor %vm2639, %vm2640
    %v2642 = vsel %vm2641, %v2634, %v2638
    %v2643 = vand.u32 2147483647, %v2633
    %vm2644 = vcmp.eq.f32.partialorder %v2643, 8.507059e+37
    %v2645 = vand.u32 %v2633, 2147483648
    %v2646 = vor.u32 1.1754944e-38, %v2645
    %v2647 = vsel %vm2644, %v2646, %v2642
    %v2648 = vmul.f32 1.0, %v2647
    %v2649 = vmul.f32 %v2628, %v2607
    %v2650 = vadd.f32 %v2468, %v2649
    %v2651 = vtanh.pop %v2650
    %v2652 = vsub.f32 1.0, %v2648
    %v2653 = vmul.f32 %v2652, %v2651
    %v2654 = vmul.f32 %v2648, 0.0
    %v2655 = vadd.f32 %v2653, %v2654
    %2656 = vmatpush.msra.mxu0 %v2537
    %2657 = vmatpush.msra.mxu0 %v2534
    %2658 = vmatpush.msra.mxu0 %v2531
    %2659 = vmatpush.msra.mxu0 %v2528
    %2660 = vmatpush.msra.mxu0 %v2525
    %2661 = vmatpush.msra.mxu0 %v2522
    %2662 = vmatpush.msra.mxu0 %v2519
    %2663 = vmatpush.msra.mxu0 %v2516
    %2664 = vmatpush.msra.mxu0 %v2513
    %2665 = vmatpush.msra.mxu0 %v2510
    %2666 = vmatpush.msra.mxu0 %v2507
    %2667 = vmatpush.msra.mxu0 %v2504
    %2668 = vmatpush.msra.mxu0 %v2501
    %2669 = vmatpush.msra.mxu0 %v2498
    %2670 = vmatpush.msra.mxu0 %v2495
    %2671 = vmatpush.msra.mxu0 %v2492
    %2672 = vmatmul.f32.gmra.mxu0 %v2655
    %v2673 = vpop.f32.mrf.mxu0
    %v2674 = vadd.f32 %v2543, %v2673
    %2675 = vdwg.mxu0
    %2676 = vmatpush.msra.mxu0 %v2538
    %2677 = vmatpush.msra.mxu0 %v2535
    %2678 = vmatpush.msra.mxu0 %v2532
    %2679 = vmatpush.msra.mxu0 %v2529
    %2680 = vmatpush.msra.mxu0 %v2526
    %2681 = vmatpush.msra.mxu0 %v2523
    %2682 = vmatpush.msra.mxu0 %v2520
    %2683 = vmatpush.msra.mxu0 %v2517
    %2684 = vmatpush.msra.mxu0 %v2514
    %2685 = vmatpush.msra.mxu0 %v2511
    %2686 = vmatpush.msra.mxu0 %v2508
    %2687 = vmatpush.msra.mxu0 %v2505
    %2688 = vmatpush.msra.mxu0 %v2502
    %2689 = vmatpush.msra.mxu0 %v2499
    %2690 = vmatpush.msra.mxu0 %v2496
    %2691 = vmatpush.msra.mxu0 %v2493
    %2692 = vmatmul.f32.gmra.mxu0 %v2655
    %v2693 = vpop.f32.mrf.mxu0
    %v2694 = vadd.f32 %v2544, %v2693
    %2695 = vdwg.mxu0
    %2696 = vmatpush.msra.mxu0 %v2539
    %2697 = vmatpush.msra.mxu0 %v2536
    %2698 = vmatpush.msra.mxu0 %v2533
    %2699 = vmatpush.msra.mxu0 %v2530
    %2700 = vmatpush.msra.mxu0 %v2527
    %2701 = vmatpush.msra.mxu0 %v2524
    %2702 = vmatpush.msra.mxu0 %v2521
    %2703 = vmatpush.msra.mxu0 %v2518
    %2704 = vmatpush.msra.mxu0 %v2515
    %2705 = vmatpush.msra.mxu0 %v2512
    %2706 = vmatpush.msra.mxu0 %v2509
    %2707 = vmatpush.msra.mxu0 %v2506
    %2708 = vmatpush.msra.mxu0 %v2503
    %2709 = vmatpush.msra.mxu0 %v2500
    %2710 = vmatpush.msra.mxu0 %v2497
    %2711 = vmatpush.msra.mxu0 %v2494
    %2712 = vmatmul.f32.gmra.mxu0 %v2655
    %v2713 = vpop.f32.mrf.mxu0
    %v2714 = vadd.f32 %v2545, %v2713
    %2715 = vdwg.mxu0
    %v2716 = vadd.f32 %v2389, %v2674
    %v2717 = vxor.u32 %v2716, 2147483648
    %v2718 = vmul.f32 %v2717, 1.442695
    %v2719 = vpow.pop %v2718
    %v2720 = vadd.f32 %v2719, 1.0
    %v2721 = vrcp.pop %v2720
    %v2722 = vmul.f32 %v2720, %v2721
    %v2723 = vsub.f32 1.0, %v2722
    %v2724 = vmul.f32 %v2721, %v2723
    %v2725 = vadd.f32 %v2721, %v2724
    %vm2726 = vweird.f32 %v2720
    %vm2727 = vweird.f32 %v2721
    %vm2728 = vmor %vm2726, %vm2727
    %v2729 = vsel %vm2728, %v2721, %v2725
    %v2730 = vand.u32 2147483647, %v2720
    %vm2731 = vcmp.eq.f32.partialorder %v2730, 8.507059e+37
    %v2732 = vand.u32 %v2720, 2147483648
    %v2733 = vor.u32 1.1754944e-38, %v2732
    %v2734 = vsel %vm2731, %v2733, %v2729
    %v2735 = vmul.f32 1.0, %v2734
    %v2736 = vadd.f32 %v2430, %v2694
    %v2737 = vxor.u32 %v2736, 2147483648
    %v2738 = vmul.f32 %v2737, 1.442695
    %v2739 = vpow.pop %v2738
    %v2740 = vadd.f32 %v2739, 1.0
    %v2741 = vrcp.pop %v2740
    %v2742 = vmul.f32 %v2740, %v2741
    %v2743 = vsub.f32 1.0, %v2742
    %v2744 = vmul.f32 %v2741, %v2743
    %v2745 = vadd.f32 %v2741, %v2744
    %vm2746 = vweird.f32 %v2740
    %vm2747 = vweird.f32 %v2741
    %vm2748 = vmor %vm2746, %vm2747
    %v2749 = vsel %vm2748, %v2741, %v2745
    %v2750 = vand.u32 2147483647, %v2740
    %vm2751 = vcmp.eq.f32.partialorder %v2750, 8.507059e+37
    %v2752 = vand.u32 %v2740, 2147483648
    %v2753 = vor.u32 1.1754944e-38, %v2752
    %v2754 = vsel %vm2751, %v2753, %v2749
    %v2755 = vmul.f32 1.0, %v2754
    %v2756 = vmul.f32 %v2735, %v2714
    %v2757 = vadd.f32 %v2471, %v2756
    %v2758 = vtanh.pop %v2757
    %v2759 = vsub.f32 1.0, %v2755
    %v2760 = vmul.f32 %v2759, %v2758
    %v2761 = vmul.f32 %v2755, %v2655
    %v2762 = vadd.f32 %v2760, %v2761
    %2763 = vmatpush.msra.mxu0 %v2537
    %2764 = vmatpush.msra.mxu0 %v2534
    %2765 = vmatpush.msra.mxu0 %v2531
    %2766 = vmatpush.msra.mxu0 %v2528
    %2767 = vmatpush.msra.mxu0 %v2525
    %2768 = vmatpush.msra.mxu0 %v2522
    %2769 = vmatpush.msra.mxu0 %v2519
    %2770 = vmatpush.msra.mxu0 %v2516
    %2771 = vmatpush.msra.mxu0 %v2513
    %2772 = vmatpush.msra.mxu0 %v2510
    %2773 = vmatpush.msra.mxu0 %v2507
    %2774 = vmatpush.msra.mxu0 %v2504
    %2775 = vmatpush.msra.mxu0 %v2501
    %2776 = vmatpush.msra.mxu0 %v2498
    %2777 = vmatpush.msra.mxu0 %v2495
    %2778 = vmatpush.msra.mxu0 %v2492
    %2779 = vmatmul.f32.gmra.mxu0 %v2762
    %v2780 = vpop.f32.mrf.mxu0
    %v2781 = vadd.f32 %v2543, %v2780
    %2782 = vdwg.mxu0
    %2783 = vmatpush.msra.mxu0 %v2538
    %2784 = vmatpush.msra.mxu0 %v2535
    %2785 = vmatpush.msra.mxu0 %v2532
    %2786 = vmatpush.msra.mxu0 %v2529
    %2787 = vmatpush.msra.mxu0 %v2526
    %2788 = vmatpush.msra.mxu0 %v2523
    %2789 = vmatpush.msra.mxu0 %v2520
    %2790 = vmatpush.msra.mxu0 %v2517
    %2791 = vmatpush.msra.mxu0 %v2514
    %2792 = vmatpush.msra.mxu0 %v2511
    %2793 = vmatpush.msra.mxu0 %v2508
    %2794 = vmatpush.msra.mxu0 %v2505
    %2795 = vmatpush.msra.mxu0 %v2502
    %2796 = vmatpush.msra.mxu0 %v2499
    %2797 = vmatpush.msra.mxu0 %v2496
    %2798 = vmatpush.msra.mxu0 %v2493
    %2799 = vmatmul.f32.gmra.mxu0 %v2762
    %v2800 = vpop.f32.mrf.mxu0
    %v2801 = vadd.f32 %v2544, %v2800
    %2802 = vdwg.mxu0
    %2803 = vmatpush.msra.mxu0 %v2539
    %2804 = vmatpush.msra.mxu0 %v2536
    %2805 = vmatpush.msra.mxu0 %v2533
    %2806 = vmatpush.msra.mxu0 %v2530
    %2807 = vmatpush.msra.mxu0 %v2527
    %2808 = vmatpush.msra.mxu0 %v2524
    %2809 = vmatpush.msra.mxu0 %v2521
    %2810 = vmatpush.msra.mxu0 %v2518
    %2811 = vmatpush.msra.mxu0 %v2515
    %2812 = vmatpush.msra.mxu0 %v2512
    %2813 = vmatpush.msra.mxu0 %v2509
    %2814 = vmatpush.msra.mxu0 %v2506
    %2815 = vmatpush.msra.mxu0 %v2503
    %2816 = vmatpush.msra.mxu0 %v2500
    %2817 = vmatpush.msra.mxu0 %v2497
    %2818 = vmatpush.msra.mxu0 %v2494
    %2819 = vmatmul.f32.gmra.mxu0 %v2762
    %v2820 = vpop.f32.mrf.mxu0
    %v2821 = vadd.f32 %v2545, %v2820
    %2822 = vdwg.mxu0
    %v2823 = vadd.f32 %v2392, %v2781
    %v2824 = vxor.u32 %v2823, 2147483648
    %v2825 = vmul.f32 %v2824, 1.442695
    %v2826 = vpow.pop %v2825
    %v2827 = vadd.f32 %v2826, 1.0
    %v2828 = vrcp.pop %v2827
    %v2829 = vmul.f32 %v2827, %v2828
    %v2830 = vsub.f32 1.0, %v2829
    %v2831 = vmul.f32 %v2828, %v2830
    %v2832 = vadd.f32 %v2828, %v2831
    %vm2833 = vweird.f32 %v2827
    %vm2834 = vweird.f32 %v2828
    %vm2835 = vmor %vm2833, %vm2834
    %v2836 = vsel %vm2835, %v2828, %v2832
    %v2837 = vand.u32 2147483647, %v2827
    %vm2838 = vcmp.eq.f32.partialorder %v2837, 8.507059e+37
    %v2839 = vand.u32 %v2827, 2147483648
    %v2840 = vor.u32 1.1754944e-38, %v2839
    %v2841 = vsel %vm2838, %v2840, %v2836
    %v2842 = vmul.f32 1.0, %v2841
    %v2843 = vadd.f32 %v2433, %v2801
    %v2844 = vxor.u32 %v2843, 2147483648
    %v2845 = vmul.f32 %v2844, 1.442695
    %v2846 = vpow.pop %v2845
    %v2847 = vadd.f32 %v2846, 1.0
    %v2848 = vrcp.pop %v2847
    %v2849 = vmul.f32 %v2847, %v2848
    %v2850 = vsub.f32 1.0, %v2849
    %v2851 = vmul.f32 %v2848, %v2850
    %v2852 = vadd.f32 %v2848, %v2851
    %vm2853 = vweird.f32 %v2847
    %vm2854 = vweird.f32 %v2848
    %vm2855 = vmor %vm2853, %vm2854
    %v2856 = vsel %vm2855, %v2848, %v2852
    %v2857 = vand.u32 2147483647, %v2847
    %vm2858 = vcmp.eq.f32.partialorder %v2857, 8.507059e+37
    %v2859 = vand.u32 %v2847, 2147483648
    %v2860 = vor.u32 1.1754944e-38, %v2859
    %v2861 = vsel %vm2858, %v2860, %v2856
    %v2862 = vmul.f32 1.0, %v2861
    %v2863 = vmul.f32 %v2842, %v2821
    %v2864 = vadd.f32 %v2474, %v2863
    %v2865 = vtanh.pop %v2864
    %v2866 = vsub.f32 1.0, %v2862
    %v2867 = vmul.f32 %v2866, %v2865
    %v2868 = vmul.f32 %v2862, %v2762
    %v2869 = vadd.f32 %v2867, %v2868
    %2870 = vmatpush.msra.mxu0 %v2537
    %2871 = vmatpush.msra.mxu0 %v2534
    %2872 = vmatpush.msra.mxu0 %v2531
    %2873 = vmatpush.msra.mxu0 %v2528
    %2874 = vmatpush.msra.mxu0 %v2525
    %2875 = vmatpush.msra.mxu0 %v2522
    %2876 = vmatpush.msra.mxu0 %v2519
    %2877 = vmatpush.msra.mxu0 %v2516
    %2878 = vmatpush.msra.mxu0 %v2513
    %2879 = vmatpush.msra.mxu0 %v2510
    %2880 = vmatpush.msra.mxu0 %v2507
    %2881 = vmatpush.msra.mxu0 %v2504
    %2882 = vmatpush.msra.mxu0 %v2501
    %2883 = vmatpush.msra.mxu0 %v2498
    %2884 = vmatpush.msra.mxu0 %v2495
    %2885 = vmatpush.msra.mxu0 %v2492
    %2886 = vmatmul.f32.gmra.mxu0 %v2869
    %v2887 = vpop.f32.mrf.mxu0
    %v2888 = vadd.f32 %v2543, %v2887
    %2889 = vdwg.mxu0
    %2890 = vmatpush.msra.mxu0 %v2538
    %2891 = vmatpush.msra.mxu0 %v2535
    %2892 = vmatpush.msra.mxu0 %v2532
    %2893 = vmatpush.msra.mxu0 %v2529
    %2894 = vmatpush.msra.mxu0 %v2526
    %2895 = vmatpush.msra.mxu0 %v2523
    %2896 = vmatpush.msra.mxu0 %v2520
    %2897 = vmatpush.msra.mxu0 %v2517
    %2898 = vmatpush.msra.mxu0 %v2514
    %2899 = vmatpush.msra.mxu0 %v2511
    %2900 = vmatpush.msra.mxu0 %v2508
    %2901 = vmatpush.msra.mxu0 %v2505
    %2902 = vmatpush.msra.mxu0 %v2502
    %2903 = vmatpush.msra.mxu0 %v2499
    %2904 = vmatpush.msra.mxu0 %v2496
    %2905 = vmatpush.msra.mxu0 %v2493
    %2906 = vmatmul.f32.gmra.mxu0 %v2869
    %v2907 = vpop.f32.mrf.mxu0
    %v2908 = vadd.f32 %v2544, %v2907
    %2909 = vdwg.mxu0
    %2910 = vmatpush.msra.mxu0 %v2539
    %2911 = vmatpush.msra.mxu0 %v2536
    %2912 = vmatpush.msra.mxu0 %v2533
    %2913 = vmatpush.msra.mxu0 %v2530
    %2914 = vmatpush.msra.mxu0 %v2527
    %2915 = vmatpush.msra.mxu0 %v2524
    %2916 = vmatpush.msra.mxu0 %v2521
    %2917 = vmatpush.msra.mxu0 %v2518
    %2918 = vmatpush.msra.mxu0 %v2515
    %2919 = vmatpush.msra.mxu0 %v2512
    %2920 = vmatpush.msra.mxu0 %v2509
    %2921 = vmatpush.msra.mxu0 %v2506
    %2922 = vmatpush.msra.mxu0 %v2503
    %2923 = vmatpush.msra.mxu0 %v2500
    %2924 = vmatpush.msra.mxu0 %v2497
    %2925 = vmatpush.msra.mxu0 %v2494
    %2926 = vmatmul.f32.gmra.mxu0 %v2869
    %v2927 = vpop.f32.mrf.mxu0
    %v2928 = vadd.f32 %v2545, %v2927
    %2929 = vdwg.mxu0
    %v2930 = vadd.f32 %v2395, %v2888
    %v2931 = vxor.u32 %v2930, 2147483648
    %v2932 = vmul.f32 %v2931, 1.442695
    %v2933 = vpow.pop %v2932
    %v2934 = vadd.f32 %v2933, 1.0
    %v2935 = vrcp.pop %v2934
    %v2936 = vmul.f32 %v2934, %v2935
    %v2937 = vsub.f32 1.0, %v2936
    %v2938 = vmul.f32 %v2935, %v2937
    %v2939 = vadd.f32 %v2935, %v2938
    %vm2940 = vweird.f32 %v2934
    %vm2941 = vweird.f32 %v2935
    %vm2942 = vmor %vm2940, %vm2941
    %v2943 = vsel %vm2942, %v2935, %v2939
    %v2944 = vand.u32 2147483647, %v2934
    %vm2945 = vcmp.eq.f32.partialorder %v2944, 8.507059e+37
    %v2946 = vand.u32 %v2934, 2147483648
    %v2947 = vor.u32 1.1754944e-38, %v2946
    %v2948 = vsel %vm2945, %v2947, %v2943
    %v2949 = vmul.f32 1.0, %v2948
    %v2950 = vadd.f32 %v2436, %v2908
    %v2951 = vxor.u32 %v2950, 2147483648
    %v2952 = vmul.f32 %v2951, 1.442695
    %v2953 = vpow.pop %v2952
    %v2954 = vadd.f32 %v2953, 1.0
    %v2955 = vrcp.pop %v2954
    %v2956 = vmul.f32 %v2954, %v2955
    %v2957 = vsub.f32 1.0, %v2956
    %v2958 = vmul.f32 %v2955, %v2957
    %v2959 = vadd.f32 %v2955, %v2958
    %vm2960 = vweird.f32 %v2954
    %vm2961 = vweird.f32 %v2955
    %vm2962 = vmor %vm2960, %vm2961
    %v2963 = vsel %vm2962, %v2955, %v2959
    %v2964 = vand.u32 2147483647, %v2954
    %vm2965 = vcmp.eq.f32.partialorder %v2964, 8.507059e+37
    %v2966 = vand.u32 %v2954, 2147483648
    %v2967 = vor.u32 1.1754944e-38, %v2966
    %v2968 = vsel %vm2965, %v2967, %v2963
    %v2969 = vmul.f32 1.0, %v2968
    %v2970 = vmul.f32 %v2949, %v2928
    %v2971 = vadd.f32 %v2477, %v2970
    %v2972 = vtanh.pop %v2971
    %v2973 = vsub.f32 1.0, %v2969
    %v2974 = vmul.f32 %v2973, %v2972
    %v2975 = vmul.f32 %v2969, %v2869
    %v2976 = vadd.f32 %v2974, %v2975
    %2977 = vmatpush.msra.mxu0 %v2537
    %2978 = vmatpush.msra.mxu0 %v2534
    %2979 = vmatpush.msra.mxu0 %v2531
    %2980 = vmatpush.msra.mxu0 %v2528
    %2981 = vmatpush.msra.mxu0 %v2525
    %2982 = vmatpush.msra.mxu0 %v2522
    %2983 = vmatpush.msra.mxu0 %v2519
    %2984 = vmatpush.msra.mxu0 %v2516
    %2985 = vmatpush.msra.mxu0 %v2513
    %2986 = vmatpush.msra.mxu0 %v2510
    %2987 = vmatpush.msra.mxu0 %v2507
    %2988 = vmatpush.msra.mxu0 %v2504
    %2989 = vmatpush.msra.mxu0 %v2501
    %2990 = vmatpush.msra.mxu0 %v2498
    %2991 = vmatpush.msra.mxu0 %v2495
    %2992 = vmatpush.msra.mxu0 %v2492
    %2993 = vmatmul.f32.gmra.mxu0 %v2976
    %v2994 = vpop.f32.mrf.mxu0
    %v2995 = vadd.f32 %v2543, %v2994
    %2996 = vdwg.mxu0
    %2997 = vmatpush.msra.mxu0 %v2538
    %2998 = vmatpush.msra.mxu0 %v2535
    %2999 = vmatpush.msra.mxu0 %v2532
    %3000 = vmatpush.msra.mxu0 %v2529
    %3001 = vmatpush.msra.mxu0 %v2526
    %3002 = vmatpush.msra.mxu0 %v2523
    %3003 = vmatpush.msra.mxu0 %v2520
    %3004 = vmatpush.msra.mxu0 %v2517
    %3005 = vmatpush.msra.mxu0 %v2514
    %3006 = vmatpush.msra.mxu0 %v2511
    %3007 = vmatpush.msra.mxu0 %v2508
    %3008 = vmatpush.msra.mxu0 %v2505
    %3009 = vmatpush.msra.mxu0 %v2502
    %3010 = vmatpush.msra.mxu0 %v2499
    %3011 = vmatpush.msra.mxu0 %v2496
    %3012 = vmatpush.msra.mxu0 %v2493
    %3013 = vmatmul.f32.gmra.mxu0 %v2976
    %v3014 = vpop.f32.mrf.mxu0
    %v3015 = vadd.f32 %v2544, %v3014
    %3016 = vdwg.mxu0
    %3017 = vmatpush.msra.mxu0 %v2539
    %3018 = vmatpush.msra.mxu0 %v2536
    %3019 = vmatpush.msra.mxu0 %v2533
    %3020 = vmatpush.msra.mxu0 %v2530
    %3021 = vmatpush.msra.mxu0 %v2527
    %3022 = vmatpush.msra.mxu0 %v2524
    %3023 = vmatpush.msra.mxu0 %v2521
    %3024 = vmatpush.msra.mxu0 %v2518
    %3025 = vmatpush.msra.mxu0 %v2515
    %3026 = vmatpush.msra.mxu0 %v2512
    %3027 = vmatpush.msra.mxu0 %v2509
    %3028 = vmatpush.msra.mxu0 %v2506
    %3029 = vmatpush.msra.mxu0 %v2503
    %3030 = vmatpush.msra.mxu0 %v2500
    %3031 = vmatpush.msra.mxu0 %v2497
    %3032 = vmatpush.msra.mxu0 %v2494
    %3033 = vmatmul.f32.gmra.mxu0 %v2976
    %v3034 = vpop.f32.mrf.mxu0
    %v3035 = vadd.f32 %v2545, %v3034
    %3036 = vdwg.mxu0
    %v3037 = vadd.f32 %v2398, %v2995
    %v3038 = vxor.u32 %v3037, 2147483648
    %v3039 = vmul.f32 %v3038, 1.442695
    %v3040 = vpow.pop %v3039
    %v3041 = vadd.f32 %v3040, 1.0
    %v3042 = vrcp.pop %v3041
    %v3043 = vmul.f32 %v3041, %v3042
    %v3044 = vsub.f32 1.0, %v3043
    %v3045 = vmul.f32 %v3042, %v3044
    %v3046 = vadd.f32 %v3042, %v3045
    %vm3047 = vweird.f32 %v3041
    %vm3048 = vweird.f32 %v3042
    %vm3049 = vmor %vm3047, %vm3048
    %v3050 = vsel %vm3049, %v3042, %v3046
    %v3051 = vand.u32 2147483647, %v3041
    %vm3052 = vcmp.eq.f32.partialorder %v3051, 8.507059e+37
    %v3053 = vand.u32 %v3041, 2147483648
    %v3054 = vor.u32 1.1754944e-38, %v3053
    %v3055 = vsel %vm3052, %v3054, %v3050
    %v3056 = vmul.f32 1.0, %v3055
    %v3057 = vadd.f32 %v2439, %v3015
    %v3058 = vxor.u32 %v3057, 2147483648
    %v3059 = vmul.f32 %v3058, 1.442695
    %v3060 = vpow.pop %v3059
    %v3061 = vadd.f32 %v3060, 1.0
    %v3062 = vrcp.pop %v3061
    %v3063 = vmul.f32 %v3061, %v3062
    %v3064 = vsub.f32 1.0, %v3063
    %v3065 = vmul.f32 %v3062, %v3064
    %v3066 = vadd.f32 %v3062, %v3065
    %vm3067 = vweird.f32 %v3061
    %vm3068 = vweird.f32 %v3062
    %vm3069 = vmor %vm3067, %vm3068
    %v3070 = vsel %vm3069, %v3062, %v3066
    %v3071 = vand.u32 2147483647, %v3061
    %vm3072 = vcmp.eq.f32.partialorder %v3071, 8.507059e+37
    %v3073 = vand.u32 %v3061, 2147483648
    %v3074 = vor.u32 1.1754944e-38, %v3073
    %v3075 = vsel %vm3072, %v3074, %v3070
    %v3076 = vmul.f32 1.0, %v3075
    %v3077 = vmul.f32 %v3056, %v3035
    %v3078 = vadd.f32 %v2480, %v3077
    %v3079 = vtanh.pop %v3078
    %v3080 = vsub.f32 1.0, %v3076
    %v3081 = vmul.f32 %v3080, %v3079
    %v3082 = vmul.f32 %v3076, %v2976
    %v3083 = vadd.f32 %v3081, %v3082
    %3084 = vmatpush.msra.mxu0 %v2537
    %3085 = vmatpush.msra.mxu0 %v2534
    %3086 = vmatpush.msra.mxu0 %v2531
    %3087 = vmatpush.msra.mxu0 %v2528
    %3088 = vmatpush.msra.mxu0 %v2525
    %3089 = vmatpush.msra.mxu0 %v2522
    %3090 = vmatpush.msra.mxu0 %v2519
    %3091 = vmatpush.msra.mxu0 %v2516
    %3092 = vmatpush.msra.mxu0 %v2513
    %3093 = vmatpush.msra.mxu0 %v2510
    %3094 = vmatpush.msra.mxu0 %v2507
    %3095 = vmatpush.msra.mxu0 %v2504
    %3096 = vmatpush.msra.mxu0 %v2501
    %3097 = vmatpush.msra.mxu0 %v2498
    %3098 = vmatpush.msra.mxu0 %v2495
    %3099 = vmatpush.msra.mxu0 %v2492
    %3100 = vmatmul.f32.gmra.mxu0 %v3083
    %v3101 = vpop.f32.mrf.mxu0
    %v3102 = vadd.f32 %v2543, %v3101
    %3103 = vdwg.mxu0
    %3104 = vmatpush.msra.mxu0 %v2538
    %3105 = vmatpush.msra.mxu0 %v2535
    %3106 = vmatpush.msra.mxu0 %v2532
    %3107 = vmatpush.msra.mxu0 %v2529
    %3108 = vmatpush.msra.mxu0 %v2526
    %3109 = vmatpush.msra.mxu0 %v2523
    %3110 = vmatpush.msra.mxu0 %v2520
    %3111 = vmatpush.msra.mxu0 %v2517
    %3112 = vmatpush.msra.mxu0 %v2514
    %3113 = vmatpush.msra.mxu0 %v2511
    %3114 = vmatpush.msra.mxu0 %v2508
    %3115 = vmatpush.msra.mxu0 %v2505
    %3116 = vmatpush.msra.mxu0 %v2502
    %3117 = vmatpush.msra.mxu0 %v2499
    %3118 = vmatpush.msra.mxu0 %v2496
    %3119 = vmatpush.msra.mxu0 %v2493
    %3120 = vmatmul.f32.gmra.mxu0 %v3083
    %v3121 = vpop.f32.mrf.mxu0
    %v3122 = vadd.f32 %v2544, %v3121
    %3123 = vdwg.mxu0
    %3124 = vmatpush.msra.mxu0 %v2539
    %3125 = vmatpush.msra.mxu0 %v2536
    %3126 = vmatpush.msra.mxu0 %v2533
    %3127 = vmatpush.msra.mxu0 %v2530
    %3128 = vmatpush.msra.mxu0 %v2527
    %3129 = vmatpush.msra.mxu0 %v2524
    %3130 = vmatpush.msra.mxu0 %v2521
    %3131 = vmatpush.msra.mxu0 %v2518
    %3132 = vmatpush.msra.mxu0 %v2515
    %3133 = vmatpush.msra.mxu0 %v2512
    %3134 = vmatpush.msra.mxu0 %v2509
    %3135 = vmatpush.msra.mxu0 %v2506
    %3136 = vmatpush.msra.mxu0 %v2503
    %3137 = vmatpush.msra.mxu0 %v2500
    %3138 = vmatpush.msra.mxu0 %v2497
    %3139 = vmatpush.msra.mxu0 %v2494
    %3140 = vmatmul.f32.gmra.mxu0 %v3083
    %v3141 = vpop.f32.mrf.mxu0
    %v3142 = vadd.f32 %v2545, %v3141
    %3143 = vdwg.mxu0
    %v3144 = vadd.f32 %v2401, %v3102
    %v3145 = vxor.u32 %v3144, 2147483648
    %v3146 = vmul.f32 %v3145, 1.442695
    %v3147 = vpow.pop %v3146
    %v3148 = vadd.f32 %v3147, 1.0
    %v3149 = vrcp.pop %v3148
    %v3150 = vmul.f32 %v3148, %v3149
    %v3151 = vsub.f32 1.0, %v3150
    %v3152 = vmul.f32 %v3149, %v3151
    %v3153 = vadd.f32 %v3149, %v3152
    %vm3154 = vweird.f32 %v3148
    %vm3155 = vweird.f32 %v3149
    %vm3156 = vmor %vm3154, %vm3155
    %v3157 = vsel %vm3156, %v3149, %v3153
    %v3158 = vand.u32 2147483647, %v3148
    %vm3159 = vcmp.eq.f32.partialorder %v3158, 8.507059e+37
    %v3160 = vand.u32 %v3148, 2147483648
    %v3161 = vor.u32 1.1754944e-38, %v3160
    %v3162 = vsel %vm3159, %v3161, %v3157
    %v3163 = vmul.f32 1.0, %v3162
    %v3164 = vadd.f32 %v2442, %v3122
    %v3165 = vxor.u32 %v3164, 2147483648
    %v3166 = vmul.f32 %v3165, 1.442695
    %v3167 = vpow.pop %v3166
    %v3168 = vadd.f32 %v3167, 1.0
    %v3169 = vrcp.pop %v3168
    %v3170 = vmul.f32 %v3168, %v3169
    %v3171 = vsub.f32 1.0, %v3170
    %v3172 = vmul.f32 %v3169, %v3171
    %v3173 = vadd.f32 %v3169, %v3172
    %vm3174 = vweird.f32 %v3168
    %vm3175 = vweird.f32 %v3169
    %vm3176 = vmor %vm3174, %vm3175
    %v3177 = vsel %vm3176, %v3169, %v3173
    %v3178 = vand.u32 2147483647, %v3168
    %vm3179 = vcmp.eq.f32.partialorder %v3178, 8.507059e+37
    %v3180 = vand.u32 %v3168, 2147483648
    %v3181 = vor.u32 1.1754944e-38, %v3180
    %v3182 = vsel %vm3179, %v3181, %v3177
    %v3183 = vmul.f32 1.0, %v3182
    %v3184 = vmul.f32 %v3163, %v3142
    %v3185 = vadd.f32 %v2483, %v3184
    %v3186 = vtanh.pop %v3185
    %v3187 = vsub.f32 1.0, %v3183
    %v3188 = vmul.f32 %v3187, %v3186
    %v3189 = vmul.f32 %v3183, %v3083
    %v3190 = vadd.f32 %v3188, %v3189
    %3191 = vmatpush.msra.mxu0 %v2537
    %3192 = vmatpush.msra.mxu0 %v2534
    %3193 = vmatpush.msra.mxu0 %v2531
    %3194 = vmatpush.msra.mxu0 %v2528
    %3195 = vmatpush.msra.mxu0 %v2525
    %3196 = vmatpush.msra.mxu0 %v2522
    %3197 = vmatpush.msra.mxu0 %v2519
    %3198 = vmatpush.msra.mxu0 %v2516
    %3199 = vmatpush.msra.mxu0 %v2513
    %3200 = vmatpush.msra.mxu0 %v2510
    %3201 = vmatpush.msra.mxu0 %v2507
    %3202 = vmatpush.msra.mxu0 %v2504
    %3203 = vmatpush.msra.mxu0 %v2501
    %3204 = vmatpush.msra.mxu0 %v2498
    %3205 = vmatpush.msra.mxu0 %v2495
    %3206 = vmatpush.msra.mxu0 %v2492
    %3207 = vmatmul.f32.gmra.mxu0 %v3190
    %v3208 = vpop.f32.mrf.mxu0
    %v3209 = vadd.f32 %v2543, %v3208
    %3210 = vdwg.mxu0
    %3211 = vmatpush.msra.mxu0 %v2538
    %3212 = vmatpush.msra.mxu0 %v2535
    %3213 = vmatpush.msra.mxu0 %v2532
    %3214 = vmatpush.msra.mxu0 %v2529
    %3215 = vmatpush.msra.mxu0 %v2526
    %3216 = vmatpush.msra.mxu0 %v2523
    %3217 = vmatpush.msra.mxu0 %v2520
    %3218 = vmatpush.msra.mxu0 %v2517
    %3219 = vmatpush.msra.mxu0 %v2514
    %3220 = vmatpush.msra.mxu0 %v2511
    %3221 = vmatpush.msra.mxu0 %v2508
    %3222 = vmatpush.msra.mxu0 %v2505
    %3223 = vmatpush.msra.mxu0 %v2502
    %3224 = vmatpush.msra.mxu0 %v2499
    %3225 = vmatpush.msra.mxu0 %v2496
    %3226 = vmatpush.msra.mxu0 %v2493
    %3227 = vmatmul.f32.gmra.mxu0 %v3190
    %v3228 = vpop.f32.mrf.mxu0
    %v3229 = vadd.f32 %v2544, %v3228
    %3230 = vdwg.mxu0
    %3231 = vmatpush.msra.mxu0 %v2539
    %3232 = vmatpush.msra.mxu0 %v2536
    %3233 = vmatpush.msra.mxu0 %v2533
    %3234 = vmatpush.msra.mxu0 %v2530
    %3235 = vmatpush.msra.mxu0 %v2527
    %3236 = vmatpush.msra.mxu0 %v2524
    %3237 = vmatpush.msra.mxu0 %v2521
    %3238 = vmatpush.msra.mxu0 %v2518
    %3239 = vmatpush.msra.mxu0 %v2515
    %3240 = vmatpush.msra.mxu0 %v2512
    %3241 = vmatpush.msra.mxu0 %v2509
    %3242 = vmatpush.msra.mxu0 %v2506
    %3243 = vmatpush.msra.mxu0 %v2503
    %3244 = vmatpush.msra.mxu0 %v2500
    %3245 = vmatpush.msra.mxu0 %v2497
    %3246 = vmatpush.msra.mxu0 %v2494
    %3247 = vmatmul.f32.gmra.mxu0 %v3190
    %v3248 = vpop.f32.mrf.mxu0
    %v3249 = vadd.f32 %v2545, %v3248
    %3250 = vdwg.mxu0
    %v3251 = vadd.f32 %v2404, %v3209
    %v3252 = vxor.u32 %v3251, 2147483648
    %v3253 = vmul.f32 %v3252, 1.442695
    %v3254 = vpow.pop %v3253
    %v3255 = vadd.f32 %v3254, 1.0
    %v3256 = vrcp.pop %v3255
    %v3257 = vmul.f32 %v3255, %v3256
    %v3258 = vsub.f32 1.0, %v3257
    %v3259 = vmul.f32 %v3256, %v3258
    %v3260 = vadd.f32 %v3256, %v3259
    %vm3261 = vweird.f32 %v3255
    %vm3262 = vweird.f32 %v3256
    %vm3263 = vmor %vm3261, %vm3262
    %v3264 = vsel %vm3263, %v3256, %v3260
    %v3265 = vand.u32 2147483647, %v3255
    %vm3266 = vcmp.eq.f32.partialorder %v3265, 8.507059e+37
    %v3267 = vand.u32 %v3255, 2147483648
    %v3268 = vor.u32 1.1754944e-38, %v3267
    %v3269 = vsel %vm3266, %v3268, %v3264
    %v3270 = vmul.f32 1.0, %v3269
    %v3271 = vadd.f32 %v2445, %v3229
    %v3272 = vxor.u32 %v3271, 2147483648
    %v3273 = vmul.f32 %v3272, 1.442695
    %v3274 = vpow.pop %v3273
    %v3275 = vadd.f32 %v3274, 1.0
    %v3276 = vrcp.pop %v3275
    %v3277 = vmul.f32 %v3275, %v3276
    %v3278 = vsub.f32 1.0, %v3277
    %v3279 = vmul.f32 %v3276, %v3278
    %v3280 = vadd.f32 %v3276, %v3279
    %vm3281 = vweird.f32 %v3275
    %vm3282 = vweird.f32 %v3276
    %vm3283 = vmor %vm3281, %vm3282
    %v3284 = vsel %vm3283, %v3276, %v3280
    %v3285 = vand.u32 2147483647, %v3275
    %vm3286 = vcmp.eq.f32.partialorder %v3285, 8.507059e+37
    %v3287 = vand.u32 %v3275, 2147483648
    %v3288 = vor.u32 1.1754944e-38, %v3287
    %v3289 = vsel %vm3286, %v3288, %v3284
    %v3290 = vmul.f32 1.0, %v3289
    %v3291 = vmul.f32 %v3270, %v3249
    %v3292 = vadd.f32 %v2486, %v3291
    %v3293 = vtanh.pop %v3292
    %v3294 = vsub.f32 1.0, %v3290
    %v3295 = vmul.f32 %v3294, %v3293
    %v3296 = vmul.f32 %v3290, %v3190
    %v3297 = vadd.f32 %v3295, %v3296
    %3298 = vmatpush.msra.mxu0 %v2537
    %3299 = vmatpush.msra.mxu0 %v2534
    %3300 = vmatpush.msra.mxu0 %v2531
    %3301 = vmatpush.msra.mxu0 %v2528
    %3302 = vmatpush.msra.mxu0 %v2525
    %3303 = vmatpush.msra.mxu0 %v2522
    %3304 = vmatpush.msra.mxu0 %v2519
    %3305 = vmatpush.msra.mxu0 %v2516
    %3306 = vmatpush.msra.mxu0 %v2513
    %3307 = vmatpush.msra.mxu0 %v2510
    %3308 = vmatpush.msra.mxu0 %v2507
    %3309 = vmatpush.msra.mxu0 %v2504
    %3310 = vmatpush.msra.mxu0 %v2501
    %3311 = vmatpush.msra.mxu0 %v2498
    %3312 = vmatpush.msra.mxu0 %v2495
    %3313 = vmatpush.msra.mxu0 %v2492
    %3314 = vmatmul.f32.gmra.mxu0 %v3297
    %v3315 = vpop.f32.mrf.mxu0
    %v3316 = vadd.f32 %v2543, %v3315
    %3317 = vdwg.mxu0
    %3318 = vmatpush.msra.mxu0 %v2538
    %3319 = vmatpush.msra.mxu0 %v2535
    %3320 = vmatpush.msra.mxu0 %v2532
    %3321 = vmatpush.msra.mxu0 %v2529
    %3322 = vmatpush.msra.mxu0 %v2526
    %3323 = vmatpush.msra.mxu0 %v2523
    %3324 = vmatpush.msra.mxu0 %v2520
    %3325 = vmatpush.msra.mxu0 %v2517
    %3326 = vmatpush.msra.mxu0 %v2514
    %3327 = vmatpush.msra.mxu0 %v2511
    %3328 = vmatpush.msra.mxu0 %v2508
    %3329 = vmatpush.msra.mxu0 %v2505
    %3330 = vmatpush.msra.mxu0 %v2502
    %3331 = vmatpush.msra.mxu0 %v2499
    %3332 = vmatpush.msra.mxu0 %v2496
    %3333 = vmatpush.msra.mxu0 %v2493
    %3334 = vmatmul.f32.gmra.mxu0 %v3297
    %v3335 = vpop.f32.mrf.mxu0
    %v3336 = vadd.f32 %v2544, %v3335
    %3337 = vdwg.mxu0
    %3338 = vmatpush.msra.mxu0 %v2539
    %3339 = vmatpush.msra.mxu0 %v2536
    %3340 = vmatpush.msra.mxu0 %v2533
    %3341 = vmatpush.msra.mxu0 %v2530
    %3342 = vmatpush.msra.mxu0 %v2527
    %3343 = vmatpush.msra.mxu0 %v2524
    %3344 = vmatpush.msra.mxu0 %v2521
    %3345 = vmatpush.msra.mxu0 %v2518
    %3346 = vmatpush.msra.mxu0 %v2515
    %3347 = vmatpush.msra.mxu0 %v2512
    %3348 = vmatpush.msra.mxu0 %v2509
    %3349 = vmatpush.msra.mxu0 %v2506
    %3350 = vmatpush.msra.mxu0 %v2503
    %3351 = vmatpush.msra.mxu0 %v2500
    %3352 = vmatpush.msra.mxu0 %v2497
    %3353 = vmatpush.msra.mxu0 %v2494
    %3354 = vmatmul.f32.gmra.mxu0 %v3297
    %v3355 = vpop.f32.mrf.mxu0
    %v3356 = vadd.f32 %v2545, %v3355
    %3357 = vdwg.mxu0
    %v3358 = vadd.f32 %v2407, %v3316
    %v3359 = vxor.u32 %v3358, 2147483648
    %v3360 = vmul.f32 %v3359, 1.442695
    %v3361 = vpow.pop %v3360
    %v3362 = vadd.f32 %v3361, 1.0
    %v3363 = vrcp.pop %v3362
    %v3364 = vmul.f32 %v3362, %v3363
    %v3365 = vsub.f32 1.0, %v3364
    %v3366 = vmul.f32 %v3363, %v3365
    %v3367 = vadd.f32 %v3363, %v3366
    %vm3368 = vweird.f32 %v3362
    %vm3369 = vweird.f32 %v3363
    %vm3370 = vmor %vm3368, %vm3369
    %v3371 = vsel %vm3370, %v3363, %v3367
    %v3372 = vand.u32 2147483647, %v3362
    %vm3373 = vcmp.eq.f32.partialorder %v3372, 8.507059e+37
    %v3374 = vand.u32 %v3362, 2147483648
    %v3375 = vor.u32 1.1754944e-38, %v3374
    %v3376 = vsel %vm3373, %v3375, %v3371
    %v3377 = vmul.f32 1.0, %v3376
    %v3378 = vadd.f32 %v2448, %v3336
    %v3379 = vxor.u32 %v3378, 2147483648
    %v3380 = vmul.f32 %v3379, 1.442695
    %v3381 = vpow.pop %v3380
    %v3382 = vadd.f32 %v3381, 1.0
    %v3383 = vrcp.pop %v3382
    %v3384 = vmul.f32 %v3382, %v3383
    %v3385 = vsub.f32 1.0, %v3384
    %v3386 = vmul.f32 %v3383, %v3385
    %v3387 = vadd.f32 %v3383, %v3386
    %vm3388 = vweird.f32 %v3382
    %vm3389 = vweird.f32 %v3383
    %vm3390 = vmor %vm3388, %vm3389
    %v3391 = vsel %vm3390, %v3383, %v3387
    %v3392 = vand.u32 2147483647, %v3382
    %vm3393 = vcmp.eq.f32.partialorder %v3392, 8.507059e+37
    %v3394 = vand.u32 %v3382, 2147483648
    %v3395 = vor.u32 1.1754944e-38, %v3394
    %v3396 = vsel %vm3393, %v3395, %v3391
    %v3397 = vmul.f32 1.0, %v3396
    %v3398 = vmul.f32 %v3377, %v3356
    %v3399 = vadd.f32 %v2489, %v3398
    %v3400 = vtanh.pop %v3399
    %v3401 = vsub.f32 1.0, %v3397
    %v3402 = vmul.f32 %v3401, %v3400
    %v3403 = vmul.f32 %v3397, %v3297
    %v3404 = vadd.f32 %v3402, %v3403
    %v3405 = vld [vmem:[%s6] sm:$0x1]
    %v3407 = vperm.slane %v3405, 0
    %v3409 = vmul.f32 %v3404, %v3407
    %3410 = vadd.xlane.f32.xlu0 %v3409
    %v3411 = vpop.xlane.xlu0 %3410
    %v3412 = vld [vmem:[#allocation3] sm:$0x1]
    %v3414 = vperm.slane %v3412, 0
    %v3416 = vadd.f32 %v3411, %v3414
    %vm3417 = vcmask 7168
    %3418 = vst.msk [vmem:[%s8] sm:$0xff] %vm3417, %v3416
    // Predicated region
    $region46: #{_gru_forward_impl.1} parent=1 // pred_check
      _
    $region47: #{_gru_forward_impl.1} parent=1 // pred_check_branch
      %3420 = sbr.rel (0) target = $region49
    $region48: #{_gru_forward_impl.1} parent=1 // pred_region
      _
    $region49: #{_gru_forward_impl.1} parent=1 // pred_fallthru
      _
    // Predicated region
    $region50: #{_gru_forward_impl.1} parent=1 // pred_check
      _
    $region51: #{_gru_forward_impl.1} parent=1 // pred_check_branch
      %3422 = sbr.rel (0) target = $region53
    $region52: #{_gru_forward_impl.1} parent=1 // pred_region
      _
    $region53: #{_gru_forward_impl.1} parent=1 // pred_fallthru
      _
    %3423 = vsyncpa [#allocation5], 1
    %3424 = vsyncpa [#allocation7], 1

</llo_original>
